<compile_context>
chip_gen: v5e
topology: v5e:2x2
jax: 0.10.0
libtpu: 0.0.40
codegen_flags: <defaults>
</compile_context>

<pallas_src>
import functools
import math

import jax
import jax.numpy as jnp
from jax import lax
from jax.experimental import pallas as pl
from jax.experimental.pallas import tpu as pltpu

CONV_NEXT_BLOCK_SCALE_INIT = 1e-6
GN_EPS = 1e-5
KS = 7            # depthwise kernel size
PAD = KS // 2     # 'same' padding for stride-1 odd kernel
LANE = 128        # TPU lane width
SUBLANE = 8       # TPU sublane count


def _round_up(x, m):
    return (x + m - 1) // m * m


def _convnext_kernel(x_ref, dww_ref, dwb_ref, b1_ref, w1_ref, w2_ref,
                     out_ref, xp_ref, *, c_real, lpad):
    """One batch sample per grid step.

    Block shapes (Cp = channels zero-padded to a multiple of 128):
      x_ref   : (1, H, W, Cp)   input sample (also serves as the residual)
      dww_ref : (7, 7, Cp)      depthwise weights, tap-major, zero-padded channels
      dwb_ref : (1, Cp)         depthwise bias (zero on padded channels)
      b1_ref  : (1, Cp)         folded GroupNorm shift for conv1 (= gn_b @ w1^T)
      w1_ref  : (Cp, Cp)        gn_w-scaled conv1 weights, (Cin, Cout)
      w2_ref  : (Cp, Cp)        gamma-scaled conv2 weights, (Cin, Cout)
      out_ref : (1, H, W, Cp)
      xp_ref  : VMEM scratch (H+6, lpad+W+rpad, Cp) f32 -- spatially padded
                activation; `lpad` (a multiple of 8, >= 3) keeps the interior
                store sublane-aligned.
    """
    _, H, W, Cp = x_ref.shape
    Hp, Wc, _ = xp_ref.shape

    x = x_ref[0].astype(jnp.float32)                          # (H, W, Cp)

    # ---- build the zero-padded activation in VMEM (no HBM-side jnp.pad) ----
    # Halo strips are re-zeroed every step (perimeter only -> cheap), so the
    # kernel stays correct however the grid is sharded across TensorCores.
    xp_ref[0:PAD, :, :] = jnp.zeros((PAD, Wc, Cp), jnp.float32)
    xp_ref[Hp - PAD:Hp, :, :] = jnp.zeros((PAD, Wc, Cp), jnp.float32)
    xp_ref[:, 0:lpad, :] = jnp.zeros((Hp, lpad, Cp), jnp.float32)
    xp_ref[:, lpad + W:Wc, :] = jnp.zeros((Hp, Wc - lpad - W, Cp), jnp.float32)
    xp_ref[PAD:PAD + H, lpad:lpad + W, :] = x   # aligned: lpad % 8 == 0

    # ---- depthwise 7x7 conv: 49 shifted multiply-accumulates on the VPU ----
    # Column shift j is on the sublane axis -> hoisted out of the tap loop
    # (7 shifted slabs instead of 49); row shift i is on the untiled leading
    # axis (free addressing). Accumulator starts from the bias broadcast.
    # TODO(synk): on v6e/v7x the taps could run in bf16 (f32 accumulator) for
    # ~2x VALU throughput; kept f32 so the same kernel stays optimal on v5e.
    dw = dww_ref[...].astype(jnp.float32)                     # (7, 7, Cp), one load
    z = jnp.broadcast_to(dwb_ref[0].astype(jnp.float32), (H, W, Cp))
    for j in range(KS):
        c0 = lpad - PAD + j
        col = xp_ref[:, c0:c0 + W, :]                         # (Hp, W, Cp)
        for i in range(KS):
            z = z + col[i:i + H] * dw[i, j]

    # ---- GroupNorm(num_groups=1): single-pass stats over (H, W, C_real) ----
    # Padded channels are exactly zero after the depthwise conv, so they do not
    # perturb the sums; 1/n uses the real channel count.
    inv_n = jnp.float32(1.0 / (H * W * c_real))
    s1 = jnp.sum(z)
    s2 = jnp.sum(z * z)
    mean = s1 * inv_n
    var = s2 * inv_n - mean * mean
    zn = (z - mean) * lax.rsqrt(var + GN_EPS)
    # GN affine (gn_w, gn_b) and gamma are pre-folded into w1/b1/w2 on the host.

    # ---- conv1 (1x1) on the MXU (bf16 operands by default, f32 accumulate) ----
    zn_flat = zn.reshape(H * W, Cp).astype(w1_ref.dtype)
    z1 = jnp.dot(zn_flat, w1_ref[...], preferred_element_type=jnp.float32)
    z1 = z1 + b1_ref[0].astype(jnp.float32)

    # ---- exact GELU (matches torch.nn.GELU default) ----
    z1 = 0.5 * z1 * (1.0 + lax.erf(z1 * jnp.float32(1.0 / math.sqrt(2.0))))

    # ---- conv2 (1x1, gamma pre-folded into the weights) ----
    z2 = jnp.dot(z1.astype(w2_ref.dtype), w2_ref[...],
                 preferred_element_type=jnp.float32)

    # ---- residual ----
    out_ref[0] = (z2.reshape(H, W, Cp) + x).astype(out_ref.dtype)


@functools.partial(jax.jit, static_argnames=("matmul_dtype",))
def convnext_block_gamma(x_nchw, params, matmul_dtype=jnp.bfloat16):
    """x_nchw: (N, C, H, W), like the PyTorch module. Returns (N, C, H, W)."""
    dw_w, dw_b, gn_w, gn_b, w1, w2, gamma = params
    N, C, H, W = x_nchw.shape
    Cp = _round_up(C, LANE)
    pc = Cp - C

    # Sublane-aligned halo geometry for the in-kernel padded scratch.
    lpad = _round_up(PAD, SUBLANE)                       # 8
    wc = _round_up(lpad + W + PAD, SUBLANE)              # right pad >= PAD
    hp = H + 2 * PAD

    # NCHW -> NHWC (channels on the lane axis), channels zero-padded to Cp.
    x_nhwc = jnp.transpose(x_nchw, (0, 2, 3, 1))
    if pc:
        x_nhwc = jnp.pad(x_nhwc, ((0, 0), (0, 0), (0, 0), (0, pc)))

    # Depthwise weights (C, 7, 7) -> (7, 7, Cp); bias -> (1, Cp).
    dw_w_hwc = jnp.pad(jnp.transpose(dw_w, (1, 2, 0)), ((0, 0), (0, 0), (0, pc)))
    dw_b_p = jnp.pad(dw_b, (0, pc)).reshape(1, Cp)

    # Fold GroupNorm affine into conv1 and gamma into conv2 (host-side algebra):
    #   (zn*gn_w + gn_b) @ w1^T = zn @ (gn_w[:,None] * w1^T) + gn_b @ w1^T
    #   gamma * (g @ w2^T)      = g  @ (w2^T * gamma[None,:])
    w1_t = w1.T                                     # (Cin, Cout)
    w2_t = w2.T
    w1_eff = gn_w[:, None] * w1_t
    b1 = gn_b @ w1_t
    w2_eff = w2_t * gamma[None, :]
    w1_eff = jnp.pad(w1_eff, ((0, pc), (0, pc))).astype(matmul_dtype)
    w2_eff = jnp.pad(w2_eff, ((0, pc), (0, pc))).astype(matmul_dtype)
    b1 = jnp.pad(b1, (0, pc)).reshape(1, Cp).astype(jnp.float32)

    # TODO(synk): for very large H*W on v7x (64 MiB VMEM) add a row-tile grid
    # axis with a 6-row halo and a two-phase GroupNorm (stats pass, then
    # normalize); whole-image-per-step tiling is fine at these sizes.
    out_nhwc = pl.pallas_call(
        functools.partial(_convnext_kernel, c_real=C, lpad=lpad),
        out_shape=jax.ShapeDtypeStruct((N, H, W, Cp), x_nchw.dtype),
        grid_spec=pltpu.PrefetchScalarGridSpec(
            num_scalar_prefetch=0,
            grid=(N,),
            in_specs=[
                pl.BlockSpec((1, H, W, Cp), lambda n: (n, 0, 0, 0)),
                pl.BlockSpec((KS, KS, Cp), lambda n: (0, 0, 0)),
                pl.BlockSpec((1, Cp), lambda n: (0, 0)),
                pl.BlockSpec((1, Cp), lambda n: (0, 0)),
                pl.BlockSpec((Cp, Cp), lambda n: (0, 0)),
                pl.BlockSpec((Cp, Cp), lambda n: (0, 0)),
            ],
            out_specs=pl.BlockSpec((1, H, W, Cp), lambda n: (n, 0, 0, 0)),
            scratch_shapes=[pltpu.VMEM((hp, wc, Cp), jnp.float32)],
        ),
        compiler_params=pltpu.CompilerParams(
            dimension_semantics=("parallel",),
            vmem_limit_bytes=48 * 1024 * 1024),
    )(x_nhwc, dw_w_hwc, dw_b_p, b1, w1_eff, w2_eff)

    # Drop channel padding, back to NCHW.
    return jnp.transpose(out_nhwc[..., :C], (0, 3, 1, 2))


def init_params(key, n_channels):
    """Deterministic parameter init mirroring the module's __init__ shapes."""
    k_dw, k_c1, k_c2 = jax.random.split(key, 3)
    C = n_channels
    # kaiming_normal_(mode='fan_in'), gain=sqrt(2): std = sqrt(2 / fan_in)
    dw_w = jax.random.normal(k_dw, (C, KS, KS), jnp.float32) * math.sqrt(2.0 / (KS * KS))
    dw_b = jnp.zeros((C,), jnp.float32)
    w1 = jax.random.normal(k_c1, (C, C), jnp.float32) * math.sqrt(2.0 / C)  # (Cout, Cin)
    w2 = jax.random.normal(k_c2, (C, C), jnp.float32) * math.sqrt(2.0 / C)
    gn_w = jnp.ones((C,), jnp.float32)
    gn_b = jnp.zeros((C,), jnp.float32)
    gamma = jnp.full((C,), CONV_NEXT_BLOCK_SCALE_INIT, jnp.float32)
    return dw_w, dw_b, gn_w, gn_b, w1, w2, gamma


def reference_forward(x_nchw, params):
    """Pure-JAX f32 reference replicating the PyTorch forward (for validation)."""
    dw_w, dw_b, gn_w, gn_b, w1, w2, gamma = params
    N, C, H, W = x_nchw.shape
    z = lax.conv_general_dilated(
        x_nchw, dw_w.reshape(C, 1, KS, KS),
        window_strides=(1, 1), padding="SAME",
        feature_group_count=C,
        dimension_numbers=("NCHW", "OIHW", "NCHW"))
    z = z + dw_b.reshape(1, C, 1, 1)
    mean = jnp.mean(z, axis=(1, 2, 3), keepdims=True)
    var = jnp.mean((z - mean) ** 2, axis=(1, 2, 3), keepdims=True)
    z = (z - mean) / jnp.sqrt(var + GN_EPS)
    z = z * gn_w.reshape(1, C, 1, 1) + gn_b.reshape(1, C, 1, 1)
    z = jnp.einsum("nchw,oc->nohw", z, w1)
    z = 0.5 * z * (1.0 + lax.erf(z / math.sqrt(2.0)))
    z = jnp.einsum("nchw,oc->nohw", z, w2)
    return gamma.reshape(1, C, 1, 1) * z + x_nchw


if __name__ == "__main__":
    key = jax.random.PRNGKey(0)
    k_param, k_x, k_alt = jax.random.split(key, 3)

    N, C, H, W = 2, 4, 16, 16
    params = init_params(k_param, C)
    x = jax.random.normal(k_x, (N, C, H, W), jnp.float32)

    # 1) Module init (gamma = 1e-6), default bf16 MXU path.
    out = jax.block_until_ready(convnext_block_gamma(x, params))
    ref = reference_forward(x, params)
    assert out.shape == (N, C, H, W)
    assert jnp.allclose(out, ref, rtol=1e-4, atol=1e-4), (
        f"max abs err {jnp.max(jnp.abs(out - ref))}")

    # 2) Non-trivial GN affine / dw bias / gamma to exercise the host-side
    #    weight folding; f32 matmuls keep the comparison tight.
    dw_w, dw_b, gn_w, gn_b, w1, w2, gamma = params
    ks = jax.random.split(k_alt, 4)
    params2 = (dw_w,
               0.5 * jax.random.normal(ks[0], dw_b.shape, jnp.float32),
               1.0 + 0.2 * jax.random.normal(ks[1], gn_w.shape, jnp.float32),
               0.3 * jax.random.normal(ks[2], gn_b.shape, jnp.float32),
               w1, w2,
               0.2 * jax.random.normal(ks[3], gamma.shape, jnp.float32))
    out2 = jax.block_until_ready(
        convnext_block_gamma(x, params2, matmul_dtype=jnp.float32))
    ref2 = reference_forward(x, params2)
    assert jnp.allclose(out2, ref2, rtol=5e-4, atol=5e-4), (
        f"max abs err {jnp.max(jnp.abs(out2 - ref2))}")

    # 3) Same params on the default bf16 path (loose tolerance: bf16 MXU noise).
    out3 = jax.block_until_ready(convnext_block_gamma(x, params2))
    assert jnp.allclose(out3, ref2, rtol=1e-1, atol=1e-1), (
        f"max abs err {jnp.max(jnp.abs(out3 - ref2))}")

    print("KERNEL_OK")
</pallas_src>

<mosaic_0001>
module attributes {stable_mosaic.version = 11 : i64} {
  func.func @_convnext_kernel(%arg0: i32, %arg1: memref<1x16x16x128xf32, #tpu.memory_space<vmem>>, %arg2: memref<7x7x128xf32, #tpu.memory_space<vmem>>, %arg3: memref<1x128xf32, #tpu.memory_space<vmem>>, %arg4: memref<1x128xf32, #tpu.memory_space<vmem>>, %arg5: memref<128x128xbf16, #tpu.memory_space<vmem>>, %arg6: memref<128x128xbf16, #tpu.memory_space<vmem>>, %arg7: memref<1x16x16x128xf32, #tpu.memory_space<vmem>>, %arg8: memref<22x32x128xf32, #tpu.memory_space<vmem>>) attributes {dimension_semantics = [#tpu.dimension_semantics<parallel>], iteration_bounds = array<i64: 2>, scalar_prefetch = 0 : i64, scratch_operands = 1 : i64, tpu.core_type = #tpu.core_type<tc>, window_params = [{transform_indices = @transform_0, window_bounds = array<i64: 1, 16, 16, 128>}, {pipeline_mode = #tpu.pipeline_mode<synchronous>, transform_indices = @transform_1, window_bounds = array<i64: 7, 7, 128>}, {pipeline_mode = #tpu.pipeline_mode<synchronous>, transform_indices = @transform_2, window_bounds = array<i64: 1, 128>}, {pipeline_mode = #tpu.pipeline_mode<synchronous>, transform_indices = @transform_3, window_bounds = array<i64: 1, 128>}, {pipeline_mode = #tpu.pipeline_mode<synchronous>, transform_indices = @transform_4, window_bounds = array<i64: 128, 128>}, {pipeline_mode = #tpu.pipeline_mode<synchronous>, transform_indices = @transform_5, window_bounds = array<i64: 128, 128>}, {transform_indices = @transform_6, window_bounds = array<i64: 1, 16, 16, 128>}]} {
    %c0 = arith.constant 0 : index
    %c0_0 = arith.constant 0 : index
    %c0_1 = arith.constant 0 : index
    %c0_2 = arith.constant 0 : index
    %0 = vector.load %arg1[%c0, %c0_0, %c0_1, %c0_2] : memref<1x16x16x128xf32, #tpu.memory_space<vmem>>, vector<1x16x16x128xf32>
    %1 = vector.shape_cast %0 : vector<1x16x16x128xf32> to vector<16x16x128xf32>
    %cst = arith.constant 0.000000e+00 : f32
    %2 = vector.broadcast %cst : f32 to vector<3x32x128xf32>
    %c0_3 = arith.constant 0 : index
    %c0_4 = arith.constant 0 : index
    %c0_5 = arith.constant 0 : index
    %3 = vector.load %arg8[%c0_3, %c0_4, %c0_5] : memref<22x32x128xf32, #tpu.memory_space<vmem>>, vector<3x32x128xf32>
    tpu.vector_store %arg8[%c0_3, %c0_4, %c0_5], %2 {strides = array<i32>} : memref<22x32x128xf32, #tpu.memory_space<vmem>>, vector<3x32x128xf32>,
    %cst_6 = arith.constant 0.000000e+00 : f32
    %4 = vector.broadcast %cst_6 : f32 to vector<3x32x128xf32>
    %c19 = arith.constant 19 : index
    %c0_7 = arith.constant 0 : index
    %c0_8 = arith.constant 0 : index
    %5 = vector.load %arg8[%c19, %c0_7, %c0_8] : memref<22x32x128xf32, #tpu.memory_space<vmem>>, vector<3x32x128xf32>
    tpu.vector_store %arg8[%c19, %c0_7, %c0_8], %4 {strides = array<i32>} : memref<22x32x128xf32, #tpu.memory_space<vmem>>, vector<3x32x128xf32>,
    %cst_9 = arith.constant 0.000000e+00 : f32
    %6 = vector.broadcast %cst_9 : f32 to vector<22x8x128xf32>
    %c0_10 = arith.constant 0 : index
    %c0_11 = arith.constant 0 : index
    %c0_12 = arith.constant 0 : index
    %7 = vector.load %arg8[%c0_10, %c0_11, %c0_12] : memref<22x32x128xf32, #tpu.memory_space<vmem>>, vector<22x8x128xf32>
    tpu.vector_store %arg8[%c0_10, %c0_11, %c0_12], %6 {strides = array<i32>} : memref<22x32x128xf32, #tpu.memory_space<vmem>>, vector<22x8x128xf32>,
    %cst_13 = arith.constant 0.000000e+00 : f32
    %8 = vector.broadcast %cst_13 : f32 to vector<22x8x128xf32>
    %c0_14 = arith.constant 0 : index
    %c24 = arith.constant 24 : index
    %c0_15 = arith.constant 0 : index
    %9 = vector.load %arg8[%c0_14, %c24, %c0_15] : memref<22x32x128xf32, #tpu.memory_space<vmem>>, vector<22x8x128xf32>
    tpu.vector_store %arg8[%c0_14, %c24, %c0_15], %8 {strides = array<i32>} : memref<22x32x128xf32, #tpu.memory_space<vmem>>, vector<22x8x128xf32>,
    %c3 = arith.constant 3 : index
    %c8 = arith.constant 8 : index
    %c0_16 = arith.constant 0 : index
    %10 = vector.load %arg8[%c3, %c8, %c0_16] : memref<22x32x128xf32, #tpu.memory_space<vmem>>, vector<16x16x128xf32>
    tpu.vector_store %arg8[%c3, %c8, %c0_16], %1 {strides = array<i32>} : memref<22x32x128xf32, #tpu.memory_space<vmem>>, vector<16x16x128xf32>,
    %c0_17 = arith.constant 0 : index
    %c0_18 = arith.constant 0 : index
    %c0_19 = arith.constant 0 : index
    %11 = vector.load %arg2[%c0_17, %c0_18, %c0_19] : memref<7x7x128xf32, #tpu.memory_space<vmem>>, vector<7x7x128xf32>
    %c0_20 = arith.constant 0 : index
    %c0_21 = arith.constant 0 : index
    %12 = vector.load %arg3[%c0_20, %c0_21] : memref<1x128xf32, #tpu.memory_space<vmem>>, vector<1x128xf32>
    %13 = vector.shape_cast %12 : vector<1x128xf32> to vector<128xf32>
    %14 = vector.shape_cast %13 : vector<128xf32> to vector<1x1x128xf32>
    %15 = vector.broadcast %14 : vector<1x1x128xf32> to vector<16x16x128xf32>
    %c0_22 = arith.constant 0 : index
    %c5 = arith.constant 5 : index
    %c0_23 = arith.constant 0 : index
    %16 = vector.load %arg8[%c0_22, %c5, %c0_23] : memref<22x32x128xf32, #tpu.memory_space<vmem>>, vector<22x16x128xf32>
    %17 = vector.extract_strided_slice %16 {offsets = [0, 0, 0], sizes = [16, 16, 128], strides = [1, 1, 1]} : vector<22x16x128xf32> to vector<16x16x128xf32>
    %18 = vector.extract_strided_slice %11 {offsets = [0, 0, 0], sizes = [1, 1, 128], strides = [1, 1, 1]} : vector<7x7x128xf32> to vector<1x1x128xf32>
    %19 = vector.shape_cast %18 : vector<1x1x128xf32> to vector<128xf32>
    %20 = vector.shape_cast %19 : vector<128xf32> to vector<1x1x128xf32>
    %21 = vector.broadcast %20 : vector<1x1x128xf32> to vector<16x16x128xf32>
    %22 = arith.mulf %17, %21 : vector<16x16x128xf32>
    %23 = arith.addf %15, %22 : vector<16x16x128xf32>
    %24 = vector.extract_strided_slice %16 {offsets = [1, 0, 0], sizes = [16, 16, 128], strides = [1, 1, 1]} : vector<22x16x128xf32> to vector<16x16x128xf32>
    %25 = vector.extract_strided_slice %11 {offsets = [1, 0, 0], sizes = [1, 1, 128], strides = [1, 1, 1]} : vector<7x7x128xf32> to vector<1x1x128xf32>
    %26 = vector.shape_cast %25 : vector<1x1x128xf32> to vector<128xf32>
    %27 = vector.shape_cast %26 : vector<128xf32> to vector<1x1x128xf32>
    %28 = vector.broadcast %27 : vector<1x1x128xf32> to vector<16x16x128xf32>
    %29 = arith.mulf %24, %28 : vector<16x16x128xf32>
    %30 = arith.addf %23, %29 : vector<16x16x128xf32>
    %31 = vector.extract_strided_slice %16 {offsets = [2, 0, 0], sizes = [16, 16, 128], strides = [1, 1, 1]} : vector<22x16x128xf32> to vector<16x16x128xf32>
    %32 = vector.extract_strided_slice %11 {offsets = [2, 0, 0], sizes = [1, 1, 128], strides = [1, 1, 1]} : vector<7x7x128xf32> to vector<1x1x128xf32>
    %33 = vector.shape_cast %32 : vector<1x1x128xf32> to vector<128xf32>
    %34 = vector.shape_cast %33 : vector<128xf32> to vector<1x1x128xf32>
    %35 = vector.broadcast %34 : vector<1x1x128xf32> to vector<16x16x128xf32>
    %36 = arith.mulf %31, %35 : vector<16x16x128xf32>
    %37 = arith.addf %30, %36 : vector<16x16x128xf32>
    %38 = vector.extract_strided_slice %16 {offsets = [3, 0, 0], sizes = [16, 16, 128], strides = [1, 1, 1]} : vector<22x16x128xf32> to vector<16x16x128xf32>
    %39 = vector.extract_strided_slice %11 {offsets = [3, 0, 0], sizes = [1, 1, 128], strides = [1, 1, 1]} : vector<7x7x128xf32> to vector<1x1x128xf32>
    %40 = vector.shape_cast %39 : vector<1x1x128xf32> to vector<128xf32>
    %41 = vector.shape_cast %40 : vector<128xf32> to vector<1x1x128xf32>
    %42 = vector.broadcast %41 : vector<1x1x128xf32> to vector<16x16x128xf32>
    %43 = arith.mulf %38, %42 : vector<16x16x128xf32>
    %44 = arith.addf %37, %43 : vector<16x16x128xf32>
    %45 = vector.extract_strided_slice %16 {offsets = [4, 0, 0], sizes = [16, 16, 128], strides = [1, 1, 1]} : vector<22x16x128xf32> to vector<16x16x128xf32>
    %46 = vector.extract_strided_slice %11 {offsets = [4, 0, 0], sizes = [1, 1, 128], strides = [1, 1, 1]} : vector<7x7x128xf32> to vector<1x1x128xf32>
    %47 = vector.shape_cast %46 : vector<1x1x128xf32> to vector<128xf32>
    %48 = vector.shape_cast %47 : vector<128xf32> to vector<1x1x128xf32>
    %49 = vector.broadcast %48 : vector<1x1x128xf32> to vector<16x16x128xf32>
    %50 = arith.mulf %45, %49 : vector<16x16x128xf32>
    %51 = arith.addf %44, %50 : vector<16x16x128xf32>
    %52 = vector.extract_strided_slice %16 {offsets = [5, 0, 0], sizes = [16, 16, 128], strides = [1, 1, 1]} : vector<22x16x128xf32> to vector<16x16x128xf32>
    %53 = vector.extract_strided_slice %11 {offsets = [5, 0, 0], sizes = [1, 1, 128], strides = [1, 1, 1]} : vector<7x7x128xf32> to vector<1x1x128xf32>
    %54 = vector.shape_cast %53 : vector<1x1x128xf32> to vector<128xf32>
    %55 = vector.shape_cast %54 : vector<128xf32> to vector<1x1x128xf32>
    %56 = vector.broadcast %55 : vector<1x1x128xf32> to vector<16x16x128xf32>
    %57 = arith.mulf %52, %56 : vector<16x16x128xf32>
    %58 = arith.addf %51, %57 : vector<16x16x128xf32>
    %59 = vector.extract_strided_slice %16 {offsets = [6, 0, 0], sizes = [16, 16, 128], strides = [1, 1, 1]} : vector<22x16x128xf32> to vector<16x16x128xf32>
    %60 = vector.extract_strided_slice %11 {offsets = [6, 0, 0], sizes = [1, 1, 128], strides = [1, 1, 1]} : vector<7x7x128xf32> to vector<1x1x128xf32>
    %61 = vector.shape_cast %60 : vector<1x1x128xf32> to vector<128xf32>
    %62 = vector.shape_cast %61 : vector<128xf32> to vector<1x1x128xf32>
    %63 = vector.broadcast %62 : vector<1x1x128xf32> to vector<16x16x128xf32>
    %64 = arith.mulf %59, %63 : vector<16x16x128xf32>
    %65 = arith.addf %58, %64 : vector<16x16x128xf32>
    %c0_24 = arith.constant 0 : index
    %c6 = arith.constant 6 : index
    %c0_25 = arith.constant 0 : index
    %66 = vector.load %arg8[%c0_24, %c6, %c0_25] : memref<22x32x128xf32, #tpu.memory_space<vmem>>, vector<22x16x128xf32>
    %67 = vector.extract_strided_slice %66 {offsets = [0, 0, 0], sizes = [16, 16, 128], strides = [1, 1, 1]} : vector<22x16x128xf32> to vector<16x16x128xf32>
    %68 = vector.extract_strided_slice %11 {offsets = [0, 1, 0], sizes = [1, 1, 128], strides = [1, 1, 1]} : vector<7x7x128xf32> to vector<1x1x128xf32>
    %69 = vector.shape_cast %68 : vector<1x1x128xf32> to vector<128xf32>
    %70 = vector.shape_cast %69 : vector<128xf32> to vector<1x1x128xf32>
    %71 = vector.broadcast %70 : vector<1x1x128xf32> to vector<16x16x128xf32>
    %72 = arith.mulf %67, %71 : vector<16x16x128xf32>
    %73 = arith.addf %65, %72 : vector<16x16x128xf32>
    %74 = vector.extract_strided_slice %66 {offsets = [1, 0, 0], sizes = [16, 16, 128], strides = [1, 1, 1]} : vector<22x16x128xf32> to vector<16x16x128xf32>
    %75 = vector.extract_strided_slice %11 {offsets = [1, 1, 0], sizes = [1, 1, 128], strides = [1, 1, 1]} : vector<7x7x128xf32> to vector<1x1x128xf32>
    %76 = vector.shape_cast %75 : vector<1x1x128xf32> to vector<128xf32>
    %77 = vector.shape_cast %76 : vector<128xf32> to vector<1x1x128xf32>
    %78 = vector.broadcast %77 : vector<1x1x128xf32> to vector<16x16x128xf32>
    %79 = arith.mulf %74, %78 : vector<16x16x128xf32>
    %80 = arith.addf %73, %79 : vector<16x16x128xf32>
    %81 = vector.extract_strided_slice %66 {offsets = [2, 0, 0], sizes = [16, 16, 128], strides = [1, 1, 1]} : vector<22x16x128xf32> to vector<16x16x128xf32>
    %82 = vector.extract_strided_slice %11 {offsets = [2, 1, 0], sizes = [1, 1, 128], strides = [1, 1, 1]} : vector<7x7x128xf32> to vector<1x1x128xf32>
    %83 = vector.shape_cast %82 : vector<1x1x128xf32> to vector<128xf32>
    %84 = vector.shape_cast %83 : vector<128xf32> to vector<1x1x128xf32>
    %85 = vector.broadcast %84 : vector<1x1x128xf32> to vector<16x16x128xf32>
    %86 = arith.mulf %81, %85 : vector<16x16x128xf32>
    %87 = arith.addf %80, %86 : vector<16x16x128xf32>
    %88 = vector.extract_strided_slice %66 {offsets = [3, 0, 0], sizes = [16, 16, 128], strides = [1, 1, 1]} : vector<22x16x128xf32> to vector<16x16x128xf32>
    %89 = vector.extract_strided_slice %11 {offsets = [3, 1, 0], sizes = [1, 1, 128], strides = [1, 1, 1]} : vector<7x7x128xf32> to vector<1x1x128xf32>
    %90 = vector.shape_cast %89 : vector<1x1x128xf32> to vector<128xf32>
    %91 = vector.shape_cast %90 : vector<128xf32> to vector<1x1x128xf32>
    %92 = vector.broadcast %91 : vector<1x1x128xf32> to vector<16x16x128xf32>
    %93 = arith.mulf %88, %92 : vector<16x16x128xf32>
    %94 = arith.addf %87, %93 : vector<16x16x128xf32>
    %95 = vector.extract_strided_slice %66 {offsets = [4, 0, 0], sizes = [16, 16, 128], strides = [1, 1, 1]} : vector<22x16x128xf32> to vector<16x16x128xf32>
    %96 = vector.extract_strided_slice %11 {offsets = [4, 1, 0], sizes = [1, 1, 128], strides = [1, 1, 1]} : vector<7x7x128xf32> to vector<1x1x128xf32>
    %97 = vector.shape_cast %96 : vector<1x1x128xf32> to vector<128xf32>
    %98 = vector.shape_cast %97 : vector<128xf32> to vector<1x1x128xf32>
    %99 = vector.broadcast %98 : vector<1x1x128xf32> to vector<16x16x128xf32>
    %100 = arith.mulf %95, %99 : vector<16x16x128xf32>
    %101 = arith.addf %94, %100 : vector<16x16x128xf32>
    %102 = vector.extract_strided_slice %66 {offsets = [5, 0, 0], sizes = [16, 16, 128], strides = [1, 1, 1]} : vector<22x16x128xf32> to vector<16x16x128xf32>
    %103 = vector.extract_strided_slice %11 {offsets = [5, 1, 0], sizes = [1, 1, 128], strides = [1, 1, 1]} : vector<7x7x128xf32> to vector<1x1x128xf32>
    %104 = vector.shape_cast %103 : vector<1x1x128xf32> to vector<128xf32>
    %105 = vector.shape_cast %104 : vector<128xf32> to vector<1x1x128xf32>
    %106 = vector.broadcast %105 : vector<1x1x128xf32> to vector<16x16x128xf32>
    %107 = arith.mulf %102, %106 : vector<16x16x128xf32>
    %108 = arith.addf %101, %107 : vector<16x16x128xf32>
    %109 = vector.extract_strided_slice %66 {offsets = [6, 0, 0], sizes = [16, 16, 128], strides = [1, 1, 1]} : vector<22x16x128xf32> to vector<16x16x128xf32>
    %110 = vector.extract_strided_slice %11 {offsets = [6, 1, 0], sizes = [1, 1, 128], strides = [1, 1, 1]} : vector<7x7x128xf32> to vector<1x1x128xf32>
    %111 = vector.shape_cast %110 : vector<1x1x128xf32> to vector<128xf32>
    %112 = vector.shape_cast %111 : vector<128xf32> to vector<1x1x128xf32>
    %113 = vector.broadcast %112 : vector<1x1x128xf32> to vector<16x16x128xf32>
    %114 = arith.mulf %109, %113 : vector<16x16x128xf32>
    %115 = arith.addf %108, %114 : vector<16x16x128xf32>
    %c0_26 = arith.constant 0 : index
    %c7 = arith.constant 7 : index
    %c0_27 = arith.constant 0 : index
    %116 = vector.load %arg8[%c0_26, %c7, %c0_27] : memref<22x32x128xf32, #tpu.memory_space<vmem>>, vector<22x16x128xf32>
    %117 = vector.extract_strided_slice %116 {offsets = [0, 0, 0], sizes = [16, 16, 128], strides = [1, 1, 1]} : vector<22x16x128xf32> to vector<16x16x128xf32>
    %118 = vector.extract_strided_slice %11 {offsets = [0, 2, 0], sizes = [1, 1, 128], strides = [1, 1, 1]} : vector<7x7x128xf32> to vector<1x1x128xf32>
    %119 = vector.shape_cast %118 : vector<1x1x128xf32> to vector<128xf32>
    %120 = vector.shape_cast %119 : vector<128xf32> to vector<1x1x128xf32>
    %121 = vector.broadcast %120 : vector<1x1x128xf32> to vector<16x16x128xf32>
    %122 = arith.mulf %117, %121 : vector<16x16x128xf32>
    %123 = arith.addf %115, %122 : vector<16x16x128xf32>
    %124 = vector.extract_strided_slice %116 {offsets = [1, 0, 0], sizes = [16, 16, 128], strides = [1, 1, 1]} : vector<22x16x128xf32> to vector<16x16x128xf32>
    %125 = vector.extract_strided_slice %11 {offsets = [1, 2, 0], sizes = [1, 1, 128], strides = [1, 1, 1]} : vector<7x7x128xf32> to vector<1x1x128xf32>
    %126 = vector.shape_cast %125 : vector<1x1x128xf32> to vector<128xf32>
    %127 = vector.shape_cast %126 : vector<128xf32> to vector<1x1x128xf32>
    %128 = vector.broadcast %127 : vector<1x1x128xf32> to vector<16x16x128xf32>
    %129 = arith.mulf %124, %128 : vector<16x16x128xf32>
    %130 = arith.addf %123, %129 : vector<16x16x128xf32>
    %131 = vector.extract_strided_slice %116 {offsets = [2, 0, 0], sizes = [16, 16, 128], strides = [1, 1, 1]} : vector<22x16x128xf32> to vector<16x16x128xf32>
    %132 = vector.extract_strided_slice %11 {offsets = [2, 2, 0], sizes = [1, 1, 128], strides = [1, 1, 1]} : vector<7x7x128xf32> to vector<1x1x128xf32>
    %133 = vector.shape_cast %132 : vector<1x1x128xf32> to vector<128xf32>
    %134 = vector.shape_cast %133 : vector<128xf32> to vector<1x1x128xf32>
    %135 = vector.broadcast %134 : vector<1x1x128xf32> to vector<16x16x128xf32>
    %136 = arith.mulf %131, %135 : vector<16x16x128xf32>
    %137 = arith.addf %130, %136 : vector<16x16x128xf32>
    %138 = vector.extract_strided_slice %116 {offsets = [3, 0, 0], sizes = [16, 16, 128], strides = [1, 1, 1]} : vector<22x16x128xf32> to vector<16x16x128xf32>
    %139 = vector.extract_strided_slice %11 {offsets = [3, 2, 0], sizes = [1, 1, 128], strides = [1, 1, 1]} : vector<7x7x128xf32> to vector<1x1x128xf32>
    %140 = vector.shape_cast %139 : vector<1x1x128xf32> to vector<128xf32>
    %141 = vector.shape_cast %140 : vector<128xf32> to vector<1x1x128xf32>
    %142 = vector.broadcast %141 : vector<1x1x128xf32> to vector<16x16x128xf32>
    %143 = arith.mulf %138, %142 : vector<16x16x128xf32>
    %144 = arith.addf %137, %143 : vector<16x16x128xf32>
    %145 = vector.extract_strided_slice %116 {offsets = [4, 0, 0], sizes = [16, 16, 128], strides = [1, 1, 1]} : vector<22x16x128xf32> to vector<16x16x128xf32>
    %146 = vector.extract_strided_slice %11 {offsets = [4, 2, 0], sizes = [1, 1, 128], strides = [1, 1, 1]} : vector<7x7x128xf32> to vector<1x1x128xf32>
    %147 = vector.shape_cast %146 : vector<1x1x128xf32> to vector<128xf32>
    %148 = vector.shape_cast %147 : vector<128xf32> to vector<1x1x128xf32>
    %149 = vector.broadcast %148 : vector<1x1x128xf32> to vector<16x16x128xf32>
    %150 = arith.mulf %145, %149 : vector<16x16x128xf32>
    %151 = arith.addf %144, %150 : vector<16x16x128xf32>
    %152 = vector.extract_strided_slice %116 {offsets = [5, 0, 0], sizes = [16, 16, 128], strides = [1, 1, 1]} : vector<22x16x128xf32> to vector<16x16x128xf32>
    %153 = vector.extract_strided_slice %11 {offsets = [5, 2, 0], sizes = [1, 1, 128], strides = [1, 1, 1]} : vector<7x7x128xf32> to vector<1x1x128xf32>
    %154 = vector.shape_cast %153 : vector<1x1x128xf32> to vector<128xf32>
    %155 = vector.shape_cast %154 : vector<128xf32> to vector<1x1x128xf32>
    %156 = vector.broadcast %155 : vector<1x1x128xf32> to vector<16x16x128xf32>
    %157 = arith.mulf %152, %156 : vector<16x16x128xf32>
    %158 = arith.addf %151, %157 : vector<16x16x128xf32>
    %159 = vector.extract_strided_slice %116 {offsets = [6, 0, 0], sizes = [16, 16, 128], strides = [1, 1, 1]} : vector<22x16x128xf32> to vector<16x16x128xf32>
    %160 = vector.extract_strided_slice %11 {offsets = [6, 2, 0], sizes = [1, 1, 128], strides = [1, 1, 1]} : vector<7x7x128xf32> to vector<1x1x128xf32>
    %161 = vector.shape_cast %160 : vector<1x1x128xf32> to vector<128xf32>
    %162 = vector.shape_cast %161 : vector<128xf32> to vector<1x1x128xf32>
    %163 = vector.broadcast %162 : vector<1x1x128xf32> to vector<16x16x128xf32>
    %164 = arith.mulf %159, %163 : vector<16x16x128xf32>
    %165 = arith.addf %158, %164 : vector<16x16x128xf32>
    %c0_28 = arith.constant 0 : index
    %c8_29 = arith.constant 8 : index
    %c0_30 = arith.constant 0 : index
    %166 = vector.load %arg8[%c0_28, %c8_29, %c0_30] : memref<22x32x128xf32, #tpu.memory_space<vmem>>, vector<22x16x128xf32>
    %167 = vector.extract_strided_slice %166 {offsets = [0, 0, 0], sizes = [16, 16, 128], strides = [1, 1, 1]} : vector<22x16x128xf32> to vector<16x16x128xf32>
    %168 = vector.extract_strided_slice %11 {offsets = [0, 3, 0], sizes = [1, 1, 128], strides = [1, 1, 1]} : vector<7x7x128xf32> to vector<1x1x128xf32>
    %169 = vector.shape_cast %168 : vector<1x1x128xf32> to vector<128xf32>
    %170 = vector.shape_cast %169 : vector<128xf32> to vector<1x1x128xf32>
    %171 = vector.broadcast %170 : vector<1x1x128xf32> to vector<16x16x128xf32>
    %172 = arith.mulf %167, %171 : vector<16x16x128xf32>
    %173 = arith.addf %165, %172 : vector<16x16x128xf32>
    %174 = vector.extract_strided_slice %166 {offsets = [1, 0, 0], sizes = [16, 16, 128], strides = [1, 1, 1]} : vector<22x16x128xf32> to vector<16x16x128xf32>
    %175 = vector.extract_strided_slice %11 {offsets = [1, 3, 0], sizes = [1, 1, 128], strides = [1, 1, 1]} : vector<7x7x128xf32> to vector<1x1x128xf32>
    %176 = vector.shape_cast %175 : vector<1x1x128xf32> to vector<128xf32>
    %177 = vector.shape_cast %176 : vector<128xf32> to vector<1x1x128xf32>
    %178 = vector.broadcast %177 : vector<1x1x128xf32> to vector<16x16x128xf32>
    %179 = arith.mulf %174, %178 : vector<16x16x128xf32>
    %180 = arith.addf %173, %179 : vector<16x16x128xf32>
    %181 = vector.extract_strided_slice %166 {offsets = [2, 0, 0], sizes = [16, 16, 128], strides = [1, 1, 1]} : vector<22x16x128xf32> to vector<16x16x128xf32>
    %182 = vector.extract_strided_slice %11 {offsets = [2, 3, 0], sizes = [1, 1, 128], strides = [1, 1, 1]} : vector<7x7x128xf32> to vector<1x1x128xf32>
    %183 = vector.shape_cast %182 : vector<1x1x128xf32> to vector<128xf32>
    %184 = vector.shape_cast %183 : vector<128xf32> to vector<1x1x128xf32>
    %185 = vector.broadcast %184 : vector<1x1x128xf32> to vector<16x16x128xf32>
    %186 = arith.mulf %181, %185 : vector<16x16x128xf32>
    %187 = arith.addf %180, %186 : vector<16x16x128xf32>
    %188 = vector.extract_strided_slice %166 {offsets = [3, 0, 0], sizes = [16, 16, 128], strides = [1, 1, 1]} : vector<22x16x128xf32> to vector<16x16x128xf32>
    %189 = vector.extract_strided_slice %11 {offsets = [3, 3, 0], sizes = [1, 1, 128], strides = [1, 1, 1]} : vector<7x7x128xf32> to vector<1x1x128xf32>
    %190 = vector.shape_cast %189 : vector<1x1x128xf32> to vector<128xf32>
    %191 = vector.shape_cast %190 : vector<128xf32> to vector<1x1x128xf32>
    %192 = vector.broadcast %191 : vector<1x1x128xf32> to vector<16x16x128xf32>
    %193 = arith.mulf %188, %192 : vector<16x16x128xf32>
    %194 = arith.addf %187, %193 : vector<16x16x128xf32>
    %195 = vector.extract_strided_slice %166 {offsets = [4, 0, 0], sizes = [16, 16, 128], strides = [1, 1, 1]} : vector<22x16x128xf32> to vector<16x16x128xf32>
    %196 = vector.extract_strided_slice %11 {offsets = [4, 3, 0], sizes = [1, 1, 128], strides = [1, 1, 1]} : vector<7x7x128xf32> to vector<1x1x128xf32>
    %197 = vector.shape_cast %196 : vector<1x1x128xf32> to vector<128xf32>
    %198 = vector.shape_cast %197 : vector<128xf32> to vector<1x1x128xf32>
    %199 = vector.broadcast %198 : vector<1x1x128xf32> to vector<16x16x128xf32>
    %200 = arith.mulf %195, %199 : vector<16x16x128xf32>
    %201 = arith.addf %194, %200 : vector<16x16x128xf32>
    %202 = vector.extract_strided_slice %166 {offsets = [5, 0, 0], sizes = [16, 16, 128], strides = [1, 1, 1]} : vector<22x16x128xf32> to vector<16x16x128xf32>
    %203 = vector.extract_strided_slice %11 {offsets = [5, 3, 0], sizes = [1, 1, 128], strides = [1, 1, 1]} : vector<7x7x128xf32> to vector<1x1x128xf32>
    %204 = vector.shape_cast %203 : vector<1x1x128xf32> to vector<128xf32>
    %205 = vector.shape_cast %204 : vector<128xf32> to vector<1x1x128xf32>
    %206 = vector.broadcast %205 : vector<1x1x128xf32> to vector<16x16x128xf32>
    %207 = arith.mulf %202, %206 : vector<16x16x128xf32>
    %208 = arith.addf %201, %207 : vector<16x16x128xf32>
    %209 = vector.extract_strided_slice %166 {offsets = [6, 0, 0], sizes = [16, 16, 128], strides = [1, 1, 1]} : vector<22x16x128xf32> to vector<16x16x128xf32>
    %210 = vector.extract_strided_slice %11 {offsets = [6, 3, 0], sizes = [1, 1, 128], strides = [1, 1, 1]} : vector<7x7x128xf32> to vector<1x1x128xf32>
    %211 = vector.shape_cast %210 : vector<1x1x128xf32> to vector<128xf32>
    %212 = vector.shape_cast %211 : vector<128xf32> to vector<1x1x128xf32>
    %213 = vector.broadcast %212 : vector<1x1x128xf32> to vector<16x16x128xf32>
    %214 = arith.mulf %209, %213 : vector<16x16x128xf32>
    %215 = arith.addf %208, %214 : vector<16x16x128xf32>
    %c0_31 = arith.constant 0 : index
    %c9 = arith.constant 9 : index
    %c0_32 = arith.constant 0 : index
    %216 = vector.load %arg8[%c0_31, %c9, %c0_32] : memref<22x32x128xf32, #tpu.memory_space<vmem>>, vector<22x16x128xf32>
    %217 = vector.extract_strided_slice %216 {offsets = [0, 0, 0], sizes = [16, 16, 128], strides = [1, 1, 1]} : vector<22x16x128xf32> to vector<16x16x128xf32>
    %218 = vector.extract_strided_slice %11 {offsets = [0, 4, 0], sizes = [1, 1, 128], strides = [1, 1, 1]} : vector<7x7x128xf32> to vector<1x1x128xf32>
    %219 = vector.shape_cast %218 : vector<1x1x128xf32> to vector<128xf32>
    %220 = vector.shape_cast %219 : vector<128xf32> to vector<1x1x128xf32>
    %221 = vector.broadcast %220 : vector<1x1x128xf32> to vector<16x16x128xf32>
    %222 = arith.mulf %217, %221 : vector<16x16x128xf32>
    %223 = arith.addf %215, %222 : vector<16x16x128xf32>
    %224 = vector.extract_strided_slice %216 {offsets = [1, 0, 0], sizes = [16, 16, 128], strides = [1, 1, 1]} : vector<22x16x128xf32> to vector<16x16x128xf32>
    %225 = vector.extract_strided_slice %11 {offsets = [1, 4, 0], sizes = [1, 1, 128], strides = [1, 1, 1]} : vector<7x7x128xf32> to vector<1x1x128xf32>
    %226 = vector.shape_cast %225 : vector<1x1x128xf32> to vector<128xf32>
    %227 = vector.shape_cast %226 : vector<128xf32> to vector<1x1x128xf32>
    %228 = vector.broadcast %227 : vector<1x1x128xf32> to vector<16x16x128xf32>
    %229 = arith.mulf %224, %228 : vector<16x16x128xf32>
    %230 = arith.addf %223, %229 : vector<16x16x128xf32>
    %231 = vector.extract_strided_slice %216 {offsets = [2, 0, 0], sizes = [16, 16, 128], strides = [1, 1, 1]} : vector<22x16x128xf32> to vector<16x16x128xf32>
    %232 = vector.extract_strided_slice %11 {offsets = [2, 4, 0], sizes = [1, 1, 128], strides = [1, 1, 1]} : vector<7x7x128xf32> to vector<1x1x128xf32>
    %233 = vector.shape_cast %232 : vector<1x1x128xf32> to vector<128xf32>
    %234 = vector.shape_cast %233 : vector<128xf32> to vector<1x1x128xf32>
    %235 = vector.broadcast %234 : vector<1x1x128xf32> to vector<16x16x128xf32>
    %236 = arith.mulf %231, %235 : vector<16x16x128xf32>
    %237 = arith.addf %230, %236 : vector<16x16x128xf32>
    %238 = vector.extract_strided_slice %216 {offsets = [3, 0, 0], sizes = [16, 16, 128], strides = [1, 1, 1]} : vector<22x16x128xf32> to vector<16x16x128xf32>
    %239 = vector.extract_strided_slice %11 {offsets = [3, 4, 0], sizes = [1, 1, 128], strides = [1, 1, 1]} : vector<7x7x128xf32> to vector<1x1x128xf32>
    %240 = vector.shape_cast %239 : vector<1x1x128xf32> to vector<128xf32>
    %241 = vector.shape_cast %240 : vector<128xf32> to vector<1x1x128xf32>
    %242 = vector.broadcast %241 : vector<1x1x128xf32> to vector<16x16x128xf32>
    %243 = arith.mulf %238, %242 : vector<16x16x128xf32>
    %244 = arith.addf %237, %243 : vector<16x16x128xf32>
    %245 = vector.extract_strided_slice %216 {offsets = [4, 0, 0], sizes = [16, 16, 128], strides = [1, 1, 1]} : vector<22x16x128xf32> to vector<16x16x128xf32>
    %246 = vector.extract_strided_slice %11 {offsets = [4, 4, 0], sizes = [1, 1, 128], strides = [1, 1, 1]} : vector<7x7x128xf32> to vector<1x1x128xf32>
    %247 = vector.shape_cast %246 : vector<1x1x128xf32> to vector<128xf32>
    %248 = vector.shape_cast %247 : vector<128xf32> to vector<1x1x128xf32>
    %249 = vector.broadcast %248 : vector<1x1x128xf32> to vector<16x16x128xf32>
    %250 = arith.mulf %245, %249 : vector<16x16x128xf32>
    %251 = arith.addf %244, %250 : vector<16x16x128xf32>
    %252 = vector.extract_strided_slice %216 {offsets = [5, 0, 0], sizes = [16, 16, 128], strides = [1, 1, 1]} : vector<22x16x128xf32> to vector<16x16x128xf32>
    %253 = vector.extract_strided_slice %11 {offsets = [5, 4, 0], sizes = [1, 1, 128], strides = [1, 1, 1]} : vector<7x7x128xf32> to vector<1x1x128xf32>
    %254 = vector.shape_cast %253 : vector<1x1x128xf32> to vector<128xf32>
    %255 = vector.shape_cast %254 : vector<128xf32> to vector<1x1x128xf32>
    %256 = vector.broadcast %255 : vector<1x1x128xf32> to vector<16x16x128xf32>
    %257 = arith.mulf %252, %256 : vector<16x16x128xf32>
    %258 = arith.addf %251, %257 : vector<16x16x128xf32>
    %259 = vector.extract_strided_slice %216 {offsets = [6, 0, 0], sizes = [16, 16, 128], strides = [1, 1, 1]} : vector<22x16x128xf32> to vector<16x16x128xf32>
    %260 = vector.extract_strided_slice %11 {offsets = [6, 4, 0], sizes = [1, 1, 128], strides = [1, 1, 1]} : vector<7x7x128xf32> to vector<1x1x128xf32>
    %261 = vector.shape_cast %260 : vector<1x1x128xf32> to vector<128xf32>
    %262 = vector.shape_cast %261 : vector<128xf32> to vector<1x1x128xf32>
    %263 = vector.broadcast %262 : vector<1x1x128xf32> to vector<16x16x128xf32>
    %264 = arith.mulf %259, %263 : vector<16x16x128xf32>
    %265 = arith.addf %258, %264 : vector<16x16x128xf32>
    %c0_33 = arith.constant 0 : index
    %c10 = arith.constant 10 : index
    %c0_34 = arith.constant 0 : index
    %266 = vector.load %arg8[%c0_33, %c10, %c0_34] : memref<22x32x128xf32, #tpu.memory_space<vmem>>, vector<22x16x128xf32>
    %267 = vector.extract_strided_slice %266 {offsets = [0, 0, 0], sizes = [16, 16, 128], strides = [1, 1, 1]} : vector<22x16x128xf32> to vector<16x16x128xf32>
    %268 = vector.extract_strided_slice %11 {offsets = [0, 5, 0], sizes = [1, 1, 128], strides = [1, 1, 1]} : vector<7x7x128xf32> to vector<1x1x128xf32>
    %269 = vector.shape_cast %268 : vector<1x1x128xf32> to vector<128xf32>
    %270 = vector.shape_cast %269 : vector<128xf32> to vector<1x1x128xf32>
    %271 = vector.broadcast %270 : vector<1x1x128xf32> to vector<16x16x128xf32>
    %272 = arith.mulf %267, %271 : vector<16x16x128xf32>
    %273 = arith.addf %265, %272 : vector<16x16x128xf32>
    %274 = vector.extract_strided_slice %266 {offsets = [1, 0, 0], sizes = [16, 16, 128], strides = [1, 1, 1]} : vector<22x16x128xf32> to vector<16x16x128xf32>
    %275 = vector.extract_strided_slice %11 {offsets = [1, 5, 0], sizes = [1, 1, 128], strides = [1, 1, 1]} : vector<7x7x128xf32> to vector<1x1x128xf32>
    %276 = vector.shape_cast %275 : vector<1x1x128xf32> to vector<128xf32>
    %277 = vector.shape_cast %276 : vector<128xf32> to vector<1x1x128xf32>
    %278 = vector.broadcast %277 : vector<1x1x128xf32> to vector<16x16x128xf32>
    %279 = arith.mulf %274, %278 : vector<16x16x128xf32>
    %280 = arith.addf %273, %279 : vector<16x16x128xf32>
    %281 = vector.extract_strided_slice %266 {offsets = [2, 0, 0], sizes = [16, 16, 128], strides = [1, 1, 1]} : vector<22x16x128xf32> to vector<16x16x128xf32>
    %282 = vector.extract_strided_slice %11 {offsets = [2, 5, 0], sizes = [1, 1, 128], strides = [1, 1, 1]} : vector<7x7x128xf32> to vector<1x1x128xf32>
    %283 = vector.shape_cast %282 : vector<1x1x128xf32> to vector<128xf32>
    %284 = vector.shape_cast %283 : vector<128xf32> to vector<1x1x128xf32>
    %285 = vector.broadcast %284 : vector<1x1x128xf32> to vector<16x16x128xf32>
    %286 = arith.mulf %281, %285 : vector<16x16x128xf32>
    %287 = arith.addf %280, %286 : vector<16x16x128xf32>
    %288 = vector.extract_strided_slice %266 {offsets = [3, 0, 0], sizes = [16, 16, 128], strides = [1, 1, 1]} : vector<22x16x128xf32> to vector<16x16x128xf32>
    %289 = vector.extract_strided_slice %11 {offsets = [3, 5, 0], sizes = [1, 1, 128], strides = [1, 1, 1]} : vector<7x7x128xf32> to vector<1x1x128xf32>
    %290 = vector.shape_cast %289 : vector<1x1x128xf32> to vector<128xf32>
    %291 = vector.shape_cast %290 : vector<128xf32> to vector<1x1x128xf32>
    %292 = vector.broadcast %291 : vector<1x1x128xf32> to vector<16x16x128xf32>
    %293 = arith.mulf %288, %292 : vector<16x16x128xf32>
    %294 = arith.addf %287, %293 : vector<16x16x128xf32>
    %295 = vector.extract_strided_slice %266 {offsets = [4, 0, 0], sizes = [16, 16, 128], strides = [1, 1, 1]} : vector<22x16x128xf32> to vector<16x16x128xf32>
    %296 = vector.extract_strided_slice %11 {offsets = [4, 5, 0], sizes = [1, 1, 128], strides = [1, 1, 1]} : vector<7x7x128xf32> to vector<1x1x128xf32>
    %297 = vector.shape_cast %296 : vector<1x1x128xf32> to vector<128xf32>
    %298 = vector.shape_cast %297 : vector<128xf32> to vector<1x1x128xf32>
    %299 = vector.broadcast %298 : vector<1x1x128xf32> to vector<16x16x128xf32>
    %300 = arith.mulf %295, %299 : vector<16x16x128xf32>
    %301 = arith.addf %294, %300 : vector<16x16x128xf32>
    %302 = vector.extract_strided_slice %266 {offsets = [5, 0, 0], sizes = [16, 16, 128], strides = [1, 1, 1]} : vector<22x16x128xf32> to vector<16x16x128xf32>
    %303 = vector.extract_strided_slice %11 {offsets = [5, 5, 0], sizes = [1, 1, 128], strides = [1, 1, 1]} : vector<7x7x128xf32> to vector<1x1x128xf32>
    %304 = vector.shape_cast %303 : vector<1x1x128xf32> to vector<128xf32>
    %305 = vector.shape_cast %304 : vector<128xf32> to vector<1x1x128xf32>
    %306 = vector.broadcast %305 : vector<1x1x128xf32> to vector<16x16x128xf32>
    %307 = arith.mulf %302, %306 : vector<16x16x128xf32>
    %308 = arith.addf %301, %307 : vector<16x16x128xf32>
    %309 = vector.extract_strided_slice %266 {offsets = [6, 0, 0], sizes = [16, 16, 128], strides = [1, 1, 1]} : vector<22x16x128xf32> to vector<16x16x128xf32>
    %310 = vector.extract_strided_slice %11 {offsets = [6, 5, 0], sizes = [1, 1, 128], strides = [1, 1, 1]} : vector<7x7x128xf32> to vector<1x1x128xf32>
    %311 = vector.shape_cast %310 : vector<1x1x128xf32> to vector<128xf32>
    %312 = vector.shape_cast %311 : vector<128xf32> to vector<1x1x128xf32>
    %313 = vector.broadcast %312 : vector<1x1x128xf32> to vector<16x16x128xf32>
    %314 = arith.mulf %309, %313 : vector<16x16x128xf32>
    %315 = arith.addf %308, %314 : vector<16x16x128xf32>
    %c0_35 = arith.constant 0 : index
    %c11 = arith.constant 11 : index
    %c0_36 = arith.constant 0 : index
    %316 = vector.load %arg8[%c0_35, %c11, %c0_36] : memref<22x32x128xf32, #tpu.memory_space<vmem>>, vector<22x16x128xf32>
    %317 = vector.extract_strided_slice %316 {offsets = [0, 0, 0], sizes = [16, 16, 128], strides = [1, 1, 1]} : vector<22x16x128xf32> to vector<16x16x128xf32>
    %318 = vector.extract_strided_slice %11 {offsets = [0, 6, 0], sizes = [1, 1, 128], strides = [1, 1, 1]} : vector<7x7x128xf32> to vector<1x1x128xf32>
    %319 = vector.shape_cast %318 : vector<1x1x128xf32> to vector<128xf32>
    %320 = vector.shape_cast %319 : vector<128xf32> to vector<1x1x128xf32>
    %321 = vector.broadcast %320 : vector<1x1x128xf32> to vector<16x16x128xf32>
    %322 = arith.mulf %317, %321 : vector<16x16x128xf32>
    %323 = arith.addf %315, %322 : vector<16x16x128xf32>
    %324 = vector.extract_strided_slice %316 {offsets = [1, 0, 0], sizes = [16, 16, 128], strides = [1, 1, 1]} : vector<22x16x128xf32> to vector<16x16x128xf32>
    %325 = vector.extract_strided_slice %11 {offsets = [1, 6, 0], sizes = [1, 1, 128], strides = [1, 1, 1]} : vector<7x7x128xf32> to vector<1x1x128xf32>
    %326 = vector.shape_cast %325 : vector<1x1x128xf32> to vector<128xf32>
    %327 = vector.shape_cast %326 : vector<128xf32> to vector<1x1x128xf32>
    %328 = vector.broadcast %327 : vector<1x1x128xf32> to vector<16x16x128xf32>
    %329 = arith.mulf %324, %328 : vector<16x16x128xf32>
    %330 = arith.addf %323, %329 : vector<16x16x128xf32>
    %331 = vector.extract_strided_slice %316 {offsets = [2, 0, 0], sizes = [16, 16, 128], strides = [1, 1, 1]} : vector<22x16x128xf32> to vector<16x16x128xf32>
    %332 = vector.extract_strided_slice %11 {offsets = [2, 6, 0], sizes = [1, 1, 128], strides = [1, 1, 1]} : vector<7x7x128xf32> to vector<1x1x128xf32>
    %333 = vector.shape_cast %332 : vector<1x1x128xf32> to vector<128xf32>
    %334 = vector.shape_cast %333 : vector<128xf32> to vector<1x1x128xf32>
    %335 = vector.broadcast %334 : vector<1x1x128xf32> to vector<16x16x128xf32>
    %336 = arith.mulf %331, %335 : vector<16x16x128xf32>
    %337 = arith.addf %330, %336 : vector<16x16x128xf32>
    %338 = vector.extract_strided_slice %316 {offsets = [3, 0, 0], sizes = [16, 16, 128], strides = [1, 1, 1]} : vector<22x16x128xf32> to vector<16x16x128xf32>
    %339 = vector.extract_strided_slice %11 {offsets = [3, 6, 0], sizes = [1, 1, 128], strides = [1, 1, 1]} : vector<7x7x128xf32> to vector<1x1x128xf32>
    %340 = vector.shape_cast %339 : vector<1x1x128xf32> to vector<128xf32>
    %341 = vector.shape_cast %340 : vector<128xf32> to vector<1x1x128xf32>
    %342 = vector.broadcast %341 : vector<1x1x128xf32> to vector<16x16x128xf32>
    %343 = arith.mulf %338, %342 : vector<16x16x128xf32>
    %344 = arith.addf %337, %343 : vector<16x16x128xf32>
    %345 = vector.extract_strided_slice %316 {offsets = [4, 0, 0], sizes = [16, 16, 128], strides = [1, 1, 1]} : vector<22x16x128xf32> to vector<16x16x128xf32>
    %346 = vector.extract_strided_slice %11 {offsets = [4, 6, 0], sizes = [1, 1, 128], strides = [1, 1, 1]} : vector<7x7x128xf32> to vector<1x1x128xf32>
    %347 = vector.shape_cast %346 : vector<1x1x128xf32> to vector<128xf32>
    %348 = vector.shape_cast %347 : vector<128xf32> to vector<1x1x128xf32>
    %349 = vector.broadcast %348 : vector<1x1x128xf32> to vector<16x16x128xf32>
    %350 = arith.mulf %345, %349 : vector<16x16x128xf32>
    %351 = arith.addf %344, %350 : vector<16x16x128xf32>
    %352 = vector.extract_strided_slice %316 {offsets = [5, 0, 0], sizes = [16, 16, 128], strides = [1, 1, 1]} : vector<22x16x128xf32> to vector<16x16x128xf32>
    %353 = vector.extract_strided_slice %11 {offsets = [5, 6, 0], sizes = [1, 1, 128], strides = [1, 1, 1]} : vector<7x7x128xf32> to vector<1x1x128xf32>
    %354 = vector.shape_cast %353 : vector<1x1x128xf32> to vector<128xf32>
    %355 = vector.shape_cast %354 : vector<128xf32> to vector<1x1x128xf32>
    %356 = vector.broadcast %355 : vector<1x1x128xf32> to vector<16x16x128xf32>
    %357 = arith.mulf %352, %356 : vector<16x16x128xf32>
    %358 = arith.addf %351, %357 : vector<16x16x128xf32>
    %359 = vector.extract_strided_slice %316 {offsets = [6, 0, 0], sizes = [16, 16, 128], strides = [1, 1, 1]} : vector<22x16x128xf32> to vector<16x16x128xf32>
    %360 = vector.extract_strided_slice %11 {offsets = [6, 6, 0], sizes = [1, 1, 128], strides = [1, 1, 1]} : vector<7x7x128xf32> to vector<1x1x128xf32>
    %361 = vector.shape_cast %360 : vector<1x1x128xf32> to vector<128xf32>
    %362 = vector.shape_cast %361 : vector<128xf32> to vector<1x1x128xf32>
    %363 = vector.broadcast %362 : vector<1x1x128xf32> to vector<16x16x128xf32>
    %364 = arith.mulf %359, %363 : vector<16x16x128xf32>
    %365 = arith.addf %358, %364 : vector<16x16x128xf32>
    %366 = vector.shape_cast %365 : vector<16x16x128xf32> to vector<1x16x16x128xf32>
    %cst_37 = arith.constant dense<0.000000e+00> : vector<1xf32>
    %367 = vector.multi_reduction <add>, %366, %cst_37 [1, 2, 3] : vector<1x16x16x128xf32> to vector<1xf32>
    %368 = vector.shape_cast %367 : vector<1xf32> to vector<1x1x1x1xf32>
    %369 = vector.extract %368[0, 0, 0, 0] : f32 from vector<1x1x1x1xf32>
    %370 = arith.mulf %365, %365 : vector<16x16x128xf32>
    %371 = vector.shape_cast %370 : vector<16x16x128xf32> to vector<1x16x16x128xf32>
    %cst_38 = arith.constant dense<0.000000e+00> : vector<1xf32>
    %372 = vector.multi_reduction <add>, %371, %cst_38 [1, 2, 3] : vector<1x16x16x128xf32> to vector<1xf32>
    %373 = vector.shape_cast %372 : vector<1xf32> to vector<1x1x1x1xf32>
    %374 = vector.extract %373[0, 0, 0, 0] : f32 from vector<1x1x1x1xf32>
    %cst_39 = arith.constant 9.765625E-4 : f32
    %375 = arith.mulf %369, %cst_39 : f32
    %cst_40 = arith.constant 9.765625E-4 : f32
    %376 = arith.mulf %374, %cst_40 : f32
    %377 = arith.mulf %375, %375 : f32
    %378 = arith.subf %376, %377 : f32
    %379 = vector.broadcast %375 : f32 to vector<16x16x128xf32>
    %380 = arith.subf %365, %379 : vector<16x16x128xf32>
    %cst_41 = arith.constant 9.99999974E-6 : f32
    %381 = arith.addf %378, %cst_41 : f32
    %382 = math.rsqrt %381 : f32
    %383 = vector.broadcast %382 : f32 to vector<16x16x128xf32>
    %384 = arith.mulf %380, %383 : vector<16x16x128xf32>
    %385 = vector.shape_cast %384 : vector<16x16x128xf32> to vector<256x128xf32>
    %386 = arith.truncf %385 : vector<256x128xf32> to vector<256x128xbf16>
    %c0_42 = arith.constant 0 : index
    %c0_43 = arith.constant 0 : index
    %387 = vector.load %arg5[%c0_42, %c0_43] : memref<128x128xbf16, #tpu.memory_space<vmem>>, vector<128x128xbf16>
    %cst_44 = arith.constant dense<0.000000e+00> : vector<256x128xf32>
    %388 = tpu.matmul %386, %387, %cst_44 {dimension_numbers = #tpu.dot_dimension_numbers<[1], [0], [0], [1], [0, 0, 1, 1], [], []>} : vector<256x128xbf16>, vector<128x128xbf16>, vector<256x128xf32> -> vector<256x128xf32>
    %c0_45 = arith.constant 0 : index
    %c0_46 = arith.constant 0 : index
    %389 = vector.load %arg4[%c0_45, %c0_46] : memref<1x128xf32, #tpu.memory_space<vmem>>, vector<1x128xf32>
    %390 = vector.shape_cast %389 : vector<1x128xf32> to vector<128xf32>
    %391 = vector.shape_cast %390 : vector<128xf32> to vector<1x128xf32>
    %392 = vector.broadcast %391 : vector<1x128xf32> to vector<256x128xf32>
    %393 = arith.addf %388, %392 : vector<256x128xf32>
    %cst_47 = arith.constant 5.000000e-01 : f32
    %394 = vector.broadcast %cst_47 : f32 to vector<256x128xf32>
    %395 = arith.mulf %394, %393 : vector<256x128xf32>
    %cst_48 = arith.constant 0.707106769 : f32
    %396 = vector.broadcast %cst_48 : f32 to vector<256x128xf32>
    %397 = arith.mulf %393, %396 : vector<256x128xf32>
    %398 = math.erf %397 : vector<256x128xf32>
    %cst_49 = arith.constant 1.000000e+00 : f32
    %399 = vector.broadcast %cst_49 : f32 to vector<256x128xf32>
    %400 = arith.addf %399, %398 : vector<256x128xf32>
    %401 = arith.mulf %395, %400 : vector<256x128xf32>
    %402 = arith.truncf %401 : vector<256x128xf32> to vector<256x128xbf16>
    %c0_50 = arith.constant 0 : index
    %c0_51 = arith.constant 0 : index
    %403 = vector.load %arg6[%c0_50, %c0_51] : memref<128x128xbf16, #tpu.memory_space<vmem>>, vector<128x128xbf16>
    %cst_52 = arith.constant dense<0.000000e+00> : vector<256x128xf32>
    %404 = tpu.matmul %402, %403, %cst_52 {dimension_numbers = #tpu.dot_dimension_numbers<[1], [0], [0], [1], [0, 0, 1, 1], [], []>} : vector<256x128xbf16>, vector<128x128xbf16>, vector<256x128xf32> -> vector<256x128xf32>
    %405 = vector.shape_cast %404 : vector<256x128xf32> to vector<16x16x128xf32>
    %406 = arith.addf %405, %1 : vector<16x16x128xf32>
    %c0_53 = arith.constant 0 : index
    %c0_54 = arith.constant 0 : index
    %c0_55 = arith.constant 0 : index
    %c0_56 = arith.constant 0 : index
    %407 = vector.load %arg7[%c0_53, %c0_54, %c0_55, %c0_56] : memref<1x16x16x128xf32, #tpu.memory_space<vmem>>, vector<1x16x16x128xf32>
    %408 = vector.shape_cast %407 : vector<1x16x16x128xf32> to vector<16x16x128xf32>
    %409 = vector.shape_cast %406 : vector<16x16x128xf32> to vector<1x16x16x128xf32>
    tpu.vector_store %arg7[%c0_53, %c0_54, %c0_55, %c0_56], %409 {strides = array<i32>} : memref<1x16x16x128xf32, #tpu.memory_space<vmem>>, vector<1x16x16x128xf32>,
    return
  }
  func.func @transform_0(%arg0: i32) -> (i32, i32, i32, i32) {
    %c0_i32 = arith.constant 0 : i32
    %c0_i32_0 = arith.constant 0 : i32
    %c0_i32_1 = arith.constant 0 : i32
    %c0_i32_2 = arith.constant 0 : i32
    return %arg0, %c0_i32, %c0_i32_0, %c0_i32_1 : i32, i32, i32, i32
  }
  func.func @transform_1(%arg0: i32) -> (i32, i32, i32) {
    %c0_i32 = arith.constant 0 : i32
    %c0_i32_0 = arith.constant 0 : i32
    %c0_i32_1 = arith.constant 0 : i32
    %c0_i32_2 = arith.constant 0 : i32
    return %c0_i32, %c0_i32_0, %c0_i32_1 : i32, i32, i32
  }
  func.func @transform_2(%arg0: i32) -> (i32, i32) {
    %c0_i32 = arith.constant 0 : i32
    %c0_i32_0 = arith.constant 0 : i32
    %c0_i32_1 = arith.constant 0 : i32
    return %c0_i32, %c0_i32_0 : i32, i32
  }
  func.func @transform_3(%arg0: i32) -> (i32, i32) {
    %c0_i32 = arith.constant 0 : i32
    %c0_i32_0 = arith.constant 0 : i32
    %c0_i32_1 = arith.constant 0 : i32
    return %c0_i32, %c0_i32_0 : i32, i32
  }
  func.func @transform_4(%arg0: i32) -> (i32, i32) {
    %c0_i32 = arith.constant 0 : i32
    %c0_i32_0 = arith.constant 0 : i32
    %c0_i32_1 = arith.constant 0 : i32
    return %c0_i32, %c0_i32_0 : i32, i32
  }
  func.func @transform_5(%arg0: i32) -> (i32, i32) {
    %c0_i32 = arith.constant 0 : i32
    %c0_i32_0 = arith.constant 0 : i32
    %c0_i32_1 = arith.constant 0 : i32
    return %c0_i32, %c0_i32_0 : i32, i32
  }
  func.func @transform_6(%arg0: i32) -> (i32, i32, i32, i32) {
    %c0_i32 = arith.constant 0 : i32
    %c0_i32_0 = arith.constant 0 : i32
    %c0_i32_1 = arith.constant 0 : i32
    %c0_i32_2 = arith.constant 0 : i32
    return %arg0, %c0_i32, %c0_i32_0, %c0_i32_1 : i32, i32, i32, i32
  }
}

</mosaic_0001>

<llo_original>
// kernel: convnext_block_gamma.1
$region0: #{convnext_block_gamma.1}
  #allocation0 [shape = 'u32[]', space=smem, size = 0x4, offset = 0x4, fixed_abs, tag = 'smem constant byte address 0x4 - core index']
  #allocation1 [shape = 'u32[72,128]{1,0:T(1,128)}', space=vmem, size = 0x9000, scoped, tag = 'internal scratch']
  #allocation2 [shape = 'f32[22,32,128]{2,1,0:T(8,128)}', space=vmem, size = 0x58000, scoped, tag = 'scratch operand']
  %s0 = inlined_call_operand.vmem [shape: f32[2,16,16,128], index: 0, kind: input, shape index: {}]
  %s1 = inlined_call_operand.vmem [shape: f32[7,7,128], index: 1, kind: input, shape index: {}]
  %s2 = inlined_call_operand.vmem [shape: f32[1,128], index: 2, kind: input, shape index: {}]
  %s3 = inlined_call_operand.vmem [shape: f32[1,128], index: 3, kind: input, shape index: {}]
  %s4 = inlined_call_operand.vmem [shape: bf16[128,128], index: 4, kind: input, shape index: {}]
  %s5 = inlined_call_operand.vmem [shape: bf16[128,128], index: 5, kind: input, shape index: {}]
  %s6 = inlined_call_operand.vmem [shape: f32[2,16,16,128], index: 6, kind: output, shape index: {}]
  %s7 = sld [smem:[#allocation0]]
  $region57: #{convnext_block_gamma.1} parent=0
    _
  %s9 = ssub.s32 1, %s7
  %s10 = scalar_select 0, %s9, %s7
  loop: start=0, step=1, limit=4
  $region2: #{convnext_block_gamma.1} parent=0 // loop_pre_header
    _
  $region3: #{convnext_block_gamma.1} parent=0 // loop_header
    %s12 = sphi 0, %s16
    %p13 = scmp.ge.s32.totalorder %s12, 4
    %s22 = sphi 0, %s24
    %s25 = sphi 0, %s22
    %s26 = sphi 0, %s25
    %s42 = sphi 0, %s26
    %s46 = sphi 0, %s46
    %s48 = sphi 0, %s46
    %s49 = sphi 0, %s48
    %s63 = sphi 0, %s49
    %s67 = sphi 0, %s67
    %s69 = sphi 0, %s67
    %s70 = sphi 0, %s69
    %s84 = sphi 0, %s70
    %s88 = sphi 0, %s88
    %s90 = sphi 0, %s88
    %s91 = sphi 0, %s90
    %s105 = sphi 0, %s91
    %s109 = sphi 0, %s109
    %s111 = sphi 0, %s109
    %s112 = sphi 0, %s111
    %s126 = sphi 0, %s112
    %s130 = sphi 0, %s130
    %s132 = sphi 0, %s130
    %s133 = sphi 0, %s132
    %s147 = sphi 0, %s133
    %s153 = sphi 0, %s155
    %s156 = sphi 0, %s153
    %s157 = sphi 0, %s156
    %s173 = sphi 0, %s157
  $region4: #{convnext_block_gamma.1} parent=0 // loop_header_branch
    %15 = sbr.rel (%p13) target = $region8
  $region5: #{convnext_block_gamma.1} parent=0 // loop_body
    %s17 = ssub.s32 %s12, 1
    %s18 = ssub.s32 %s12, 2
    %s19 = sadd.s32 %s12, 1
    %s20 = ssub.s32 %s12, %s19
    %p21 = scmp.eq.s32.totalorder %s20, 0
    %s23 = sadd.s32 %s22, 1
    %s24 = scalar_select %p21, %s22, %s23
    %p27 = pneg %p21
    %p28 = scmp.eq.s32.totalorder %s12, 1
    %p29 = por %p27, %p28
    %p30 = scmp.ne.s32.totalorder %s22, %s25
    %p31 = scmp.eq.s32.totalorder %s12, 0
    %p32 = por %p30, %p31
    %p33 = scmp.ne.s32.totalorder %s22, %s25
    %p34 = scmp.eq.s32.totalorder %s17, 1
    %p35 = por %p33, %p34
    %p36 = scmp.ne.s32.totalorder %s25, %s26
    %p37 = scmp.eq.s32.totalorder %s17, 0
    %p38 = por %p36, %p37
    %p39 = scmp.ne.s32.totalorder %s25, %s26
    %p40 = scmp.eq.s32.totalorder %s18, 1
    %p41 = por %p39, %p40
    %p43 = scmp.ne.s32.totalorder %s26, %s42
    %p44 = scmp.eq.s32.totalorder %s18, 0
    %p45 = por %p43, %p44
    %s47 = sadd.s32 %s46, 1
    %p50 = scmp.eq.s32.totalorder %s12, 1
    %p51 = scmp.ne.s32.totalorder %s46, %s48
    %p52 = scmp.eq.s32.totalorder %s12, 0
    %p53 = por %p51, %p52
    %p54 = scmp.ne.s32.totalorder %s46, %s48
    %p55 = scmp.eq.s32.totalorder %s17, 1
    %p56 = por %p54, %p55
    %p57 = scmp.ne.s32.totalorder %s48, %s49
    %p58 = scmp.eq.s32.totalorder %s17, 0
    %p59 = por %p57, %p58
    %p60 = scmp.ne.s32.totalorder %s48, %s49
    %p61 = scmp.eq.s32.totalorder %s18, 1
    %p62 = por %p60, %p61
    %p64 = scmp.ne.s32.totalorder %s49, %s63
    %p65 = scmp.eq.s32.totalorder %s18, 0
    %p66 = por %p64, %p65
    %s68 = sadd.s32 %s67, 1
    %p71 = scmp.eq.s32.totalorder %s12, 1
    %p72 = scmp.ne.s32.totalorder %s67, %s69
    %p73 = scmp.eq.s32.totalorder %s12, 0
    %p74 = por %p72, %p73
    %p75 = scmp.ne.s32.totalorder %s67, %s69
    %p76 = scmp.eq.s32.totalorder %s17, 1
    %p77 = por %p75, %p76
    %p78 = scmp.ne.s32.totalorder %s69, %s70
    %p79 = scmp.eq.s32.totalorder %s17, 0
    %p80 = por %p78, %p79
    %p81 = scmp.ne.s32.totalorder %s69, %s70
    %p82 = scmp.eq.s32.totalorder %s18, 1
    %p83 = por %p81, %p82
    %p85 = scmp.ne.s32.totalorder %s70, %s84
    %p86 = scmp.eq.s32.totalorder %s18, 0
    %p87 = por %p85, %p86
    %s89 = sadd.s32 %s88, 1
    %p92 = scmp.eq.s32.totalorder %s12, 1
    %p93 = scmp.ne.s32.totalorder %s88, %s90
    %p94 = scmp.eq.s32.totalorder %s12, 0
    %p95 = por %p93, %p94
    %p96 = scmp.ne.s32.totalorder %s88, %s90
    %p97 = scmp.eq.s32.totalorder %s17, 1
    %p98 = por %p96, %p97
    %p99 = scmp.ne.s32.totalorder %s90, %s91
    %p100 = scmp.eq.s32.totalorder %s17, 0
    %p101 = por %p99, %p100
    %p102 = scmp.ne.s32.totalorder %s90, %s91
    %p103 = scmp.eq.s32.totalorder %s18, 1
    %p104 = por %p102, %p103
    %p106 = scmp.ne.s32.totalorder %s91, %s105
    %p107 = scmp.eq.s32.totalorder %s18, 0
    %p108 = por %p106, %p107
    %s110 = sadd.s32 %s109, 1
    %p113 = scmp.eq.s32.totalorder %s12, 1
    %p114 = scmp.ne.s32.totalorder %s109, %s111
    %p115 = scmp.eq.s32.totalorder %s12, 0
    %p116 = por %p114, %p115
    %p117 = scmp.ne.s32.totalorder %s109, %s111
    %p118 = scmp.eq.s32.totalorder %s17, 1
    %p119 = por %p117, %p118
    %p120 = scmp.ne.s32.totalorder %s111, %s112
    %p121 = scmp.eq.s32.totalorder %s17, 0
    %p122 = por %p120, %p121
    %p123 = scmp.ne.s32.totalorder %s111, %s112
    %p124 = scmp.eq.s32.totalorder %s18, 1
    %p125 = por %p123, %p124
    %p127 = scmp.ne.s32.totalorder %s112, %s126
    %p128 = scmp.eq.s32.totalorder %s18, 0
    %p129 = por %p127, %p128
    %s131 = sadd.s32 %s130, 1
    %p134 = scmp.eq.s32.totalorder %s12, 1
    %p135 = scmp.ne.s32.totalorder %s130, %s132
    %p136 = scmp.eq.s32.totalorder %s12, 0
    %p137 = por %p135, %p136
    %p138 = scmp.ne.s32.totalorder %s130, %s132
    %p139 = scmp.eq.s32.totalorder %s17, 1
    %p140 = por %p138, %p139
    %p141 = scmp.ne.s32.totalorder %s132, %s133
    %p142 = scmp.eq.s32.totalorder %s17, 0
    %p143 = por %p141, %p142
    %p144 = scmp.ne.s32.totalorder %s132, %s133
    %p145 = scmp.eq.s32.totalorder %s18, 1
    %p146 = por %p144, %p145
    %p148 = scmp.ne.s32.totalorder %s133, %s147
    %p149 = scmp.eq.s32.totalorder %s18, 0
    %p150 = por %p148, %p149
    %s151 = ssub.s32 %s12, %s19
    %p152 = scmp.eq.s32.totalorder %s151, 0
    %s154 = sadd.s32 %s153, 1
    %s155 = scalar_select %p152, %s153, %s154
    %p158 = pneg %p152
    %p159 = scmp.eq.s32.totalorder %s12, 1
    %p160 = por %p158, %p159
    %p161 = scmp.ne.s32.totalorder %s153, %s156
    %p162 = scmp.eq.s32.totalorder %s12, 0
    %p163 = por %p161, %p162
    %p164 = scmp.ne.s32.totalorder %s153, %s156
    %p165 = scmp.eq.s32.totalorder %s17, 1
    %p166 = por %p164, %p165
    %p167 = scmp.ne.s32.totalorder %s156, %s157
    %p168 = scmp.eq.s32.totalorder %s17, 0
    %p169 = por %p167, %p168
    %p170 = scmp.ne.s32.totalorder %s156, %s157
    %p171 = scmp.eq.s32.totalorder %s18, 1
    %p172 = por %p170, %p171
    %p174 = scmp.ne.s32.totalorder %s157, %s173
    %p175 = scmp.eq.s32.totalorder %s18, 0
    %p176 = por %p174, %p175
    %p177 = scmp.le.s32.totalorder 1, %s12
    %p178 = scmp.lt.s32.totalorder %s12, 3
    %p179 = pnand %p177, %p178
    %p180 = pneg %p179
    // Predicated region
    $region9: #{convnext_block_gamma.1} parent=5 // pred_check
      _
    $region10: #{convnext_block_gamma.1} parent=5 // pred_check_branch
      %182 = sbr.rel (%p179) target = $region12
    $region11: #{convnext_block_gamma.1} parent=5 // pred_region
      %s183 = ssub.s32 %s12, 1
      // Predicated region
      $region13: #{convnext_block_gamma.1} parent=11 // pred_check
        %p184 = pneg %p59
      $region14: #{convnext_block_gamma.1} parent=11 // pred_check_branch
        %186 = sbr.rel (%p184) target = $region16
      $region15: #{convnext_block_gamma.1} parent=11 // pred_region
        _
      $region16: #{convnext_block_gamma.1} parent=11 // pred_fallthru
        _
      // Predicated region
      $region17: #{convnext_block_gamma.1} parent=11 // pred_check
        %p187 = pneg %p80
      $region18: #{convnext_block_gamma.1} parent=11 // pred_check_branch
        %189 = sbr.rel (%p187) target = $region20
      $region19: #{convnext_block_gamma.1} parent=11 // pred_region
        _
      $region20: #{convnext_block_gamma.1} parent=11 // pred_fallthru
        _
      // Predicated region
      $region21: #{convnext_block_gamma.1} parent=11 // pred_check
        %p190 = pneg %p101
      $region22: #{convnext_block_gamma.1} parent=11 // pred_check_branch
        %192 = sbr.rel (%p190) target = $region24
      $region23: #{convnext_block_gamma.1} parent=11 // pred_region
        _
      $region24: #{convnext_block_gamma.1} parent=11 // pred_fallthru
        _
      // Predicated region
      $region25: #{convnext_block_gamma.1} parent=11 // pred_check
        %p193 = pneg %p122
      $region26: #{convnext_block_gamma.1} parent=11 // pred_check_branch
        %195 = sbr.rel (%p193) target = $region28
      $region27: #{convnext_block_gamma.1} parent=11 // pred_region
        _
      $region28: #{convnext_block_gamma.1} parent=11 // pred_fallthru
        _
      // Predicated region
      $region29: #{convnext_block_gamma.1} parent=11 // pred_check
        %p196 = pneg %p143
      $region30: #{convnext_block_gamma.1} parent=11 // pred_check_branch
        %198 = sbr.rel (%p196) target = $region32
      $region31: #{convnext_block_gamma.1} parent=11 // pred_region
        _
      $region32: #{convnext_block_gamma.1} parent=11 // pred_fallthru
        _
    $region12: #{convnext_block_gamma.1} parent=5 // pred_fallthru
      _
    %p199 = scmp.lt.s32.totalorder %s12, 2
    // Predicated region
    $region33: #{convnext_block_gamma.1} parent=5 // pred_check
      %p200 = pneg %p199
    $region34: #{convnext_block_gamma.1} parent=5 // pred_check_branch
      %202 = sbr.rel (%p200) target = $region36
    $region35: #{convnext_block_gamma.1} parent=5 // pred_region
      // Predicated region
      $region37: #{convnext_block_gamma.1} parent=35 // pred_check
        %p203 = pneg %p32
      $region38: #{convnext_block_gamma.1} parent=35 // pred_check_branch
        %205 = sbr.rel (%p203) target = $region40
      $region39: #{convnext_block_gamma.1} parent=35 // pred_region
        %p206 = scmp.lt.s32.totalorder %s12, 1
        %s207 = scalar_select %p206, %s12, 1
        %s208 = smul.addr %s207, 32
        %s209 = smul.addr %s208, 8
        %s210 = scalar_lea.vmem %s0, %s209
      $region40: #{convnext_block_gamma.1} parent=35 // pred_fallthru
        _
    $region36: #{convnext_block_gamma.1} parent=5 // pred_fallthru
      _
    %p211 = scmp.le.s32.totalorder 1, %s12
    %p212 = scmp.lt.s32.totalorder %s12, 3
    %p213 = pnand %p211, %p212
    %p214 = pneg %p213
    // Predicated region
    $region41: #{convnext_block_gamma.1} parent=5 // pred_check
      _
    $region42: #{convnext_block_gamma.1} parent=5 // pred_check_branch
      %216 = sbr.rel (%p213) target = $region44
    $region43: #{convnext_block_gamma.1} parent=5 // pred_region
      %s217 = ssub.s32 %s12, 1
      %p218 = scmp.lt.s32.totalorder %s17, 1
      %s219 = scalar_select %p218, %s17, 1
      %s220 = smul.addr %s219, 32
      %s221 = smul.addr %s220, 8
      %s222 = scalar_lea.vmem %s0, %s221
      %p223 = pneg %p38
      %p224 = pneg %p35
      %p225 = pneg %p59
      %p226 = pneg %p56
      %p227 = pneg %p80
      %p228 = pneg %p77
      %p229 = pneg %p101
      %p230 = pneg %p98
      %p231 = pneg %p122
      %p232 = pneg %p119
      %p233 = pneg %p143
      %p234 = pneg %p140
      %p235 = pneg %p169
      %p236 = pneg %p166
      %p237 = scmp.lt.s32.totalorder %s17, 1
      %s238 = scalar_select %p237, %s17, 1
      %s239 = smul.addr %s238, 32
      %s240 = smul.addr %s239, 8
      %s241 = scalar_lea.vmem %s6, %s240
      %p242 = scmp.lt.s32.totalorder %s17, 1
      %s243 = scalar_select %p242, %s17, 1
      %s244 = smul.addr %s243, 32
      %s245 = smul.addr %s244, 8
      %s246 = scalar_lea.vmem %s0, %s245
      %p247 = scmp.lt.s32.totalorder %s17, 1
      %s248 = scalar_select %p247, %s17, 1
      %s249 = smul.addr %s248, 32
      %s250 = smul.addr %s249, 8
      %s251 = scalar_lea.vmem %s6, %s250
      %v252 = vld [vmem:[%s246] sm:$0xff]
      %v253 = vld [vmem:[%s246 + $0x8] sm:$0xff]
      %v254 = vld [vmem:[%s246 + $0x10] sm:$0xff]
      %v255 = vld [vmem:[%s246 + $0x18] sm:$0xff]
      %v256 = vld [vmem:[%s246 + $0x20] sm:$0xff]
      %v257 = vld [vmem:[%s246 + $0x28] sm:$0xff]
      %v258 = vld [vmem:[%s246 + $0x30] sm:$0xff]
      %v259 = vld [vmem:[%s246 + $0x38] sm:$0xff]
      %v260 = vld [vmem:[%s246 + $0x40] sm:$0xff]
      %v261 = vld [vmem:[%s246 + $0x48] sm:$0xff]
      %v262 = vld [vmem:[%s246 + $0x50] sm:$0xff]
      %v263 = vld [vmem:[%s246 + $0x58] sm:$0xff]
      %v264 = vld [vmem:[%s246 + $0x60] sm:$0xff]
      %v265 = vld [vmem:[%s246 + $0x68] sm:$0xff]
      %v266 = vld [vmem:[%s246 + $0x70] sm:$0xff]
      %v267 = vld [vmem:[%s246 + $0x78] sm:$0xff]
      %v268 = vld [vmem:[%s246 + $0x80] sm:$0xff]
      %v269 = vld [vmem:[%s246 + $0x88] sm:$0xff]
      %v270 = vld [vmem:[%s246 + $0x90] sm:$0xff]
      %v271 = vld [vmem:[%s246 + $0x98] sm:$0xff]
      %v272 = vld [vmem:[%s246 + $0xa0] sm:$0xff]
      %v273 = vld [vmem:[%s246 + $0xa8] sm:$0xff]
      %v274 = vld [vmem:[%s246 + $0xb0] sm:$0xff]
      %v275 = vld [vmem:[%s246 + $0xb8] sm:$0xff]
      %v276 = vld [vmem:[%s246 + $0xc0] sm:$0xff]
      %v277 = vld [vmem:[%s246 + $0xc8] sm:$0xff]
      %v278 = vld [vmem:[%s246 + $0xd0] sm:$0xff]
      %v279 = vld [vmem:[%s246 + $0xd8] sm:$0xff]
      %v280 = vld [vmem:[%s246 + $0xe0] sm:$0xff]
      %v281 = vld [vmem:[%s246 + $0xe8] sm:$0xff]
      %v282 = vld [vmem:[%s246 + $0xf0] sm:$0xff]
      %v283 = vld [vmem:[%s246 + $0xf8] sm:$0xff]
      %284 = vst [vmem:[#allocation2] sm:$0xff] 0.0
      %285 = vst [vmem:[#allocation2 + $0x8] sm:$0xff] 0.0
      %286 = vst [vmem:[#allocation2 + $0x10] sm:$0xff] 0.0
      %287 = vst [vmem:[#allocation2 + $0x18] sm:$0xff] 0.0
      %288 = vst [vmem:[#allocation2 + $0x20] sm:$0xff] 0.0
      %289 = vst [vmem:[#allocation2 + $0x28] sm:$0xff] 0.0
      %290 = vst [vmem:[#allocation2 + $0x30] sm:$0xff] 0.0
      %291 = vst [vmem:[#allocation2 + $0x38] sm:$0xff] 0.0
      %292 = vst [vmem:[#allocation2 + $0x40] sm:$0xff] 0.0
      %293 = vst [vmem:[#allocation2 + $0x48] sm:$0xff] 0.0
      %294 = vst [vmem:[#allocation2 + $0x50] sm:$0xff] 0.0
      %295 = vst [vmem:[#allocation2 + $0x58] sm:$0xff] 0.0
      %s296 = scalar_lea.vmem [#allocation2], 608
      %297 = vst [vmem:[%s296] sm:$0xff] 0.0
      %298 = vst [vmem:[%s296 + $0x8] sm:$0xff] 0.0
      %299 = vst [vmem:[%s296 + $0x10] sm:$0xff] 0.0
      %300 = vst [vmem:[%s296 + $0x18] sm:$0xff] 0.0
      %301 = vst [vmem:[%s296 + $0x20] sm:$0xff] 0.0
      %302 = vst [vmem:[%s296 + $0x28] sm:$0xff] 0.0
      %303 = vst [vmem:[%s296 + $0x30] sm:$0xff] 0.0
      %304 = vst [vmem:[%s296 + $0x38] sm:$0xff] 0.0
      %305 = vst [vmem:[%s296 + $0x40] sm:$0xff] 0.0
      %306 = vst [vmem:[%s296 + $0x48] sm:$0xff] 0.0
      %307 = vst [vmem:[%s296 + $0x50] sm:$0xff] 0.0
      %308 = vst [vmem:[%s296 + $0x58] sm:$0xff] 0.0
      %309 = vst [vmem:[#allocation2] sm:$0xff] 0.0
      %310 = vst [vmem:[#allocation2 + $0x20] sm:$0xff] 0.0
      %311 = vst [vmem:[#allocation2 + $0x40] sm:$0xff] 0.0
      %312 = vst [vmem:[#allocation2 + $0x60] sm:$0xff] 0.0
      %313 = vst [vmem:[#allocation2 + $0x80] sm:$0xff] 0.0
      %314 = vst [vmem:[#allocation2 + $0xa0] sm:$0xff] 0.0
      %315 = vst [vmem:[#allocation2 + $0xc0] sm:$0xff] 0.0
      %316 = vst [vmem:[#allocation2 + $0xe0] sm:$0xff] 0.0
      %317 = vst [vmem:[#allocation2 + $0x100] sm:$0xff] 0.0
      %318 = vst [vmem:[#allocation2 + $0x120] sm:$0xff] 0.0
      %319 = vst [vmem:[#allocation2 + $0x140] sm:$0xff] 0.0
      %320 = vst [vmem:[#allocation2 + $0x160] sm:$0xff] 0.0
      %321 = vst [vmem:[#allocation2 + $0x180] sm:$0xff] 0.0
      %322 = vst [vmem:[#allocation2 + $0x1a0] sm:$0xff] 0.0
      %323 = vst [vmem:[#allocation2 + $0x1c0] sm:$0xff] 0.0
      %324 = vst [vmem:[#allocation2 + $0x1e0] sm:$0xff] 0.0
      %325 = vst [vmem:[#allocation2 + $0x200] sm:$0xff] 0.0
      %326 = vst [vmem:[#allocation2 + $0x220] sm:$0xff] 0.0
      %327 = vst [vmem:[#allocation2 + $0x240] sm:$0xff] 0.0
      %328 = vst [vmem:[#allocation2 + $0x260] sm:$0xff] 0.0
      %329 = vst [vmem:[#allocation2 + $0x280] sm:$0xff] 0.0
      %330 = vst [vmem:[#allocation2 + $0x2a0] sm:$0xff] 0.0
      %331 = vst [vmem:[#allocation2 + $0x18] sm:$0xff] 0.0
      %332 = vst [vmem:[#allocation2 + $0x38] sm:$0xff] 0.0
      %333 = vst [vmem:[#allocation2 + $0x58] sm:$0xff] 0.0
      %334 = vst [vmem:[#allocation2 + $0x78] sm:$0xff] 0.0
      %335 = vst [vmem:[#allocation2 + $0x98] sm:$0xff] 0.0
      %336 = vst [vmem:[#allocation2 + $0xb8] sm:$0xff] 0.0
      %337 = vst [vmem:[#allocation2 + $0xd8] sm:$0xff] 0.0
      %338 = vst [vmem:[#allocation2 + $0xf8] sm:$0xff] 0.0
      %339 = vst [vmem:[#allocation2 + $0x118] sm:$0xff] 0.0
      %340 = vst [vmem:[#allocation2 + $0x138] sm:$0xff] 0.0
      %341 = vst [vmem:[#allocation2 + $0x158] sm:$0xff] 0.0
      %342 = vst [vmem:[#allocation2 + $0x178] sm:$0xff] 0.0
      %343 = vst [vmem:[#allocation2 + $0x198] sm:$0xff] 0.0
      %344 = vst [vmem:[#allocation2 + $0x1b8] sm:$0xff] 0.0
      %345 = vst [vmem:[#allocation2 + $0x1d8] sm:$0xff] 0.0
      %346 = vst [vmem:[#allocation2 + $0x1f8] sm:$0xff] 0.0
      %347 = vst [vmem:[#allocation2 + $0x218] sm:$0xff] 0.0
      %348 = vst [vmem:[#allocation2 + $0x238] sm:$0xff] 0.0
      %349 = vst [vmem:[#allocation2 + $0x258] sm:$0xff] 0.0
      %350 = vst [vmem:[#allocation2 + $0x278] sm:$0xff] 0.0
      %351 = vst [vmem:[#allocation2 + $0x298] sm:$0xff] 0.0
      %352 = vst [vmem:[#allocation2 + $0x2b8] sm:$0xff] 0.0
      %s353 = scalar_lea.vmem [#allocation2], 96
      %354 = vst [vmem:[%s353 + $0x8] sm:$0xff] %v252
      %355 = vst [vmem:[%s353 + $0x10] sm:$0xff] %v253
      %356 = vst [vmem:[%s353 + $0x28] sm:$0xff] %v254
      %357 = vst [vmem:[%s353 + $0x30] sm:$0xff] %v255
      %358 = vst [vmem:[%s353 + $0x48] sm:$0xff] %v256
      %359 = vst [vmem:[%s353 + $0x50] sm:$0xff] %v257
      %360 = vst [vmem:[%s353 + $0x68] sm:$0xff] %v258
      %361 = vst [vmem:[%s353 + $0x70] sm:$0xff] %v259
      %362 = vst [vmem:[%s353 + $0x88] sm:$0xff] %v260
      %363 = vst [vmem:[%s353 + $0x90] sm:$0xff] %v261
      %364 = vst [vmem:[%s353 + $0xa8] sm:$0xff] %v262
      %365 = vst [vmem:[%s353 + $0xb0] sm:$0xff] %v263
      %366 = vst [vmem:[%s353 + $0xc8] sm:$0xff] %v264
      %367 = vst [vmem:[%s353 + $0xd0] sm:$0xff] %v265
      %368 = vst [vmem:[%s353 + $0xe8] sm:$0xff] %v266
      %369 = vst [vmem:[%s353 + $0xf0] sm:$0xff] %v267
      %370 = vst [vmem:[%s353 + $0x108] sm:$0xff] %v268
      %371 = vst [vmem:[%s353 + $0x110] sm:$0xff] %v269
      %372 = vst [vmem:[%s353 + $0x128] sm:$0xff] %v270
      %373 = vst [vmem:[%s353 + $0x130] sm:$0xff] %v271
      %374 = vst [vmem:[%s353 + $0x148] sm:$0xff] %v272
      %375 = vst [vmem:[%s353 + $0x150] sm:$0xff] %v273
      %376 = vst [vmem:[%s353 + $0x168] sm:$0xff] %v274
      %377 = vst [vmem:[%s353 + $0x170] sm:$0xff] %v275
      %378 = vst [vmem:[%s353 + $0x188] sm:$0xff] %v276
      %379 = vst [vmem:[%s353 + $0x190] sm:$0xff] %v277
      %380 = vst [vmem:[%s353 + $0x1a8] sm:$0xff] %v278
      %381 = vst [vmem:[%s353 + $0x1b0] sm:$0xff] %v279
      %382 = vst [vmem:[%s353 + $0x1c8] sm:$0xff] %v280
      %383 = vst [vmem:[%s353 + $0x1d0] sm:$0xff] %v281
      %384 = vst [vmem:[%s353 + $0x1e8] sm:$0xff] %v282
      %385 = vst [vmem:[%s353 + $0x1f0] sm:$0xff] %v283
      %v386 = vld [vmem:[%s1] sm:$0x7f]
      %v387 = vld [vmem:[%s1 + $0x8] sm:$0x7f]
      %v388 = vld [vmem:[%s1 + $0x10] sm:$0x7f]
      %v389 = vld [vmem:[%s1 + $0x18] sm:$0x7f]
      %v390 = vld [vmem:[%s1 + $0x20] sm:$0x7f]
      %v391 = vld [vmem:[%s1 + $0x28] sm:$0x7f]
      %v392 = vld [vmem:[%s1 + $0x30] sm:$0x7f]
      %v393 = vld [vmem:[%s2] sm:$0x1]
      %v395 = vperm.slane %v393, 0
      %v397 = vld [vmem:[#allocation2 + $0x5] sm:$0xff]
      %v398 = vld [vmem:[#allocation2 + $0xd] sm:$0xff]
      %v399 = vld [vmem:[#allocation2 + $0x25] sm:$0xff]
      %v400 = vld [vmem:[#allocation2 + $0x2d] sm:$0xff]
      %v401 = vld [vmem:[#allocation2 + $0x45] sm:$0xff]
      %v402 = vld [vmem:[#allocation2 + $0x4d] sm:$0xff]
      %v403 = vld [vmem:[#allocation2 + $0x65] sm:$0xff]
      %v404 = vld [vmem:[#allocation2 + $0x6d] sm:$0xff]
      %v405 = vld [vmem:[#allocation2 + $0x85] sm:$0xff]
      %v406 = vld [vmem:[#allocation2 + $0x8d] sm:$0xff]
      %v407 = vld [vmem:[#allocation2 + $0xa5] sm:$0xff]
      %v408 = vld [vmem:[#allocation2 + $0xad] sm:$0xff]
      %v409 = vld [vmem:[#allocation2 + $0xc5] sm:$0xff]
      %v410 = vld [vmem:[#allocation2 + $0xcd] sm:$0xff]
      %v411 = vld [vmem:[#allocation2 + $0xe5] sm:$0xff]
      %v412 = vld [vmem:[#allocation2 + $0xed] sm:$0xff]
      %v413 = vld [vmem:[#allocation2 + $0x105] sm:$0xff]
      %v414 = vld [vmem:[#allocation2 + $0x10d] sm:$0xff]
      %v415 = vld [vmem:[#allocation2 + $0x125] sm:$0xff]
      %v416 = vld [vmem:[#allocation2 + $0x12d] sm:$0xff]
      %v417 = vld [vmem:[#allocation2 + $0x145] sm:$0xff]
      %v418 = vld [vmem:[#allocation2 + $0x14d] sm:$0xff]
      %v419 = vld [vmem:[#allocation2 + $0x165] sm:$0xff]
      %v420 = vld [vmem:[#allocation2 + $0x16d] sm:$0xff]
      %v421 = vld [vmem:[#allocation2 + $0x185] sm:$0xff]
      %v422 = vld [vmem:[#allocation2 + $0x18d] sm:$0xff]
      %v423 = vld [vmem:[#allocation2 + $0x1a5] sm:$0xff]
      %v424 = vld [vmem:[#allocation2 + $0x1ad] sm:$0xff]
      %v425 = vld [vmem:[#allocation2 + $0x1c5] sm:$0xff]
      %v426 = vld [vmem:[#allocation2 + $0x1cd] sm:$0xff]
      %v427 = vld [vmem:[#allocation2 + $0x1e5] sm:$0xff]
      %v428 = vld [vmem:[#allocation2 + $0x1ed] sm:$0xff]
      %v429 = vld [vmem:[#allocation2 + $0x205] sm:$0xff]
      %v430 = vld [vmem:[#allocation2 + $0x20d] sm:$0xff]
      %v431 = vld [vmem:[#allocation2 + $0x225] sm:$0xff]
      %v432 = vld [vmem:[#allocation2 + $0x22d] sm:$0xff]
      %v433 = vld [vmem:[#allocation2 + $0x245] sm:$0xff]
      %v434 = vld [vmem:[#allocation2 + $0x24d] sm:$0xff]
      %v435 = vld [vmem:[#allocation2 + $0x265] sm:$0xff]
      %v436 = vld [vmem:[#allocation2 + $0x26d] sm:$0xff]
      %v437 = vld [vmem:[#allocation2 + $0x285] sm:$0xff]
      %v438 = vld [vmem:[#allocation2 + $0x28d] sm:$0xff]
      %v439 = vld [vmem:[#allocation2 + $0x2a5] sm:$0xff]
      %v440 = vld [vmem:[#allocation2 + $0x2ad] sm:$0xff]
      %v441 = vperm.slane %v386, 0
      %v442 = vmul.f32 %v397, %v441
      %v443 = vmul.f32 %v398, %v441
      %v444 = vmul.f32 %v399, %v441
      %v445 = vmul.f32 %v400, %v441
      %v446 = vmul.f32 %v401, %v441
      %v447 = vmul.f32 %v402, %v441
      %v448 = vmul.f32 %v403, %v441
      %v449 = vmul.f32 %v404, %v441
      %v450 = vmul.f32 %v405, %v441
      %v451 = vmul.f32 %v406, %v441
      %v452 = vmul.f32 %v407, %v441
      %v453 = vmul.f32 %v408, %v441
      %v454 = vmul.f32 %v409, %v441
      %v455 = vmul.f32 %v410, %v441
      %v456 = vmul.f32 %v411, %v441
      %v457 = vmul.f32 %v412, %v441
      %v458 = vmul.f32 %v413, %v441
      %v459 = vmul.f32 %v414, %v441
      %v460 = vmul.f32 %v415, %v441
      %v461 = vmul.f32 %v416, %v441
      %v462 = vmul.f32 %v417, %v441
      %v463 = vmul.f32 %v418, %v441
      %v464 = vmul.f32 %v419, %v441
      %v465 = vmul.f32 %v420, %v441
      %v466 = vmul.f32 %v421, %v441
      %v467 = vmul.f32 %v422, %v441
      %v468 = vmul.f32 %v423, %v441
      %v469 = vmul.f32 %v424, %v441
      %v470 = vmul.f32 %v425, %v441
      %v471 = vmul.f32 %v426, %v441
      %v472 = vmul.f32 %v427, %v441
      %v473 = vmul.f32 %v428, %v441
      %v474 = vadd.f32 %v395, %v442
      %v475 = vadd.f32 %v395, %v443
      %v476 = vadd.f32 %v395, %v444
      %v477 = vadd.f32 %v395, %v445
      %v478 = vadd.f32 %v395, %v446
      %v479 = vadd.f32 %v395, %v447
      %v480 = vadd.f32 %v395, %v448
      %v481 = vadd.f32 %v395, %v449
      %v482 = vadd.f32 %v395, %v450
      %v483 = vadd.f32 %v395, %v451
      %v484 = vadd.f32 %v395, %v452
      %v485 = vadd.f32 %v395, %v453
      %v486 = vadd.f32 %v395, %v454
      %v487 = vadd.f32 %v395, %v455
      %v488 = vadd.f32 %v395, %v456
      %v489 = vadd.f32 %v395, %v457
      %v490 = vadd.f32 %v395, %v458
      %v491 = vadd.f32 %v395, %v459
      %v492 = vadd.f32 %v395, %v460
      %v493 = vadd.f32 %v395, %v461
      %v494 = vadd.f32 %v395, %v462
      %v495 = vadd.f32 %v395, %v463
      %v496 = vadd.f32 %v395, %v464
      %v497 = vadd.f32 %v395, %v465
      %v498 = vadd.f32 %v395, %v466
      %v499 = vadd.f32 %v395, %v467
      %v500 = vadd.f32 %v395, %v468
      %v501 = vadd.f32 %v395, %v469
      %v502 = vadd.f32 %v395, %v470
      %v503 = vadd.f32 %v395, %v471
      %v504 = vadd.f32 %v395, %v472
      %v505 = vadd.f32 %v395, %v473
      %v506 = vperm.slane %v387, 0
      %v507 = vmul.f32 %v399, %v506
      %v508 = vmul.f32 %v400, %v506
      %v509 = vmul.f32 %v401, %v506
      %v510 = vmul.f32 %v402, %v506
      %v511 = vmul.f32 %v403, %v506
      %v512 = vmul.f32 %v404, %v506
      %v513 = vmul.f32 %v405, %v506
      %v514 = vmul.f32 %v406, %v506
      %v515 = vmul.f32 %v407, %v506
      %v516 = vmul.f32 %v408, %v506
      %v517 = vmul.f32 %v409, %v506
      %v518 = vmul.f32 %v410, %v506
      %v519 = vmul.f32 %v411, %v506
      %v520 = vmul.f32 %v412, %v506
      %v521 = vmul.f32 %v413, %v506
      %v522 = vmul.f32 %v414, %v506
      %v523 = vmul.f32 %v415, %v506
      %v524 = vmul.f32 %v416, %v506
      %v525 = vmul.f32 %v417, %v506
      %v526 = vmul.f32 %v418, %v506
      %v527 = vmul.f32 %v419, %v506
      %v528 = vmul.f32 %v420, %v506
      %v529 = vmul.f32 %v421, %v506
      %v530 = vmul.f32 %v422, %v506
      %v531 = vmul.f32 %v423, %v506
      %v532 = vmul.f32 %v424, %v506
      %v533 = vmul.f32 %v425, %v506
      %v534 = vmul.f32 %v426, %v506
      %v535 = vmul.f32 %v427, %v506
      %v536 = vmul.f32 %v428, %v506
      %v537 = vmul.f32 %v429, %v506
      %v538 = vmul.f32 %v430, %v506
      %v539 = vadd.f32 %v474, %v507
      %v540 = vadd.f32 %v475, %v508
      %v541 = vadd.f32 %v476, %v509
      %v542 = vadd.f32 %v477, %v510
      %v543 = vadd.f32 %v478, %v511
      %v544 = vadd.f32 %v479, %v512
      %v545 = vadd.f32 %v480, %v513
      %v546 = vadd.f32 %v481, %v514
      %v547 = vadd.f32 %v482, %v515
      %v548 = vadd.f32 %v483, %v516
      %v549 = vadd.f32 %v484, %v517
      %v550 = vadd.f32 %v485, %v518
      %v551 = vadd.f32 %v486, %v519
      %v552 = vadd.f32 %v487, %v520
      %v553 = vadd.f32 %v488, %v521
      %v554 = vadd.f32 %v489, %v522
      %v555 = vadd.f32 %v490, %v523
      %v556 = vadd.f32 %v491, %v524
      %v557 = vadd.f32 %v492, %v525
      %v558 = vadd.f32 %v493, %v526
      %v559 = vadd.f32 %v494, %v527
      %v560 = vadd.f32 %v495, %v528
      %v561 = vadd.f32 %v496, %v529
      %v562 = vadd.f32 %v497, %v530
      %v563 = vadd.f32 %v498, %v531
      %v564 = vadd.f32 %v499, %v532
      %v565 = vadd.f32 %v500, %v533
      %v566 = vadd.f32 %v501, %v534
      %v567 = vadd.f32 %v502, %v535
      %v568 = vadd.f32 %v503, %v536
      %v569 = vadd.f32 %v504, %v537
      %v570 = vadd.f32 %v505, %v538
      %v571 = vperm.slane %v388, 0
      %v572 = vmul.f32 %v401, %v571
      %v573 = vmul.f32 %v402, %v571
      %v574 = vmul.f32 %v403, %v571
      %v575 = vmul.f32 %v404, %v571
      %v576 = vmul.f32 %v405, %v571
      %v577 = vmul.f32 %v406, %v571
      %v578 = vmul.f32 %v407, %v571
      %v579 = vmul.f32 %v408, %v571
      %v580 = vmul.f32 %v409, %v571
      %v581 = vmul.f32 %v410, %v571
      %v582 = vmul.f32 %v411, %v571
      %v583 = vmul.f32 %v412, %v571
      %v584 = vmul.f32 %v413, %v571
      %v585 = vmul.f32 %v414, %v571
      %v586 = vmul.f32 %v415, %v571
      %v587 = vmul.f32 %v416, %v571
      %v588 = vmul.f32 %v417, %v571
      %v589 = vmul.f32 %v418, %v571
      %v590 = vmul.f32 %v419, %v571
      %v591 = vmul.f32 %v420, %v571
      %v592 = vmul.f32 %v421, %v571
      %v593 = vmul.f32 %v422, %v571
      %v594 = vmul.f32 %v423, %v571
      %v595 = vmul.f32 %v424, %v571
      %v596 = vmul.f32 %v425, %v571
      %v597 = vmul.f32 %v426, %v571
      %v598 = vmul.f32 %v427, %v571
      %v599 = vmul.f32 %v428, %v571
      %v600 = vmul.f32 %v429, %v571
      %v601 = vmul.f32 %v430, %v571
      %v602 = vmul.f32 %v431, %v571
      %v603 = vmul.f32 %v432, %v571
      %v604 = vadd.f32 %v539, %v572
      %v605 = vadd.f32 %v540, %v573
      %v606 = vadd.f32 %v541, %v574
      %v607 = vadd.f32 %v542, %v575
      %v608 = vadd.f32 %v543, %v576
      %v609 = vadd.f32 %v544, %v577
      %v610 = vadd.f32 %v545, %v578
      %v611 = vadd.f32 %v546, %v579
      %v612 = vadd.f32 %v547, %v580
      %v613 = vadd.f32 %v548, %v581
      %v614 = vadd.f32 %v549, %v582
      %v615 = vadd.f32 %v550, %v583
      %v616 = vadd.f32 %v551, %v584
      %v617 = vadd.f32 %v552, %v585
      %v618 = vadd.f32 %v553, %v586
      %v619 = vadd.f32 %v554, %v587
      %v620 = vadd.f32 %v555, %v588
      %v621 = vadd.f32 %v556, %v589
      %v622 = vadd.f32 %v557, %v590
      %v623 = vadd.f32 %v558, %v591
      %v624 = vadd.f32 %v559, %v592
      %v625 = vadd.f32 %v560, %v593
      %v626 = vadd.f32 %v561, %v594
      %v627 = vadd.f32 %v562, %v595
      %v628 = vadd.f32 %v563, %v596
      %v629 = vadd.f32 %v564, %v597
      %v630 = vadd.f32 %v565, %v598
      %v631 = vadd.f32 %v566, %v599
      %v632 = vadd.f32 %v567, %v600
      %v633 = vadd.f32 %v568, %v601
      %v634 = vadd.f32 %v569, %v602
      %v635 = vadd.f32 %v570, %v603
      %v636 = vperm.slane %v389, 0
      %v637 = vmul.f32 %v403, %v636
      %v638 = vmul.f32 %v404, %v636
      %v639 = vmul.f32 %v405, %v636
      %v640 = vmul.f32 %v406, %v636
      %v641 = vmul.f32 %v407, %v636
      %v642 = vmul.f32 %v408, %v636
      %v643 = vmul.f32 %v409, %v636
      %v644 = vmul.f32 %v410, %v636
      %v645 = vmul.f32 %v411, %v636
      %v646 = vmul.f32 %v412, %v636
      %v647 = vmul.f32 %v413, %v636
      %v648 = vmul.f32 %v414, %v636
      %v649 = vmul.f32 %v415, %v636
      %v650 = vmul.f32 %v416, %v636
      %v651 = vmul.f32 %v417, %v636
      %v652 = vmul.f32 %v418, %v636
      %v653 = vmul.f32 %v419, %v636
      %v654 = vmul.f32 %v420, %v636
      %v655 = vmul.f32 %v421, %v636
      %v656 = vmul.f32 %v422, %v636
      %v657 = vmul.f32 %v423, %v636
      %v658 = vmul.f32 %v424, %v636
      %v659 = vmul.f32 %v425, %v636
      %v660 = vmul.f32 %v426, %v636
      %v661 = vmul.f32 %v427, %v636
      %v662 = vmul.f32 %v428, %v636
      %v663 = vmul.f32 %v429, %v636
      %v664 = vmul.f32 %v430, %v636
      %v665 = vmul.f32 %v431, %v636
      %v666 = vmul.f32 %v432, %v636
      %v667 = vmul.f32 %v433, %v636
      %v668 = vmul.f32 %v434, %v636
      %v669 = vadd.f32 %v604, %v637
      %v670 = vadd.f32 %v605, %v638
      %v671 = vadd.f32 %v606, %v639
      %v672 = vadd.f32 %v607, %v640
      %v673 = vadd.f32 %v608, %v641
      %v674 = vadd.f32 %v609, %v642
      %v675 = vadd.f32 %v610, %v643
      %v676 = vadd.f32 %v611, %v644
      %v677 = vadd.f32 %v612, %v645
      %v678 = vadd.f32 %v613, %v646
      %v679 = vadd.f32 %v614, %v647
      %v680 = vadd.f32 %v615, %v648
      %v681 = vadd.f32 %v616, %v649
      %v682 = vadd.f32 %v617, %v650
      %v683 = vadd.f32 %v618, %v651
      %v684 = vadd.f32 %v619, %v652
      %v685 = vadd.f32 %v620, %v653
      %v686 = vadd.f32 %v621, %v654
      %v687 = vadd.f32 %v622, %v655
      %v688 = vadd.f32 %v623, %v656
      %v689 = vadd.f32 %v624, %v657
      %v690 = vadd.f32 %v625, %v658
      %v691 = vadd.f32 %v626, %v659
      %v692 = vadd.f32 %v627, %v660
      %v693 = vadd.f32 %v628, %v661
      %v694 = vadd.f32 %v629, %v662
      %v695 = vadd.f32 %v630, %v663
      %v696 = vadd.f32 %v631, %v664
      %v697 = vadd.f32 %v632, %v665
      %v698 = vadd.f32 %v633, %v666
      %v699 = vadd.f32 %v634, %v667
      %v700 = vadd.f32 %v635, %v668
      %v701 = vperm.slane %v390, 0
      %v702 = vmul.f32 %v405, %v701
      %v703 = vmul.f32 %v406, %v701
      %v704 = vmul.f32 %v407, %v701
      %v705 = vmul.f32 %v408, %v701
      %v706 = vmul.f32 %v409, %v701
      %v707 = vmul.f32 %v410, %v701
      %v708 = vmul.f32 %v411, %v701
      %v709 = vmul.f32 %v412, %v701
      %v710 = vmul.f32 %v413, %v701
      %v711 = vmul.f32 %v414, %v701
      %v712 = vmul.f32 %v415, %v701
      %v713 = vmul.f32 %v416, %v701
      %v714 = vmul.f32 %v417, %v701
      %v715 = vmul.f32 %v418, %v701
      %v716 = vmul.f32 %v419, %v701
      %v717 = vmul.f32 %v420, %v701
      %v718 = vmul.f32 %v421, %v701
      %v719 = vmul.f32 %v422, %v701
      %v720 = vmul.f32 %v423, %v701
      %v721 = vmul.f32 %v424, %v701
      %v722 = vmul.f32 %v425, %v701
      %v723 = vmul.f32 %v426, %v701
      %v724 = vmul.f32 %v427, %v701
      %v725 = vmul.f32 %v428, %v701
      %v726 = vmul.f32 %v429, %v701
      %v727 = vmul.f32 %v430, %v701
      %v728 = vmul.f32 %v431, %v701
      %v729 = vmul.f32 %v432, %v701
      %v730 = vmul.f32 %v433, %v701
      %v731 = vmul.f32 %v434, %v701
      %v732 = vmul.f32 %v435, %v701
      %v733 = vmul.f32 %v436, %v701
      %v734 = vadd.f32 %v669, %v702
      %v735 = vadd.f32 %v670, %v703
      %v736 = vadd.f32 %v671, %v704
      %v737 = vadd.f32 %v672, %v705
      %v738 = vadd.f32 %v673, %v706
      %v739 = vadd.f32 %v674, %v707
      %v740 = vadd.f32 %v675, %v708
      %v741 = vadd.f32 %v676, %v709
      %v742 = vadd.f32 %v677, %v710
      %v743 = vadd.f32 %v678, %v711
      %v744 = vadd.f32 %v679, %v712
      %v745 = vadd.f32 %v680, %v713
      %v746 = vadd.f32 %v681, %v714
      %v747 = vadd.f32 %v682, %v715
      %v748 = vadd.f32 %v683, %v716
      %v749 = vadd.f32 %v684, %v717
      %v750 = vadd.f32 %v685, %v718
      %v751 = vadd.f32 %v686, %v719
      %v752 = vadd.f32 %v687, %v720
      %v753 = vadd.f32 %v688, %v721
      %v754 = vadd.f32 %v689, %v722
      %v755 = vadd.f32 %v690, %v723
      %v756 = vadd.f32 %v691, %v724
      %v757 = vadd.f32 %v692, %v725
      %v758 = vadd.f32 %v693, %v726
      %v759 = vadd.f32 %v694, %v727
      %v760 = vadd.f32 %v695, %v728
      %v761 = vadd.f32 %v696, %v729
      %v762 = vadd.f32 %v697, %v730
      %v763 = vadd.f32 %v698, %v731
      %v764 = vadd.f32 %v699, %v732
      %v765 = vadd.f32 %v700, %v733
      %v766 = vperm.slane %v391, 0
      %v767 = vmul.f32 %v407, %v766
      %v768 = vmul.f32 %v408, %v766
      %v769 = vmul.f32 %v409, %v766
      %v770 = vmul.f32 %v410, %v766
      %v771 = vmul.f32 %v411, %v766
      %v772 = vmul.f32 %v412, %v766
      %v773 = vmul.f32 %v413, %v766
      %v774 = vmul.f32 %v414, %v766
      %v775 = vmul.f32 %v415, %v766
      %v776 = vmul.f32 %v416, %v766
      %v777 = vmul.f32 %v417, %v766
      %v778 = vmul.f32 %v418, %v766
      %v779 = vmul.f32 %v419, %v766
      %v780 = vmul.f32 %v420, %v766
      %v781 = vmul.f32 %v421, %v766
      %v782 = vmul.f32 %v422, %v766
      %v783 = vmul.f32 %v423, %v766
      %v784 = vmul.f32 %v424, %v766
      %v785 = vmul.f32 %v425, %v766
      %v786 = vmul.f32 %v426, %v766
      %v787 = vmul.f32 %v427, %v766
      %v788 = vmul.f32 %v428, %v766
      %v789 = vmul.f32 %v429, %v766
      %v790 = vmul.f32 %v430, %v766
      %v791 = vmul.f32 %v431, %v766
      %v792 = vmul.f32 %v432, %v766
      %v793 = vmul.f32 %v433, %v766
      %v794 = vmul.f32 %v434, %v766
      %v795 = vmul.f32 %v435, %v766
      %v796 = vmul.f32 %v436, %v766
      %v797 = vmul.f32 %v437, %v766
      %v798 = vmul.f32 %v438, %v766
      %v799 = vadd.f32 %v734, %v767
      %v800 = vadd.f32 %v735, %v768
      %v801 = vadd.f32 %v736, %v769
      %v802 = vadd.f32 %v737, %v770
      %v803 = vadd.f32 %v738, %v771
      %v804 = vadd.f32 %v739, %v772
      %v805 = vadd.f32 %v740, %v773
      %v806 = vadd.f32 %v741, %v774
      %v807 = vadd.f32 %v742, %v775
      %v808 = vadd.f32 %v743, %v776
      %v809 = vadd.f32 %v744, %v777
      %v810 = vadd.f32 %v745, %v778
      %v811 = vadd.f32 %v746, %v779
      %v812 = vadd.f32 %v747, %v780
      %v813 = vadd.f32 %v748, %v781
      %v814 = vadd.f32 %v749, %v782
      %v815 = vadd.f32 %v750, %v783
      %v816 = vadd.f32 %v751, %v784
      %v817 = vadd.f32 %v752, %v785
      %v818 = vadd.f32 %v753, %v786
      %v819 = vadd.f32 %v754, %v787
      %v820 = vadd.f32 %v755, %v788
      %v821 = vadd.f32 %v756, %v789
      %v822 = vadd.f32 %v757, %v790
      %v823 = vadd.f32 %v758, %v791
      %v824 = vadd.f32 %v759, %v792
      %v825 = vadd.f32 %v760, %v793
      %v826 = vadd.f32 %v761, %v794
      %v827 = vadd.f32 %v762, %v795
      %v828 = vadd.f32 %v763, %v796
      %v829 = vadd.f32 %v764, %v797
      %v830 = vadd.f32 %v765, %v798
      %v831 = vperm.slane %v392, 0
      %v832 = vmul.f32 %v409, %v831
      %v833 = vmul.f32 %v410, %v831
      %v834 = vmul.f32 %v411, %v831
      %v835 = vmul.f32 %v412, %v831
      %v836 = vmul.f32 %v413, %v831
      %v837 = vmul.f32 %v414, %v831
      %v838 = vmul.f32 %v415, %v831
      %v839 = vmul.f32 %v416, %v831
      %v840 = vmul.f32 %v417, %v831
      %v841 = vmul.f32 %v418, %v831
      %v842 = vmul.f32 %v419, %v831
      %v843 = vmul.f32 %v420, %v831
      %v844 = vmul.f32 %v421, %v831
      %v845 = vmul.f32 %v422, %v831
      %v846 = vmul.f32 %v423, %v831
      %v847 = vmul.f32 %v424, %v831
      %v848 = vmul.f32 %v425, %v831
      %v849 = vmul.f32 %v426, %v831
      %v850 = vmul.f32 %v427, %v831
      %v851 = vmul.f32 %v428, %v831
      %v852 = vmul.f32 %v429, %v831
      %v853 = vmul.f32 %v430, %v831
      %v854 = vmul.f32 %v431, %v831
      %v855 = vmul.f32 %v432, %v831
      %v856 = vmul.f32 %v433, %v831
      %v857 = vmul.f32 %v434, %v831
      %v858 = vmul.f32 %v435, %v831
      %v859 = vmul.f32 %v436, %v831
      %v860 = vmul.f32 %v437, %v831
      %v861 = vmul.f32 %v438, %v831
      %v862 = vmul.f32 %v439, %v831
      %v863 = vmul.f32 %v440, %v831
      %v864 = vadd.f32 %v799, %v832
      %v865 = vadd.f32 %v800, %v833
      %v866 = vadd.f32 %v801, %v834
      %v867 = vadd.f32 %v802, %v835
      %v868 = vadd.f32 %v803, %v836
      %v869 = vadd.f32 %v804, %v837
      %v870 = vadd.f32 %v805, %v838
      %v871 = vadd.f32 %v806, %v839
      %v872 = vadd.f32 %v807, %v840
      %v873 = vadd.f32 %v808, %v841
      %v874 = vadd.f32 %v809, %v842
      %v875 = vadd.f32 %v810, %v843
      %v876 = vadd.f32 %v811, %v844
      %v877 = vadd.f32 %v812, %v845
      %v878 = vadd.f32 %v813, %v846
      %v879 = vadd.f32 %v814, %v847
      %v880 = vadd.f32 %v815, %v848
      %v881 = vadd.f32 %v816, %v849
      %v882 = vadd.f32 %v817, %v850
      %v883 = vadd.f32 %v818, %v851
      %v884 = vadd.f32 %v819, %v852
      %v885 = vadd.f32 %v820, %v853
      %v886 = vadd.f32 %v821, %v854
      %v887 = vadd.f32 %v822, %v855
      %v888 = vadd.f32 %v823, %v856
      %v889 = vadd.f32 %v824, %v857
      %v890 = vadd.f32 %v825, %v858
      %v891 = vadd.f32 %v826, %v859
      %v892 = vadd.f32 %v827, %v860
      %v893 = vadd.f32 %v828, %v861
      %v894 = vadd.f32 %v829, %v862
      %v895 = vadd.f32 %v830, %v863
      %v896 = vld [vmem:[#allocation2 + $0x6] sm:$0xff]
      %v897 = vld [vmem:[#allocation2 + $0xe] sm:$0xff]
      %v898 = vld [vmem:[#allocation2 + $0x26] sm:$0xff]
      %v899 = vld [vmem:[#allocation2 + $0x2e] sm:$0xff]
      %v900 = vld [vmem:[#allocation2 + $0x46] sm:$0xff]
      %v901 = vld [vmem:[#allocation2 + $0x4e] sm:$0xff]
      %v902 = vld [vmem:[#allocation2 + $0x66] sm:$0xff]
      %v903 = vld [vmem:[#allocation2 + $0x6e] sm:$0xff]
      %v904 = vld [vmem:[#allocation2 + $0x86] sm:$0xff]
      %v905 = vld [vmem:[#allocation2 + $0x8e] sm:$0xff]
      %v906 = vld [vmem:[#allocation2 + $0xa6] sm:$0xff]
      %v907 = vld [vmem:[#allocation2 + $0xae] sm:$0xff]
      %v908 = vld [vmem:[#allocation2 + $0xc6] sm:$0xff]
      %v909 = vld [vmem:[#allocation2 + $0xce] sm:$0xff]
      %v910 = vld [vmem:[#allocation2 + $0xe6] sm:$0xff]
      %v911 = vld [vmem:[#allocation2 + $0xee] sm:$0xff]
      %v912 = vld [vmem:[#allocation2 + $0x106] sm:$0xff]
      %v913 = vld [vmem:[#allocation2 + $0x10e] sm:$0xff]
      %v914 = vld [vmem:[#allocation2 + $0x126] sm:$0xff]
      %v915 = vld [vmem:[#allocation2 + $0x12e] sm:$0xff]
      %v916 = vld [vmem:[#allocation2 + $0x146] sm:$0xff]
      %v917 = vld [vmem:[#allocation2 + $0x14e] sm:$0xff]
      %v918 = vld [vmem:[#allocation2 + $0x166] sm:$0xff]
      %v919 = vld [vmem:[#allocation2 + $0x16e] sm:$0xff]
      %v920 = vld [vmem:[#allocation2 + $0x186] sm:$0xff]
      %v921 = vld [vmem:[#allocation2 + $0x18e] sm:$0xff]
      %v922 = vld [vmem:[#allocation2 + $0x1a6] sm:$0xff]
      %v923 = vld [vmem:[#allocation2 + $0x1ae] sm:$0xff]
      %v924 = vld [vmem:[#allocation2 + $0x1c6] sm:$0xff]
      %v925 = vld [vmem:[#allocation2 + $0x1ce] sm:$0xff]
      %v926 = vld [vmem:[#allocation2 + $0x1e6] sm:$0xff]
      %v927 = vld [vmem:[#allocation2 + $0x1ee] sm:$0xff]
      %v928 = vld [vmem:[#allocation2 + $0x206] sm:$0xff]
      %v929 = vld [vmem:[#allocation2 + $0x20e] sm:$0xff]
      %v930 = vld [vmem:[#allocation2 + $0x226] sm:$0xff]
      %v931 = vld [vmem:[#allocation2 + $0x22e] sm:$0xff]
      %v932 = vld [vmem:[#allocation2 + $0x246] sm:$0xff]
      %v933 = vld [vmem:[#allocation2 + $0x24e] sm:$0xff]
      %v934 = vld [vmem:[#allocation2 + $0x266] sm:$0xff]
      %v935 = vld [vmem:[#allocation2 + $0x26e] sm:$0xff]
      %v936 = vld [vmem:[#allocation2 + $0x286] sm:$0xff]
      %v937 = vld [vmem:[#allocation2 + $0x28e] sm:$0xff]
      %v938 = vld [vmem:[#allocation2 + $0x2a6] sm:$0xff]
      %v939 = vld [vmem:[#allocation2 + $0x2ae] sm:$0xff]
      %v940 = vperm.slane %v386, 1
      %v941 = vmul.f32 %v896, %v940
      %v942 = vmul.f32 %v897, %v940
      %v943 = vmul.f32 %v898, %v940
      %v944 = vmul.f32 %v899, %v940
      %v945 = vmul.f32 %v900, %v940
      %v946 = vmul.f32 %v901, %v940
      %v947 = vmul.f32 %v902, %v940
      %v948 = vmul.f32 %v903, %v940
      %v949 = vmul.f32 %v904, %v940
      %v950 = vmul.f32 %v905, %v940
      %v951 = vmul.f32 %v906, %v940
      %v952 = vmul.f32 %v907, %v940
      %v953 = vmul.f32 %v908, %v940
      %v954 = vmul.f32 %v909, %v940
      %v955 = vmul.f32 %v910, %v940
      %v956 = vmul.f32 %v911, %v940
      %v957 = vmul.f32 %v912, %v940
      %v958 = vmul.f32 %v913, %v940
      %v959 = vmul.f32 %v914, %v940
      %v960 = vmul.f32 %v915, %v940
      %v961 = vmul.f32 %v916, %v940
      %v962 = vmul.f32 %v917, %v940
      %v963 = vmul.f32 %v918, %v940
      %v964 = vmul.f32 %v919, %v940
      %v965 = vmul.f32 %v920, %v940
      %v966 = vmul.f32 %v921, %v940
      %v967 = vmul.f32 %v922, %v940
      %v968 = vmul.f32 %v923, %v940
      %v969 = vmul.f32 %v924, %v940
      %v970 = vmul.f32 %v925, %v940
      %v971 = vmul.f32 %v926, %v940
      %v972 = vmul.f32 %v927, %v940
      %v973 = vadd.f32 %v864, %v941
      %v974 = vadd.f32 %v865, %v942
      %v975 = vadd.f32 %v866, %v943
      %v976 = vadd.f32 %v867, %v944
      %v977 = vadd.f32 %v868, %v945
      %v978 = vadd.f32 %v869, %v946
      %v979 = vadd.f32 %v870, %v947
      %v980 = vadd.f32 %v871, %v948
      %v981 = vadd.f32 %v872, %v949
      %v982 = vadd.f32 %v873, %v950
      %v983 = vadd.f32 %v874, %v951
      %v984 = vadd.f32 %v875, %v952
      %v985 = vadd.f32 %v876, %v953
      %v986 = vadd.f32 %v877, %v954
      %v987 = vadd.f32 %v878, %v955
      %v988 = vadd.f32 %v879, %v956
      %v989 = vadd.f32 %v880, %v957
      %v990 = vadd.f32 %v881, %v958
      %v991 = vadd.f32 %v882, %v959
      %v992 = vadd.f32 %v883, %v960
      %v993 = vadd.f32 %v884, %v961
      %v994 = vadd.f32 %v885, %v962
      %v995 = vadd.f32 %v886, %v963
      %v996 = vadd.f32 %v887, %v964
      %v997 = vadd.f32 %v888, %v965
      %v998 = vadd.f32 %v889, %v966
      %v999 = vadd.f32 %v890, %v967
      %v1000 = vadd.f32 %v891, %v968
      %v1001 = vadd.f32 %v892, %v969
      %v1002 = vadd.f32 %v893, %v970
      %v1003 = vadd.f32 %v894, %v971
      %v1004 = vadd.f32 %v895, %v972
      %v1005 = vperm.slane %v387, 1
      %v1006 = vmul.f32 %v898, %v1005
      %v1007 = vmul.f32 %v899, %v1005
      %v1008 = vmul.f32 %v900, %v1005
      %v1009 = vmul.f32 %v901, %v1005
      %v1010 = vmul.f32 %v902, %v1005
      %v1011 = vmul.f32 %v903, %v1005
      %v1012 = vmul.f32 %v904, %v1005
      %v1013 = vmul.f32 %v905, %v1005
      %v1014 = vmul.f32 %v906, %v1005
      %v1015 = vmul.f32 %v907, %v1005
      %v1016 = vmul.f32 %v908, %v1005
      %v1017 = vmul.f32 %v909, %v1005
      %v1018 = vmul.f32 %v910, %v1005
      %v1019 = vmul.f32 %v911, %v1005
      %v1020 = vmul.f32 %v912, %v1005
      %v1021 = vmul.f32 %v913, %v1005
      %v1022 = vmul.f32 %v914, %v1005
      %v1023 = vmul.f32 %v915, %v1005
      %v1024 = vmul.f32 %v916, %v1005
      %v1025 = vmul.f32 %v917, %v1005
      %v1026 = vmul.f32 %v918, %v1005
      %v1027 = vmul.f32 %v919, %v1005
      %v1028 = vmul.f32 %v920, %v1005
      %v1029 = vmul.f32 %v921, %v1005
      %v1030 = vmul.f32 %v922, %v1005
      %v1031 = vmul.f32 %v923, %v1005
      %v1032 = vmul.f32 %v924, %v1005
      %v1033 = vmul.f32 %v925, %v1005
      %v1034 = vmul.f32 %v926, %v1005
      %v1035 = vmul.f32 %v927, %v1005
      %v1036 = vmul.f32 %v928, %v1005
      %v1037 = vmul.f32 %v929, %v1005
      %v1038 = vadd.f32 %v973, %v1006
      %v1039 = vadd.f32 %v974, %v1007
      %v1040 = vadd.f32 %v975, %v1008
      %v1041 = vadd.f32 %v976, %v1009
      %v1042 = vadd.f32 %v977, %v1010
      %v1043 = vadd.f32 %v978, %v1011
      %v1044 = vadd.f32 %v979, %v1012
      %v1045 = vadd.f32 %v980, %v1013
      %v1046 = vadd.f32 %v981, %v1014
      %v1047 = vadd.f32 %v982, %v1015
      %v1048 = vadd.f32 %v983, %v1016
      %v1049 = vadd.f32 %v984, %v1017
      %v1050 = vadd.f32 %v985, %v1018
      %v1051 = vadd.f32 %v986, %v1019
      %v1052 = vadd.f32 %v987, %v1020
      %v1053 = vadd.f32 %v988, %v1021
      %v1054 = vadd.f32 %v989, %v1022
      %v1055 = vadd.f32 %v990, %v1023
      %v1056 = vadd.f32 %v991, %v1024
      %v1057 = vadd.f32 %v992, %v1025
      %v1058 = vadd.f32 %v993, %v1026
      %v1059 = vadd.f32 %v994, %v1027
      %v1060 = vadd.f32 %v995, %v1028
      %v1061 = vadd.f32 %v996, %v1029
      %v1062 = vadd.f32 %v997, %v1030
      %v1063 = vadd.f32 %v998, %v1031
      %v1064 = vadd.f32 %v999, %v1032
      %v1065 = vadd.f32 %v1000, %v1033
      %v1066 = vadd.f32 %v1001, %v1034
      %v1067 = vadd.f32 %v1002, %v1035
      %v1068 = vadd.f32 %v1003, %v1036
      %v1069 = vadd.f32 %v1004, %v1037
      %v1070 = vperm.slane %v388, 1
      %v1071 = vmul.f32 %v900, %v1070
      %v1072 = vmul.f32 %v901, %v1070
      %v1073 = vmul.f32 %v902, %v1070
      %v1074 = vmul.f32 %v903, %v1070
      %v1075 = vmul.f32 %v904, %v1070
      %v1076 = vmul.f32 %v905, %v1070
      %v1077 = vmul.f32 %v906, %v1070
      %v1078 = vmul.f32 %v907, %v1070
      %v1079 = vmul.f32 %v908, %v1070
      %v1080 = vmul.f32 %v909, %v1070
      %v1081 = vmul.f32 %v910, %v1070
      %v1082 = vmul.f32 %v911, %v1070
      %v1083 = vmul.f32 %v912, %v1070
      %v1084 = vmul.f32 %v913, %v1070
      %v1085 = vmul.f32 %v914, %v1070
      %v1086 = vmul.f32 %v915, %v1070
      %v1087 = vmul.f32 %v916, %v1070
      %v1088 = vmul.f32 %v917, %v1070
      %v1089 = vmul.f32 %v918, %v1070
      %v1090 = vmul.f32 %v919, %v1070
      %v1091 = vmul.f32 %v920, %v1070
      %v1092 = vmul.f32 %v921, %v1070
      %v1093 = vmul.f32 %v922, %v1070
      %v1094 = vmul.f32 %v923, %v1070
      %v1095 = vmul.f32 %v924, %v1070
      %v1096 = vmul.f32 %v925, %v1070
      %v1097 = vmul.f32 %v926, %v1070
      %v1098 = vmul.f32 %v927, %v1070
      %v1099 = vmul.f32 %v928, %v1070
      %v1100 = vmul.f32 %v929, %v1070
      %v1101 = vmul.f32 %v930, %v1070
      %v1102 = vmul.f32 %v931, %v1070
      %v1103 = vadd.f32 %v1038, %v1071
      %v1104 = vadd.f32 %v1039, %v1072
      %v1105 = vadd.f32 %v1040, %v1073
      %v1106 = vadd.f32 %v1041, %v1074
      %v1107 = vadd.f32 %v1042, %v1075
      %v1108 = vadd.f32 %v1043, %v1076
      %v1109 = vadd.f32 %v1044, %v1077
      %v1110 = vadd.f32 %v1045, %v1078
      %v1111 = vadd.f32 %v1046, %v1079
      %v1112 = vadd.f32 %v1047, %v1080
      %v1113 = vadd.f32 %v1048, %v1081
      %v1114 = vadd.f32 %v1049, %v1082
      %v1115 = vadd.f32 %v1050, %v1083
      %v1116 = vadd.f32 %v1051, %v1084
      %v1117 = vadd.f32 %v1052, %v1085
      %v1118 = vadd.f32 %v1053, %v1086
      %v1119 = vadd.f32 %v1054, %v1087
      %v1120 = vadd.f32 %v1055, %v1088
      %v1121 = vadd.f32 %v1056, %v1089
      %v1122 = vadd.f32 %v1057, %v1090
      %v1123 = vadd.f32 %v1058, %v1091
      %v1124 = vadd.f32 %v1059, %v1092
      %v1125 = vadd.f32 %v1060, %v1093
      %v1126 = vadd.f32 %v1061, %v1094
      %v1127 = vadd.f32 %v1062, %v1095
      %v1128 = vadd.f32 %v1063, %v1096
      %v1129 = vadd.f32 %v1064, %v1097
      %v1130 = vadd.f32 %v1065, %v1098
      %v1131 = vadd.f32 %v1066, %v1099
      %v1132 = vadd.f32 %v1067, %v1100
      %v1133 = vadd.f32 %v1068, %v1101
      %v1134 = vadd.f32 %v1069, %v1102
      %v1135 = vperm.slane %v389, 1
      %v1136 = vmul.f32 %v902, %v1135
      %v1137 = vmul.f32 %v903, %v1135
      %v1138 = vmul.f32 %v904, %v1135
      %v1139 = vmul.f32 %v905, %v1135
      %v1140 = vmul.f32 %v906, %v1135
      %v1141 = vmul.f32 %v907, %v1135
      %v1142 = vmul.f32 %v908, %v1135
      %v1143 = vmul.f32 %v909, %v1135
      %v1144 = vmul.f32 %v910, %v1135
      %v1145 = vmul.f32 %v911, %v1135
      %v1146 = vmul.f32 %v912, %v1135
      %v1147 = vmul.f32 %v913, %v1135
      %v1148 = vmul.f32 %v914, %v1135
      %v1149 = vmul.f32 %v915, %v1135
      %v1150 = vmul.f32 %v916, %v1135
      %v1151 = vmul.f32 %v917, %v1135
      %v1152 = vmul.f32 %v918, %v1135
      %v1153 = vmul.f32 %v919, %v1135
      %v1154 = vmul.f32 %v920, %v1135
      %v1155 = vmul.f32 %v921, %v1135
      %v1156 = vmul.f32 %v922, %v1135
      %v1157 = vmul.f32 %v923, %v1135
      %v1158 = vmul.f32 %v924, %v1135
      %v1159 = vmul.f32 %v925, %v1135
      %v1160 = vmul.f32 %v926, %v1135
      %v1161 = vmul.f32 %v927, %v1135
      %v1162 = vmul.f32 %v928, %v1135
      %v1163 = vmul.f32 %v929, %v1135
      %v1164 = vmul.f32 %v930, %v1135
      %v1165 = vmul.f32 %v931, %v1135
      %v1166 = vmul.f32 %v932, %v1135
      %v1167 = vmul.f32 %v933, %v1135
      %v1168 = vadd.f32 %v1103, %v1136
      %v1169 = vadd.f32 %v1104, %v1137
      %v1170 = vadd.f32 %v1105, %v1138
      %v1171 = vadd.f32 %v1106, %v1139
      %v1172 = vadd.f32 %v1107, %v1140
      %v1173 = vadd.f32 %v1108, %v1141
      %v1174 = vadd.f32 %v1109, %v1142
      %v1175 = vadd.f32 %v1110, %v1143
      %v1176 = vadd.f32 %v1111, %v1144
      %v1177 = vadd.f32 %v1112, %v1145
      %v1178 = vadd.f32 %v1113, %v1146
      %v1179 = vadd.f32 %v1114, %v1147
      %v1180 = vadd.f32 %v1115, %v1148
      %v1181 = vadd.f32 %v1116, %v1149
      %v1182 = vadd.f32 %v1117, %v1150
      %v1183 = vadd.f32 %v1118, %v1151
      %v1184 = vadd.f32 %v1119, %v1152
      %v1185 = vadd.f32 %v1120, %v1153
      %v1186 = vadd.f32 %v1121, %v1154
      %v1187 = vadd.f32 %v1122, %v1155
      %v1188 = vadd.f32 %v1123, %v1156
      %v1189 = vadd.f32 %v1124, %v1157
      %v1190 = vadd.f32 %v1125, %v1158
      %v1191 = vadd.f32 %v1126, %v1159
      %v1192 = vadd.f32 %v1127, %v1160
      %v1193 = vadd.f32 %v1128, %v1161
      %v1194 = vadd.f32 %v1129, %v1162
      %v1195 = vadd.f32 %v1130, %v1163
      %v1196 = vadd.f32 %v1131, %v1164
      %v1197 = vadd.f32 %v1132, %v1165
      %v1198 = vadd.f32 %v1133, %v1166
      %v1199 = vadd.f32 %v1134, %v1167
      %v1200 = vperm.slane %v390, 1
      %v1201 = vmul.f32 %v904, %v1200
      %v1202 = vmul.f32 %v905, %v1200
      %v1203 = vmul.f32 %v906, %v1200
      %v1204 = vmul.f32 %v907, %v1200
      %v1205 = vmul.f32 %v908, %v1200
      %v1206 = vmul.f32 %v909, %v1200
      %v1207 = vmul.f32 %v910, %v1200
      %v1208 = vmul.f32 %v911, %v1200
      %v1209 = vmul.f32 %v912, %v1200
      %v1210 = vmul.f32 %v913, %v1200
      %v1211 = vmul.f32 %v914, %v1200
      %v1212 = vmul.f32 %v915, %v1200
      %v1213 = vmul.f32 %v916, %v1200
      %v1214 = vmul.f32 %v917, %v1200
      %v1215 = vmul.f32 %v918, %v1200
      %v1216 = vmul.f32 %v919, %v1200
      %v1217 = vmul.f32 %v920, %v1200
      %v1218 = vmul.f32 %v921, %v1200
      %v1219 = vmul.f32 %v922, %v1200
      %v1220 = vmul.f32 %v923, %v1200
      %v1221 = vmul.f32 %v924, %v1200
      %v1222 = vmul.f32 %v925, %v1200
      %v1223 = vmul.f32 %v926, %v1200
      %v1224 = vmul.f32 %v927, %v1200
      %v1225 = vmul.f32 %v928, %v1200
      %v1226 = vmul.f32 %v929, %v1200
      %v1227 = vmul.f32 %v930, %v1200
      %v1228 = vmul.f32 %v931, %v1200
      %v1229 = vmul.f32 %v932, %v1200
      %v1230 = vmul.f32 %v933, %v1200
      %v1231 = vmul.f32 %v934, %v1200
      %v1232 = vmul.f32 %v935, %v1200
      %v1233 = vadd.f32 %v1168, %v1201
      %v1234 = vadd.f32 %v1169, %v1202
      %v1235 = vadd.f32 %v1170, %v1203
      %v1236 = vadd.f32 %v1171, %v1204
      %v1237 = vadd.f32 %v1172, %v1205
      %v1238 = vadd.f32 %v1173, %v1206
      %v1239 = vadd.f32 %v1174, %v1207
      %v1240 = vadd.f32 %v1175, %v1208
      %v1241 = vadd.f32 %v1176, %v1209
      %v1242 = vadd.f32 %v1177, %v1210
      %v1243 = vadd.f32 %v1178, %v1211
      %v1244 = vadd.f32 %v1179, %v1212
      %v1245 = vadd.f32 %v1180, %v1213
      %v1246 = vadd.f32 %v1181, %v1214
      %v1247 = vadd.f32 %v1182, %v1215
      %v1248 = vadd.f32 %v1183, %v1216
      %v1249 = vadd.f32 %v1184, %v1217
      %v1250 = vadd.f32 %v1185, %v1218
      %v1251 = vadd.f32 %v1186, %v1219
      %v1252 = vadd.f32 %v1187, %v1220
      %v1253 = vadd.f32 %v1188, %v1221
      %v1254 = vadd.f32 %v1189, %v1222
      %v1255 = vadd.f32 %v1190, %v1223
      %v1256 = vadd.f32 %v1191, %v1224
      %v1257 = vadd.f32 %v1192, %v1225
      %v1258 = vadd.f32 %v1193, %v1226
      %v1259 = vadd.f32 %v1194, %v1227
      %v1260 = vadd.f32 %v1195, %v1228
      %v1261 = vadd.f32 %v1196, %v1229
      %v1262 = vadd.f32 %v1197, %v1230
      %v1263 = vadd.f32 %v1198, %v1231
      %v1264 = vadd.f32 %v1199, %v1232
      %v1265 = vperm.slane %v391, 1
      %v1266 = vmul.f32 %v906, %v1265
      %v1267 = vmul.f32 %v907, %v1265
      %v1268 = vmul.f32 %v908, %v1265
      %v1269 = vmul.f32 %v909, %v1265
      %v1270 = vmul.f32 %v910, %v1265
      %v1271 = vmul.f32 %v911, %v1265
      %v1272 = vmul.f32 %v912, %v1265
      %v1273 = vmul.f32 %v913, %v1265
      %v1274 = vmul.f32 %v914, %v1265
      %v1275 = vmul.f32 %v915, %v1265
      %v1276 = vmul.f32 %v916, %v1265
      %v1277 = vmul.f32 %v917, %v1265
      %v1278 = vmul.f32 %v918, %v1265
      %v1279 = vmul.f32 %v919, %v1265
      %v1280 = vmul.f32 %v920, %v1265
      %v1281 = vmul.f32 %v921, %v1265
      %v1282 = vmul.f32 %v922, %v1265
      %v1283 = vmul.f32 %v923, %v1265
      %v1284 = vmul.f32 %v924, %v1265
      %v1285 = vmul.f32 %v925, %v1265
      %v1286 = vmul.f32 %v926, %v1265
      %v1287 = vmul.f32 %v927, %v1265
      %v1288 = vmul.f32 %v928, %v1265
      %v1289 = vmul.f32 %v929, %v1265
      %v1290 = vmul.f32 %v930, %v1265
      %v1291 = vmul.f32 %v931, %v1265
      %v1292 = vmul.f32 %v932, %v1265
      %v1293 = vmul.f32 %v933, %v1265
      %v1294 = vmul.f32 %v934, %v1265
      %v1295 = vmul.f32 %v935, %v1265
      %v1296 = vmul.f32 %v936, %v1265
      %v1297 = vmul.f32 %v937, %v1265
      %v1298 = vadd.f32 %v1233, %v1266
      %v1299 = vadd.f32 %v1234, %v1267
      %v1300 = vadd.f32 %v1235, %v1268
      %v1301 = vadd.f32 %v1236, %v1269
      %v1302 = vadd.f32 %v1237, %v1270
      %v1303 = vadd.f32 %v1238, %v1271
      %v1304 = vadd.f32 %v1239, %v1272
      %v1305 = vadd.f32 %v1240, %v1273
      %v1306 = vadd.f32 %v1241, %v1274
      %v1307 = vadd.f32 %v1242, %v1275
      %v1308 = vadd.f32 %v1243, %v1276
      %v1309 = vadd.f32 %v1244, %v1277
      %v1310 = vadd.f32 %v1245, %v1278
      %v1311 = vadd.f32 %v1246, %v1279
      %v1312 = vadd.f32 %v1247, %v1280
      %v1313 = vadd.f32 %v1248, %v1281
      %v1314 = vadd.f32 %v1249, %v1282
      %v1315 = vadd.f32 %v1250, %v1283
      %v1316 = vadd.f32 %v1251, %v1284
      %v1317 = vadd.f32 %v1252, %v1285
      %v1318 = vadd.f32 %v1253, %v1286
      %v1319 = vadd.f32 %v1254, %v1287
      %v1320 = vadd.f32 %v1255, %v1288
      %v1321 = vadd.f32 %v1256, %v1289
      %v1322 = vadd.f32 %v1257, %v1290
      %v1323 = vadd.f32 %v1258, %v1291
      %v1324 = vadd.f32 %v1259, %v1292
      %v1325 = vadd.f32 %v1260, %v1293
      %v1326 = vadd.f32 %v1261, %v1294
      %v1327 = vadd.f32 %v1262, %v1295
      %v1328 = vadd.f32 %v1263, %v1296
      %v1329 = vadd.f32 %v1264, %v1297
      %v1330 = vperm.slane %v392, 1
      %v1331 = vmul.f32 %v908, %v1330
      %v1332 = vmul.f32 %v909, %v1330
      %v1333 = vmul.f32 %v910, %v1330
      %v1334 = vmul.f32 %v911, %v1330
      %v1335 = vmul.f32 %v912, %v1330
      %v1336 = vmul.f32 %v913, %v1330
      %v1337 = vmul.f32 %v914, %v1330
      %v1338 = vmul.f32 %v915, %v1330
      %v1339 = vmul.f32 %v916, %v1330
      %v1340 = vmul.f32 %v917, %v1330
      %v1341 = vmul.f32 %v918, %v1330
      %v1342 = vmul.f32 %v919, %v1330
      %v1343 = vmul.f32 %v920, %v1330
      %v1344 = vmul.f32 %v921, %v1330
      %v1345 = vmul.f32 %v922, %v1330
      %v1346 = vmul.f32 %v923, %v1330
      %v1347 = vmul.f32 %v924, %v1330
      %v1348 = vmul.f32 %v925, %v1330
      %v1349 = vmul.f32 %v926, %v1330
      %v1350 = vmul.f32 %v927, %v1330
      %v1351 = vmul.f32 %v928, %v1330
      %v1352 = vmul.f32 %v929, %v1330
      %v1353 = vmul.f32 %v930, %v1330
      %v1354 = vmul.f32 %v931, %v1330
      %v1355 = vmul.f32 %v932, %v1330
      %v1356 = vmul.f32 %v933, %v1330
      %v1357 = vmul.f32 %v934, %v1330
      %v1358 = vmul.f32 %v935, %v1330
      %v1359 = vmul.f32 %v936, %v1330
      %v1360 = vmul.f32 %v937, %v1330
      %v1361 = vmul.f32 %v938, %v1330
      %v1362 = vmul.f32 %v939, %v1330
      %v1363 = vadd.f32 %v1298, %v1331
      %v1364 = vadd.f32 %v1299, %v1332
      %v1365 = vadd.f32 %v1300, %v1333
      %v1366 = vadd.f32 %v1301, %v1334
      %v1367 = vadd.f32 %v1302, %v1335
      %v1368 = vadd.f32 %v1303, %v1336
      %v1369 = vadd.f32 %v1304, %v1337
      %v1370 = vadd.f32 %v1305, %v1338
      %v1371 = vadd.f32 %v1306, %v1339
      %v1372 = vadd.f32 %v1307, %v1340
      %v1373 = vadd.f32 %v1308, %v1341
      %v1374 = vadd.f32 %v1309, %v1342
      %v1375 = vadd.f32 %v1310, %v1343
      %v1376 = vadd.f32 %v1311, %v1344
      %v1377 = vadd.f32 %v1312, %v1345
      %v1378 = vadd.f32 %v1313, %v1346
      %v1379 = vadd.f32 %v1314, %v1347
      %v1380 = vadd.f32 %v1315, %v1348
      %v1381 = vadd.f32 %v1316, %v1349
      %v1382 = vadd.f32 %v1317, %v1350
      %v1383 = vadd.f32 %v1318, %v1351
      %v1384 = vadd.f32 %v1319, %v1352
      %v1385 = vadd.f32 %v1320, %v1353
      %v1386 = vadd.f32 %v1321, %v1354
      %v1387 = vadd.f32 %v1322, %v1355
      %v1388 = vadd.f32 %v1323, %v1356
      %v1389 = vadd.f32 %v1324, %v1357
      %v1390 = vadd.f32 %v1325, %v1358
      %v1391 = vadd.f32 %v1326, %v1359
      %v1392 = vadd.f32 %v1327, %v1360
      %v1393 = vadd.f32 %v1328, %v1361
      %v1394 = vadd.f32 %v1329, %v1362
      %v1395 = vld [vmem:[#allocation2 + $0x7] sm:$0xff]
      %v1396 = vld [vmem:[#allocation2 + $0xf] sm:$0xff]
      %v1397 = vld [vmem:[#allocation2 + $0x27] sm:$0xff]
      %v1398 = vld [vmem:[#allocation2 + $0x2f] sm:$0xff]
      %v1399 = vld [vmem:[#allocation2 + $0x47] sm:$0xff]
      %v1400 = vld [vmem:[#allocation2 + $0x4f] sm:$0xff]
      %v1401 = vld [vmem:[#allocation2 + $0x67] sm:$0xff]
      %v1402 = vld [vmem:[#allocation2 + $0x6f] sm:$0xff]
      %v1403 = vld [vmem:[#allocation2 + $0x87] sm:$0xff]
      %v1404 = vld [vmem:[#allocation2 + $0x8f] sm:$0xff]
      %v1405 = vld [vmem:[#allocation2 + $0xa7] sm:$0xff]
      %v1406 = vld [vmem:[#allocation2 + $0xaf] sm:$0xff]
      %v1407 = vld [vmem:[#allocation2 + $0xc7] sm:$0xff]
      %v1408 = vld [vmem:[#allocation2 + $0xcf] sm:$0xff]
      %v1409 = vld [vmem:[#allocation2 + $0xe7] sm:$0xff]
      %v1410 = vld [vmem:[#allocation2 + $0xef] sm:$0xff]
      %v1411 = vld [vmem:[#allocation2 + $0x107] sm:$0xff]
      %v1412 = vld [vmem:[#allocation2 + $0x10f] sm:$0xff]
      %v1413 = vld [vmem:[#allocation2 + $0x127] sm:$0xff]
      %v1414 = vld [vmem:[#allocation2 + $0x12f] sm:$0xff]
      %v1415 = vld [vmem:[#allocation2 + $0x147] sm:$0xff]
      %v1416 = vld [vmem:[#allocation2 + $0x14f] sm:$0xff]
      %v1417 = vld [vmem:[#allocation2 + $0x167] sm:$0xff]
      %v1418 = vld [vmem:[#allocation2 + $0x16f] sm:$0xff]
      %v1419 = vld [vmem:[#allocation2 + $0x187] sm:$0xff]
      %v1420 = vld [vmem:[#allocation2 + $0x18f] sm:$0xff]
      %v1421 = vld [vmem:[#allocation2 + $0x1a7] sm:$0xff]
      %v1422 = vld [vmem:[#allocation2 + $0x1af] sm:$0xff]
      %v1423 = vld [vmem:[#allocation2 + $0x1c7] sm:$0xff]
      %v1424 = vld [vmem:[#allocation2 + $0x1cf] sm:$0xff]
      %v1425 = vld [vmem:[#allocation2 + $0x1e7] sm:$0xff]
      %v1426 = vld [vmem:[#allocation2 + $0x1ef] sm:$0xff]
      %v1427 = vld [vmem:[#allocation2 + $0x207] sm:$0xff]
      %v1428 = vld [vmem:[#allocation2 + $0x20f] sm:$0xff]
      %v1429 = vld [vmem:[#allocation2 + $0x227] sm:$0xff]
      %v1430 = vld [vmem:[#allocation2 + $0x22f] sm:$0xff]
      %v1431 = vld [vmem:[#allocation2 + $0x247] sm:$0xff]
      %v1432 = vld [vmem:[#allocation2 + $0x24f] sm:$0xff]
      %v1433 = vld [vmem:[#allocation2 + $0x267] sm:$0xff]
      %v1434 = vld [vmem:[#allocation2 + $0x26f] sm:$0xff]
      %v1435 = vld [vmem:[#allocation2 + $0x287] sm:$0xff]
      %v1436 = vld [vmem:[#allocation2 + $0x28f] sm:$0xff]
      %v1437 = vld [vmem:[#allocation2 + $0x2a7] sm:$0xff]
      %v1438 = vld [vmem:[#allocation2 + $0x2af] sm:$0xff]
      %v1439 = vperm.slane %v386, 2
      %v1440 = vmul.f32 %v1395, %v1439
      %v1441 = vmul.f32 %v1396, %v1439
      %v1442 = vmul.f32 %v1397, %v1439
      %v1443 = vmul.f32 %v1398, %v1439
      %v1444 = vmul.f32 %v1399, %v1439
      %v1445 = vmul.f32 %v1400, %v1439
      %v1446 = vmul.f32 %v1401, %v1439
      %v1447 = vmul.f32 %v1402, %v1439
      %v1448 = vmul.f32 %v1403, %v1439
      %v1449 = vmul.f32 %v1404, %v1439
      %v1450 = vmul.f32 %v1405, %v1439
      %v1451 = vmul.f32 %v1406, %v1439
      %v1452 = vmul.f32 %v1407, %v1439
      %v1453 = vmul.f32 %v1408, %v1439
      %v1454 = vmul.f32 %v1409, %v1439
      %v1455 = vmul.f32 %v1410, %v1439
      %v1456 = vmul.f32 %v1411, %v1439
      %v1457 = vmul.f32 %v1412, %v1439
      %v1458 = vmul.f32 %v1413, %v1439
      %v1459 = vmul.f32 %v1414, %v1439
      %v1460 = vmul.f32 %v1415, %v1439
      %v1461 = vmul.f32 %v1416, %v1439
      %v1462 = vmul.f32 %v1417, %v1439
      %v1463 = vmul.f32 %v1418, %v1439
      %v1464 = vmul.f32 %v1419, %v1439
      %v1465 = vmul.f32 %v1420, %v1439
      %v1466 = vmul.f32 %v1421, %v1439
      %v1467 = vmul.f32 %v1422, %v1439
      %v1468 = vmul.f32 %v1423, %v1439
      %v1469 = vmul.f32 %v1424, %v1439
      %v1470 = vmul.f32 %v1425, %v1439
      %v1471 = vmul.f32 %v1426, %v1439
      %v1472 = vadd.f32 %v1363, %v1440
      %v1473 = vadd.f32 %v1364, %v1441
      %v1474 = vadd.f32 %v1365, %v1442
      %v1475 = vadd.f32 %v1366, %v1443
      %v1476 = vadd.f32 %v1367, %v1444
      %v1477 = vadd.f32 %v1368, %v1445
      %v1478 = vadd.f32 %v1369, %v1446
      %v1479 = vadd.f32 %v1370, %v1447
      %v1480 = vadd.f32 %v1371, %v1448
      %v1481 = vadd.f32 %v1372, %v1449
      %v1482 = vadd.f32 %v1373, %v1450
      %v1483 = vadd.f32 %v1374, %v1451
      %v1484 = vadd.f32 %v1375, %v1452
      %v1485 = vadd.f32 %v1376, %v1453
      %v1486 = vadd.f32 %v1377, %v1454
      %v1487 = vadd.f32 %v1378, %v1455
      %v1488 = vadd.f32 %v1379, %v1456
      %v1489 = vadd.f32 %v1380, %v1457
      %v1490 = vadd.f32 %v1381, %v1458
      %v1491 = vadd.f32 %v1382, %v1459
      %v1492 = vadd.f32 %v1383, %v1460
      %v1493 = vadd.f32 %v1384, %v1461
      %v1494 = vadd.f32 %v1385, %v1462
      %v1495 = vadd.f32 %v1386, %v1463
      %v1496 = vadd.f32 %v1387, %v1464
      %v1497 = vadd.f32 %v1388, %v1465
      %v1498 = vadd.f32 %v1389, %v1466
      %v1499 = vadd.f32 %v1390, %v1467
      %v1500 = vadd.f32 %v1391, %v1468
      %v1501 = vadd.f32 %v1392, %v1469
      %v1502 = vadd.f32 %v1393, %v1470
      %v1503 = vadd.f32 %v1394, %v1471
      %v1504 = vperm.slane %v387, 2
      %v1505 = vmul.f32 %v1397, %v1504
      %v1506 = vmul.f32 %v1398, %v1504
      %v1507 = vmul.f32 %v1399, %v1504
      %v1508 = vmul.f32 %v1400, %v1504
      %v1509 = vmul.f32 %v1401, %v1504
      %v1510 = vmul.f32 %v1402, %v1504
      %v1511 = vmul.f32 %v1403, %v1504
      %v1512 = vmul.f32 %v1404, %v1504
      %v1513 = vmul.f32 %v1405, %v1504
      %v1514 = vmul.f32 %v1406, %v1504
      %v1515 = vmul.f32 %v1407, %v1504
      %v1516 = vmul.f32 %v1408, %v1504
      %v1517 = vmul.f32 %v1409, %v1504
      %v1518 = vmul.f32 %v1410, %v1504
      %v1519 = vmul.f32 %v1411, %v1504
      %v1520 = vmul.f32 %v1412, %v1504
      %v1521 = vmul.f32 %v1413, %v1504
      %v1522 = vmul.f32 %v1414, %v1504
      %v1523 = vmul.f32 %v1415, %v1504
      %v1524 = vmul.f32 %v1416, %v1504
      %v1525 = vmul.f32 %v1417, %v1504
      %v1526 = vmul.f32 %v1418, %v1504
      %v1527 = vmul.f32 %v1419, %v1504
      %v1528 = vmul.f32 %v1420, %v1504
      %v1529 = vmul.f32 %v1421, %v1504
      %v1530 = vmul.f32 %v1422, %v1504
      %v1531 = vmul.f32 %v1423, %v1504
      %v1532 = vmul.f32 %v1424, %v1504
      %v1533 = vmul.f32 %v1425, %v1504
      %v1534 = vmul.f32 %v1426, %v1504
      %v1535 = vmul.f32 %v1427, %v1504
      %v1536 = vmul.f32 %v1428, %v1504
      %v1537 = vadd.f32 %v1472, %v1505
      %v1538 = vadd.f32 %v1473, %v1506
      %v1539 = vadd.f32 %v1474, %v1507
      %v1540 = vadd.f32 %v1475, %v1508
      %v1541 = vadd.f32 %v1476, %v1509
      %v1542 = vadd.f32 %v1477, %v1510
      %v1543 = vadd.f32 %v1478, %v1511
      %v1544 = vadd.f32 %v1479, %v1512
      %v1545 = vadd.f32 %v1480, %v1513
      %v1546 = vadd.f32 %v1481, %v1514
      %v1547 = vadd.f32 %v1482, %v1515
      %v1548 = vadd.f32 %v1483, %v1516
      %v1549 = vadd.f32 %v1484, %v1517
      %v1550 = vadd.f32 %v1485, %v1518
      %v1551 = vadd.f32 %v1486, %v1519
      %v1552 = vadd.f32 %v1487, %v1520
      %v1553 = vadd.f32 %v1488, %v1521
      %v1554 = vadd.f32 %v1489, %v1522
      %v1555 = vadd.f32 %v1490, %v1523
      %v1556 = vadd.f32 %v1491, %v1524
      %v1557 = vadd.f32 %v1492, %v1525
      %v1558 = vadd.f32 %v1493, %v1526
      %v1559 = vadd.f32 %v1494, %v1527
      %v1560 = vadd.f32 %v1495, %v1528
      %v1561 = vadd.f32 %v1496, %v1529
      %v1562 = vadd.f32 %v1497, %v1530
      %v1563 = vadd.f32 %v1498, %v1531
      %v1564 = vadd.f32 %v1499, %v1532
      %v1565 = vadd.f32 %v1500, %v1533
      %v1566 = vadd.f32 %v1501, %v1534
      %v1567 = vadd.f32 %v1502, %v1535
      %v1568 = vadd.f32 %v1503, %v1536
      %v1569 = vperm.slane %v388, 2
      %v1570 = vmul.f32 %v1399, %v1569
      %v1571 = vmul.f32 %v1400, %v1569
      %v1572 = vmul.f32 %v1401, %v1569
      %v1573 = vmul.f32 %v1402, %v1569
      %v1574 = vmul.f32 %v1403, %v1569
      %v1575 = vmul.f32 %v1404, %v1569
      %v1576 = vmul.f32 %v1405, %v1569
      %v1577 = vmul.f32 %v1406, %v1569
      %v1578 = vmul.f32 %v1407, %v1569
      %v1579 = vmul.f32 %v1408, %v1569
      %v1580 = vmul.f32 %v1409, %v1569
      %v1581 = vmul.f32 %v1410, %v1569
      %v1582 = vmul.f32 %v1411, %v1569
      %v1583 = vmul.f32 %v1412, %v1569
      %v1584 = vmul.f32 %v1413, %v1569
      %v1585 = vmul.f32 %v1414, %v1569
      %v1586 = vmul.f32 %v1415, %v1569
      %v1587 = vmul.f32 %v1416, %v1569
      %v1588 = vmul.f32 %v1417, %v1569
      %v1589 = vmul.f32 %v1418, %v1569
      %v1590 = vmul.f32 %v1419, %v1569
      %v1591 = vmul.f32 %v1420, %v1569
      %v1592 = vmul.f32 %v1421, %v1569
      %v1593 = vmul.f32 %v1422, %v1569
      %v1594 = vmul.f32 %v1423, %v1569
      %v1595 = vmul.f32 %v1424, %v1569
      %v1596 = vmul.f32 %v1425, %v1569
      %v1597 = vmul.f32 %v1426, %v1569
      %v1598 = vmul.f32 %v1427, %v1569
      %v1599 = vmul.f32 %v1428, %v1569
      %v1600 = vmul.f32 %v1429, %v1569
      %v1601 = vmul.f32 %v1430, %v1569
      %v1602 = vadd.f32 %v1537, %v1570
      %v1603 = vadd.f32 %v1538, %v1571
      %v1604 = vadd.f32 %v1539, %v1572
      %v1605 = vadd.f32 %v1540, %v1573
      %v1606 = vadd.f32 %v1541, %v1574
      %v1607 = vadd.f32 %v1542, %v1575
      %v1608 = vadd.f32 %v1543, %v1576
      %v1609 = vadd.f32 %v1544, %v1577
      %v1610 = vadd.f32 %v1545, %v1578
      %v1611 = vadd.f32 %v1546, %v1579
      %v1612 = vadd.f32 %v1547, %v1580
      %v1613 = vadd.f32 %v1548, %v1581
      %v1614 = vadd.f32 %v1549, %v1582
      %v1615 = vadd.f32 %v1550, %v1583
      %v1616 = vadd.f32 %v1551, %v1584
      %v1617 = vadd.f32 %v1552, %v1585
      %v1618 = vadd.f32 %v1553, %v1586
      %v1619 = vadd.f32 %v1554, %v1587
      %v1620 = vadd.f32 %v1555, %v1588
      %v1621 = vadd.f32 %v1556, %v1589
      %v1622 = vadd.f32 %v1557, %v1590
      %v1623 = vadd.f32 %v1558, %v1591
      %v1624 = vadd.f32 %v1559, %v1592
      %v1625 = vadd.f32 %v1560, %v1593
      %v1626 = vadd.f32 %v1561, %v1594
      %v1627 = vadd.f32 %v1562, %v1595
      %v1628 = vadd.f32 %v1563, %v1596
      %v1629 = vadd.f32 %v1564, %v1597
      %v1630 = vadd.f32 %v1565, %v1598
      %v1631 = vadd.f32 %v1566, %v1599
      %v1632 = vadd.f32 %v1567, %v1600
      %v1633 = vadd.f32 %v1568, %v1601
      %v1634 = vperm.slane %v389, 2
      %v1635 = vmul.f32 %v1401, %v1634
      %v1636 = vmul.f32 %v1402, %v1634
      %v1637 = vmul.f32 %v1403, %v1634
      %v1638 = vmul.f32 %v1404, %v1634
      %v1639 = vmul.f32 %v1405, %v1634
      %v1640 = vmul.f32 %v1406, %v1634
      %v1641 = vmul.f32 %v1407, %v1634
      %v1642 = vmul.f32 %v1408, %v1634
      %v1643 = vmul.f32 %v1409, %v1634
      %v1644 = vmul.f32 %v1410, %v1634
      %v1645 = vmul.f32 %v1411, %v1634
      %v1646 = vmul.f32 %v1412, %v1634
      %v1647 = vmul.f32 %v1413, %v1634
      %v1648 = vmul.f32 %v1414, %v1634
      %v1649 = vmul.f32 %v1415, %v1634
      %v1650 = vmul.f32 %v1416, %v1634
      %v1651 = vmul.f32 %v1417, %v1634
      %v1652 = vmul.f32 %v1418, %v1634
      %v1653 = vmul.f32 %v1419, %v1634
      %v1654 = vmul.f32 %v1420, %v1634
      %v1655 = vmul.f32 %v1421, %v1634
      %v1656 = vmul.f32 %v1422, %v1634
      %v1657 = vmul.f32 %v1423, %v1634
      %v1658 = vmul.f32 %v1424, %v1634
      %v1659 = vmul.f32 %v1425, %v1634
      %v1660 = vmul.f32 %v1426, %v1634
      %v1661 = vmul.f32 %v1427, %v1634
      %v1662 = vmul.f32 %v1428, %v1634
      %v1663 = vmul.f32 %v1429, %v1634
      %v1664 = vmul.f32 %v1430, %v1634
      %v1665 = vmul.f32 %v1431, %v1634
      %v1666 = vmul.f32 %v1432, %v1634
      %v1667 = vadd.f32 %v1602, %v1635
      %v1668 = vadd.f32 %v1603, %v1636
      %v1669 = vadd.f32 %v1604, %v1637
      %v1670 = vadd.f32 %v1605, %v1638
      %v1671 = vadd.f32 %v1606, %v1639
      %v1672 = vadd.f32 %v1607, %v1640
      %v1673 = vadd.f32 %v1608, %v1641
      %v1674 = vadd.f32 %v1609, %v1642
      %v1675 = vadd.f32 %v1610, %v1643
      %v1676 = vadd.f32 %v1611, %v1644
      %v1677 = vadd.f32 %v1612, %v1645
      %v1678 = vadd.f32 %v1613, %v1646
      %v1679 = vadd.f32 %v1614, %v1647
      %v1680 = vadd.f32 %v1615, %v1648
      %v1681 = vadd.f32 %v1616, %v1649
      %v1682 = vadd.f32 %v1617, %v1650
      %v1683 = vadd.f32 %v1618, %v1651
      %v1684 = vadd.f32 %v1619, %v1652
      %v1685 = vadd.f32 %v1620, %v1653
      %v1686 = vadd.f32 %v1621, %v1654
      %v1687 = vadd.f32 %v1622, %v1655
      %v1688 = vadd.f32 %v1623, %v1656
      %v1689 = vadd.f32 %v1624, %v1657
      %v1690 = vadd.f32 %v1625, %v1658
      %v1691 = vadd.f32 %v1626, %v1659
      %v1692 = vadd.f32 %v1627, %v1660
      %v1693 = vadd.f32 %v1628, %v1661
      %v1694 = vadd.f32 %v1629, %v1662
      %v1695 = vadd.f32 %v1630, %v1663
      %v1696 = vadd.f32 %v1631, %v1664
      %v1697 = vadd.f32 %v1632, %v1665
      %v1698 = vadd.f32 %v1633, %v1666
      %v1699 = vperm.slane %v390, 2
      %v1700 = vmul.f32 %v1403, %v1699
      %v1701 = vmul.f32 %v1404, %v1699
      %v1702 = vmul.f32 %v1405, %v1699
      %v1703 = vmul.f32 %v1406, %v1699
      %v1704 = vmul.f32 %v1407, %v1699
      %v1705 = vmul.f32 %v1408, %v1699
      %v1706 = vmul.f32 %v1409, %v1699
      %v1707 = vmul.f32 %v1410, %v1699
      %v1708 = vmul.f32 %v1411, %v1699
      %v1709 = vmul.f32 %v1412, %v1699
      %v1710 = vmul.f32 %v1413, %v1699
      %v1711 = vmul.f32 %v1414, %v1699
      %v1712 = vmul.f32 %v1415, %v1699
      %v1713 = vmul.f32 %v1416, %v1699
      %v1714 = vmul.f32 %v1417, %v1699
      %v1715 = vmul.f32 %v1418, %v1699
      %v1716 = vmul.f32 %v1419, %v1699
      %v1717 = vmul.f32 %v1420, %v1699
      %v1718 = vmul.f32 %v1421, %v1699
      %v1719 = vmul.f32 %v1422, %v1699
      %v1720 = vmul.f32 %v1423, %v1699
      %v1721 = vmul.f32 %v1424, %v1699
      %v1722 = vmul.f32 %v1425, %v1699
      %v1723 = vmul.f32 %v1426, %v1699
      %v1724 = vmul.f32 %v1427, %v1699
      %v1725 = vmul.f32 %v1428, %v1699
      %v1726 = vmul.f32 %v1429, %v1699
      %v1727 = vmul.f32 %v1430, %v1699
      %v1728 = vmul.f32 %v1431, %v1699
      %v1729 = vmul.f32 %v1432, %v1699
      %v1730 = vmul.f32 %v1433, %v1699
      %v1731 = vmul.f32 %v1434, %v1699
      %v1732 = vadd.f32 %v1667, %v1700
      %v1733 = vadd.f32 %v1668, %v1701
      %v1734 = vadd.f32 %v1669, %v1702
      %v1735 = vadd.f32 %v1670, %v1703
      %v1736 = vadd.f32 %v1671, %v1704
      %v1737 = vadd.f32 %v1672, %v1705
      %v1738 = vadd.f32 %v1673, %v1706
      %v1739 = vadd.f32 %v1674, %v1707
      %v1740 = vadd.f32 %v1675, %v1708
      %v1741 = vadd.f32 %v1676, %v1709
      %v1742 = vadd.f32 %v1677, %v1710
      %v1743 = vadd.f32 %v1678, %v1711
      %v1744 = vadd.f32 %v1679, %v1712
      %v1745 = vadd.f32 %v1680, %v1713
      %v1746 = vadd.f32 %v1681, %v1714
      %v1747 = vadd.f32 %v1682, %v1715
      %v1748 = vadd.f32 %v1683, %v1716
      %v1749 = vadd.f32 %v1684, %v1717
      %v1750 = vadd.f32 %v1685, %v1718
      %v1751 = vadd.f32 %v1686, %v1719
      %v1752 = vadd.f32 %v1687, %v1720
      %v1753 = vadd.f32 %v1688, %v1721
      %v1754 = vadd.f32 %v1689, %v1722
      %v1755 = vadd.f32 %v1690, %v1723
      %v1756 = vadd.f32 %v1691, %v1724
      %v1757 = vadd.f32 %v1692, %v1725
      %v1758 = vadd.f32 %v1693, %v1726
      %v1759 = vadd.f32 %v1694, %v1727
      %v1760 = vadd.f32 %v1695, %v1728
      %v1761 = vadd.f32 %v1696, %v1729
      %v1762 = vadd.f32 %v1697, %v1730
      %v1763 = vadd.f32 %v1698, %v1731
      %v1764 = vperm.slane %v391, 2
      %v1765 = vmul.f32 %v1405, %v1764
      %v1766 = vmul.f32 %v1406, %v1764
      %v1767 = vmul.f32 %v1407, %v1764
      %v1768 = vmul.f32 %v1408, %v1764
      %v1769 = vmul.f32 %v1409, %v1764
      %v1770 = vmul.f32 %v1410, %v1764
      %v1771 = vmul.f32 %v1411, %v1764
      %v1772 = vmul.f32 %v1412, %v1764
      %v1773 = vmul.f32 %v1413, %v1764
      %v1774 = vmul.f32 %v1414, %v1764
      %v1775 = vmul.f32 %v1415, %v1764
      %v1776 = vmul.f32 %v1416, %v1764
      %v1777 = vmul.f32 %v1417, %v1764
      %v1778 = vmul.f32 %v1418, %v1764
      %v1779 = vmul.f32 %v1419, %v1764
      %v1780 = vmul.f32 %v1420, %v1764
      %v1781 = vmul.f32 %v1421, %v1764
      %v1782 = vmul.f32 %v1422, %v1764
      %v1783 = vmul.f32 %v1423, %v1764
      %v1784 = vmul.f32 %v1424, %v1764
      %v1785 = vmul.f32 %v1425, %v1764
      %v1786 = vmul.f32 %v1426, %v1764
      %v1787 = vmul.f32 %v1427, %v1764
      %v1788 = vmul.f32 %v1428, %v1764
      %v1789 = vmul.f32 %v1429, %v1764
      %v1790 = vmul.f32 %v1430, %v1764
      %v1791 = vmul.f32 %v1431, %v1764
      %v1792 = vmul.f32 %v1432, %v1764
      %v1793 = vmul.f32 %v1433, %v1764
      %v1794 = vmul.f32 %v1434, %v1764
      %v1795 = vmul.f32 %v1435, %v1764
      %v1796 = vmul.f32 %v1436, %v1764
      %v1797 = vadd.f32 %v1732, %v1765
      %v1798 = vadd.f32 %v1733, %v1766
      %v1799 = vadd.f32 %v1734, %v1767
      %v1800 = vadd.f32 %v1735, %v1768
      %v1801 = vadd.f32 %v1736, %v1769
      %v1802 = vadd.f32 %v1737, %v1770
      %v1803 = vadd.f32 %v1738, %v1771
      %v1804 = vadd.f32 %v1739, %v1772
      %v1805 = vadd.f32 %v1740, %v1773
      %v1806 = vadd.f32 %v1741, %v1774
      %v1807 = vadd.f32 %v1742, %v1775
      %v1808 = vadd.f32 %v1743, %v1776
      %v1809 = vadd.f32 %v1744, %v1777
      %v1810 = vadd.f32 %v1745, %v1778
      %v1811 = vadd.f32 %v1746, %v1779
      %v1812 = vadd.f32 %v1747, %v1780
      %v1813 = vadd.f32 %v1748, %v1781
      %v1814 = vadd.f32 %v1749, %v1782
      %v1815 = vadd.f32 %v1750, %v1783
      %v1816 = vadd.f32 %v1751, %v1784
      %v1817 = vadd.f32 %v1752, %v1785
      %v1818 = vadd.f32 %v1753, %v1786
      %v1819 = vadd.f32 %v1754, %v1787
      %v1820 = vadd.f32 %v1755, %v1788
      %v1821 = vadd.f32 %v1756, %v1789
      %v1822 = vadd.f32 %v1757, %v1790
      %v1823 = vadd.f32 %v1758, %v1791
      %v1824 = vadd.f32 %v1759, %v1792
      %v1825 = vadd.f32 %v1760, %v1793
      %v1826 = vadd.f32 %v1761, %v1794
      %v1827 = vadd.f32 %v1762, %v1795
      %v1828 = vadd.f32 %v1763, %v1796
      %v1829 = vperm.slane %v392, 2
      %v1830 = vmul.f32 %v1407, %v1829
      %v1831 = vmul.f32 %v1408, %v1829
      %v1832 = vmul.f32 %v1409, %v1829
      %v1833 = vmul.f32 %v1410, %v1829
      %v1834 = vmul.f32 %v1411, %v1829
      %v1835 = vmul.f32 %v1412, %v1829
      %v1836 = vmul.f32 %v1413, %v1829
      %v1837 = vmul.f32 %v1414, %v1829
      %v1838 = vmul.f32 %v1415, %v1829
      %v1839 = vmul.f32 %v1416, %v1829
      %v1840 = vmul.f32 %v1417, %v1829
      %v1841 = vmul.f32 %v1418, %v1829
      %v1842 = vmul.f32 %v1419, %v1829
      %v1843 = vmul.f32 %v1420, %v1829
      %v1844 = vmul.f32 %v1421, %v1829
      %v1845 = vmul.f32 %v1422, %v1829
      %v1846 = vmul.f32 %v1423, %v1829
      %v1847 = vmul.f32 %v1424, %v1829
      %v1848 = vmul.f32 %v1425, %v1829
      %v1849 = vmul.f32 %v1426, %v1829
      %v1850 = vmul.f32 %v1427, %v1829
      %v1851 = vmul.f32 %v1428, %v1829
      %v1852 = vmul.f32 %v1429, %v1829
      %v1853 = vmul.f32 %v1430, %v1829
      %v1854 = vmul.f32 %v1431, %v1829
      %v1855 = vmul.f32 %v1432, %v1829
      %v1856 = vmul.f32 %v1433, %v1829
      %v1857 = vmul.f32 %v1434, %v1829
      %v1858 = vmul.f32 %v1435, %v1829
      %v1859 = vmul.f32 %v1436, %v1829
      %v1860 = vmul.f32 %v1437, %v1829
      %v1861 = vmul.f32 %v1438, %v1829
      %v1862 = vadd.f32 %v1797, %v1830
      %v1863 = vadd.f32 %v1798, %v1831
      %v1864 = vadd.f32 %v1799, %v1832
      %v1865 = vadd.f32 %v1800, %v1833
      %v1866 = vadd.f32 %v1801, %v1834
      %v1867 = vadd.f32 %v1802, %v1835
      %v1868 = vadd.f32 %v1803, %v1836
      %v1869 = vadd.f32 %v1804, %v1837
      %v1870 = vadd.f32 %v1805, %v1838
      %v1871 = vadd.f32 %v1806, %v1839
      %v1872 = vadd.f32 %v1807, %v1840
      %v1873 = vadd.f32 %v1808, %v1841
      %v1874 = vadd.f32 %v1809, %v1842
      %v1875 = vadd.f32 %v1810, %v1843
      %v1876 = vadd.f32 %v1811, %v1844
      %v1877 = vadd.f32 %v1812, %v1845
      %v1878 = vadd.f32 %v1813, %v1846
      %v1879 = vadd.f32 %v1814, %v1847
      %v1880 = vadd.f32 %v1815, %v1848
      %v1881 = vadd.f32 %v1816, %v1849
      %v1882 = vadd.f32 %v1817, %v1850
      %v1883 = vadd.f32 %v1818, %v1851
      %v1884 = vadd.f32 %v1819, %v1852
      %v1885 = vadd.f32 %v1820, %v1853
      %v1886 = vadd.f32 %v1821, %v1854
      %v1887 = vadd.f32 %v1822, %v1855
      %v1888 = vadd.f32 %v1823, %v1856
      %v1889 = vadd.f32 %v1824, %v1857
      %v1890 = vadd.f32 %v1825, %v1858
      %v1891 = vadd.f32 %v1826, %v1859
      %v1892 = vadd.f32 %v1827, %v1860
      %v1893 = vadd.f32 %v1828, %v1861
      %v1894 = vld [vmem:[#allocation2 + $0x8] sm:$0xff]
      %v1895 = vld [vmem:[#allocation2 + $0x10] sm:$0xff]
      %v1896 = vld [vmem:[#allocation2 + $0x28] sm:$0xff]
      %v1897 = vld [vmem:[#allocation2 + $0x30] sm:$0xff]
      %v1898 = vld [vmem:[#allocation2 + $0x48] sm:$0xff]
      %v1899 = vld [vmem:[#allocation2 + $0x50] sm:$0xff]
      %v1900 = vld [vmem:[#allocation2 + $0x68] sm:$0xff]
      %v1901 = vld [vmem:[#allocation2 + $0x70] sm:$0xff]
      %v1902 = vld [vmem:[#allocation2 + $0x88] sm:$0xff]
      %v1903 = vld [vmem:[#allocation2 + $0x90] sm:$0xff]
      %v1904 = vld [vmem:[#allocation2 + $0xa8] sm:$0xff]
      %v1905 = vld [vmem:[#allocation2 + $0xb0] sm:$0xff]
      %v1906 = vld [vmem:[#allocation2 + $0xc8] sm:$0xff]
      %v1907 = vld [vmem:[#allocation2 + $0xd0] sm:$0xff]
      %v1908 = vld [vmem:[#allocation2 + $0xe8] sm:$0xff]
      %v1909 = vld [vmem:[#allocation2 + $0xf0] sm:$0xff]
      %v1910 = vld [vmem:[#allocation2 + $0x108] sm:$0xff]
      %v1911 = vld [vmem:[#allocation2 + $0x110] sm:$0xff]
      %v1912 = vld [vmem:[#allocation2 + $0x128] sm:$0xff]
      %v1913 = vld [vmem:[#allocation2 + $0x130] sm:$0xff]
      %v1914 = vld [vmem:[#allocation2 + $0x148] sm:$0xff]
      %v1915 = vld [vmem:[#allocation2 + $0x150] sm:$0xff]
      %v1916 = vld [vmem:[#allocation2 + $0x168] sm:$0xff]
      %v1917 = vld [vmem:[#allocation2 + $0x170] sm:$0xff]
      %v1918 = vld [vmem:[#allocation2 + $0x188] sm:$0xff]
      %v1919 = vld [vmem:[#allocation2 + $0x190] sm:$0xff]
      %v1920 = vld [vmem:[#allocation2 + $0x1a8] sm:$0xff]
      %v1921 = vld [vmem:[#allocation2 + $0x1b0] sm:$0xff]
      %v1922 = vld [vmem:[#allocation2 + $0x1c8] sm:$0xff]
      %v1923 = vld [vmem:[#allocation2 + $0x1d0] sm:$0xff]
      %v1924 = vld [vmem:[#allocation2 + $0x1e8] sm:$0xff]
      %v1925 = vld [vmem:[#allocation2 + $0x1f0] sm:$0xff]
      %v1926 = vld [vmem:[#allocation2 + $0x208] sm:$0xff]
      %v1927 = vld [vmem:[#allocation2 + $0x210] sm:$0xff]
      %v1928 = vld [vmem:[#allocation2 + $0x228] sm:$0xff]
      %v1929 = vld [vmem:[#allocation2 + $0x230] sm:$0xff]
      %v1930 = vld [vmem:[#allocation2 + $0x248] sm:$0xff]
      %v1931 = vld [vmem:[#allocation2 + $0x250] sm:$0xff]
      %v1932 = vld [vmem:[#allocation2 + $0x268] sm:$0xff]
      %v1933 = vld [vmem:[#allocation2 + $0x270] sm:$0xff]
      %v1934 = vld [vmem:[#allocation2 + $0x288] sm:$0xff]
      %v1935 = vld [vmem:[#allocation2 + $0x290] sm:$0xff]
      %v1936 = vld [vmem:[#allocation2 + $0x2a8] sm:$0xff]
      %v1937 = vld [vmem:[#allocation2 + $0x2b0] sm:$0xff]
      %v1938 = vperm.slane %v386, 3
      %v1939 = vmul.f32 %v1894, %v1938
      %v1940 = vmul.f32 %v1895, %v1938
      %v1941 = vmul.f32 %v1896, %v1938
      %v1942 = vmul.f32 %v1897, %v1938
      %v1943 = vmul.f32 %v1898, %v1938
      %v1944 = vmul.f32 %v1899, %v1938
      %v1945 = vmul.f32 %v1900, %v1938
      %v1946 = vmul.f32 %v1901, %v1938
      %v1947 = vmul.f32 %v1902, %v1938
      %v1948 = vmul.f32 %v1903, %v1938
      %v1949 = vmul.f32 %v1904, %v1938
      %v1950 = vmul.f32 %v1905, %v1938
      %v1951 = vmul.f32 %v1906, %v1938
      %v1952 = vmul.f32 %v1907, %v1938
      %v1953 = vmul.f32 %v1908, %v1938
      %v1954 = vmul.f32 %v1909, %v1938
      %v1955 = vmul.f32 %v1910, %v1938
      %v1956 = vmul.f32 %v1911, %v1938
      %v1957 = vmul.f32 %v1912, %v1938
      %v1958 = vmul.f32 %v1913, %v1938
      %v1959 = vmul.f32 %v1914, %v1938
      %v1960 = vmul.f32 %v1915, %v1938
      %v1961 = vmul.f32 %v1916, %v1938
      %v1962 = vmul.f32 %v1917, %v1938
      %v1963 = vmul.f32 %v1918, %v1938
      %v1964 = vmul.f32 %v1919, %v1938
      %v1965 = vmul.f32 %v1920, %v1938
      %v1966 = vmul.f32 %v1921, %v1938
      %v1967 = vmul.f32 %v1922, %v1938
      %v1968 = vmul.f32 %v1923, %v1938
      %v1969 = vmul.f32 %v1924, %v1938
      %v1970 = vmul.f32 %v1925, %v1938
      %v1971 = vadd.f32 %v1862, %v1939
      %v1972 = vadd.f32 %v1863, %v1940
      %v1973 = vadd.f32 %v1864, %v1941
      %v1974 = vadd.f32 %v1865, %v1942
      %v1975 = vadd.f32 %v1866, %v1943
      %v1976 = vadd.f32 %v1867, %v1944
      %v1977 = vadd.f32 %v1868, %v1945
      %v1978 = vadd.f32 %v1869, %v1946
      %v1979 = vadd.f32 %v1870, %v1947
      %v1980 = vadd.f32 %v1871, %v1948
      %v1981 = vadd.f32 %v1872, %v1949
      %v1982 = vadd.f32 %v1873, %v1950
      %v1983 = vadd.f32 %v1874, %v1951
      %v1984 = vadd.f32 %v1875, %v1952
      %v1985 = vadd.f32 %v1876, %v1953
      %v1986 = vadd.f32 %v1877, %v1954
      %v1987 = vadd.f32 %v1878, %v1955
      %v1988 = vadd.f32 %v1879, %v1956
      %v1989 = vadd.f32 %v1880, %v1957
      %v1990 = vadd.f32 %v1881, %v1958
      %v1991 = vadd.f32 %v1882, %v1959
      %v1992 = vadd.f32 %v1883, %v1960
      %v1993 = vadd.f32 %v1884, %v1961
      %v1994 = vadd.f32 %v1885, %v1962
      %v1995 = vadd.f32 %v1886, %v1963
      %v1996 = vadd.f32 %v1887, %v1964
      %v1997 = vadd.f32 %v1888, %v1965
      %v1998 = vadd.f32 %v1889, %v1966
      %v1999 = vadd.f32 %v1890, %v1967
      %v2000 = vadd.f32 %v1891, %v1968
      %v2001 = vadd.f32 %v1892, %v1969
      %v2002 = vadd.f32 %v1893, %v1970
      %v2003 = vperm.slane %v387, 3
      %v2004 = vmul.f32 %v1896, %v2003
      %v2005 = vmul.f32 %v1897, %v2003
      %v2006 = vmul.f32 %v1898, %v2003
      %v2007 = vmul.f32 %v1899, %v2003
      %v2008 = vmul.f32 %v1900, %v2003
      %v2009 = vmul.f32 %v1901, %v2003
      %v2010 = vmul.f32 %v1902, %v2003
      %v2011 = vmul.f32 %v1903, %v2003
      %v2012 = vmul.f32 %v1904, %v2003
      %v2013 = vmul.f32 %v1905, %v2003
      %v2014 = vmul.f32 %v1906, %v2003
      %v2015 = vmul.f32 %v1907, %v2003
      %v2016 = vmul.f32 %v1908, %v2003
      %v2017 = vmul.f32 %v1909, %v2003
      %v2018 = vmul.f32 %v1910, %v2003
      %v2019 = vmul.f32 %v1911, %v2003
      %v2020 = vmul.f32 %v1912, %v2003
      %v2021 = vmul.f32 %v1913, %v2003
      %v2022 = vmul.f32 %v1914, %v2003
      %v2023 = vmul.f32 %v1915, %v2003
      %v2024 = vmul.f32 %v1916, %v2003
      %v2025 = vmul.f32 %v1917, %v2003
      %v2026 = vmul.f32 %v1918, %v2003
      %v2027 = vmul.f32 %v1919, %v2003
      %v2028 = vmul.f32 %v1920, %v2003
      %v2029 = vmul.f32 %v1921, %v2003
      %v2030 = vmul.f32 %v1922, %v2003
      %v2031 = vmul.f32 %v1923, %v2003
      %v2032 = vmul.f32 %v1924, %v2003
      %v2033 = vmul.f32 %v1925, %v2003
      %v2034 = vmul.f32 %v1926, %v2003
      %v2035 = vmul.f32 %v1927, %v2003
      %v2036 = vadd.f32 %v1971, %v2004
      %v2037 = vadd.f32 %v1972, %v2005
      %v2038 = vadd.f32 %v1973, %v2006
      %v2039 = vadd.f32 %v1974, %v2007
      %v2040 = vadd.f32 %v1975, %v2008
      %v2041 = vadd.f32 %v1976, %v2009
      %v2042 = vadd.f32 %v1977, %v2010
      %v2043 = vadd.f32 %v1978, %v2011
      %v2044 = vadd.f32 %v1979, %v2012
      %v2045 = vadd.f32 %v1980, %v2013
      %v2046 = vadd.f32 %v1981, %v2014
      %v2047 = vadd.f32 %v1982, %v2015
      %v2048 = vadd.f32 %v1983, %v2016
      %v2049 = vadd.f32 %v1984, %v2017
      %v2050 = vadd.f32 %v1985, %v2018
      %v2051 = vadd.f32 %v1986, %v2019
      %v2052 = vadd.f32 %v1987, %v2020
      %v2053 = vadd.f32 %v1988, %v2021
      %v2054 = vadd.f32 %v1989, %v2022
      %v2055 = vadd.f32 %v1990, %v2023
      %v2056 = vadd.f32 %v1991, %v2024
      %v2057 = vadd.f32 %v1992, %v2025
      %v2058 = vadd.f32 %v1993, %v2026
      %v2059 = vadd.f32 %v1994, %v2027
      %v2060 = vadd.f32 %v1995, %v2028
      %v2061 = vadd.f32 %v1996, %v2029
      %v2062 = vadd.f32 %v1997, %v2030
      %v2063 = vadd.f32 %v1998, %v2031
      %v2064 = vadd.f32 %v1999, %v2032
      %v2065 = vadd.f32 %v2000, %v2033
      %v2066 = vadd.f32 %v2001, %v2034
      %v2067 = vadd.f32 %v2002, %v2035
      %v2068 = vperm.slane %v388, 3
      %v2069 = vmul.f32 %v1898, %v2068
      %v2070 = vmul.f32 %v1899, %v2068
      %v2071 = vmul.f32 %v1900, %v2068
      %v2072 = vmul.f32 %v1901, %v2068
      %v2073 = vmul.f32 %v1902, %v2068
      %v2074 = vmul.f32 %v1903, %v2068
      %v2075 = vmul.f32 %v1904, %v2068
      %v2076 = vmul.f32 %v1905, %v2068
      %v2077 = vmul.f32 %v1906, %v2068
      %v2078 = vmul.f32 %v1907, %v2068
      %v2079 = vmul.f32 %v1908, %v2068
      %v2080 = vmul.f32 %v1909, %v2068
      %v2081 = vmul.f32 %v1910, %v2068
      %v2082 = vmul.f32 %v1911, %v2068
      %v2083 = vmul.f32 %v1912, %v2068
      %v2084 = vmul.f32 %v1913, %v2068
      %v2085 = vmul.f32 %v1914, %v2068
      %v2086 = vmul.f32 %v1915, %v2068
      %v2087 = vmul.f32 %v1916, %v2068
      %v2088 = vmul.f32 %v1917, %v2068
      %v2089 = vmul.f32 %v1918, %v2068
      %v2090 = vmul.f32 %v1919, %v2068
      %v2091 = vmul.f32 %v1920, %v2068
      %v2092 = vmul.f32 %v1921, %v2068
      %v2093 = vmul.f32 %v1922, %v2068
      %v2094 = vmul.f32 %v1923, %v2068
      %v2095 = vmul.f32 %v1924, %v2068
      %v2096 = vmul.f32 %v1925, %v2068
      %v2097 = vmul.f32 %v1926, %v2068
      %v2098 = vmul.f32 %v1927, %v2068
      %v2099 = vmul.f32 %v1928, %v2068
      %v2100 = vmul.f32 %v1929, %v2068
      %v2101 = vadd.f32 %v2036, %v2069
      %v2102 = vadd.f32 %v2037, %v2070
      %v2103 = vadd.f32 %v2038, %v2071
      %v2104 = vadd.f32 %v2039, %v2072
      %v2105 = vadd.f32 %v2040, %v2073
      %v2106 = vadd.f32 %v2041, %v2074
      %v2107 = vadd.f32 %v2042, %v2075
      %v2108 = vadd.f32 %v2043, %v2076
      %v2109 = vadd.f32 %v2044, %v2077
      %v2110 = vadd.f32 %v2045, %v2078
      %v2111 = vadd.f32 %v2046, %v2079
      %v2112 = vadd.f32 %v2047, %v2080
      %v2113 = vadd.f32 %v2048, %v2081
      %v2114 = vadd.f32 %v2049, %v2082
      %v2115 = vadd.f32 %v2050, %v2083
      %v2116 = vadd.f32 %v2051, %v2084
      %v2117 = vadd.f32 %v2052, %v2085
      %v2118 = vadd.f32 %v2053, %v2086
      %v2119 = vadd.f32 %v2054, %v2087
      %v2120 = vadd.f32 %v2055, %v2088
      %v2121 = vadd.f32 %v2056, %v2089
      %v2122 = vadd.f32 %v2057, %v2090
      %v2123 = vadd.f32 %v2058, %v2091
      %v2124 = vadd.f32 %v2059, %v2092
      %v2125 = vadd.f32 %v2060, %v2093
      %v2126 = vadd.f32 %v2061, %v2094
      %v2127 = vadd.f32 %v2062, %v2095
      %v2128 = vadd.f32 %v2063, %v2096
      %v2129 = vadd.f32 %v2064, %v2097
      %v2130 = vadd.f32 %v2065, %v2098
      %v2131 = vadd.f32 %v2066, %v2099
      %v2132 = vadd.f32 %v2067, %v2100
      %v2133 = vperm.slane %v389, 3
      %v2134 = vmul.f32 %v1900, %v2133
      %v2135 = vmul.f32 %v1901, %v2133
      %v2136 = vmul.f32 %v1902, %v2133
      %v2137 = vmul.f32 %v1903, %v2133
      %v2138 = vmul.f32 %v1904, %v2133
      %v2139 = vmul.f32 %v1905, %v2133
      %v2140 = vmul.f32 %v1906, %v2133
      %v2141 = vmul.f32 %v1907, %v2133
      %v2142 = vmul.f32 %v1908, %v2133
      %v2143 = vmul.f32 %v1909, %v2133
      %v2144 = vmul.f32 %v1910, %v2133
      %v2145 = vmul.f32 %v1911, %v2133
      %v2146 = vmul.f32 %v1912, %v2133
      %v2147 = vmul.f32 %v1913, %v2133
      %v2148 = vmul.f32 %v1914, %v2133
      %v2149 = vmul.f32 %v1915, %v2133
      %v2150 = vmul.f32 %v1916, %v2133
      %v2151 = vmul.f32 %v1917, %v2133
      %v2152 = vmul.f32 %v1918, %v2133
      %v2153 = vmul.f32 %v1919, %v2133
      %v2154 = vmul.f32 %v1920, %v2133
      %v2155 = vmul.f32 %v1921, %v2133
      %v2156 = vmul.f32 %v1922, %v2133
      %v2157 = vmul.f32 %v1923, %v2133
      %v2158 = vmul.f32 %v1924, %v2133
      %v2159 = vmul.f32 %v1925, %v2133
      %v2160 = vmul.f32 %v1926, %v2133
      %v2161 = vmul.f32 %v1927, %v2133
      %v2162 = vmul.f32 %v1928, %v2133
      %v2163 = vmul.f32 %v1929, %v2133
      %v2164 = vmul.f32 %v1930, %v2133
      %v2165 = vmul.f32 %v1931, %v2133
      %v2166 = vadd.f32 %v2101, %v2134
      %v2167 = vadd.f32 %v2102, %v2135
      %v2168 = vadd.f32 %v2103, %v2136
      %v2169 = vadd.f32 %v2104, %v2137
      %v2170 = vadd.f32 %v2105, %v2138
      %v2171 = vadd.f32 %v2106, %v2139
      %v2172 = vadd.f32 %v2107, %v2140
      %v2173 = vadd.f32 %v2108, %v2141
      %v2174 = vadd.f32 %v2109, %v2142
      %v2175 = vadd.f32 %v2110, %v2143
      %v2176 = vadd.f32 %v2111, %v2144
      %v2177 = vadd.f32 %v2112, %v2145
      %v2178 = vadd.f32 %v2113, %v2146
      %v2179 = vadd.f32 %v2114, %v2147
      %v2180 = vadd.f32 %v2115, %v2148
      %v2181 = vadd.f32 %v2116, %v2149
      %v2182 = vadd.f32 %v2117, %v2150
      %v2183 = vadd.f32 %v2118, %v2151
      %v2184 = vadd.f32 %v2119, %v2152
      %v2185 = vadd.f32 %v2120, %v2153
      %v2186 = vadd.f32 %v2121, %v2154
      %v2187 = vadd.f32 %v2122, %v2155
      %v2188 = vadd.f32 %v2123, %v2156
      %v2189 = vadd.f32 %v2124, %v2157
      %v2190 = vadd.f32 %v2125, %v2158
      %v2191 = vadd.f32 %v2126, %v2159
      %v2192 = vadd.f32 %v2127, %v2160
      %v2193 = vadd.f32 %v2128, %v2161
      %v2194 = vadd.f32 %v2129, %v2162
      %v2195 = vadd.f32 %v2130, %v2163
      %v2196 = vadd.f32 %v2131, %v2164
      %v2197 = vadd.f32 %v2132, %v2165
      %v2198 = vperm.slane %v390, 3
      %v2199 = vmul.f32 %v1902, %v2198
      %v2200 = vmul.f32 %v1903, %v2198
      %v2201 = vmul.f32 %v1904, %v2198
      %v2202 = vmul.f32 %v1905, %v2198
      %v2203 = vmul.f32 %v1906, %v2198
      %v2204 = vmul.f32 %v1907, %v2198
      %v2205 = vmul.f32 %v1908, %v2198
      %v2206 = vmul.f32 %v1909, %v2198
      %v2207 = vmul.f32 %v1910, %v2198
      %v2208 = vmul.f32 %v1911, %v2198
      %v2209 = vmul.f32 %v1912, %v2198
      %v2210 = vmul.f32 %v1913, %v2198
      %v2211 = vmul.f32 %v1914, %v2198
      %v2212 = vmul.f32 %v1915, %v2198
      %v2213 = vmul.f32 %v1916, %v2198
      %v2214 = vmul.f32 %v1917, %v2198
      %v2215 = vmul.f32 %v1918, %v2198
      %v2216 = vmul.f32 %v1919, %v2198
      %v2217 = vmul.f32 %v1920, %v2198
      %v2218 = vmul.f32 %v1921, %v2198
      %v2219 = vmul.f32 %v1922, %v2198
      %v2220 = vmul.f32 %v1923, %v2198
      %v2221 = vmul.f32 %v1924, %v2198
      %v2222 = vmul.f32 %v1925, %v2198
      %v2223 = vmul.f32 %v1926, %v2198
      %v2224 = vmul.f32 %v1927, %v2198
      %v2225 = vmul.f32 %v1928, %v2198
      %v2226 = vmul.f32 %v1929, %v2198
      %v2227 = vmul.f32 %v1930, %v2198
      %v2228 = vmul.f32 %v1931, %v2198
      %v2229 = vmul.f32 %v1932, %v2198
      %v2230 = vmul.f32 %v1933, %v2198
      %v2231 = vadd.f32 %v2166, %v2199
      %v2232 = vadd.f32 %v2167, %v2200
      %v2233 = vadd.f32 %v2168, %v2201
      %v2234 = vadd.f32 %v2169, %v2202
      %v2235 = vadd.f32 %v2170, %v2203
      %v2236 = vadd.f32 %v2171, %v2204
      %v2237 = vadd.f32 %v2172, %v2205
      %v2238 = vadd.f32 %v2173, %v2206
      %v2239 = vadd.f32 %v2174, %v2207
      %v2240 = vadd.f32 %v2175, %v2208
      %v2241 = vadd.f32 %v2176, %v2209
      %v2242 = vadd.f32 %v2177, %v2210
      %v2243 = vadd.f32 %v2178, %v2211
      %v2244 = vadd.f32 %v2179, %v2212
      %v2245 = vadd.f32 %v2180, %v2213
      %v2246 = vadd.f32 %v2181, %v2214
      %v2247 = vadd.f32 %v2182, %v2215
      %v2248 = vadd.f32 %v2183, %v2216
      %v2249 = vadd.f32 %v2184, %v2217
      %v2250 = vadd.f32 %v2185, %v2218
      %v2251 = vadd.f32 %v2186, %v2219
      %v2252 = vadd.f32 %v2187, %v2220
      %v2253 = vadd.f32 %v2188, %v2221
      %v2254 = vadd.f32 %v2189, %v2222
      %v2255 = vadd.f32 %v2190, %v2223
      %v2256 = vadd.f32 %v2191, %v2224
      %v2257 = vadd.f32 %v2192, %v2225
      %v2258 = vadd.f32 %v2193, %v2226
      %v2259 = vadd.f32 %v2194, %v2227
      %v2260 = vadd.f32 %v2195, %v2228
      %v2261 = vadd.f32 %v2196, %v2229
      %v2262 = vadd.f32 %v2197, %v2230
      %v2263 = vperm.slane %v391, 3
      %v2264 = vmul.f32 %v1904, %v2263
      %v2265 = vmul.f32 %v1905, %v2263
      %v2266 = vmul.f32 %v1906, %v2263
      %v2267 = vmul.f32 %v1907, %v2263
      %v2268 = vmul.f32 %v1908, %v2263
      %v2269 = vmul.f32 %v1909, %v2263
      %v2270 = vmul.f32 %v1910, %v2263
      %v2271 = vmul.f32 %v1911, %v2263
      %v2272 = vmul.f32 %v1912, %v2263
      %v2273 = vmul.f32 %v1913, %v2263
      %v2274 = vmul.f32 %v1914, %v2263
      %v2275 = vmul.f32 %v1915, %v2263
      %v2276 = vmul.f32 %v1916, %v2263
      %v2277 = vmul.f32 %v1917, %v2263
      %v2278 = vmul.f32 %v1918, %v2263
      %v2279 = vmul.f32 %v1919, %v2263
      %v2280 = vmul.f32 %v1920, %v2263
      %v2281 = vmul.f32 %v1921, %v2263
      %v2282 = vmul.f32 %v1922, %v2263
      %v2283 = vmul.f32 %v1923, %v2263
      %v2284 = vmul.f32 %v1924, %v2263
      %v2285 = vmul.f32 %v1925, %v2263
      %v2286 = vmul.f32 %v1926, %v2263
      %v2287 = vmul.f32 %v1927, %v2263
      %v2288 = vmul.f32 %v1928, %v2263
      %v2289 = vmul.f32 %v1929, %v2263
      %v2290 = vmul.f32 %v1930, %v2263
      %v2291 = vmul.f32 %v1931, %v2263
      %v2292 = vmul.f32 %v1932, %v2263
      %v2293 = vmul.f32 %v1933, %v2263
      %v2294 = vmul.f32 %v1934, %v2263
      %v2295 = vmul.f32 %v1935, %v2263
      %v2296 = vadd.f32 %v2231, %v2264
      %v2297 = vadd.f32 %v2232, %v2265
      %v2298 = vadd.f32 %v2233, %v2266
      %v2299 = vadd.f32 %v2234, %v2267
      %v2300 = vadd.f32 %v2235, %v2268
      %v2301 = vadd.f32 %v2236, %v2269
      %v2302 = vadd.f32 %v2237, %v2270
      %v2303 = vadd.f32 %v2238, %v2271
      %v2304 = vadd.f32 %v2239, %v2272
      %v2305 = vadd.f32 %v2240, %v2273
      %v2306 = vadd.f32 %v2241, %v2274
      %v2307 = vadd.f32 %v2242, %v2275
      %v2308 = vadd.f32 %v2243, %v2276
      %v2309 = vadd.f32 %v2244, %v2277
      %v2310 = vadd.f32 %v2245, %v2278
      %v2311 = vadd.f32 %v2246, %v2279
      %v2312 = vadd.f32 %v2247, %v2280
      %v2313 = vadd.f32 %v2248, %v2281
      %v2314 = vadd.f32 %v2249, %v2282
      %v2315 = vadd.f32 %v2250, %v2283
      %v2316 = vadd.f32 %v2251, %v2284
      %v2317 = vadd.f32 %v2252, %v2285
      %v2318 = vadd.f32 %v2253, %v2286
      %v2319 = vadd.f32 %v2254, %v2287
      %v2320 = vadd.f32 %v2255, %v2288
      %v2321 = vadd.f32 %v2256, %v2289
      %v2322 = vadd.f32 %v2257, %v2290
      %v2323 = vadd.f32 %v2258, %v2291
      %v2324 = vadd.f32 %v2259, %v2292
      %v2325 = vadd.f32 %v2260, %v2293
      %v2326 = vadd.f32 %v2261, %v2294
      %v2327 = vadd.f32 %v2262, %v2295
      %v2328 = vperm.slane %v392, 3
      %v2329 = vmul.f32 %v1906, %v2328
      %v2330 = vmul.f32 %v1907, %v2328
      %v2331 = vmul.f32 %v1908, %v2328
      %v2332 = vmul.f32 %v1909, %v2328
      %v2333 = vmul.f32 %v1910, %v2328
      %v2334 = vmul.f32 %v1911, %v2328
      %v2335 = vmul.f32 %v1912, %v2328
      %v2336 = vmul.f32 %v1913, %v2328
      %v2337 = vmul.f32 %v1914, %v2328
      %v2338 = vmul.f32 %v1915, %v2328
      %v2339 = vmul.f32 %v1916, %v2328
      %v2340 = vmul.f32 %v1917, %v2328
      %v2341 = vmul.f32 %v1918, %v2328
      %v2342 = vmul.f32 %v1919, %v2328
      %v2343 = vmul.f32 %v1920, %v2328
      %v2344 = vmul.f32 %v1921, %v2328
      %v2345 = vmul.f32 %v1922, %v2328
      %v2346 = vmul.f32 %v1923, %v2328
      %v2347 = vmul.f32 %v1924, %v2328
      %v2348 = vmul.f32 %v1925, %v2328
      %v2349 = vmul.f32 %v1926, %v2328
      %v2350 = vmul.f32 %v1927, %v2328
      %v2351 = vmul.f32 %v1928, %v2328
      %v2352 = vmul.f32 %v1929, %v2328
      %v2353 = vmul.f32 %v1930, %v2328
      %v2354 = vmul.f32 %v1931, %v2328
      %v2355 = vmul.f32 %v1932, %v2328
      %v2356 = vmul.f32 %v1933, %v2328
      %v2357 = vmul.f32 %v1934, %v2328
      %v2358 = vmul.f32 %v1935, %v2328
      %v2359 = vmul.f32 %v1936, %v2328
      %v2360 = vmul.f32 %v1937, %v2328
      %v2361 = vadd.f32 %v2296, %v2329
      %v2362 = vadd.f32 %v2297, %v2330
      %v2363 = vadd.f32 %v2298, %v2331
      %v2364 = vadd.f32 %v2299, %v2332
      %v2365 = vadd.f32 %v2300, %v2333
      %v2366 = vadd.f32 %v2301, %v2334
      %v2367 = vadd.f32 %v2302, %v2335
      %v2368 = vadd.f32 %v2303, %v2336
      %v2369 = vadd.f32 %v2304, %v2337
      %v2370 = vadd.f32 %v2305, %v2338
      %v2371 = vadd.f32 %v2306, %v2339
      %v2372 = vadd.f32 %v2307, %v2340
      %v2373 = vadd.f32 %v2308, %v2341
      %v2374 = vadd.f32 %v2309, %v2342
      %v2375 = vadd.f32 %v2310, %v2343
      %v2376 = vadd.f32 %v2311, %v2344
      %v2377 = vadd.f32 %v2312, %v2345
      %v2378 = vadd.f32 %v2313, %v2346
      %v2379 = vadd.f32 %v2314, %v2347
      %v2380 = vadd.f32 %v2315, %v2348
      %v2381 = vadd.f32 %v2316, %v2349
      %v2382 = vadd.f32 %v2317, %v2350
      %v2383 = vadd.f32 %v2318, %v2351
      %v2384 = vadd.f32 %v2319, %v2352
      %v2385 = vadd.f32 %v2320, %v2353
      %v2386 = vadd.f32 %v2321, %v2354
      %v2387 = vadd.f32 %v2322, %v2355
      %v2388 = vadd.f32 %v2323, %v2356
      %v2389 = vadd.f32 %v2324, %v2357
      %v2390 = vadd.f32 %v2325, %v2358
      %v2391 = vadd.f32 %v2326, %v2359
      %v2392 = vadd.f32 %v2327, %v2360
      %v2393 = vld [vmem:[#allocation2 + $0x9] sm:$0xff]
      %v2394 = vld [vmem:[#allocation2 + $0x11] sm:$0xff]
      %v2395 = vld [vmem:[#allocation2 + $0x29] sm:$0xff]
      %v2396 = vld [vmem:[#allocation2 + $0x31] sm:$0xff]
      %v2397 = vld [vmem:[#allocation2 + $0x49] sm:$0xff]
      %v2398 = vld [vmem:[#allocation2 + $0x51] sm:$0xff]
      %v2399 = vld [vmem:[#allocation2 + $0x69] sm:$0xff]
      %v2400 = vld [vmem:[#allocation2 + $0x71] sm:$0xff]
      %v2401 = vld [vmem:[#allocation2 + $0x89] sm:$0xff]
      %v2402 = vld [vmem:[#allocation2 + $0x91] sm:$0xff]
      %v2403 = vld [vmem:[#allocation2 + $0xa9] sm:$0xff]
      %v2404 = vld [vmem:[#allocation2 + $0xb1] sm:$0xff]
      %v2405 = vld [vmem:[#allocation2 + $0xc9] sm:$0xff]
      %v2406 = vld [vmem:[#allocation2 + $0xd1] sm:$0xff]
      %v2407 = vld [vmem:[#allocation2 + $0xe9] sm:$0xff]
      %v2408 = vld [vmem:[#allocation2 + $0xf1] sm:$0xff]
      %v2409 = vld [vmem:[#allocation2 + $0x109] sm:$0xff]
      %v2410 = vld [vmem:[#allocation2 + $0x111] sm:$0xff]
      %v2411 = vld [vmem:[#allocation2 + $0x129] sm:$0xff]
      %v2412 = vld [vmem:[#allocation2 + $0x131] sm:$0xff]
      %v2413 = vld [vmem:[#allocation2 + $0x149] sm:$0xff]
      %v2414 = vld [vmem:[#allocation2 + $0x151] sm:$0xff]
      %v2415 = vld [vmem:[#allocation2 + $0x169] sm:$0xff]
      %v2416 = vld [vmem:[#allocation2 + $0x171] sm:$0xff]
      %v2417 = vld [vmem:[#allocation2 + $0x189] sm:$0xff]
      %v2418 = vld [vmem:[#allocation2 + $0x191] sm:$0xff]
      %v2419 = vld [vmem:[#allocation2 + $0x1a9] sm:$0xff]
      %v2420 = vld [vmem:[#allocation2 + $0x1b1] sm:$0xff]
      %v2421 = vld [vmem:[#allocation2 + $0x1c9] sm:$0xff]
      %v2422 = vld [vmem:[#allocation2 + $0x1d1] sm:$0xff]
      %v2423 = vld [vmem:[#allocation2 + $0x1e9] sm:$0xff]
      %v2424 = vld [vmem:[#allocation2 + $0x1f1] sm:$0xff]
      %v2425 = vld [vmem:[#allocation2 + $0x209] sm:$0xff]
      %v2426 = vld [vmem:[#allocation2 + $0x211] sm:$0xff]
      %v2427 = vld [vmem:[#allocation2 + $0x229] sm:$0xff]
      %v2428 = vld [vmem:[#allocation2 + $0x231] sm:$0xff]
      %v2429 = vld [vmem:[#allocation2 + $0x249] sm:$0xff]
      %v2430 = vld [vmem:[#allocation2 + $0x251] sm:$0xff]
      %v2431 = vld [vmem:[#allocation2 + $0x269] sm:$0xff]
      %v2432 = vld [vmem:[#allocation2 + $0x271] sm:$0xff]
      %v2433 = vld [vmem:[#allocation2 + $0x289] sm:$0xff]
      %v2434 = vld [vmem:[#allocation2 + $0x291] sm:$0xff]
      %v2435 = vld [vmem:[#allocation2 + $0x2a9] sm:$0xff]
      %v2436 = vld [vmem:[#allocation2 + $0x2b1] sm:$0xff]
      %v2437 = vperm.slane %v386, 4
      %v2438 = vmul.f32 %v2393, %v2437
      %v2439 = vmul.f32 %v2394, %v2437
      %v2440 = vmul.f32 %v2395, %v2437
      %v2441 = vmul.f32 %v2396, %v2437
      %v2442 = vmul.f32 %v2397, %v2437
      %v2443 = vmul.f32 %v2398, %v2437
      %v2444 = vmul.f32 %v2399, %v2437
      %v2445 = vmul.f32 %v2400, %v2437
      %v2446 = vmul.f32 %v2401, %v2437
      %v2447 = vmul.f32 %v2402, %v2437
      %v2448 = vmul.f32 %v2403, %v2437
      %v2449 = vmul.f32 %v2404, %v2437
      %v2450 = vmul.f32 %v2405, %v2437
      %v2451 = vmul.f32 %v2406, %v2437
      %v2452 = vmul.f32 %v2407, %v2437
      %v2453 = vmul.f32 %v2408, %v2437
      %v2454 = vmul.f32 %v2409, %v2437
      %v2455 = vmul.f32 %v2410, %v2437
      %v2456 = vmul.f32 %v2411, %v2437
      %v2457 = vmul.f32 %v2412, %v2437
      %v2458 = vmul.f32 %v2413, %v2437
      %v2459 = vmul.f32 %v2414, %v2437
      %v2460 = vmul.f32 %v2415, %v2437
      %v2461 = vmul.f32 %v2416, %v2437
      %v2462 = vmul.f32 %v2417, %v2437
      %v2463 = vmul.f32 %v2418, %v2437
      %v2464 = vmul.f32 %v2419, %v2437
      %v2465 = vmul.f32 %v2420, %v2437
      %v2466 = vmul.f32 %v2421, %v2437
      %v2467 = vmul.f32 %v2422, %v2437
      %v2468 = vmul.f32 %v2423, %v2437
      %v2469 = vmul.f32 %v2424, %v2437
      %v2470 = vadd.f32 %v2361, %v2438
      %v2471 = vadd.f32 %v2362, %v2439
      %v2472 = vadd.f32 %v2363, %v2440
      %v2473 = vadd.f32 %v2364, %v2441
      %v2474 = vadd.f32 %v2365, %v2442
      %v2475 = vadd.f32 %v2366, %v2443
      %v2476 = vadd.f32 %v2367, %v2444
      %v2477 = vadd.f32 %v2368, %v2445
      %v2478 = vadd.f32 %v2369, %v2446
      %v2479 = vadd.f32 %v2370, %v2447
      %v2480 = vadd.f32 %v2371, %v2448
      %v2481 = vadd.f32 %v2372, %v2449
      %v2482 = vadd.f32 %v2373, %v2450
      %v2483 = vadd.f32 %v2374, %v2451
      %v2484 = vadd.f32 %v2375, %v2452
      %v2485 = vadd.f32 %v2376, %v2453
      %v2486 = vadd.f32 %v2377, %v2454
      %v2487 = vadd.f32 %v2378, %v2455
      %v2488 = vadd.f32 %v2379, %v2456
      %v2489 = vadd.f32 %v2380, %v2457
      %v2490 = vadd.f32 %v2381, %v2458
      %v2491 = vadd.f32 %v2382, %v2459
      %v2492 = vadd.f32 %v2383, %v2460
      %v2493 = vadd.f32 %v2384, %v2461
      %v2494 = vadd.f32 %v2385, %v2462
      %v2495 = vadd.f32 %v2386, %v2463
      %v2496 = vadd.f32 %v2387, %v2464
      %v2497 = vadd.f32 %v2388, %v2465
      %v2498 = vadd.f32 %v2389, %v2466
      %v2499 = vadd.f32 %v2390, %v2467
      %v2500 = vadd.f32 %v2391, %v2468
      %v2501 = vadd.f32 %v2392, %v2469
      %v2502 = vperm.slane %v387, 4
      %v2503 = vmul.f32 %v2395, %v2502
      %v2504 = vmul.f32 %v2396, %v2502
      %v2505 = vmul.f32 %v2397, %v2502
      %v2506 = vmul.f32 %v2398, %v2502
      %v2507 = vmul.f32 %v2399, %v2502
      %v2508 = vmul.f32 %v2400, %v2502
      %v2509 = vmul.f32 %v2401, %v2502
      %v2510 = vmul.f32 %v2402, %v2502
      %v2511 = vmul.f32 %v2403, %v2502
      %v2512 = vmul.f32 %v2404, %v2502
      %v2513 = vmul.f32 %v2405, %v2502
      %v2514 = vmul.f32 %v2406, %v2502
      %v2515 = vmul.f32 %v2407, %v2502
      %v2516 = vmul.f32 %v2408, %v2502
      %v2517 = vmul.f32 %v2409, %v2502
      %v2518 = vmul.f32 %v2410, %v2502
      %v2519 = vmul.f32 %v2411, %v2502
      %v2520 = vmul.f32 %v2412, %v2502
      %v2521 = vmul.f32 %v2413, %v2502
      %v2522 = vmul.f32 %v2414, %v2502
      %v2523 = vmul.f32 %v2415, %v2502
      %v2524 = vmul.f32 %v2416, %v2502
      %v2525 = vmul.f32 %v2417, %v2502
      %v2526 = vmul.f32 %v2418, %v2502
      %v2527 = vmul.f32 %v2419, %v2502
      %v2528 = vmul.f32 %v2420, %v2502
      %v2529 = vmul.f32 %v2421, %v2502
      %v2530 = vmul.f32 %v2422, %v2502
      %v2531 = vmul.f32 %v2423, %v2502
      %v2532 = vmul.f32 %v2424, %v2502
      %v2533 = vmul.f32 %v2425, %v2502
      %v2534 = vmul.f32 %v2426, %v2502
      %v2535 = vadd.f32 %v2470, %v2503
      %v2536 = vadd.f32 %v2471, %v2504
      %v2537 = vadd.f32 %v2472, %v2505
      %v2538 = vadd.f32 %v2473, %v2506
      %v2539 = vadd.f32 %v2474, %v2507
      %v2540 = vadd.f32 %v2475, %v2508
      %v2541 = vadd.f32 %v2476, %v2509
      %v2542 = vadd.f32 %v2477, %v2510
      %v2543 = vadd.f32 %v2478, %v2511
      %v2544 = vadd.f32 %v2479, %v2512
      %v2545 = vadd.f32 %v2480, %v2513
      %v2546 = vadd.f32 %v2481, %v2514
      %v2547 = vadd.f32 %v2482, %v2515
      %v2548 = vadd.f32 %v2483, %v2516
      %v2549 = vadd.f32 %v2484, %v2517
      %v2550 = vadd.f32 %v2485, %v2518
      %v2551 = vadd.f32 %v2486, %v2519
      %v2552 = vadd.f32 %v2487, %v2520
      %v2553 = vadd.f32 %v2488, %v2521
      %v2554 = vadd.f32 %v2489, %v2522
      %v2555 = vadd.f32 %v2490, %v2523
      %v2556 = vadd.f32 %v2491, %v2524
      %v2557 = vadd.f32 %v2492, %v2525
      %v2558 = vadd.f32 %v2493, %v2526
      %v2559 = vadd.f32 %v2494, %v2527
      %v2560 = vadd.f32 %v2495, %v2528
      %v2561 = vadd.f32 %v2496, %v2529
      %v2562 = vadd.f32 %v2497, %v2530
      %v2563 = vadd.f32 %v2498, %v2531
      %v2564 = vadd.f32 %v2499, %v2532
      %v2565 = vadd.f32 %v2500, %v2533
      %v2566 = vadd.f32 %v2501, %v2534
      %v2567 = vperm.slane %v388, 4
      %v2568 = vmul.f32 %v2397, %v2567
      %v2569 = vmul.f32 %v2398, %v2567
      %v2570 = vmul.f32 %v2399, %v2567
      %v2571 = vmul.f32 %v2400, %v2567
      %v2572 = vmul.f32 %v2401, %v2567
      %v2573 = vmul.f32 %v2402, %v2567
      %v2574 = vmul.f32 %v2403, %v2567
      %v2575 = vmul.f32 %v2404, %v2567
      %v2576 = vmul.f32 %v2405, %v2567
      %v2577 = vmul.f32 %v2406, %v2567
      %v2578 = vmul.f32 %v2407, %v2567
      %v2579 = vmul.f32 %v2408, %v2567
      %v2580 = vmul.f32 %v2409, %v2567
      %v2581 = vmul.f32 %v2410, %v2567
      %v2582 = vmul.f32 %v2411, %v2567
      %v2583 = vmul.f32 %v2412, %v2567
      %v2584 = vmul.f32 %v2413, %v2567
      %v2585 = vmul.f32 %v2414, %v2567
      %v2586 = vmul.f32 %v2415, %v2567
      %v2587 = vmul.f32 %v2416, %v2567
      %v2588 = vmul.f32 %v2417, %v2567
      %v2589 = vmul.f32 %v2418, %v2567
      %v2590 = vmul.f32 %v2419, %v2567
      %v2591 = vmul.f32 %v2420, %v2567
      %v2592 = vmul.f32 %v2421, %v2567
      %v2593 = vmul.f32 %v2422, %v2567
      %v2594 = vmul.f32 %v2423, %v2567
      %v2595 = vmul.f32 %v2424, %v2567
      %v2596 = vmul.f32 %v2425, %v2567
      %v2597 = vmul.f32 %v2426, %v2567
      %v2598 = vmul.f32 %v2427, %v2567
      %v2599 = vmul.f32 %v2428, %v2567
      %v2600 = vadd.f32 %v2535, %v2568
      %v2601 = vadd.f32 %v2536, %v2569
      %v2602 = vadd.f32 %v2537, %v2570
      %v2603 = vadd.f32 %v2538, %v2571
      %v2604 = vadd.f32 %v2539, %v2572
      %v2605 = vadd.f32 %v2540, %v2573
      %v2606 = vadd.f32 %v2541, %v2574
      %v2607 = vadd.f32 %v2542, %v2575
      %v2608 = vadd.f32 %v2543, %v2576
      %v2609 = vadd.f32 %v2544, %v2577
      %v2610 = vadd.f32 %v2545, %v2578
      %v2611 = vadd.f32 %v2546, %v2579
      %v2612 = vadd.f32 %v2547, %v2580
      %v2613 = vadd.f32 %v2548, %v2581
      %v2614 = vadd.f32 %v2549, %v2582
      %v2615 = vadd.f32 %v2550, %v2583
      %v2616 = vadd.f32 %v2551, %v2584
      %v2617 = vadd.f32 %v2552, %v2585
      %v2618 = vadd.f32 %v2553, %v2586
      %v2619 = vadd.f32 %v2554, %v2587
      %v2620 = vadd.f32 %v2555, %v2588
      %v2621 = vadd.f32 %v2556, %v2589
      %v2622 = vadd.f32 %v2557, %v2590
      %v2623 = vadd.f32 %v2558, %v2591
      %v2624 = vadd.f32 %v2559, %v2592
      %v2625 = vadd.f32 %v2560, %v2593
      %v2626 = vadd.f32 %v2561, %v2594
      %v2627 = vadd.f32 %v2562, %v2595
      %v2628 = vadd.f32 %v2563, %v2596
      %v2629 = vadd.f32 %v2564, %v2597
      %v2630 = vadd.f32 %v2565, %v2598
      %v2631 = vadd.f32 %v2566, %v2599
      %v2632 = vperm.slane %v389, 4
      %v2633 = vmul.f32 %v2399, %v2632
      %v2634 = vmul.f32 %v2400, %v2632
      %v2635 = vmul.f32 %v2401, %v2632
      %v2636 = vmul.f32 %v2402, %v2632
      %v2637 = vmul.f32 %v2403, %v2632
      %v2638 = vmul.f32 %v2404, %v2632
      %v2639 = vmul.f32 %v2405, %v2632
      %v2640 = vmul.f32 %v2406, %v2632
      %v2641 = vmul.f32 %v2407, %v2632
      %v2642 = vmul.f32 %v2408, %v2632
      %v2643 = vmul.f32 %v2409, %v2632
      %v2644 = vmul.f32 %v2410, %v2632
      %v2645 = vmul.f32 %v2411, %v2632
      %v2646 = vmul.f32 %v2412, %v2632
      %v2647 = vmul.f32 %v2413, %v2632
      %v2648 = vmul.f32 %v2414, %v2632
      %v2649 = vmul.f32 %v2415, %v2632
      %v2650 = vmul.f32 %v2416, %v2632
      %v2651 = vmul.f32 %v2417, %v2632
      %v2652 = vmul.f32 %v2418, %v2632
      %v2653 = vmul.f32 %v2419, %v2632
      %v2654 = vmul.f32 %v2420, %v2632
      %v2655 = vmul.f32 %v2421, %v2632
      %v2656 = vmul.f32 %v2422, %v2632
      %v2657 = vmul.f32 %v2423, %v2632
      %v2658 = vmul.f32 %v2424, %v2632
      %v2659 = vmul.f32 %v2425, %v2632
      %v2660 = vmul.f32 %v2426, %v2632
      %v2661 = vmul.f32 %v2427, %v2632
      %v2662 = vmul.f32 %v2428, %v2632
      %v2663 = vmul.f32 %v2429, %v2632
      %v2664 = vmul.f32 %v2430, %v2632
      %v2665 = vadd.f32 %v2600, %v2633
      %v2666 = vadd.f32 %v2601, %v2634
      %v2667 = vadd.f32 %v2602, %v2635
      %v2668 = vadd.f32 %v2603, %v2636
      %v2669 = vadd.f32 %v2604, %v2637
      %v2670 = vadd.f32 %v2605, %v2638
      %v2671 = vadd.f32 %v2606, %v2639
      %v2672 = vadd.f32 %v2607, %v2640
      %v2673 = vadd.f32 %v2608, %v2641
      %v2674 = vadd.f32 %v2609, %v2642
      %v2675 = vadd.f32 %v2610, %v2643
      %v2676 = vadd.f32 %v2611, %v2644
      %v2677 = vadd.f32 %v2612, %v2645
      %v2678 = vadd.f32 %v2613, %v2646
      %v2679 = vadd.f32 %v2614, %v2647
      %v2680 = vadd.f32 %v2615, %v2648
      %v2681 = vadd.f32 %v2616, %v2649
      %v2682 = vadd.f32 %v2617, %v2650
      %v2683 = vadd.f32 %v2618, %v2651
      %v2684 = vadd.f32 %v2619, %v2652
      %v2685 = vadd.f32 %v2620, %v2653
      %v2686 = vadd.f32 %v2621, %v2654
      %v2687 = vadd.f32 %v2622, %v2655
      %v2688 = vadd.f32 %v2623, %v2656
      %v2689 = vadd.f32 %v2624, %v2657
      %v2690 = vadd.f32 %v2625, %v2658
      %v2691 = vadd.f32 %v2626, %v2659
      %v2692 = vadd.f32 %v2627, %v2660
      %v2693 = vadd.f32 %v2628, %v2661
      %v2694 = vadd.f32 %v2629, %v2662
      %v2695 = vadd.f32 %v2630, %v2663
      %v2696 = vadd.f32 %v2631, %v2664
      %v2697 = vperm.slane %v390, 4
      %v2698 = vmul.f32 %v2401, %v2697
      %v2699 = vmul.f32 %v2402, %v2697
      %v2700 = vmul.f32 %v2403, %v2697
      %v2701 = vmul.f32 %v2404, %v2697
      %v2702 = vmul.f32 %v2405, %v2697
      %v2703 = vmul.f32 %v2406, %v2697
      %v2704 = vmul.f32 %v2407, %v2697
      %v2705 = vmul.f32 %v2408, %v2697
      %v2706 = vmul.f32 %v2409, %v2697
      %v2707 = vmul.f32 %v2410, %v2697
      %v2708 = vmul.f32 %v2411, %v2697
      %v2709 = vmul.f32 %v2412, %v2697
      %v2710 = vmul.f32 %v2413, %v2697
      %v2711 = vmul.f32 %v2414, %v2697
      %v2712 = vmul.f32 %v2415, %v2697
      %v2713 = vmul.f32 %v2416, %v2697
      %v2714 = vmul.f32 %v2417, %v2697
      %v2715 = vmul.f32 %v2418, %v2697
      %v2716 = vmul.f32 %v2419, %v2697
      %v2717 = vmul.f32 %v2420, %v2697
      %v2718 = vmul.f32 %v2421, %v2697
      %v2719 = vmul.f32 %v2422, %v2697
      %v2720 = vmul.f32 %v2423, %v2697
      %v2721 = vmul.f32 %v2424, %v2697
      %v2722 = vmul.f32 %v2425, %v2697
      %v2723 = vmul.f32 %v2426, %v2697
      %v2724 = vmul.f32 %v2427, %v2697
      %v2725 = vmul.f32 %v2428, %v2697
      %v2726 = vmul.f32 %v2429, %v2697
      %v2727 = vmul.f32 %v2430, %v2697
      %v2728 = vmul.f32 %v2431, %v2697
      %v2729 = vmul.f32 %v2432, %v2697
      %v2730 = vadd.f32 %v2665, %v2698
      %v2731 = vadd.f32 %v2666, %v2699
      %v2732 = vadd.f32 %v2667, %v2700
      %v2733 = vadd.f32 %v2668, %v2701
      %v2734 = vadd.f32 %v2669, %v2702
      %v2735 = vadd.f32 %v2670, %v2703
      %v2736 = vadd.f32 %v2671, %v2704
      %v2737 = vadd.f32 %v2672, %v2705
      %v2738 = vadd.f32 %v2673, %v2706
      %v2739 = vadd.f32 %v2674, %v2707
      %v2740 = vadd.f32 %v2675, %v2708
      %v2741 = vadd.f32 %v2676, %v2709
      %v2742 = vadd.f32 %v2677, %v2710
      %v2743 = vadd.f32 %v2678, %v2711
      %v2744 = vadd.f32 %v2679, %v2712
      %v2745 = vadd.f32 %v2680, %v2713
      %v2746 = vadd.f32 %v2681, %v2714
      %v2747 = vadd.f32 %v2682, %v2715
      %v2748 = vadd.f32 %v2683, %v2716
      %v2749 = vadd.f32 %v2684, %v2717
      %v2750 = vadd.f32 %v2685, %v2718
      %v2751 = vadd.f32 %v2686, %v2719
      %v2752 = vadd.f32 %v2687, %v2720
      %v2753 = vadd.f32 %v2688, %v2721
      %v2754 = vadd.f32 %v2689, %v2722
      %v2755 = vadd.f32 %v2690, %v2723
      %v2756 = vadd.f32 %v2691, %v2724
      %v2757 = vadd.f32 %v2692, %v2725
      %v2758 = vadd.f32 %v2693, %v2726
      %v2759 = vadd.f32 %v2694, %v2727
      %v2760 = vadd.f32 %v2695, %v2728
      %v2761 = vadd.f32 %v2696, %v2729
      %v2762 = vperm.slane %v391, 4
      %v2763 = vmul.f32 %v2403, %v2762
      %v2764 = vmul.f32 %v2404, %v2762
      %v2765 = vmul.f32 %v2405, %v2762
      %v2766 = vmul.f32 %v2406, %v2762
      %v2767 = vmul.f32 %v2407, %v2762
      %v2768 = vmul.f32 %v2408, %v2762
      %v2769 = vmul.f32 %v2409, %v2762
      %v2770 = vmul.f32 %v2410, %v2762
      %v2771 = vmul.f32 %v2411, %v2762
      %v2772 = vmul.f32 %v2412, %v2762
      %v2773 = vmul.f32 %v2413, %v2762
      %v2774 = vmul.f32 %v2414, %v2762
      %v2775 = vmul.f32 %v2415, %v2762
      %v2776 = vmul.f32 %v2416, %v2762
      %v2777 = vmul.f32 %v2417, %v2762
      %v2778 = vmul.f32 %v2418, %v2762
      %v2779 = vmul.f32 %v2419, %v2762
      %v2780 = vmul.f32 %v2420, %v2762
      %v2781 = vmul.f32 %v2421, %v2762
      %v2782 = vmul.f32 %v2422, %v2762
      %v2783 = vmul.f32 %v2423, %v2762
      %v2784 = vmul.f32 %v2424, %v2762
      %v2785 = vmul.f32 %v2425, %v2762
      %v2786 = vmul.f32 %v2426, %v2762
      %v2787 = vmul.f32 %v2427, %v2762
      %v2788 = vmul.f32 %v2428, %v2762
      %v2789 = vmul.f32 %v2429, %v2762
      %v2790 = vmul.f32 %v2430, %v2762
      %v2791 = vmul.f32 %v2431, %v2762
      %v2792 = vmul.f32 %v2432, %v2762
      %v2793 = vmul.f32 %v2433, %v2762
      %v2794 = vmul.f32 %v2434, %v2762
      %v2795 = vadd.f32 %v2730, %v2763
      %v2796 = vadd.f32 %v2731, %v2764
      %v2797 = vadd.f32 %v2732, %v2765
      %v2798 = vadd.f32 %v2733, %v2766
      %v2799 = vadd.f32 %v2734, %v2767
      %v2800 = vadd.f32 %v2735, %v2768
      %v2801 = vadd.f32 %v2736, %v2769
      %v2802 = vadd.f32 %v2737, %v2770
      %v2803 = vadd.f32 %v2738, %v2771
      %v2804 = vadd.f32 %v2739, %v2772
      %v2805 = vadd.f32 %v2740, %v2773
      %v2806 = vadd.f32 %v2741, %v2774
      %v2807 = vadd.f32 %v2742, %v2775
      %v2808 = vadd.f32 %v2743, %v2776
      %v2809 = vadd.f32 %v2744, %v2777
      %v2810 = vadd.f32 %v2745, %v2778
      %v2811 = vadd.f32 %v2746, %v2779
      %v2812 = vadd.f32 %v2747, %v2780
      %v2813 = vadd.f32 %v2748, %v2781
      %v2814 = vadd.f32 %v2749, %v2782
      %v2815 = vadd.f32 %v2750, %v2783
      %v2816 = vadd.f32 %v2751, %v2784
      %v2817 = vadd.f32 %v2752, %v2785
      %v2818 = vadd.f32 %v2753, %v2786
      %v2819 = vadd.f32 %v2754, %v2787
      %v2820 = vadd.f32 %v2755, %v2788
      %v2821 = vadd.f32 %v2756, %v2789
      %v2822 = vadd.f32 %v2757, %v2790
      %v2823 = vadd.f32 %v2758, %v2791
      %v2824 = vadd.f32 %v2759, %v2792
      %v2825 = vadd.f32 %v2760, %v2793
      %v2826 = vadd.f32 %v2761, %v2794
      %v2827 = vperm.slane %v392, 4
      %v2828 = vmul.f32 %v2405, %v2827
      %v2829 = vmul.f32 %v2406, %v2827
      %v2830 = vmul.f32 %v2407, %v2827
      %v2831 = vmul.f32 %v2408, %v2827
      %v2832 = vmul.f32 %v2409, %v2827
      %v2833 = vmul.f32 %v2410, %v2827
      %v2834 = vmul.f32 %v2411, %v2827
      %v2835 = vmul.f32 %v2412, %v2827
      %v2836 = vmul.f32 %v2413, %v2827
      %v2837 = vmul.f32 %v2414, %v2827
      %v2838 = vmul.f32 %v2415, %v2827
      %v2839 = vmul.f32 %v2416, %v2827
      %v2840 = vmul.f32 %v2417, %v2827
      %v2841 = vmul.f32 %v2418, %v2827
      %v2842 = vmul.f32 %v2419, %v2827
      %v2843 = vmul.f32 %v2420, %v2827
      %v2844 = vmul.f32 %v2421, %v2827
      %v2845 = vmul.f32 %v2422, %v2827
      %v2846 = vmul.f32 %v2423, %v2827
      %v2847 = vmul.f32 %v2424, %v2827
      %v2848 = vmul.f32 %v2425, %v2827
      %v2849 = vmul.f32 %v2426, %v2827
      %v2850 = vmul.f32 %v2427, %v2827
      %v2851 = vmul.f32 %v2428, %v2827
      %v2852 = vmul.f32 %v2429, %v2827
      %v2853 = vmul.f32 %v2430, %v2827
      %v2854 = vmul.f32 %v2431, %v2827
      %v2855 = vmul.f32 %v2432, %v2827
      %v2856 = vmul.f32 %v2433, %v2827
      %v2857 = vmul.f32 %v2434, %v2827
      %v2858 = vmul.f32 %v2435, %v2827
      %v2859 = vmul.f32 %v2436, %v2827
      %v2860 = vadd.f32 %v2795, %v2828
      %v2861 = vadd.f32 %v2796, %v2829
      %v2862 = vadd.f32 %v2797, %v2830
      %v2863 = vadd.f32 %v2798, %v2831
      %v2864 = vadd.f32 %v2799, %v2832
      %v2865 = vadd.f32 %v2800, %v2833
      %v2866 = vadd.f32 %v2801, %v2834
      %v2867 = vadd.f32 %v2802, %v2835
      %v2868 = vadd.f32 %v2803, %v2836
      %v2869 = vadd.f32 %v2804, %v2837
      %v2870 = vadd.f32 %v2805, %v2838
      %v2871 = vadd.f32 %v2806, %v2839
      %v2872 = vadd.f32 %v2807, %v2840
      %v2873 = vadd.f32 %v2808, %v2841
      %v2874 = vadd.f32 %v2809, %v2842
      %v2875 = vadd.f32 %v2810, %v2843
      %v2876 = vadd.f32 %v2811, %v2844
      %v2877 = vadd.f32 %v2812, %v2845
      %v2878 = vadd.f32 %v2813, %v2846
      %v2879 = vadd.f32 %v2814, %v2847
      %v2880 = vadd.f32 %v2815, %v2848
      %v2881 = vadd.f32 %v2816, %v2849
      %v2882 = vadd.f32 %v2817, %v2850
      %v2883 = vadd.f32 %v2818, %v2851
      %v2884 = vadd.f32 %v2819, %v2852
      %v2885 = vadd.f32 %v2820, %v2853
      %v2886 = vadd.f32 %v2821, %v2854
      %v2887 = vadd.f32 %v2822, %v2855
      %v2888 = vadd.f32 %v2823, %v2856
      %v2889 = vadd.f32 %v2824, %v2857
      %v2890 = vadd.f32 %v2825, %v2858
      %v2891 = vadd.f32 %v2826, %v2859
      %v2892 = vld [vmem:[#allocation2 + $0xa] sm:$0xff]
      %v2893 = vld [vmem:[#allocation2 + $0x12] sm:$0xff]
      %v2894 = vld [vmem:[#allocation2 + $0x2a] sm:$0xff]
      %v2895 = vld [vmem:[#allocation2 + $0x32] sm:$0xff]
      %v2896 = vld [vmem:[#allocation2 + $0x4a] sm:$0xff]
      %v2897 = vld [vmem:[#allocation2 + $0x52] sm:$0xff]
      %v2898 = vld [vmem:[#allocation2 + $0x6a] sm:$0xff]
      %v2899 = vld [vmem:[#allocation2 + $0x72] sm:$0xff]
      %v2900 = vld [vmem:[#allocation2 + $0x8a] sm:$0xff]
      %v2901 = vld [vmem:[#allocation2 + $0x92] sm:$0xff]
      %v2902 = vld [vmem:[#allocation2 + $0xaa] sm:$0xff]
      %v2903 = vld [vmem:[#allocation2 + $0xb2] sm:$0xff]
      %v2904 = vld [vmem:[#allocation2 + $0xca] sm:$0xff]
      %v2905 = vld [vmem:[#allocation2 + $0xd2] sm:$0xff]
      %v2906 = vld [vmem:[#allocation2 + $0xea] sm:$0xff]
      %v2907 = vld [vmem:[#allocation2 + $0xf2] sm:$0xff]
      %v2908 = vld [vmem:[#allocation2 + $0x10a] sm:$0xff]
      %v2909 = vld [vmem:[#allocation2 + $0x112] sm:$0xff]
      %v2910 = vld [vmem:[#allocation2 + $0x12a] sm:$0xff]
      %v2911 = vld [vmem:[#allocation2 + $0x132] sm:$0xff]
      %v2912 = vld [vmem:[#allocation2 + $0x14a] sm:$0xff]
      %v2913 = vld [vmem:[#allocation2 + $0x152] sm:$0xff]
      %v2914 = vld [vmem:[#allocation2 + $0x16a] sm:$0xff]
      %v2915 = vld [vmem:[#allocation2 + $0x172] sm:$0xff]
      %v2916 = vld [vmem:[#allocation2 + $0x18a] sm:$0xff]
      %v2917 = vld [vmem:[#allocation2 + $0x192] sm:$0xff]
      %v2918 = vld [vmem:[#allocation2 + $0x1aa] sm:$0xff]
      %v2919 = vld [vmem:[#allocation2 + $0x1b2] sm:$0xff]
      %v2920 = vld [vmem:[#allocation2 + $0x1ca] sm:$0xff]
      %v2921 = vld [vmem:[#allocation2 + $0x1d2] sm:$0xff]
      %v2922 = vld [vmem:[#allocation2 + $0x1ea] sm:$0xff]
      %v2923 = vld [vmem:[#allocation2 + $0x1f2] sm:$0xff]
      %v2924 = vld [vmem:[#allocation2 + $0x20a] sm:$0xff]
      %v2925 = vld [vmem:[#allocation2 + $0x212] sm:$0xff]
      %v2926 = vld [vmem:[#allocation2 + $0x22a] sm:$0xff]
      %v2927 = vld [vmem:[#allocation2 + $0x232] sm:$0xff]
      %v2928 = vld [vmem:[#allocation2 + $0x24a] sm:$0xff]
      %v2929 = vld [vmem:[#allocation2 + $0x252] sm:$0xff]
      %v2930 = vld [vmem:[#allocation2 + $0x26a] sm:$0xff]
      %v2931 = vld [vmem:[#allocation2 + $0x272] sm:$0xff]
      %v2932 = vld [vmem:[#allocation2 + $0x28a] sm:$0xff]
      %v2933 = vld [vmem:[#allocation2 + $0x292] sm:$0xff]
      %v2934 = vld [vmem:[#allocation2 + $0x2aa] sm:$0xff]
      %v2935 = vld [vmem:[#allocation2 + $0x2b2] sm:$0xff]
      %v2936 = vperm.slane %v386, 5
      %v2937 = vmul.f32 %v2892, %v2936
      %v2938 = vmul.f32 %v2893, %v2936
      %v2939 = vmul.f32 %v2894, %v2936
      %v2940 = vmul.f32 %v2895, %v2936
      %v2941 = vmul.f32 %v2896, %v2936
      %v2942 = vmul.f32 %v2897, %v2936
      %v2943 = vmul.f32 %v2898, %v2936
      %v2944 = vmul.f32 %v2899, %v2936
      %v2945 = vmul.f32 %v2900, %v2936
      %v2946 = vmul.f32 %v2901, %v2936
      %v2947 = vmul.f32 %v2902, %v2936
      %v2948 = vmul.f32 %v2903, %v2936
      %v2949 = vmul.f32 %v2904, %v2936
      %v2950 = vmul.f32 %v2905, %v2936
      %v2951 = vmul.f32 %v2906, %v2936
      %v2952 = vmul.f32 %v2907, %v2936
      %v2953 = vmul.f32 %v2908, %v2936
      %v2954 = vmul.f32 %v2909, %v2936
      %v2955 = vmul.f32 %v2910, %v2936
      %v2956 = vmul.f32 %v2911, %v2936
      %v2957 = vmul.f32 %v2912, %v2936
      %v2958 = vmul.f32 %v2913, %v2936
      %v2959 = vmul.f32 %v2914, %v2936
      %v2960 = vmul.f32 %v2915, %v2936
      %v2961 = vmul.f32 %v2916, %v2936
      %v2962 = vmul.f32 %v2917, %v2936
      %v2963 = vmul.f32 %v2918, %v2936
      %v2964 = vmul.f32 %v2919, %v2936
      %v2965 = vmul.f32 %v2920, %v2936
      %v2966 = vmul.f32 %v2921, %v2936
      %v2967 = vmul.f32 %v2922, %v2936
      %v2968 = vmul.f32 %v2923, %v2936
      %v2969 = vadd.f32 %v2860, %v2937
      %v2970 = vadd.f32 %v2861, %v2938
      %v2971 = vadd.f32 %v2862, %v2939
      %v2972 = vadd.f32 %v2863, %v2940
      %v2973 = vadd.f32 %v2864, %v2941
      %v2974 = vadd.f32 %v2865, %v2942
      %v2975 = vadd.f32 %v2866, %v2943
      %v2976 = vadd.f32 %v2867, %v2944
      %v2977 = vadd.f32 %v2868, %v2945
      %v2978 = vadd.f32 %v2869, %v2946
      %v2979 = vadd.f32 %v2870, %v2947
      %v2980 = vadd.f32 %v2871, %v2948
      %v2981 = vadd.f32 %v2872, %v2949
      %v2982 = vadd.f32 %v2873, %v2950
      %v2983 = vadd.f32 %v2874, %v2951
      %v2984 = vadd.f32 %v2875, %v2952
      %v2985 = vadd.f32 %v2876, %v2953
      %v2986 = vadd.f32 %v2877, %v2954
      %v2987 = vadd.f32 %v2878, %v2955
      %v2988 = vadd.f32 %v2879, %v2956
      %v2989 = vadd.f32 %v2880, %v2957
      %v2990 = vadd.f32 %v2881, %v2958
      %v2991 = vadd.f32 %v2882, %v2959
      %v2992 = vadd.f32 %v2883, %v2960
      %v2993 = vadd.f32 %v2884, %v2961
      %v2994 = vadd.f32 %v2885, %v2962
      %v2995 = vadd.f32 %v2886, %v2963
      %v2996 = vadd.f32 %v2887, %v2964
      %v2997 = vadd.f32 %v2888, %v2965
      %v2998 = vadd.f32 %v2889, %v2966
      %v2999 = vadd.f32 %v2890, %v2967
      %v3000 = vadd.f32 %v2891, %v2968
      %v3001 = vperm.slane %v387, 5
      %v3002 = vmul.f32 %v2894, %v3001
      %v3003 = vmul.f32 %v2895, %v3001
      %v3004 = vmul.f32 %v2896, %v3001
      %v3005 = vmul.f32 %v2897, %v3001
      %v3006 = vmul.f32 %v2898, %v3001
      %v3007 = vmul.f32 %v2899, %v3001
      %v3008 = vmul.f32 %v2900, %v3001
      %v3009 = vmul.f32 %v2901, %v3001
      %v3010 = vmul.f32 %v2902, %v3001
      %v3011 = vmul.f32 %v2903, %v3001
      %v3012 = vmul.f32 %v2904, %v3001
      %v3013 = vmul.f32 %v2905, %v3001
      %v3014 = vmul.f32 %v2906, %v3001
      %v3015 = vmul.f32 %v2907, %v3001
      %v3016 = vmul.f32 %v2908, %v3001
      %v3017 = vmul.f32 %v2909, %v3001
      %v3018 = vmul.f32 %v2910, %v3001
      %v3019 = vmul.f32 %v2911, %v3001
      %v3020 = vmul.f32 %v2912, %v3001
      %v3021 = vmul.f32 %v2913, %v3001
      %v3022 = vmul.f32 %v2914, %v3001
      %v3023 = vmul.f32 %v2915, %v3001
      %v3024 = vmul.f32 %v2916, %v3001
      %v3025 = vmul.f32 %v2917, %v3001
      %v3026 = vmul.f32 %v2918, %v3001
      %v3027 = vmul.f32 %v2919, %v3001
      %v3028 = vmul.f32 %v2920, %v3001
      %v3029 = vmul.f32 %v2921, %v3001
      %v3030 = vmul.f32 %v2922, %v3001
      %v3031 = vmul.f32 %v2923, %v3001
      %v3032 = vmul.f32 %v2924, %v3001
      %v3033 = vmul.f32 %v2925, %v3001
      %v3034 = vadd.f32 %v2969, %v3002
      %v3035 = vadd.f32 %v2970, %v3003
      %v3036 = vadd.f32 %v2971, %v3004
      %v3037 = vadd.f32 %v2972, %v3005
      %v3038 = vadd.f32 %v2973, %v3006
      %v3039 = vadd.f32 %v2974, %v3007
      %v3040 = vadd.f32 %v2975, %v3008
      %v3041 = vadd.f32 %v2976, %v3009
      %v3042 = vadd.f32 %v2977, %v3010
      %v3043 = vadd.f32 %v2978, %v3011
      %v3044 = vadd.f32 %v2979, %v3012
      %v3045 = vadd.f32 %v2980, %v3013
      %v3046 = vadd.f32 %v2981, %v3014
      %v3047 = vadd.f32 %v2982, %v3015
      %v3048 = vadd.f32 %v2983, %v3016
      %v3049 = vadd.f32 %v2984, %v3017
      %v3050 = vadd.f32 %v2985, %v3018
      %v3051 = vadd.f32 %v2986, %v3019
      %v3052 = vadd.f32 %v2987, %v3020
      %v3053 = vadd.f32 %v2988, %v3021
      %v3054 = vadd.f32 %v2989, %v3022
      %v3055 = vadd.f32 %v2990, %v3023
      %v3056 = vadd.f32 %v2991, %v3024
      %v3057 = vadd.f32 %v2992, %v3025
      %v3058 = vadd.f32 %v2993, %v3026
      %v3059 = vadd.f32 %v2994, %v3027
      %v3060 = vadd.f32 %v2995, %v3028
      %v3061 = vadd.f32 %v2996, %v3029
      %v3062 = vadd.f32 %v2997, %v3030
      %v3063 = vadd.f32 %v2998, %v3031
      %v3064 = vadd.f32 %v2999, %v3032
      %v3065 = vadd.f32 %v3000, %v3033
      %v3066 = vperm.slane %v388, 5
      %v3067 = vmul.f32 %v2896, %v3066
      %v3068 = vmul.f32 %v2897, %v3066
      %v3069 = vmul.f32 %v2898, %v3066
      %v3070 = vmul.f32 %v2899, %v3066
      %v3071 = vmul.f32 %v2900, %v3066
      %v3072 = vmul.f32 %v2901, %v3066
      %v3073 = vmul.f32 %v2902, %v3066
      %v3074 = vmul.f32 %v2903, %v3066
      %v3075 = vmul.f32 %v2904, %v3066
      %v3076 = vmul.f32 %v2905, %v3066
      %v3077 = vmul.f32 %v2906, %v3066
      %v3078 = vmul.f32 %v2907, %v3066
      %v3079 = vmul.f32 %v2908, %v3066
      %v3080 = vmul.f32 %v2909, %v3066
      %v3081 = vmul.f32 %v2910, %v3066
      %v3082 = vmul.f32 %v2911, %v3066
      %v3083 = vmul.f32 %v2912, %v3066
      %v3084 = vmul.f32 %v2913, %v3066
      %v3085 = vmul.f32 %v2914, %v3066
      %v3086 = vmul.f32 %v2915, %v3066
      %v3087 = vmul.f32 %v2916, %v3066
      %v3088 = vmul.f32 %v2917, %v3066
      %v3089 = vmul.f32 %v2918, %v3066
      %v3090 = vmul.f32 %v2919, %v3066
      %v3091 = vmul.f32 %v2920, %v3066
      %v3092 = vmul.f32 %v2921, %v3066
      %v3093 = vmul.f32 %v2922, %v3066
      %v3094 = vmul.f32 %v2923, %v3066
      %v3095 = vmul.f32 %v2924, %v3066
      %v3096 = vmul.f32 %v2925, %v3066
      %v3097 = vmul.f32 %v2926, %v3066
      %v3098 = vmul.f32 %v2927, %v3066
      %v3099 = vadd.f32 %v3034, %v3067
      %v3100 = vadd.f32 %v3035, %v3068
      %v3101 = vadd.f32 %v3036, %v3069
      %v3102 = vadd.f32 %v3037, %v3070
      %v3103 = vadd.f32 %v3038, %v3071
      %v3104 = vadd.f32 %v3039, %v3072
      %v3105 = vadd.f32 %v3040, %v3073
      %v3106 = vadd.f32 %v3041, %v3074
      %v3107 = vadd.f32 %v3042, %v3075
      %v3108 = vadd.f32 %v3043, %v3076
      %v3109 = vadd.f32 %v3044, %v3077
      %v3110 = vadd.f32 %v3045, %v3078
      %v3111 = vadd.f32 %v3046, %v3079
      %v3112 = vadd.f32 %v3047, %v3080
      %v3113 = vadd.f32 %v3048, %v3081
      %v3114 = vadd.f32 %v3049, %v3082
      %v3115 = vadd.f32 %v3050, %v3083
      %v3116 = vadd.f32 %v3051, %v3084
      %v3117 = vadd.f32 %v3052, %v3085
      %v3118 = vadd.f32 %v3053, %v3086
      %v3119 = vadd.f32 %v3054, %v3087
      %v3120 = vadd.f32 %v3055, %v3088
      %v3121 = vadd.f32 %v3056, %v3089
      %v3122 = vadd.f32 %v3057, %v3090
      %v3123 = vadd.f32 %v3058, %v3091
      %v3124 = vadd.f32 %v3059, %v3092
      %v3125 = vadd.f32 %v3060, %v3093
      %v3126 = vadd.f32 %v3061, %v3094
      %v3127 = vadd.f32 %v3062, %v3095
      %v3128 = vadd.f32 %v3063, %v3096
      %v3129 = vadd.f32 %v3064, %v3097
      %v3130 = vadd.f32 %v3065, %v3098
      %v3131 = vperm.slane %v389, 5
      %v3132 = vmul.f32 %v2898, %v3131
      %v3133 = vmul.f32 %v2899, %v3131
      %v3134 = vmul.f32 %v2900, %v3131
      %v3135 = vmul.f32 %v2901, %v3131
      %v3136 = vmul.f32 %v2902, %v3131
      %v3137 = vmul.f32 %v2903, %v3131
      %v3138 = vmul.f32 %v2904, %v3131
      %v3139 = vmul.f32 %v2905, %v3131
      %v3140 = vmul.f32 %v2906, %v3131
      %v3141 = vmul.f32 %v2907, %v3131
      %v3142 = vmul.f32 %v2908, %v3131
      %v3143 = vmul.f32 %v2909, %v3131
      %v3144 = vmul.f32 %v2910, %v3131
      %v3145 = vmul.f32 %v2911, %v3131
      %v3146 = vmul.f32 %v2912, %v3131
      %v3147 = vmul.f32 %v2913, %v3131
      %v3148 = vmul.f32 %v2914, %v3131
      %v3149 = vmul.f32 %v2915, %v3131
      %v3150 = vmul.f32 %v2916, %v3131
      %v3151 = vmul.f32 %v2917, %v3131
      %v3152 = vmul.f32 %v2918, %v3131
      %v3153 = vmul.f32 %v2919, %v3131
      %v3154 = vmul.f32 %v2920, %v3131
      %v3155 = vmul.f32 %v2921, %v3131
      %v3156 = vmul.f32 %v2922, %v3131
      %v3157 = vmul.f32 %v2923, %v3131
      %v3158 = vmul.f32 %v2924, %v3131
      %v3159 = vmul.f32 %v2925, %v3131
      %v3160 = vmul.f32 %v2926, %v3131
      %v3161 = vmul.f32 %v2927, %v3131
      %v3162 = vmul.f32 %v2928, %v3131
      %v3163 = vmul.f32 %v2929, %v3131
      %v3164 = vadd.f32 %v3099, %v3132
      %v3165 = vadd.f32 %v3100, %v3133
      %v3166 = vadd.f32 %v3101, %v3134
      %v3167 = vadd.f32 %v3102, %v3135
      %v3168 = vadd.f32 %v3103, %v3136
      %v3169 = vadd.f32 %v3104, %v3137
      %v3170 = vadd.f32 %v3105, %v3138
      %v3171 = vadd.f32 %v3106, %v3139
      %v3172 = vadd.f32 %v3107, %v3140
      %v3173 = vadd.f32 %v3108, %v3141
      %v3174 = vadd.f32 %v3109, %v3142
      %v3175 = vadd.f32 %v3110, %v3143
      %v3176 = vadd.f32 %v3111, %v3144
      %v3177 = vadd.f32 %v3112, %v3145
      %v3178 = vadd.f32 %v3113, %v3146
      %v3179 = vadd.f32 %v3114, %v3147
      %v3180 = vadd.f32 %v3115, %v3148
      %v3181 = vadd.f32 %v3116, %v3149
      %v3182 = vadd.f32 %v3117, %v3150
      %v3183 = vadd.f32 %v3118, %v3151
      %v3184 = vadd.f32 %v3119, %v3152
      %v3185 = vadd.f32 %v3120, %v3153
      %v3186 = vadd.f32 %v3121, %v3154
      %v3187 = vadd.f32 %v3122, %v3155
      %v3188 = vadd.f32 %v3123, %v3156
      %v3189 = vadd.f32 %v3124, %v3157
      %v3190 = vadd.f32 %v3125, %v3158
      %v3191 = vadd.f32 %v3126, %v3159
      %v3192 = vadd.f32 %v3127, %v3160
      %v3193 = vadd.f32 %v3128, %v3161
      %v3194 = vadd.f32 %v3129, %v3162
      %v3195 = vadd.f32 %v3130, %v3163
      %v3196 = vperm.slane %v390, 5
      %v3197 = vmul.f32 %v2900, %v3196
      %v3198 = vmul.f32 %v2901, %v3196
      %v3199 = vmul.f32 %v2902, %v3196
      %v3200 = vmul.f32 %v2903, %v3196
      %v3201 = vmul.f32 %v2904, %v3196
      %v3202 = vmul.f32 %v2905, %v3196
      %v3203 = vmul.f32 %v2906, %v3196
      %v3204 = vmul.f32 %v2907, %v3196
      %v3205 = vmul.f32 %v2908, %v3196
      %v3206 = vmul.f32 %v2909, %v3196
      %v3207 = vmul.f32 %v2910, %v3196
      %v3208 = vmul.f32 %v2911, %v3196
      %v3209 = vmul.f32 %v2912, %v3196
      %v3210 = vmul.f32 %v2913, %v3196
      %v3211 = vmul.f32 %v2914, %v3196
      %v3212 = vmul.f32 %v2915, %v3196
      %v3213 = vmul.f32 %v2916, %v3196
      %v3214 = vmul.f32 %v2917, %v3196
      %v3215 = vmul.f32 %v2918, %v3196
      %v3216 = vmul.f32 %v2919, %v3196
      %v3217 = vmul.f32 %v2920, %v3196
      %v3218 = vmul.f32 %v2921, %v3196
      %v3219 = vmul.f32 %v2922, %v3196
      %v3220 = vmul.f32 %v2923, %v3196
      %v3221 = vmul.f32 %v2924, %v3196
      %v3222 = vmul.f32 %v2925, %v3196
      %v3223 = vmul.f32 %v2926, %v3196
      %v3224 = vmul.f32 %v2927, %v3196
      %v3225 = vmul.f32 %v2928, %v3196
      %v3226 = vmul.f32 %v2929, %v3196
      %v3227 = vmul.f32 %v2930, %v3196
      %v3228 = vmul.f32 %v2931, %v3196
      %v3229 = vadd.f32 %v3164, %v3197
      %v3230 = vadd.f32 %v3165, %v3198
      %v3231 = vadd.f32 %v3166, %v3199
      %v3232 = vadd.f32 %v3167, %v3200
      %v3233 = vadd.f32 %v3168, %v3201
      %v3234 = vadd.f32 %v3169, %v3202
      %v3235 = vadd.f32 %v3170, %v3203
      %v3236 = vadd.f32 %v3171, %v3204
      %v3237 = vadd.f32 %v3172, %v3205
      %v3238 = vadd.f32 %v3173, %v3206
      %v3239 = vadd.f32 %v3174, %v3207
      %v3240 = vadd.f32 %v3175, %v3208
      %v3241 = vadd.f32 %v3176, %v3209
      %v3242 = vadd.f32 %v3177, %v3210
      %v3243 = vadd.f32 %v3178, %v3211
      %v3244 = vadd.f32 %v3179, %v3212
      %v3245 = vadd.f32 %v3180, %v3213
      %v3246 = vadd.f32 %v3181, %v3214
      %v3247 = vadd.f32 %v3182, %v3215
      %v3248 = vadd.f32 %v3183, %v3216
      %v3249 = vadd.f32 %v3184, %v3217
      %v3250 = vadd.f32 %v3185, %v3218
      %v3251 = vadd.f32 %v3186, %v3219
      %v3252 = vadd.f32 %v3187, %v3220
      %v3253 = vadd.f32 %v3188, %v3221
      %v3254 = vadd.f32 %v3189, %v3222
      %v3255 = vadd.f32 %v3190, %v3223
      %v3256 = vadd.f32 %v3191, %v3224
      %v3257 = vadd.f32 %v3192, %v3225
      %v3258 = vadd.f32 %v3193, %v3226
      %v3259 = vadd.f32 %v3194, %v3227
      %v3260 = vadd.f32 %v3195, %v3228
      %v3261 = vperm.slane %v391, 5
      %v3262 = vmul.f32 %v2902, %v3261
      %v3263 = vmul.f32 %v2903, %v3261
      %v3264 = vmul.f32 %v2904, %v3261
      %v3265 = vmul.f32 %v2905, %v3261
      %v3266 = vmul.f32 %v2906, %v3261
      %v3267 = vmul.f32 %v2907, %v3261
      %v3268 = vmul.f32 %v2908, %v3261
      %v3269 = vmul.f32 %v2909, %v3261
      %v3270 = vmul.f32 %v2910, %v3261
      %v3271 = vmul.f32 %v2911, %v3261
      %v3272 = vmul.f32 %v2912, %v3261
      %v3273 = vmul.f32 %v2913, %v3261
      %v3274 = vmul.f32 %v2914, %v3261
      %v3275 = vmul.f32 %v2915, %v3261
      %v3276 = vmul.f32 %v2916, %v3261
      %v3277 = vmul.f32 %v2917, %v3261
      %v3278 = vmul.f32 %v2918, %v3261
      %v3279 = vmul.f32 %v2919, %v3261
      %v3280 = vmul.f32 %v2920, %v3261
      %v3281 = vmul.f32 %v2921, %v3261
      %v3282 = vmul.f32 %v2922, %v3261
      %v3283 = vmul.f32 %v2923, %v3261
      %v3284 = vmul.f32 %v2924, %v3261
      %v3285 = vmul.f32 %v2925, %v3261
      %v3286 = vmul.f32 %v2926, %v3261
      %v3287 = vmul.f32 %v2927, %v3261
      %v3288 = vmul.f32 %v2928, %v3261
      %v3289 = vmul.f32 %v2929, %v3261
      %v3290 = vmul.f32 %v2930, %v3261
      %v3291 = vmul.f32 %v2931, %v3261
      %v3292 = vmul.f32 %v2932, %v3261
      %v3293 = vmul.f32 %v2933, %v3261
      %v3294 = vadd.f32 %v3229, %v3262
      %v3295 = vadd.f32 %v3230, %v3263
      %v3296 = vadd.f32 %v3231, %v3264
      %v3297 = vadd.f32 %v3232, %v3265
      %v3298 = vadd.f32 %v3233, %v3266
      %v3299 = vadd.f32 %v3234, %v3267
      %v3300 = vadd.f32 %v3235, %v3268
      %v3301 = vadd.f32 %v3236, %v3269
      %v3302 = vadd.f32 %v3237, %v3270
      %v3303 = vadd.f32 %v3238, %v3271
      %v3304 = vadd.f32 %v3239, %v3272
      %v3305 = vadd.f32 %v3240, %v3273
      %v3306 = vadd.f32 %v3241, %v3274
      %v3307 = vadd.f32 %v3242, %v3275
      %v3308 = vadd.f32 %v3243, %v3276
      %v3309 = vadd.f32 %v3244, %v3277
      %v3310 = vadd.f32 %v3245, %v3278
      %v3311 = vadd.f32 %v3246, %v3279
      %v3312 = vadd.f32 %v3247, %v3280
      %v3313 = vadd.f32 %v3248, %v3281
      %v3314 = vadd.f32 %v3249, %v3282
      %v3315 = vadd.f32 %v3250, %v3283
      %v3316 = vadd.f32 %v3251, %v3284
      %v3317 = vadd.f32 %v3252, %v3285
      %v3318 = vadd.f32 %v3253, %v3286
      %v3319 = vadd.f32 %v3254, %v3287
      %v3320 = vadd.f32 %v3255, %v3288
      %v3321 = vadd.f32 %v3256, %v3289
      %v3322 = vadd.f32 %v3257, %v3290
      %v3323 = vadd.f32 %v3258, %v3291
      %v3324 = vadd.f32 %v3259, %v3292
      %v3325 = vadd.f32 %v3260, %v3293
      %v3326 = vperm.slane %v392, 5
      %v3327 = vmul.f32 %v2904, %v3326
      %v3328 = vmul.f32 %v2905, %v3326
      %v3329 = vmul.f32 %v2906, %v3326
      %v3330 = vmul.f32 %v2907, %v3326
      %v3331 = vmul.f32 %v2908, %v3326
      %v3332 = vmul.f32 %v2909, %v3326
      %v3333 = vmul.f32 %v2910, %v3326
      %v3334 = vmul.f32 %v2911, %v3326
      %v3335 = vmul.f32 %v2912, %v3326
      %v3336 = vmul.f32 %v2913, %v3326
      %v3337 = vmul.f32 %v2914, %v3326
      %v3338 = vmul.f32 %v2915, %v3326
      %v3339 = vmul.f32 %v2916, %v3326
      %v3340 = vmul.f32 %v2917, %v3326
      %v3341 = vmul.f32 %v2918, %v3326
      %v3342 = vmul.f32 %v2919, %v3326
      %v3343 = vmul.f32 %v2920, %v3326
      %v3344 = vmul.f32 %v2921, %v3326
      %v3345 = vmul.f32 %v2922, %v3326
      %v3346 = vmul.f32 %v2923, %v3326
      %v3347 = vmul.f32 %v2924, %v3326
      %v3348 = vmul.f32 %v2925, %v3326
      %v3349 = vmul.f32 %v2926, %v3326
      %v3350 = vmul.f32 %v2927, %v3326
      %v3351 = vmul.f32 %v2928, %v3326
      %v3352 = vmul.f32 %v2929, %v3326
      %v3353 = vmul.f32 %v2930, %v3326
      %v3354 = vmul.f32 %v2931, %v3326
      %v3355 = vmul.f32 %v2932, %v3326
      %v3356 = vmul.f32 %v2933, %v3326
      %v3357 = vmul.f32 %v2934, %v3326
      %v3358 = vmul.f32 %v2935, %v3326
      %v3359 = vadd.f32 %v3294, %v3327
      %v3360 = vadd.f32 %v3295, %v3328
      %v3361 = vadd.f32 %v3296, %v3329
      %v3362 = vadd.f32 %v3297, %v3330
      %v3363 = vadd.f32 %v3298, %v3331
      %v3364 = vadd.f32 %v3299, %v3332
      %v3365 = vadd.f32 %v3300, %v3333
      %v3366 = vadd.f32 %v3301, %v3334
      %v3367 = vadd.f32 %v3302, %v3335
      %v3368 = vadd.f32 %v3303, %v3336
      %v3369 = vadd.f32 %v3304, %v3337
      %v3370 = vadd.f32 %v3305, %v3338
      %v3371 = vadd.f32 %v3306, %v3339
      %v3372 = vadd.f32 %v3307, %v3340
      %v3373 = vadd.f32 %v3308, %v3341
      %v3374 = vadd.f32 %v3309, %v3342
      %v3375 = vadd.f32 %v3310, %v3343
      %v3376 = vadd.f32 %v3311, %v3344
      %v3377 = vadd.f32 %v3312, %v3345
      %v3378 = vadd.f32 %v3313, %v3346
      %v3379 = vadd.f32 %v3314, %v3347
      %v3380 = vadd.f32 %v3315, %v3348
      %v3381 = vadd.f32 %v3316, %v3349
      %v3382 = vadd.f32 %v3317, %v3350
      %v3383 = vadd.f32 %v3318, %v3351
      %v3384 = vadd.f32 %v3319, %v3352
      %v3385 = vadd.f32 %v3320, %v3353
      %v3386 = vadd.f32 %v3321, %v3354
      %v3387 = vadd.f32 %v3322, %v3355
      %v3388 = vadd.f32 %v3323, %v3356
      %v3389 = vadd.f32 %v3324, %v3357
      %v3390 = vadd.f32 %v3325, %v3358
      %v3391 = vld [vmem:[#allocation2 + $0xb] sm:$0xff]
      %v3392 = vld [vmem:[#allocation2 + $0x13] sm:$0xff]
      %v3393 = vld [vmem:[#allocation2 + $0x2b] sm:$0xff]
      %v3394 = vld [vmem:[#allocation2 + $0x33] sm:$0xff]
      %v3395 = vld [vmem:[#allocation2 + $0x4b] sm:$0xff]
      %v3396 = vld [vmem:[#allocation2 + $0x53] sm:$0xff]
      %v3397 = vld [vmem:[#allocation2 + $0x6b] sm:$0xff]
      %v3398 = vld [vmem:[#allocation2 + $0x73] sm:$0xff]
      %v3399 = vld [vmem:[#allocation2 + $0x8b] sm:$0xff]
      %v3400 = vld [vmem:[#allocation2 + $0x93] sm:$0xff]
      %v3401 = vld [vmem:[#allocation2 + $0xab] sm:$0xff]
      %v3402 = vld [vmem:[#allocation2 + $0xb3] sm:$0xff]
      %v3403 = vld [vmem:[#allocation2 + $0xcb] sm:$0xff]
      %v3404 = vld [vmem:[#allocation2 + $0xd3] sm:$0xff]
      %v3405 = vld [vmem:[#allocation2 + $0xeb] sm:$0xff]
      %v3406 = vld [vmem:[#allocation2 + $0xf3] sm:$0xff]
      %v3407 = vld [vmem:[#allocation2 + $0x10b] sm:$0xff]
      %v3408 = vld [vmem:[#allocation2 + $0x113] sm:$0xff]
      %v3409 = vld [vmem:[#allocation2 + $0x12b] sm:$0xff]
      %v3410 = vld [vmem:[#allocation2 + $0x133] sm:$0xff]
      %v3411 = vld [vmem:[#allocation2 + $0x14b] sm:$0xff]
      %v3412 = vld [vmem:[#allocation2 + $0x153] sm:$0xff]
      %v3413 = vld [vmem:[#allocation2 + $0x16b] sm:$0xff]
      %v3414 = vld [vmem:[#allocation2 + $0x173] sm:$0xff]
      %v3415 = vld [vmem:[#allocation2 + $0x18b] sm:$0xff]
      %v3416 = vld [vmem:[#allocation2 + $0x193] sm:$0xff]
      %v3417 = vld [vmem:[#allocation2 + $0x1ab] sm:$0xff]
      %v3418 = vld [vmem:[#allocation2 + $0x1b3] sm:$0xff]
      %v3419 = vld [vmem:[#allocation2 + $0x1cb] sm:$0xff]
      %v3420 = vld [vmem:[#allocation2 + $0x1d3] sm:$0xff]
      %v3421 = vld [vmem:[#allocation2 + $0x1eb] sm:$0xff]
      %v3422 = vld [vmem:[#allocation2 + $0x1f3] sm:$0xff]
      %v3423 = vld [vmem:[#allocation2 + $0x20b] sm:$0xff]
      %v3424 = vld [vmem:[#allocation2 + $0x213] sm:$0xff]
      %v3425 = vld [vmem:[#allocation2 + $0x22b] sm:$0xff]
      %v3426 = vld [vmem:[#allocation2 + $0x233] sm:$0xff]
      %v3427 = vld [vmem:[#allocation2 + $0x24b] sm:$0xff]
      %v3428 = vld [vmem:[#allocation2 + $0x253] sm:$0xff]
      %v3429 = vld [vmem:[#allocation2 + $0x26b] sm:$0xff]
      %v3430 = vld [vmem:[#allocation2 + $0x273] sm:$0xff]
      %v3431 = vld [vmem:[#allocation2 + $0x28b] sm:$0xff]
      %v3432 = vld [vmem:[#allocation2 + $0x293] sm:$0xff]
      %v3433 = vld [vmem:[#allocation2 + $0x2ab] sm:$0xff]
      %v3434 = vld [vmem:[#allocation2 + $0x2b3] sm:$0xff]
      %v3435 = vperm.slane %v386, 6
      %v3436 = vmul.f32 %v3391, %v3435
      %v3437 = vmul.f32 %v3392, %v3435
      %v3438 = vmul.f32 %v3393, %v3435
      %v3439 = vmul.f32 %v3394, %v3435
      %v3440 = vmul.f32 %v3395, %v3435
      %v3441 = vmul.f32 %v3396, %v3435
      %v3442 = vmul.f32 %v3397, %v3435
      %v3443 = vmul.f32 %v3398, %v3435
      %v3444 = vmul.f32 %v3399, %v3435
      %v3445 = vmul.f32 %v3400, %v3435
      %v3446 = vmul.f32 %v3401, %v3435
      %v3447 = vmul.f32 %v3402, %v3435
      %v3448 = vmul.f32 %v3403, %v3435
      %v3449 = vmul.f32 %v3404, %v3435
      %v3450 = vmul.f32 %v3405, %v3435
      %v3451 = vmul.f32 %v3406, %v3435
      %v3452 = vmul.f32 %v3407, %v3435
      %v3453 = vmul.f32 %v3408, %v3435
      %v3454 = vmul.f32 %v3409, %v3435
      %v3455 = vmul.f32 %v3410, %v3435
      %v3456 = vmul.f32 %v3411, %v3435
      %v3457 = vmul.f32 %v3412, %v3435
      %v3458 = vmul.f32 %v3413, %v3435
      %v3459 = vmul.f32 %v3414, %v3435
      %v3460 = vmul.f32 %v3415, %v3435
      %v3461 = vmul.f32 %v3416, %v3435
      %v3462 = vmul.f32 %v3417, %v3435
      %v3463 = vmul.f32 %v3418, %v3435
      %v3464 = vmul.f32 %v3419, %v3435
      %v3465 = vmul.f32 %v3420, %v3435
      %v3466 = vmul.f32 %v3421, %v3435
      %v3467 = vmul.f32 %v3422, %v3435
      %v3468 = vadd.f32 %v3359, %v3436
      %v3469 = vadd.f32 %v3360, %v3437
      %v3470 = vadd.f32 %v3361, %v3438
      %v3471 = vadd.f32 %v3362, %v3439
      %v3472 = vadd.f32 %v3363, %v3440
      %v3473 = vadd.f32 %v3364, %v3441
      %v3474 = vadd.f32 %v3365, %v3442
      %v3475 = vadd.f32 %v3366, %v3443
      %v3476 = vadd.f32 %v3367, %v3444
      %v3477 = vadd.f32 %v3368, %v3445
      %v3478 = vadd.f32 %v3369, %v3446
      %v3479 = vadd.f32 %v3370, %v3447
      %v3480 = vadd.f32 %v3371, %v3448
      %v3481 = vadd.f32 %v3372, %v3449
      %v3482 = vadd.f32 %v3373, %v3450
      %v3483 = vadd.f32 %v3374, %v3451
      %v3484 = vadd.f32 %v3375, %v3452
      %v3485 = vadd.f32 %v3376, %v3453
      %v3486 = vadd.f32 %v3377, %v3454
      %v3487 = vadd.f32 %v3378, %v3455
      %v3488 = vadd.f32 %v3379, %v3456
      %v3489 = vadd.f32 %v3380, %v3457
      %v3490 = vadd.f32 %v3381, %v3458
      %v3491 = vadd.f32 %v3382, %v3459
      %v3492 = vadd.f32 %v3383, %v3460
      %v3493 = vadd.f32 %v3384, %v3461
      %v3494 = vadd.f32 %v3385, %v3462
      %v3495 = vadd.f32 %v3386, %v3463
      %v3496 = vadd.f32 %v3387, %v3464
      %v3497 = vadd.f32 %v3388, %v3465
      %v3498 = vadd.f32 %v3389, %v3466
      %v3499 = vadd.f32 %v3390, %v3467
      %v3500 = vperm.slane %v387, 6
      %v3501 = vmul.f32 %v3393, %v3500
      %v3502 = vmul.f32 %v3394, %v3500
      %v3503 = vmul.f32 %v3395, %v3500
      %v3504 = vmul.f32 %v3396, %v3500
      %v3505 = vmul.f32 %v3397, %v3500
      %v3506 = vmul.f32 %v3398, %v3500
      %v3507 = vmul.f32 %v3399, %v3500
      %v3508 = vmul.f32 %v3400, %v3500
      %v3509 = vmul.f32 %v3401, %v3500
      %v3510 = vmul.f32 %v3402, %v3500
      %v3511 = vmul.f32 %v3403, %v3500
      %v3512 = vmul.f32 %v3404, %v3500
      %v3513 = vmul.f32 %v3405, %v3500
      %v3514 = vmul.f32 %v3406, %v3500
      %v3515 = vmul.f32 %v3407, %v3500
      %v3516 = vmul.f32 %v3408, %v3500
      %v3517 = vmul.f32 %v3409, %v3500
      %v3518 = vmul.f32 %v3410, %v3500
      %v3519 = vmul.f32 %v3411, %v3500
      %v3520 = vmul.f32 %v3412, %v3500
      %v3521 = vmul.f32 %v3413, %v3500
      %v3522 = vmul.f32 %v3414, %v3500
      %v3523 = vmul.f32 %v3415, %v3500
      %v3524 = vmul.f32 %v3416, %v3500
      %v3525 = vmul.f32 %v3417, %v3500
      %v3526 = vmul.f32 %v3418, %v3500
      %v3527 = vmul.f32 %v3419, %v3500
      %v3528 = vmul.f32 %v3420, %v3500
      %v3529 = vmul.f32 %v3421, %v3500
      %v3530 = vmul.f32 %v3422, %v3500
      %v3531 = vmul.f32 %v3423, %v3500
      %v3532 = vmul.f32 %v3424, %v3500
      %v3533 = vadd.f32 %v3468, %v3501
      %v3534 = vadd.f32 %v3469, %v3502
      %v3535 = vadd.f32 %v3470, %v3503
      %v3536 = vadd.f32 %v3471, %v3504
      %v3537 = vadd.f32 %v3472, %v3505
      %v3538 = vadd.f32 %v3473, %v3506
      %v3539 = vadd.f32 %v3474, %v3507
      %v3540 = vadd.f32 %v3475, %v3508
      %v3541 = vadd.f32 %v3476, %v3509
      %v3542 = vadd.f32 %v3477, %v3510
      %v3543 = vadd.f32 %v3478, %v3511
      %v3544 = vadd.f32 %v3479, %v3512
      %v3545 = vadd.f32 %v3480, %v3513
      %v3546 = vadd.f32 %v3481, %v3514
      %v3547 = vadd.f32 %v3482, %v3515
      %v3548 = vadd.f32 %v3483, %v3516
      %v3549 = vadd.f32 %v3484, %v3517
      %v3550 = vadd.f32 %v3485, %v3518
      %v3551 = vadd.f32 %v3486, %v3519
      %v3552 = vadd.f32 %v3487, %v3520
      %v3553 = vadd.f32 %v3488, %v3521
      %v3554 = vadd.f32 %v3489, %v3522
      %v3555 = vadd.f32 %v3490, %v3523
      %v3556 = vadd.f32 %v3491, %v3524
      %v3557 = vadd.f32 %v3492, %v3525
      %v3558 = vadd.f32 %v3493, %v3526
      %v3559 = vadd.f32 %v3494, %v3527
      %v3560 = vadd.f32 %v3495, %v3528
      %v3561 = vadd.f32 %v3496, %v3529
      %v3562 = vadd.f32 %v3497, %v3530
      %v3563 = vadd.f32 %v3498, %v3531
      %v3564 = vadd.f32 %v3499, %v3532
      %v3565 = vperm.slane %v388, 6
      %v3566 = vmul.f32 %v3395, %v3565
      %v3567 = vmul.f32 %v3396, %v3565
      %v3568 = vmul.f32 %v3397, %v3565
      %v3569 = vmul.f32 %v3398, %v3565
      %v3570 = vmul.f32 %v3399, %v3565
      %v3571 = vmul.f32 %v3400, %v3565
      %v3572 = vmul.f32 %v3401, %v3565
      %v3573 = vmul.f32 %v3402, %v3565
      %v3574 = vmul.f32 %v3403, %v3565
      %v3575 = vmul.f32 %v3404, %v3565
      %v3576 = vmul.f32 %v3405, %v3565
      %v3577 = vmul.f32 %v3406, %v3565
      %v3578 = vmul.f32 %v3407, %v3565
      %v3579 = vmul.f32 %v3408, %v3565
      %v3580 = vmul.f32 %v3409, %v3565
      %v3581 = vmul.f32 %v3410, %v3565
      %v3582 = vmul.f32 %v3411, %v3565
      %v3583 = vmul.f32 %v3412, %v3565
      %v3584 = vmul.f32 %v3413, %v3565
      %v3585 = vmul.f32 %v3414, %v3565
      %v3586 = vmul.f32 %v3415, %v3565
      %v3587 = vmul.f32 %v3416, %v3565
      %v3588 = vmul.f32 %v3417, %v3565
      %v3589 = vmul.f32 %v3418, %v3565
      %v3590 = vmul.f32 %v3419, %v3565
      %v3591 = vmul.f32 %v3420, %v3565
      %v3592 = vmul.f32 %v3421, %v3565
      %v3593 = vmul.f32 %v3422, %v3565
      %v3594 = vmul.f32 %v3423, %v3565
      %v3595 = vmul.f32 %v3424, %v3565
      %v3596 = vmul.f32 %v3425, %v3565
      %v3597 = vmul.f32 %v3426, %v3565
      %v3598 = vadd.f32 %v3533, %v3566
      %v3599 = vadd.f32 %v3534, %v3567
      %v3600 = vadd.f32 %v3535, %v3568
      %v3601 = vadd.f32 %v3536, %v3569
      %v3602 = vadd.f32 %v3537, %v3570
      %v3603 = vadd.f32 %v3538, %v3571
      %v3604 = vadd.f32 %v3539, %v3572
      %v3605 = vadd.f32 %v3540, %v3573
      %v3606 = vadd.f32 %v3541, %v3574
      %v3607 = vadd.f32 %v3542, %v3575
      %v3608 = vadd.f32 %v3543, %v3576
      %v3609 = vadd.f32 %v3544, %v3577
      %v3610 = vadd.f32 %v3545, %v3578
      %v3611 = vadd.f32 %v3546, %v3579
      %v3612 = vadd.f32 %v3547, %v3580
      %v3613 = vadd.f32 %v3548, %v3581
      %v3614 = vadd.f32 %v3549, %v3582
      %v3615 = vadd.f32 %v3550, %v3583
      %v3616 = vadd.f32 %v3551, %v3584
      %v3617 = vadd.f32 %v3552, %v3585
      %v3618 = vadd.f32 %v3553, %v3586
      %v3619 = vadd.f32 %v3554, %v3587
      %v3620 = vadd.f32 %v3555, %v3588
      %v3621 = vadd.f32 %v3556, %v3589
      %v3622 = vadd.f32 %v3557, %v3590
      %v3623 = vadd.f32 %v3558, %v3591
      %v3624 = vadd.f32 %v3559, %v3592
      %v3625 = vadd.f32 %v3560, %v3593
      %v3626 = vadd.f32 %v3561, %v3594
      %v3627 = vadd.f32 %v3562, %v3595
      %v3628 = vadd.f32 %v3563, %v3596
      %v3629 = vadd.f32 %v3564, %v3597
      %v3630 = vperm.slane %v389, 6
      %v3631 = vmul.f32 %v3397, %v3630
      %v3632 = vmul.f32 %v3398, %v3630
      %v3633 = vmul.f32 %v3399, %v3630
      %v3634 = vmul.f32 %v3400, %v3630
      %v3635 = vmul.f32 %v3401, %v3630
      %v3636 = vmul.f32 %v3402, %v3630
      %v3637 = vmul.f32 %v3403, %v3630
      %v3638 = vmul.f32 %v3404, %v3630
      %v3639 = vmul.f32 %v3405, %v3630
      %v3640 = vmul.f32 %v3406, %v3630
      %v3641 = vmul.f32 %v3407, %v3630
      %v3642 = vmul.f32 %v3408, %v3630
      %v3643 = vmul.f32 %v3409, %v3630
      %v3644 = vmul.f32 %v3410, %v3630
      %v3645 = vmul.f32 %v3411, %v3630
      %v3646 = vmul.f32 %v3412, %v3630
      %v3647 = vmul.f32 %v3413, %v3630
      %v3648 = vmul.f32 %v3414, %v3630
      %v3649 = vmul.f32 %v3415, %v3630
      %v3650 = vmul.f32 %v3416, %v3630
      %v3651 = vmul.f32 %v3417, %v3630
      %v3652 = vmul.f32 %v3418, %v3630
      %v3653 = vmul.f32 %v3419, %v3630
      %v3654 = vmul.f32 %v3420, %v3630
      %v3655 = vmul.f32 %v3421, %v3630
      %v3656 = vmul.f32 %v3422, %v3630
      %v3657 = vmul.f32 %v3423, %v3630
      %v3658 = vmul.f32 %v3424, %v3630
      %v3659 = vmul.f32 %v3425, %v3630
      %v3660 = vmul.f32 %v3426, %v3630
      %v3661 = vmul.f32 %v3427, %v3630
      %v3662 = vmul.f32 %v3428, %v3630
      %v3663 = vadd.f32 %v3598, %v3631
      %v3664 = vadd.f32 %v3599, %v3632
      %v3665 = vadd.f32 %v3600, %v3633
      %v3666 = vadd.f32 %v3601, %v3634
      %v3667 = vadd.f32 %v3602, %v3635
      %v3668 = vadd.f32 %v3603, %v3636
      %v3669 = vadd.f32 %v3604, %v3637
      %v3670 = vadd.f32 %v3605, %v3638
      %v3671 = vadd.f32 %v3606, %v3639
      %v3672 = vadd.f32 %v3607, %v3640
      %v3673 = vadd.f32 %v3608, %v3641
      %v3674 = vadd.f32 %v3609, %v3642
      %v3675 = vadd.f32 %v3610, %v3643
      %v3676 = vadd.f32 %v3611, %v3644
      %v3677 = vadd.f32 %v3612, %v3645
      %v3678 = vadd.f32 %v3613, %v3646
      %v3679 = vadd.f32 %v3614, %v3647
      %v3680 = vadd.f32 %v3615, %v3648
      %v3681 = vadd.f32 %v3616, %v3649
      %v3682 = vadd.f32 %v3617, %v3650
      %v3683 = vadd.f32 %v3618, %v3651
      %v3684 = vadd.f32 %v3619, %v3652
      %v3685 = vadd.f32 %v3620, %v3653
      %v3686 = vadd.f32 %v3621, %v3654
      %v3687 = vadd.f32 %v3622, %v3655
      %v3688 = vadd.f32 %v3623, %v3656
      %v3689 = vadd.f32 %v3624, %v3657
      %v3690 = vadd.f32 %v3625, %v3658
      %v3691 = vadd.f32 %v3626, %v3659
      %v3692 = vadd.f32 %v3627, %v3660
      %v3693 = vadd.f32 %v3628, %v3661
      %v3694 = vadd.f32 %v3629, %v3662
      %v3695 = vperm.slane %v390, 6
      %v3696 = vmul.f32 %v3399, %v3695
      %v3697 = vmul.f32 %v3400, %v3695
      %v3698 = vmul.f32 %v3401, %v3695
      %v3699 = vmul.f32 %v3402, %v3695
      %v3700 = vmul.f32 %v3403, %v3695
      %v3701 = vmul.f32 %v3404, %v3695
      %v3702 = vmul.f32 %v3405, %v3695
      %v3703 = vmul.f32 %v3406, %v3695
      %v3704 = vmul.f32 %v3407, %v3695
      %v3705 = vmul.f32 %v3408, %v3695
      %v3706 = vmul.f32 %v3409, %v3695
      %v3707 = vmul.f32 %v3410, %v3695
      %v3708 = vmul.f32 %v3411, %v3695
      %v3709 = vmul.f32 %v3412, %v3695
      %v3710 = vmul.f32 %v3413, %v3695
      %v3711 = vmul.f32 %v3414, %v3695
      %v3712 = vmul.f32 %v3415, %v3695
      %v3713 = vmul.f32 %v3416, %v3695
      %v3714 = vmul.f32 %v3417, %v3695
      %v3715 = vmul.f32 %v3418, %v3695
      %v3716 = vmul.f32 %v3419, %v3695
      %v3717 = vmul.f32 %v3420, %v3695
      %v3718 = vmul.f32 %v3421, %v3695
      %v3719 = vmul.f32 %v3422, %v3695
      %v3720 = vmul.f32 %v3423, %v3695
      %v3721 = vmul.f32 %v3424, %v3695
      %v3722 = vmul.f32 %v3425, %v3695
      %v3723 = vmul.f32 %v3426, %v3695
      %v3724 = vmul.f32 %v3427, %v3695
      %v3725 = vmul.f32 %v3428, %v3695
      %v3726 = vmul.f32 %v3429, %v3695
      %v3727 = vmul.f32 %v3430, %v3695
      %v3728 = vadd.f32 %v3663, %v3696
      %v3729 = vadd.f32 %v3664, %v3697
      %v3730 = vadd.f32 %v3665, %v3698
      %v3731 = vadd.f32 %v3666, %v3699
      %v3732 = vadd.f32 %v3667, %v3700
      %v3733 = vadd.f32 %v3668, %v3701
      %v3734 = vadd.f32 %v3669, %v3702
      %v3735 = vadd.f32 %v3670, %v3703
      %v3736 = vadd.f32 %v3671, %v3704
      %v3737 = vadd.f32 %v3672, %v3705
      %v3738 = vadd.f32 %v3673, %v3706
      %v3739 = vadd.f32 %v3674, %v3707
      %v3740 = vadd.f32 %v3675, %v3708
      %v3741 = vadd.f32 %v3676, %v3709
      %v3742 = vadd.f32 %v3677, %v3710
      %v3743 = vadd.f32 %v3678, %v3711
      %v3744 = vadd.f32 %v3679, %v3712
      %v3745 = vadd.f32 %v3680, %v3713
      %v3746 = vadd.f32 %v3681, %v3714
      %v3747 = vadd.f32 %v3682, %v3715
      %v3748 = vadd.f32 %v3683, %v3716
      %v3749 = vadd.f32 %v3684, %v3717
      %v3750 = vadd.f32 %v3685, %v3718
      %v3751 = vadd.f32 %v3686, %v3719
      %v3752 = vadd.f32 %v3687, %v3720
      %v3753 = vadd.f32 %v3688, %v3721
      %v3754 = vadd.f32 %v3689, %v3722
      %v3755 = vadd.f32 %v3690, %v3723
      %v3756 = vadd.f32 %v3691, %v3724
      %v3757 = vadd.f32 %v3692, %v3725
      %v3758 = vadd.f32 %v3693, %v3726
      %v3759 = vadd.f32 %v3694, %v3727
      %v3760 = vperm.slane %v391, 6
      %v3761 = vmul.f32 %v3401, %v3760
      %v3762 = vmul.f32 %v3402, %v3760
      %v3763 = vmul.f32 %v3403, %v3760
      %v3764 = vmul.f32 %v3404, %v3760
      %v3765 = vmul.f32 %v3405, %v3760
      %v3766 = vmul.f32 %v3406, %v3760
      %v3767 = vmul.f32 %v3407, %v3760
      %v3768 = vmul.f32 %v3408, %v3760
      %v3769 = vmul.f32 %v3409, %v3760
      %v3770 = vmul.f32 %v3410, %v3760
      %v3771 = vmul.f32 %v3411, %v3760
      %v3772 = vmul.f32 %v3412, %v3760
      %v3773 = vmul.f32 %v3413, %v3760
      %v3774 = vmul.f32 %v3414, %v3760
      %v3775 = vmul.f32 %v3415, %v3760
      %v3776 = vmul.f32 %v3416, %v3760
      %v3777 = vmul.f32 %v3417, %v3760
      %v3778 = vmul.f32 %v3418, %v3760
      %v3779 = vmul.f32 %v3419, %v3760
      %v3780 = vmul.f32 %v3420, %v3760
      %v3781 = vmul.f32 %v3421, %v3760
      %v3782 = vmul.f32 %v3422, %v3760
      %v3783 = vmul.f32 %v3423, %v3760
      %v3784 = vmul.f32 %v3424, %v3760
      %v3785 = vmul.f32 %v3425, %v3760
      %v3786 = vmul.f32 %v3426, %v3760
      %v3787 = vmul.f32 %v3427, %v3760
      %v3788 = vmul.f32 %v3428, %v3760
      %v3789 = vmul.f32 %v3429, %v3760
      %v3790 = vmul.f32 %v3430, %v3760
      %v3791 = vmul.f32 %v3431, %v3760
      %v3792 = vmul.f32 %v3432, %v3760
      %v3793 = vadd.f32 %v3728, %v3761
      %v3794 = vadd.f32 %v3729, %v3762
      %v3795 = vadd.f32 %v3730, %v3763
      %v3796 = vadd.f32 %v3731, %v3764
      %v3797 = vadd.f32 %v3732, %v3765
      %v3798 = vadd.f32 %v3733, %v3766
      %v3799 = vadd.f32 %v3734, %v3767
      %v3800 = vadd.f32 %v3735, %v3768
      %v3801 = vadd.f32 %v3736, %v3769
      %v3802 = vadd.f32 %v3737, %v3770
      %v3803 = vadd.f32 %v3738, %v3771
      %v3804 = vadd.f32 %v3739, %v3772
      %v3805 = vadd.f32 %v3740, %v3773
      %v3806 = vadd.f32 %v3741, %v3774
      %v3807 = vadd.f32 %v3742, %v3775
      %v3808 = vadd.f32 %v3743, %v3776
      %v3809 = vadd.f32 %v3744, %v3777
      %v3810 = vadd.f32 %v3745, %v3778
      %v3811 = vadd.f32 %v3746, %v3779
      %v3812 = vadd.f32 %v3747, %v3780
      %v3813 = vadd.f32 %v3748, %v3781
      %v3814 = vadd.f32 %v3749, %v3782
      %v3815 = vadd.f32 %v3750, %v3783
      %v3816 = vadd.f32 %v3751, %v3784
      %v3817 = vadd.f32 %v3752, %v3785
      %v3818 = vadd.f32 %v3753, %v3786
      %v3819 = vadd.f32 %v3754, %v3787
      %v3820 = vadd.f32 %v3755, %v3788
      %v3821 = vadd.f32 %v3756, %v3789
      %v3822 = vadd.f32 %v3757, %v3790
      %v3823 = vadd.f32 %v3758, %v3791
      %v3824 = vadd.f32 %v3759, %v3792
      %v3825 = vperm.slane %v392, 6
      %v3826 = vmul.f32 %v3403, %v3825
      %v3827 = vmul.f32 %v3404, %v3825
      %v3828 = vmul.f32 %v3405, %v3825
      %v3829 = vmul.f32 %v3406, %v3825
      %v3830 = vmul.f32 %v3407, %v3825
      %v3831 = vmul.f32 %v3408, %v3825
      %v3832 = vmul.f32 %v3409, %v3825
      %v3833 = vmul.f32 %v3410, %v3825
      %v3834 = vmul.f32 %v3411, %v3825
      %v3835 = vmul.f32 %v3412, %v3825
      %v3836 = vmul.f32 %v3413, %v3825
      %v3837 = vmul.f32 %v3414, %v3825
      %v3838 = vmul.f32 %v3415, %v3825
      %v3839 = vmul.f32 %v3416, %v3825
      %v3840 = vmul.f32 %v3417, %v3825
      %v3841 = vmul.f32 %v3418, %v3825
      %v3842 = vmul.f32 %v3419, %v3825
      %v3843 = vmul.f32 %v3420, %v3825
      %v3844 = vmul.f32 %v3421, %v3825
      %v3845 = vmul.f32 %v3422, %v3825
      %v3846 = vmul.f32 %v3423, %v3825
      %v3847 = vmul.f32 %v3424, %v3825
      %v3848 = vmul.f32 %v3425, %v3825
      %v3849 = vmul.f32 %v3426, %v3825
      %v3850 = vmul.f32 %v3427, %v3825
      %v3851 = vmul.f32 %v3428, %v3825
      %v3852 = vmul.f32 %v3429, %v3825
      %v3853 = vmul.f32 %v3430, %v3825
      %v3854 = vmul.f32 %v3431, %v3825
      %v3855 = vmul.f32 %v3432, %v3825
      %v3856 = vmul.f32 %v3433, %v3825
      %v3857 = vmul.f32 %v3434, %v3825
      %v3858 = vadd.f32 %v3793, %v3826
      %v3859 = vadd.f32 %v3794, %v3827
      %v3860 = vadd.f32 %v3795, %v3828
      %v3861 = vadd.f32 %v3796, %v3829
      %v3862 = vadd.f32 %v3797, %v3830
      %v3863 = vadd.f32 %v3798, %v3831
      %v3864 = vadd.f32 %v3799, %v3832
      %v3865 = vadd.f32 %v3800, %v3833
      %v3866 = vadd.f32 %v3801, %v3834
      %v3867 = vadd.f32 %v3802, %v3835
      %v3868 = vadd.f32 %v3803, %v3836
      %v3869 = vadd.f32 %v3804, %v3837
      %v3870 = vadd.f32 %v3805, %v3838
      %v3871 = vadd.f32 %v3806, %v3839
      %v3872 = vadd.f32 %v3807, %v3840
      %v3873 = vadd.f32 %v3808, %v3841
      %v3874 = vadd.f32 %v3809, %v3842
      %v3875 = vadd.f32 %v3810, %v3843
      %v3876 = vadd.f32 %v3811, %v3844
      %v3877 = vadd.f32 %v3812, %v3845
      %v3878 = vadd.f32 %v3813, %v3846
      %v3879 = vadd.f32 %v3814, %v3847
      %v3880 = vadd.f32 %v3815, %v3848
      %v3881 = vadd.f32 %v3816, %v3849
      %v3882 = vadd.f32 %v3817, %v3850
      %v3883 = vadd.f32 %v3818, %v3851
      %v3884 = vadd.f32 %v3819, %v3852
      %v3885 = vadd.f32 %v3820, %v3853
      %v3886 = vadd.f32 %v3821, %v3854
      %v3887 = vadd.f32 %v3822, %v3855
      %v3888 = vadd.f32 %v3823, %v3856
      %v3889 = vadd.f32 %v3824, %v3857
      %v3890 = vadd.f32 %v3858, %v3859
      %v3891 = vadd.f32 %v3890, %v3860
      %v3892 = vadd.f32 %v3891, %v3861
      %v3893 = vadd.f32 %v3892, %v3862
      %v3894 = vadd.f32 %v3893, %v3863
      %v3895 = vadd.f32 %v3894, %v3864
      %v3896 = vadd.f32 %v3895, %v3865
      %v3897 = vadd.f32 %v3896, %v3866
      %v3898 = vadd.f32 %v3897, %v3867
      %v3899 = vadd.f32 %v3898, %v3868
      %v3900 = vadd.f32 %v3899, %v3869
      %v3901 = vadd.f32 %v3900, %v3870
      %v3902 = vadd.f32 %v3901, %v3871
      %v3903 = vadd.f32 %v3902, %v3872
      %v3904 = vadd.f32 %v3903, %v3873
      %v3905 = vadd.f32 %v3904, %v3874
      %v3906 = vadd.f32 %v3905, %v3875
      %v3907 = vadd.f32 %v3906, %v3876
      %v3908 = vadd.f32 %v3907, %v3877
      %v3909 = vadd.f32 %v3908, %v3878
      %v3910 = vadd.f32 %v3909, %v3879
      %v3911 = vadd.f32 %v3910, %v3880
      %v3912 = vadd.f32 %v3911, %v3881
      %v3913 = vadd.f32 %v3912, %v3882
      %v3914 = vadd.f32 %v3913, %v3883
      %v3915 = vadd.f32 %v3914, %v3884
      %v3916 = vadd.f32 %v3915, %v3885
      %v3917 = vadd.f32 %v3916, %v3886
      %v3918 = vadd.f32 %v3917, %v3887
      %v3919 = vadd.f32 %v3918, %v3888
      %v3920 = vadd.f32 %v3919, %v3889
      %3921 = vadd.xlane.f32.xlu0 %v3920
      %v3922 = vpop.xlane.xlu0 %3921
      %v3923 = vrot.slane %v3922, 4
      %v3924 = vadd.f32 %v3922, %v3923
      %v3925 = vrot.slane %v3924, 2
      %v3926 = vadd.f32 %v3924, %v3925
      %v3927 = vrot.slane %v3926, 1
      %v3928 = vadd.f32 %v3926, %v3927
      %s3929 = vtos %v3928
      %v3930 = vmul.f32 %v3858, %v3858
      %v3931 = vmul.f32 %v3859, %v3859
      %v3932 = vmul.f32 %v3860, %v3860
      %v3933 = vmul.f32 %v3861, %v3861
      %v3934 = vmul.f32 %v3862, %v3862
      %v3935 = vmul.f32 %v3863, %v3863
      %v3936 = vmul.f32 %v3864, %v3864
      %v3937 = vmul.f32 %v3865, %v3865
      %v3938 = vmul.f32 %v3866, %v3866
      %v3939 = vmul.f32 %v3867, %v3867
      %v3940 = vmul.f32 %v3868, %v3868
      %v3941 = vmul.f32 %v3869, %v3869
      %v3942 = vmul.f32 %v3870, %v3870
      %v3943 = vmul.f32 %v3871, %v3871
      %v3944 = vmul.f32 %v3872, %v3872
      %v3945 = vmul.f32 %v3873, %v3873
      %v3946 = vmul.f32 %v3874, %v3874
      %v3947 = vmul.f32 %v3875, %v3875
      %v3948 = vmul.f32 %v3876, %v3876
      %v3949 = vmul.f32 %v3877, %v3877
      %v3950 = vmul.f32 %v3878, %v3878
      %v3951 = vmul.f32 %v3879, %v3879
      %v3952 = vmul.f32 %v3880, %v3880
      %v3953 = vmul.f32 %v3881, %v3881
      %v3954 = vmul.f32 %v3882, %v3882
      %v3955 = vmul.f32 %v3883, %v3883
      %v3956 = vmul.f32 %v3884, %v3884
      %v3957 = vmul.f32 %v3885, %v3885
      %v3958 = vmul.f32 %v3886, %v3886
      %v3959 = vmul.f32 %v3887, %v3887
      %v3960 = vmul.f32 %v3888, %v3888
      %v3961 = vmul.f32 %v3889, %v3889
      %v3962 = vadd.f32 %v3930, %v3931
      %v3963 = vadd.f32 %v3962, %v3932
      %v3964 = vadd.f32 %v3963, %v3933
      %v3965 = vadd.f32 %v3964, %v3934
      %v3966 = vadd.f32 %v3965, %v3935
      %v3967 = vadd.f32 %v3966, %v3936
      %v3968 = vadd.f32 %v3967, %v3937
      %v3969 = vadd.f32 %v3968, %v3938
      %v3970 = vadd.f32 %v3969, %v3939
      %v3971 = vadd.f32 %v3970, %v3940
      %v3972 = vadd.f32 %v3971, %v3941
      %v3973 = vadd.f32 %v3972, %v3942
      %v3974 = vadd.f32 %v3973, %v3943
      %v3975 = vadd.f32 %v3974, %v3944
      %v3976 = vadd.f32 %v3975, %v3945
      %v3977 = vadd.f32 %v3976, %v3946
      %v3978 = vadd.f32 %v3977, %v3947
      %v3979 = vadd.f32 %v3978, %v3948
      %v3980 = vadd.f32 %v3979, %v3949
      %v3981 = vadd.f32 %v3980, %v3950
      %v3982 = vadd.f32 %v3981, %v3951
      %v3983 = vadd.f32 %v3982, %v3952
      %v3984 = vadd.f32 %v3983, %v3953
      %v3985 = vadd.f32 %v3984, %v3954
      %v3986 = vadd.f32 %v3985, %v3955
      %v3987 = vadd.f32 %v3986, %v3956
      %v3988 = vadd.f32 %v3987, %v3957
      %v3989 = vadd.f32 %v3988, %v3958
      %v3990 = vadd.f32 %v3989, %v3959
      %v3991 = vadd.f32 %v3990, %v3960
      %v3992 = vadd.f32 %v3991, %v3961
      %3993 = vadd.xlane.f32.xlu0 %v3992
      %v3994 = vpop.xlane.xlu0 %3993
      %v3995 = vrot.slane %v3994, 4
      %v3996 = vadd.f32 %v3994, %v3995
      %v3997 = vrot.slane %v3996, 2
      %v3998 = vadd.f32 %v3996, %v3997
      %v3999 = vrot.slane %v3998, 1
      %v4000 = vadd.f32 %v3998, %v3999
      %s4001 = vtos %v4000
      %s4002 = smul.f32 %s3929, 0.0009765625
      %s4003 = smul.f32 %s4001, 0.0009765625
      %s4004 = smul.f32 %s4002, %s4002
      %s4005 = ssub.f32 %s4003, %s4004
      %v4006 = vstv %s4002
      %v4007 = vsub.f32 %v3858, %v4006
      %v4008 = vsub.f32 %v3859, %v4006
      %v4009 = vsub.f32 %v3860, %v4006
      %v4010 = vsub.f32 %v3861, %v4006
      %v4011 = vsub.f32 %v3862, %v4006
      %v4012 = vsub.f32 %v3863, %v4006
      %v4013 = vsub.f32 %v3864, %v4006
      %v4014 = vsub.f32 %v3865, %v4006
      %v4015 = vsub.f32 %v3866, %v4006
      %v4016 = vsub.f32 %v3867, %v4006
      %v4017 = vsub.f32 %v3868, %v4006
      %v4018 = vsub.f32 %v3869, %v4006
      %v4019 = vsub.f32 %v3870, %v4006
      %v4020 = vsub.f32 %v3871, %v4006
      %v4021 = vsub.f32 %v3872, %v4006
      %v4022 = vsub.f32 %v3873, %v4006
      %v4023 = vsub.f32 %v3874, %v4006
      %v4024 = vsub.f32 %v3875, %v4006
      %v4025 = vsub.f32 %v3876, %v4006
      %v4026 = vsub.f32 %v3877, %v4006
      %v4027 = vsub.f32 %v3878, %v4006
      %v4028 = vsub.f32 %v3879, %v4006
      %v4029 = vsub.f32 %v3880, %v4006
      %v4030 = vsub.f32 %v3881, %v4006
      %v4031 = vsub.f32 %v3882, %v4006
      %v4032 = vsub.f32 %v3883, %v4006
      %v4033 = vsub.f32 %v3884, %v4006
      %v4034 = vsub.f32 %v3885, %v4006
      %v4035 = vsub.f32 %v3886, %v4006
      %v4036 = vsub.f32 %v3887, %v4006
      %v4037 = vsub.f32 %v3888, %v4006
      %v4038 = vsub.f32 %v3889, %v4006
      %s4039 = sadd.f32 %s4005, 1e-05
      %v4040 = vstv %s4039
      %v4041 = vrsqrt.pop %v4040
      %v4042 = vmul.f32 %v4041, %v4040
      %v4043 = vmul.f32 %v4042, %v4041
      %v4044 = vmul.f32 0.5, %v4043
      %v4045 = vsub.f32 1.5, %v4044
      %v4046 = vmul.f32 %v4041, %v4045
      %vm4047 = vweird.f32 %v4040
      %vm4048 = vweird.f32 %v4041
      %vm4049 = vmor %vm4047, %vm4048
      %v4050 = vsel %vm4049, %v4041, %v4046
      %s4051 = vtos %v4050
      %v4052 = vstv %s4051
      %v4053 = vmul.f32 %v4007, %v4052
      %v4054 = vmul.f32 %v4008, %v4052
      %v4055 = vmul.f32 %v4009, %v4052
      %v4056 = vmul.f32 %v4010, %v4052
      %v4057 = vmul.f32 %v4011, %v4052
      %v4058 = vmul.f32 %v4012, %v4052
      %v4059 = vmul.f32 %v4013, %v4052
      %v4060 = vmul.f32 %v4014, %v4052
      %v4061 = vmul.f32 %v4015, %v4052
      %v4062 = vmul.f32 %v4016, %v4052
      %v4063 = vmul.f32 %v4017, %v4052
      %v4064 = vmul.f32 %v4018, %v4052
      %v4065 = vmul.f32 %v4019, %v4052
      %v4066 = vmul.f32 %v4020, %v4052
      %v4067 = vmul.f32 %v4021, %v4052
      %v4068 = vmul.f32 %v4022, %v4052
      %v4069 = vmul.f32 %v4023, %v4052
      %v4070 = vmul.f32 %v4024, %v4052
      %v4071 = vmul.f32 %v4025, %v4052
      %v4072 = vmul.f32 %v4026, %v4052
      %v4073 = vmul.f32 %v4027, %v4052
      %v4074 = vmul.f32 %v4028, %v4052
      %v4075 = vmul.f32 %v4029, %v4052
      %v4076 = vmul.f32 %v4030, %v4052
      %v4077 = vmul.f32 %v4031, %v4052
      %v4078 = vmul.f32 %v4032, %v4052
      %v4079 = vmul.f32 %v4033, %v4052
      %v4080 = vmul.f32 %v4034, %v4052
      %v4081 = vmul.f32 %v4035, %v4052
      %v4082 = vmul.f32 %v4036, %v4052
      %v4083 = vmul.f32 %v4037, %v4052
      %v4084 = vmul.f32 %v4038, %v4052
      %v4085 = vpack.c.bf16 %v4054, %v4053
      %v4086 = vpack.c.bf16 %v4056, %v4055
      %v4087 = vpack.c.bf16 %v4058, %v4057
      %v4088 = vpack.c.bf16 %v4060, %v4059
      %v4089 = vpack.c.bf16 %v4062, %v4061
      %v4090 = vpack.c.bf16 %v4064, %v4063
      %v4091 = vpack.c.bf16 %v4066, %v4065
      %v4092 = vpack.c.bf16 %v4068, %v4067
      %v4093 = vpack.c.bf16 %v4070, %v4069
      %v4094 = vpack.c.bf16 %v4072, %v4071
      %v4095 = vpack.c.bf16 %v4074, %v4073
      %v4096 = vpack.c.bf16 %v4076, %v4075
      %v4097 = vpack.c.bf16 %v4078, %v4077
      %v4098 = vpack.c.bf16 %v4080, %v4079
      %v4099 = vpack.c.bf16 %v4082, %v4081
      %v4100 = vpack.c.bf16 %v4084, %v4083
      %v4101 = vld [vmem:[%s4] sm:$0xf]
      %v4102 = vld [vmem:[%s4 + $0x4] sm:$0xf]
      %v4103 = vld [vmem:[%s4 + $0x8] sm:$0xf]
      %v4104 = vld [vmem:[%s4 + $0xc] sm:$0xf]
      %v4105 = vld [vmem:[%s4 + $0x10] sm:$0xf]
      %v4106 = vld [vmem:[%s4 + $0x14] sm:$0xf]
      %v4107 = vld [vmem:[%s4 + $0x18] sm:$0xf]
      %v4108 = vld [vmem:[%s4 + $0x1c] sm:$0xf]
      %v4109 = vld [vmem:[%s4 + $0x20] sm:$0xf]
      %v4110 = vld [vmem:[%s4 + $0x24] sm:$0xf]
      %v4111 = vld [vmem:[%s4 + $0x28] sm:$0xf]
      %v4112 = vld [vmem:[%s4 + $0x2c] sm:$0xf]
      %v4113 = vld [vmem:[%s4 + $0x30] sm:$0xf]
      %v4114 = vld [vmem:[%s4 + $0x34] sm:$0xf]
      %v4115 = vld [vmem:[%s4 + $0x38] sm:$0xf]
      %v4116 = vld [vmem:[%s4 + $0x3c] sm:$0xf]
      %v4117 = vld [vmem:[%s3] sm:$0x1]
      %v4119 = vperm.slane %v4117, 0
      %v4137 = vunpack.c.l.b16 %v4101
      %v4138 = vunpack.c.l.b16 %v4102
      %v4139 = vunpack.c.l.b16 %v4103
      %v4140 = vunpack.c.l.b16 %v4104
      %v4141 = vunpack.c.l.b16 %v4105
      %v4142 = vunpack.c.l.b16 %v4106
      %v4143 = vunpack.c.l.b16 %v4107
      %v4144 = vunpack.c.l.b16 %v4108
      %v4145 = vunpack.c.l.b16 %v4109
      %v4146 = vunpack.c.l.b16 %v4110
      %v4147 = vunpack.c.l.b16 %v4111
      %v4148 = vunpack.c.l.b16 %v4112
      %v4149 = vunpack.c.l.b16 %v4113
      %v4150 = vunpack.c.l.b16 %v4114
      %v4151 = vunpack.c.l.b16 %v4115
      %v4152 = vunpack.c.l.b16 %v4116
      %v4153 = vpack.c.b16 %v4138, %v4137
      %v4154 = vpack.c.b16 %v4140, %v4139
      %v4155 = vpack.c.b16 %v4142, %v4141
      %v4156 = vpack.c.b16 %v4144, %v4143
      %v4157 = vpack.c.b16 %v4146, %v4145
      %v4158 = vpack.c.b16 %v4148, %v4147
      %v4159 = vpack.c.b16 %v4150, %v4149
      %v4160 = vpack.c.b16 %v4152, %v4151
      %4169 = vmatpush.bf16.msra.mxu0 %v4160
      %4170 = vmatpush.bf16.msra.mxu0 %v4159
      %4171 = vmatpush.bf16.msra.mxu0 %v4158
      %4172 = vmatpush.bf16.msra.mxu0 %v4157
      %4173 = vmatpush.bf16.msra.mxu0 %v4156
      %4174 = vmatpush.bf16.msra.mxu0 %v4155
      %4175 = vmatpush.bf16.msra.mxu0 %v4154
      %4176 = vmatpush.bf16.msra.mxu0 %v4153
      %4177 = vmatmul.bf16.gmra.mxu0 %v4085
      %v4178 = vpop.f32.mrf.mxu0
      %v4179 = vadd.f32 %v4119, %v4178
      %v4180 = vpop.f32.mrf.mxu0
      %v4181 = vadd.f32 %v4119, %v4180
      %4182 = vmatmul.bf16.gmra.mxu0 %v4086
      %v4183 = vpop.f32.mrf.mxu0
      %v4184 = vadd.f32 %v4119, %v4183
      %v4185 = vpop.f32.mrf.mxu0
      %v4186 = vadd.f32 %v4119, %v4185
      %4187 = vmatmul.bf16.gmra.mxu0 %v4087
      %v4188 = vpop.f32.mrf.mxu0
      %v4189 = vadd.f32 %v4119, %v4188
      %v4190 = vpop.f32.mrf.mxu0
      %v4191 = vadd.f32 %v4119, %v4190
      %4192 = vmatmul.bf16.gmra.mxu0 %v4088
      %v4193 = vpop.f32.mrf.mxu0
      %v4194 = vadd.f32 %v4119, %v4193
      %v4195 = vpop.f32.mrf.mxu0
      %v4196 = vadd.f32 %v4119, %v4195
      %4197 = vmatmul.bf16.gmra.mxu0 %v4089
      %v4198 = vpop.f32.mrf.mxu0
      %v4199 = vadd.f32 %v4119, %v4198
      %v4200 = vpop.f32.mrf.mxu0
      %v4201 = vadd.f32 %v4119, %v4200
      %4202 = vmatmul.bf16.gmra.mxu0 %v4090
      %v4203 = vpop.f32.mrf.mxu0
      %v4204 = vadd.f32 %v4119, %v4203
      %v4205 = vpop.f32.mrf.mxu0
      %v4206 = vadd.f32 %v4119, %v4205
      %4207 = vmatmul.bf16.gmra.mxu0 %v4091
      %v4208 = vpop.f32.mrf.mxu0
      %v4209 = vadd.f32 %v4119, %v4208
      %v4210 = vpop.f32.mrf.mxu0
      %v4211 = vadd.f32 %v4119, %v4210
      %4212 = vmatmul.bf16.gmra.mxu0 %v4092
      %v4213 = vpop.f32.mrf.mxu0
      %v4214 = vadd.f32 %v4119, %v4213
      %v4215 = vpop.f32.mrf.mxu0
      %v4216 = vadd.f32 %v4119, %v4215
      %4217 = vmatmul.bf16.gmra.mxu0 %v4093
      %v4218 = vpop.f32.mrf.mxu0
      %v4219 = vadd.f32 %v4119, %v4218
      %v4220 = vpop.f32.mrf.mxu0
      %v4221 = vadd.f32 %v4119, %v4220
      %4222 = vmatmul.bf16.gmra.mxu0 %v4094
      %v4223 = vpop.f32.mrf.mxu0
      %v4224 = vadd.f32 %v4119, %v4223
      %v4225 = vpop.f32.mrf.mxu0
      %v4226 = vadd.f32 %v4119, %v4225
      %4227 = vmatmul.bf16.gmra.mxu0 %v4095
      %v4228 = vpop.f32.mrf.mxu0
      %v4229 = vadd.f32 %v4119, %v4228
      %v4230 = vpop.f32.mrf.mxu0
      %v4231 = vadd.f32 %v4119, %v4230
      %4232 = vmatmul.bf16.gmra.mxu0 %v4096
      %v4233 = vpop.f32.mrf.mxu0
      %v4234 = vadd.f32 %v4119, %v4233
      %v4235 = vpop.f32.mrf.mxu0
      %v4236 = vadd.f32 %v4119, %v4235
      %4237 = vmatmul.bf16.gmra.mxu0 %v4097
      %v4238 = vpop.f32.mrf.mxu0
      %v4239 = vadd.f32 %v4119, %v4238
      %v4240 = vpop.f32.mrf.mxu0
      %v4241 = vadd.f32 %v4119, %v4240
      %4242 = vmatmul.bf16.gmra.mxu0 %v4098
      %v4243 = vpop.f32.mrf.mxu0
      %v4244 = vadd.f32 %v4119, %v4243
      %v4245 = vpop.f32.mrf.mxu0
      %v4246 = vadd.f32 %v4119, %v4245
      %4247 = vmatmul.bf16.gmra.mxu0 %v4099
      %v4248 = vpop.f32.mrf.mxu0
      %v4249 = vadd.f32 %v4119, %v4248
      %v4250 = vpop.f32.mrf.mxu0
      %v4251 = vadd.f32 %v4119, %v4250
      %4252 = vmatmul.bf16.gmra.mxu0 %v4100
      %v4253 = vpop.f32.mrf.mxu0
      %v4254 = vadd.f32 %v4119, %v4253
      %v4255 = vpop.f32.mrf.mxu0
      %v4256 = vadd.f32 %v4119, %v4255
      %4257 = vdwg.mxu0
      %v4258 = vmul.f32 %v4179, 0.5
      %v4259 = vmul.f32 %v4181, 0.5
      %v4260 = vmul.f32 %v4184, 0.5
      %v4261 = vmul.f32 %v4186, 0.5
      %v4262 = vmul.f32 %v4189, 0.5
      %v4263 = vmul.f32 %v4191, 0.5
      %v4264 = vmul.f32 %v4194, 0.5
      %v4265 = vmul.f32 %v4196, 0.5
      %v4266 = vmul.f32 %v4199, 0.5
      %v4267 = vmul.f32 %v4201, 0.5
      %v4268 = vmul.f32 %v4204, 0.5
      %v4269 = vmul.f32 %v4206, 0.5
      %v4270 = vmul.f32 %v4209, 0.5
      %v4271 = vmul.f32 %v4211, 0.5
      %v4272 = vmul.f32 %v4214, 0.5
      %v4273 = vmul.f32 %v4216, 0.5
      %v4274 = vmul.f32 %v4219, 0.5
      %v4275 = vmul.f32 %v4221, 0.5
      %v4276 = vmul.f32 %v4224, 0.5
      %v4277 = vmul.f32 %v4226, 0.5
      %v4278 = vmul.f32 %v4229, 0.5
      %v4279 = vmul.f32 %v4231, 0.5
      %v4280 = vmul.f32 %v4234, 0.5
      %v4281 = vmul.f32 %v4236, 0.5
      %v4282 = vmul.f32 %v4239, 0.5
      %v4283 = vmul.f32 %v4241, 0.5
      %v4284 = vmul.f32 %v4244, 0.5
      %v4285 = vmul.f32 %v4246, 0.5
      %v4286 = vmul.f32 %v4249, 0.5
      %v4287 = vmul.f32 %v4251, 0.5
      %v4288 = vmul.f32 %v4254, 0.5
      %v4289 = vmul.f32 %v4256, 0.5
      %v4290 = vmul.f32 %v4179, 0.70710677
      %v4291 = vmul.f32 %v4181, 0.70710677
      %v4292 = vmul.f32 %v4184, 0.70710677
      %v4293 = vmul.f32 %v4186, 0.70710677
      %v4294 = vmul.f32 %v4189, 0.70710677
      %v4295 = vmul.f32 %v4191, 0.70710677
      %v4296 = vmul.f32 %v4194, 0.70710677
      %v4297 = vmul.f32 %v4196, 0.70710677
      %v4298 = vmul.f32 %v4199, 0.70710677
      %v4299 = vmul.f32 %v4201, 0.70710677
      %v4300 = vmul.f32 %v4204, 0.70710677
      %v4301 = vmul.f32 %v4206, 0.70710677
      %v4302 = vmul.f32 %v4209, 0.70710677
      %v4303 = vmul.f32 %v4211, 0.70710677
      %v4304 = vmul.f32 %v4214, 0.70710677
      %v4305 = vmul.f32 %v4216, 0.70710677
      %v4306 = vmul.f32 %v4219, 0.70710677
      %v4307 = vmul.f32 %v4221, 0.70710677
      %v4308 = vmul.f32 %v4224, 0.70710677
      %v4309 = vmul.f32 %v4226, 0.70710677
      %v4310 = vmul.f32 %v4229, 0.70710677
      %v4311 = vmul.f32 %v4231, 0.70710677
      %v4312 = vmul.f32 %v4234, 0.70710677
      %v4313 = vmul.f32 %v4236, 0.70710677
      %v4314 = vmul.f32 %v4239, 0.70710677
      %v4315 = vmul.f32 %v4241, 0.70710677
      %v4316 = vmul.f32 %v4244, 0.70710677
      %v4317 = vmul.f32 %v4246, 0.70710677
      %v4318 = vmul.f32 %v4249, 0.70710677
      %v4319 = vmul.f32 %v4251, 0.70710677
      %v4320 = vmul.f32 %v4254, 0.70710677
      %v4321 = vmul.f32 %v4256, 0.70710677
      %v4322 = vmul.f32 %v4290, %v4290
      %v4323 = vmin.f32 16.0, %v4322
      %v4324 = vmul.f32 %v4323, 2.1237322e-06
      %v4325 = vadd.f32 %v4324, 0.00028619796
      %v4326 = vmul.f32 %v4323, %v4325
      %v4327 = vadd.f32 %v4326, 0.0036580483
      %v4328 = vmul.f32 %v4323, %v4327
      %v4329 = vadd.f32 %v4328, 0.05243302
      %v4330 = vmul.f32 %v4323, %v4329
      %v4331 = vadd.f32 %v4330, 0.18741608
      %v4332 = vmul.f32 %v4323, %v4331
      %v4333 = vadd.f32 %v4332, 1.1283791
      %v4334 = vmul.f32 %v4290, %v4333
      %v4335 = vmul.f32 %v4323, 3.8918573e-05
      %v4336 = vadd.f32 %v4335, 0.001143296
      %v4337 = vmul.f32 %v4323, %v4336
      %v4338 = vadd.f32 %v4337, 0.014752088
      %v4339 = vmul.f32 %v4323, %v4338
      %v4340 = vadd.f32 %v4339, 0.112945676
      %v4341 = vmul.f32 %v4323, %v4340
      %v4342 = vadd.f32 %v4341, 0.4994258
      %v4343 = vmul.f32 %v4323, %v4342
      %v4344 = vadd.f32 %v4343, 1.0
      %v4345 = vrcp.pop %v4344
      %v4346 = vmul.f32 %v4344, %v4345
      %v4347 = vsub.f32 1.0, %v4346
      %v4348 = vmul.f32 %v4345, %v4347
      %v4349 = vadd.f32 %v4345, %v4348
      %vm4350 = vweird.f32 %v4344
      %vm4351 = vweird.f32 %v4345
      %vm4352 = vmor %vm4350, %vm4351
      %v4353 = vsel %vm4352, %v4345, %v4349
      %v4354 = vand.u32 2147483647, %v4344
      %vm4355 = vcmp.eq.f32.partialorder %v4354, 8.507059e+37
      %v4356 = vand.u32 %v4344, 2147483648
      %v4357 = vor.u32 1.1754944e-38, %v4356
      %v4358 = vsel %vm4355, %v4357, %v4353
      %v4359 = vmul.f32 %v4334, %v4358
      %v4360 = vmin.f32 %v4359, 1.0
      %v4361 = vmax.f32 %v4360, -1.0
      %v4362 = vmul.f32 %v4291, %v4291
      %v4363 = vmin.f32 16.0, %v4362
      %v4364 = vmul.f32 %v4363, 2.1237322e-06
      %v4365 = vadd.f32 %v4364, 0.00028619796
      %v4366 = vmul.f32 %v4363, %v4365
      %v4367 = vadd.f32 %v4366, 0.0036580483
      %v4368 = vmul.f32 %v4363, %v4367
      %v4369 = vadd.f32 %v4368, 0.05243302
      %v4370 = vmul.f32 %v4363, %v4369
      %v4371 = vadd.f32 %v4370, 0.18741608
      %v4372 = vmul.f32 %v4363, %v4371
      %v4373 = vadd.f32 %v4372, 1.1283791
      %v4374 = vmul.f32 %v4291, %v4373
      %v4375 = vmul.f32 %v4363, 3.8918573e-05
      %v4376 = vadd.f32 %v4375, 0.001143296
      %v4377 = vmul.f32 %v4363, %v4376
      %v4378 = vadd.f32 %v4377, 0.014752088
      %v4379 = vmul.f32 %v4363, %v4378
      %v4380 = vadd.f32 %v4379, 0.112945676
      %v4381 = vmul.f32 %v4363, %v4380
      %v4382 = vadd.f32 %v4381, 0.4994258
      %v4383 = vmul.f32 %v4363, %v4382
      %v4384 = vadd.f32 %v4383, 1.0
      %v4385 = vrcp.pop %v4384
      %v4386 = vmul.f32 %v4384, %v4385
      %v4387 = vsub.f32 1.0, %v4386
      %v4388 = vmul.f32 %v4385, %v4387
      %v4389 = vadd.f32 %v4385, %v4388
      %vm4390 = vweird.f32 %v4384
      %vm4391 = vweird.f32 %v4385
      %vm4392 = vmor %vm4390, %vm4391
      %v4393 = vsel %vm4392, %v4385, %v4389
      %v4394 = vand.u32 2147483647, %v4384
      %vm4395 = vcmp.eq.f32.partialorder %v4394, 8.507059e+37
      %v4396 = vand.u32 %v4384, 2147483648
      %v4397 = vor.u32 1.1754944e-38, %v4396
      %v4398 = vsel %vm4395, %v4397, %v4393
      %v4399 = vmul.f32 %v4374, %v4398
      %v4400 = vmin.f32 %v4399, 1.0
      %v4401 = vmax.f32 %v4400, -1.0
      %v4402 = vmul.f32 %v4292, %v4292
      %v4403 = vmin.f32 16.0, %v4402
      %v4404 = vmul.f32 %v4403, 2.1237322e-06
      %v4405 = vadd.f32 %v4404, 0.00028619796
      %v4406 = vmul.f32 %v4403, %v4405
      %v4407 = vadd.f32 %v4406, 0.0036580483
      %v4408 = vmul.f32 %v4403, %v4407
      %v4409 = vadd.f32 %v4408, 0.05243302
      %v4410 = vmul.f32 %v4403, %v4409
      %v4411 = vadd.f32 %v4410, 0.18741608
      %v4412 = vmul.f32 %v4403, %v4411
      %v4413 = vadd.f32 %v4412, 1.1283791
      %v4414 = vmul.f32 %v4292, %v4413
      %v4415 = vmul.f32 %v4403, 3.8918573e-05
      %v4416 = vadd.f32 %v4415, 0.001143296
      %v4417 = vmul.f32 %v4403, %v4416
      %v4418 = vadd.f32 %v4417, 0.014752088
      %v4419 = vmul.f32 %v4403, %v4418
      %v4420 = vadd.f32 %v4419, 0.112945676
      %v4421 = vmul.f32 %v4403, %v4420
      %v4422 = vadd.f32 %v4421, 0.4994258
      %v4423 = vmul.f32 %v4403, %v4422
      %v4424 = vadd.f32 %v4423, 1.0
      %v4425 = vrcp.pop %v4424
      %v4426 = vmul.f32 %v4424, %v4425
      %v4427 = vsub.f32 1.0, %v4426
      %v4428 = vmul.f32 %v4425, %v4427
      %v4429 = vadd.f32 %v4425, %v4428
      %vm4430 = vweird.f32 %v4424
      %vm4431 = vweird.f32 %v4425
      %vm4432 = vmor %vm4430, %vm4431
      %v4433 = vsel %vm4432, %v4425, %v4429
      %v4434 = vand.u32 2147483647, %v4424
      %vm4435 = vcmp.eq.f32.partialorder %v4434, 8.507059e+37
      %v4436 = vand.u32 %v4424, 2147483648
      %v4437 = vor.u32 1.1754944e-38, %v4436
      %v4438 = vsel %vm4435, %v4437, %v4433
      %v4439 = vmul.f32 %v4414, %v4438
      %v4440 = vmin.f32 %v4439, 1.0
      %v4441 = vmax.f32 %v4440, -1.0
      %v4442 = vmul.f32 %v4293, %v4293
      %v4443 = vmin.f32 16.0, %v4442
      %v4444 = vmul.f32 %v4443, 2.1237322e-06
      %v4445 = vadd.f32 %v4444, 0.00028619796
      %v4446 = vmul.f32 %v4443, %v4445
      %v4447 = vadd.f32 %v4446, 0.0036580483
      %v4448 = vmul.f32 %v4443, %v4447
      %v4449 = vadd.f32 %v4448, 0.05243302
      %v4450 = vmul.f32 %v4443, %v4449
      %v4451 = vadd.f32 %v4450, 0.18741608
      %v4452 = vmul.f32 %v4443, %v4451
      %v4453 = vadd.f32 %v4452, 1.1283791
      %v4454 = vmul.f32 %v4293, %v4453
      %v4455 = vmul.f32 %v4443, 3.8918573e-05
      %v4456 = vadd.f32 %v4455, 0.001143296
      %v4457 = vmul.f32 %v4443, %v4456
      %v4458 = vadd.f32 %v4457, 0.014752088
      %v4459 = vmul.f32 %v4443, %v4458
      %v4460 = vadd.f32 %v4459, 0.112945676
      %v4461 = vmul.f32 %v4443, %v4460
      %v4462 = vadd.f32 %v4461, 0.4994258
      %v4463 = vmul.f32 %v4443, %v4462
      %v4464 = vadd.f32 %v4463, 1.0
      %v4465 = vrcp.pop %v4464
      %v4466 = vmul.f32 %v4464, %v4465
      %v4467 = vsub.f32 1.0, %v4466
      %v4468 = vmul.f32 %v4465, %v4467
      %v4469 = vadd.f32 %v4465, %v4468
      %vm4470 = vweird.f32 %v4464
      %vm4471 = vweird.f32 %v4465
      %vm4472 = vmor %vm4470, %vm4471
      %v4473 = vsel %vm4472, %v4465, %v4469
      %v4474 = vand.u32 2147483647, %v4464
      %vm4475 = vcmp.eq.f32.partialorder %v4474, 8.507059e+37
      %v4476 = vand.u32 %v4464, 2147483648
      %v4477 = vor.u32 1.1754944e-38, %v4476
      %v4478 = vsel %vm4475, %v4477, %v4473
      %v4479 = vmul.f32 %v4454, %v4478
      %v4480 = vmin.f32 %v4479, 1.0
      %v4481 = vmax.f32 %v4480, -1.0
      %v4482 = vmul.f32 %v4294, %v4294
      %v4483 = vmin.f32 16.0, %v4482
      %v4484 = vmul.f32 %v4483, 2.1237322e-06
      %v4485 = vadd.f32 %v4484, 0.00028619796
      %v4486 = vmul.f32 %v4483, %v4485
      %v4487 = vadd.f32 %v4486, 0.0036580483
      %v4488 = vmul.f32 %v4483, %v4487
      %v4489 = vadd.f32 %v4488, 0.05243302
      %v4490 = vmul.f32 %v4483, %v4489
      %v4491 = vadd.f32 %v4490, 0.18741608
      %v4492 = vmul.f32 %v4483, %v4491
      %v4493 = vadd.f32 %v4492, 1.1283791
      %v4494 = vmul.f32 %v4294, %v4493
      %v4495 = vmul.f32 %v4483, 3.8918573e-05
      %v4496 = vadd.f32 %v4495, 0.001143296
      %v4497 = vmul.f32 %v4483, %v4496
      %v4498 = vadd.f32 %v4497, 0.014752088
      %v4499 = vmul.f32 %v4483, %v4498
      %v4500 = vadd.f32 %v4499, 0.112945676
      %v4501 = vmul.f32 %v4483, %v4500
      %v4502 = vadd.f32 %v4501, 0.4994258
      %v4503 = vmul.f32 %v4483, %v4502
      %v4504 = vadd.f32 %v4503, 1.0
      %v4505 = vrcp.pop %v4504
      %v4506 = vmul.f32 %v4504, %v4505
      %v4507 = vsub.f32 1.0, %v4506
      %v4508 = vmul.f32 %v4505, %v4507
      %v4509 = vadd.f32 %v4505, %v4508
      %vm4510 = vweird.f32 %v4504
      %vm4511 = vweird.f32 %v4505
      %vm4512 = vmor %vm4510, %vm4511
      %v4513 = vsel %vm4512, %v4505, %v4509
      %v4514 = vand.u32 2147483647, %v4504
      %vm4515 = vcmp.eq.f32.partialorder %v4514, 8.507059e+37
      %v4516 = vand.u32 %v4504, 2147483648
      %v4517 = vor.u32 1.1754944e-38, %v4516
      %v4518 = vsel %vm4515, %v4517, %v4513
      %v4519 = vmul.f32 %v4494, %v4518
      %v4520 = vmin.f32 %v4519, 1.0
      %v4521 = vmax.f32 %v4520, -1.0
      %v4522 = vmul.f32 %v4295, %v4295
      %v4523 = vmin.f32 16.0, %v4522
      %v4524 = vmul.f32 %v4523, 2.1237322e-06
      %v4525 = vadd.f32 %v4524, 0.00028619796
      %v4526 = vmul.f32 %v4523, %v4525
      %v4527 = vadd.f32 %v4526, 0.0036580483
      %v4528 = vmul.f32 %v4523, %v4527
      %v4529 = vadd.f32 %v4528, 0.05243302
      %v4530 = vmul.f32 %v4523, %v4529
      %v4531 = vadd.f32 %v4530, 0.18741608
      %v4532 = vmul.f32 %v4523, %v4531
      %v4533 = vadd.f32 %v4532, 1.1283791
      %v4534 = vmul.f32 %v4295, %v4533
      %v4535 = vmul.f32 %v4523, 3.8918573e-05
      %v4536 = vadd.f32 %v4535, 0.001143296
      %v4537 = vmul.f32 %v4523, %v4536
      %v4538 = vadd.f32 %v4537, 0.014752088
      %v4539 = vmul.f32 %v4523, %v4538
      %v4540 = vadd.f32 %v4539, 0.112945676
      %v4541 = vmul.f32 %v4523, %v4540
      %v4542 = vadd.f32 %v4541, 0.4994258
      %v4543 = vmul.f32 %v4523, %v4542
      %v4544 = vadd.f32 %v4543, 1.0
      %v4545 = vrcp.pop %v4544
      %v4546 = vmul.f32 %v4544, %v4545
      %v4547 = vsub.f32 1.0, %v4546
      %v4548 = vmul.f32 %v4545, %v4547
      %v4549 = vadd.f32 %v4545, %v4548
      %vm4550 = vweird.f32 %v4544
      %vm4551 = vweird.f32 %v4545
      %vm4552 = vmor %vm4550, %vm4551
      %v4553 = vsel %vm4552, %v4545, %v4549
      %v4554 = vand.u32 2147483647, %v4544
      %vm4555 = vcmp.eq.f32.partialorder %v4554, 8.507059e+37
      %v4556 = vand.u32 %v4544, 2147483648
      %v4557 = vor.u32 1.1754944e-38, %v4556
      %v4558 = vsel %vm4555, %v4557, %v4553
      %v4559 = vmul.f32 %v4534, %v4558
      %v4560 = vmin.f32 %v4559, 1.0
      %v4561 = vmax.f32 %v4560, -1.0
      %v4562 = vmul.f32 %v4296, %v4296
      %v4563 = vmin.f32 16.0, %v4562
      %v4564 = vmul.f32 %v4563, 2.1237322e-06
      %v4565 = vadd.f32 %v4564, 0.00028619796
      %v4566 = vmul.f32 %v4563, %v4565
      %v4567 = vadd.f32 %v4566, 0.0036580483
      %v4568 = vmul.f32 %v4563, %v4567
      %v4569 = vadd.f32 %v4568, 0.05243302
      %v4570 = vmul.f32 %v4563, %v4569
      %v4571 = vadd.f32 %v4570, 0.18741608
      %v4572 = vmul.f32 %v4563, %v4571
      %v4573 = vadd.f32 %v4572, 1.1283791
      %v4574 = vmul.f32 %v4296, %v4573
      %v4575 = vmul.f32 %v4563, 3.8918573e-05
      %v4576 = vadd.f32 %v4575, 0.001143296
      %v4577 = vmul.f32 %v4563, %v4576
      %v4578 = vadd.f32 %v4577, 0.014752088
      %v4579 = vmul.f32 %v4563, %v4578
      %v4580 = vadd.f32 %v4579, 0.112945676
      %v4581 = vmul.f32 %v4563, %v4580
      %v4582 = vadd.f32 %v4581, 0.4994258
      %v4583 = vmul.f32 %v4563, %v4582
      %v4584 = vadd.f32 %v4583, 1.0
      %v4585 = vrcp.pop %v4584
      %v4586 = vmul.f32 %v4584, %v4585
      %v4587 = vsub.f32 1.0, %v4586
      %v4588 = vmul.f32 %v4585, %v4587
      %v4589 = vadd.f32 %v4585, %v4588
      %vm4590 = vweird.f32 %v4584
      %vm4591 = vweird.f32 %v4585
      %vm4592 = vmor %vm4590, %vm4591
      %v4593 = vsel %vm4592, %v4585, %v4589
      %v4594 = vand.u32 2147483647, %v4584
      %vm4595 = vcmp.eq.f32.partialorder %v4594, 8.507059e+37
      %v4596 = vand.u32 %v4584, 2147483648
      %v4597 = vor.u32 1.1754944e-38, %v4596
      %v4598 = vsel %vm4595, %v4597, %v4593
      %v4599 = vmul.f32 %v4574, %v4598
      %v4600 = vmin.f32 %v4599, 1.0
      %v4601 = vmax.f32 %v4600, -1.0
      %v4602 = vmul.f32 %v4297, %v4297
      %v4603 = vmin.f32 16.0, %v4602
      %v4604 = vmul.f32 %v4603, 2.1237322e-06
      %v4605 = vadd.f32 %v4604, 0.00028619796
      %v4606 = vmul.f32 %v4603, %v4605
      %v4607 = vadd.f32 %v4606, 0.0036580483
      %v4608 = vmul.f32 %v4603, %v4607
      %v4609 = vadd.f32 %v4608, 0.05243302
      %v4610 = vmul.f32 %v4603, %v4609
      %v4611 = vadd.f32 %v4610, 0.18741608
      %v4612 = vmul.f32 %v4603, %v4611
      %v4613 = vadd.f32 %v4612, 1.1283791
      %v4614 = vmul.f32 %v4297, %v4613
      %v4615 = vmul.f32 %v4603, 3.8918573e-05
      %v4616 = vadd.f32 %v4615, 0.001143296
      %v4617 = vmul.f32 %v4603, %v4616
      %v4618 = vadd.f32 %v4617, 0.014752088
      %v4619 = vmul.f32 %v4603, %v4618
      %v4620 = vadd.f32 %v4619, 0.112945676
      %v4621 = vmul.f32 %v4603, %v4620
      %v4622 = vadd.f32 %v4621, 0.4994258
      %v4623 = vmul.f32 %v4603, %v4622
      %v4624 = vadd.f32 %v4623, 1.0
      %v4625 = vrcp.pop %v4624
      %v4626 = vmul.f32 %v4624, %v4625
      %v4627 = vsub.f32 1.0, %v4626
      %v4628 = vmul.f32 %v4625, %v4627
      %v4629 = vadd.f32 %v4625, %v4628
      %vm4630 = vweird.f32 %v4624
      %vm4631 = vweird.f32 %v4625
      %vm4632 = vmor %vm4630, %vm4631
      %v4633 = vsel %vm4632, %v4625, %v4629
      %v4634 = vand.u32 2147483647, %v4624
      %vm4635 = vcmp.eq.f32.partialorder %v4634, 8.507059e+37
      %v4636 = vand.u32 %v4624, 2147483648
      %v4637 = vor.u32 1.1754944e-38, %v4636
      %v4638 = vsel %vm4635, %v4637, %v4633
      %v4639 = vmul.f32 %v4614, %v4638
      %v4640 = vmin.f32 %v4639, 1.0
      %v4641 = vmax.f32 %v4640, -1.0
      %v4642 = vmul.f32 %v4298, %v4298
      %v4643 = vmin.f32 16.0, %v4642
      %v4644 = vmul.f32 %v4643, 2.1237322e-06
      %v4645 = vadd.f32 %v4644, 0.00028619796
      %v4646 = vmul.f32 %v4643, %v4645
      %v4647 = vadd.f32 %v4646, 0.0036580483
      %v4648 = vmul.f32 %v4643, %v4647
      %v4649 = vadd.f32 %v4648, 0.05243302
      %v4650 = vmul.f32 %v4643, %v4649
      %v4651 = vadd.f32 %v4650, 0.18741608
      %v4652 = vmul.f32 %v4643, %v4651
      %v4653 = vadd.f32 %v4652, 1.1283791
      %v4654 = vmul.f32 %v4298, %v4653
      %v4655 = vmul.f32 %v4643, 3.8918573e-05
      %v4656 = vadd.f32 %v4655, 0.001143296
      %v4657 = vmul.f32 %v4643, %v4656
      %v4658 = vadd.f32 %v4657, 0.014752088
      %v4659 = vmul.f32 %v4643, %v4658
      %v4660 = vadd.f32 %v4659, 0.112945676
      %v4661 = vmul.f32 %v4643, %v4660
      %v4662 = vadd.f32 %v4661, 0.4994258
      %v4663 = vmul.f32 %v4643, %v4662
      %v4664 = vadd.f32 %v4663, 1.0
      %v4665 = vrcp.pop %v4664
      %v4666 = vmul.f32 %v4664, %v4665
      %v4667 = vsub.f32 1.0, %v4666
      %v4668 = vmul.f32 %v4665, %v4667
      %v4669 = vadd.f32 %v4665, %v4668
      %vm4670 = vweird.f32 %v4664
      %vm4671 = vweird.f32 %v4665
      %vm4672 = vmor %vm4670, %vm4671
      %v4673 = vsel %vm4672, %v4665, %v4669
      %v4674 = vand.u32 2147483647, %v4664
      %vm4675 = vcmp.eq.f32.partialorder %v4674, 8.507059e+37
      %v4676 = vand.u32 %v4664, 2147483648
      %v4677 = vor.u32 1.1754944e-38, %v4676
      %v4678 = vsel %vm4675, %v4677, %v4673
      %v4679 = vmul.f32 %v4654, %v4678
      %v4680 = vmin.f32 %v4679, 1.0
      %v4681 = vmax.f32 %v4680, -1.0
      %v4682 = vmul.f32 %v4299, %v4299
      %v4683 = vmin.f32 16.0, %v4682
      %v4684 = vmul.f32 %v4683, 2.1237322e-06
      %v4685 = vadd.f32 %v4684, 0.00028619796
      %v4686 = vmul.f32 %v4683, %v4685
      %v4687 = vadd.f32 %v4686, 0.0036580483
      %v4688 = vmul.f32 %v4683, %v4687
      %v4689 = vadd.f32 %v4688, 0.05243302
      %v4690 = vmul.f32 %v4683, %v4689
      %v4691 = vadd.f32 %v4690, 0.18741608
      %v4692 = vmul.f32 %v4683, %v4691
      %v4693 = vadd.f32 %v4692, 1.1283791
      %v4694 = vmul.f32 %v4299, %v4693
      %v4695 = vmul.f32 %v4683, 3.8918573e-05
      %v4696 = vadd.f32 %v4695, 0.001143296
      %v4697 = vmul.f32 %v4683, %v4696
      %v4698 = vadd.f32 %v4697, 0.014752088
      %v4699 = vmul.f32 %v4683, %v4698
      %v4700 = vadd.f32 %v4699, 0.112945676
      %v4701 = vmul.f32 %v4683, %v4700
      %v4702 = vadd.f32 %v4701, 0.4994258
      %v4703 = vmul.f32 %v4683, %v4702
      %v4704 = vadd.f32 %v4703, 1.0
      %v4705 = vrcp.pop %v4704
      %v4706 = vmul.f32 %v4704, %v4705
      %v4707 = vsub.f32 1.0, %v4706
      %v4708 = vmul.f32 %v4705, %v4707
      %v4709 = vadd.f32 %v4705, %v4708
      %vm4710 = vweird.f32 %v4704
      %vm4711 = vweird.f32 %v4705
      %vm4712 = vmor %vm4710, %vm4711
      %v4713 = vsel %vm4712, %v4705, %v4709
      %v4714 = vand.u32 2147483647, %v4704
      %vm4715 = vcmp.eq.f32.partialorder %v4714, 8.507059e+37
      %v4716 = vand.u32 %v4704, 2147483648
      %v4717 = vor.u32 1.1754944e-38, %v4716
      %v4718 = vsel %vm4715, %v4717, %v4713
      %v4719 = vmul.f32 %v4694, %v4718
      %v4720 = vmin.f32 %v4719, 1.0
      %v4721 = vmax.f32 %v4720, -1.0
      %v4722 = vmul.f32 %v4300, %v4300
      %v4723 = vmin.f32 16.0, %v4722
      %v4724 = vmul.f32 %v4723, 2.1237322e-06
      %v4725 = vadd.f32 %v4724, 0.00028619796
      %v4726 = vmul.f32 %v4723, %v4725
      %v4727 = vadd.f32 %v4726, 0.0036580483
      %v4728 = vmul.f32 %v4723, %v4727
      %v4729 = vadd.f32 %v4728, 0.05243302
      %v4730 = vmul.f32 %v4723, %v4729
      %v4731 = vadd.f32 %v4730, 0.18741608
      %v4732 = vmul.f32 %v4723, %v4731
      %v4733 = vadd.f32 %v4732, 1.1283791
      %v4734 = vmul.f32 %v4300, %v4733
      %v4735 = vmul.f32 %v4723, 3.8918573e-05
      %v4736 = vadd.f32 %v4735, 0.001143296
      %v4737 = vmul.f32 %v4723, %v4736
      %v4738 = vadd.f32 %v4737, 0.014752088
      %v4739 = vmul.f32 %v4723, %v4738
      %v4740 = vadd.f32 %v4739, 0.112945676
      %v4741 = vmul.f32 %v4723, %v4740
      %v4742 = vadd.f32 %v4741, 0.4994258
      %v4743 = vmul.f32 %v4723, %v4742
      %v4744 = vadd.f32 %v4743, 1.0
      %v4745 = vrcp.pop %v4744
      %v4746 = vmul.f32 %v4744, %v4745
      %v4747 = vsub.f32 1.0, %v4746
      %v4748 = vmul.f32 %v4745, %v4747
      %v4749 = vadd.f32 %v4745, %v4748
      %vm4750 = vweird.f32 %v4744
      %vm4751 = vweird.f32 %v4745
      %vm4752 = vmor %vm4750, %vm4751
      %v4753 = vsel %vm4752, %v4745, %v4749
      %v4754 = vand.u32 2147483647, %v4744
      %vm4755 = vcmp.eq.f32.partialorder %v4754, 8.507059e+37
      %v4756 = vand.u32 %v4744, 2147483648
      %v4757 = vor.u32 1.1754944e-38, %v4756
      %v4758 = vsel %vm4755, %v4757, %v4753
      %v4759 = vmul.f32 %v4734, %v4758
      %v4760 = vmin.f32 %v4759, 1.0
      %v4761 = vmax.f32 %v4760, -1.0
      %v4762 = vmul.f32 %v4301, %v4301
      %v4763 = vmin.f32 16.0, %v4762
      %v4764 = vmul.f32 %v4763, 2.1237322e-06
      %v4765 = vadd.f32 %v4764, 0.00028619796
      %v4766 = vmul.f32 %v4763, %v4765
      %v4767 = vadd.f32 %v4766, 0.0036580483
      %v4768 = vmul.f32 %v4763, %v4767
      %v4769 = vadd.f32 %v4768, 0.05243302
      %v4770 = vmul.f32 %v4763, %v4769
      %v4771 = vadd.f32 %v4770, 0.18741608
      %v4772 = vmul.f32 %v4763, %v4771
      %v4773 = vadd.f32 %v4772, 1.1283791
      %v4774 = vmul.f32 %v4301, %v4773
      %v4775 = vmul.f32 %v4763, 3.8918573e-05
      %v4776 = vadd.f32 %v4775, 0.001143296
      %v4777 = vmul.f32 %v4763, %v4776
      %v4778 = vadd.f32 %v4777, 0.014752088
      %v4779 = vmul.f32 %v4763, %v4778
      %v4780 = vadd.f32 %v4779, 0.112945676
      %v4781 = vmul.f32 %v4763, %v4780
      %v4782 = vadd.f32 %v4781, 0.4994258
      %v4783 = vmul.f32 %v4763, %v4782
      %v4784 = vadd.f32 %v4783, 1.0
      %v4785 = vrcp.pop %v4784
      %v4786 = vmul.f32 %v4784, %v4785
      %v4787 = vsub.f32 1.0, %v4786
      %v4788 = vmul.f32 %v4785, %v4787
      %v4789 = vadd.f32 %v4785, %v4788
      %vm4790 = vweird.f32 %v4784
      %vm4791 = vweird.f32 %v4785
      %vm4792 = vmor %vm4790, %vm4791
      %v4793 = vsel %vm4792, %v4785, %v4789
      %v4794 = vand.u32 2147483647, %v4784
      %vm4795 = vcmp.eq.f32.partialorder %v4794, 8.507059e+37
      %v4796 = vand.u32 %v4784, 2147483648
      %v4797 = vor.u32 1.1754944e-38, %v4796
      %v4798 = vsel %vm4795, %v4797, %v4793
      %v4799 = vmul.f32 %v4774, %v4798
      %v4800 = vmin.f32 %v4799, 1.0
      %v4801 = vmax.f32 %v4800, -1.0
      %v4802 = vmul.f32 %v4302, %v4302
      %v4803 = vmin.f32 16.0, %v4802
      %v4804 = vmul.f32 %v4803, 2.1237322e-06
      %v4805 = vadd.f32 %v4804, 0.00028619796
      %v4806 = vmul.f32 %v4803, %v4805
      %v4807 = vadd.f32 %v4806, 0.0036580483
      %v4808 = vmul.f32 %v4803, %v4807
      %v4809 = vadd.f32 %v4808, 0.05243302
      %v4810 = vmul.f32 %v4803, %v4809
      %v4811 = vadd.f32 %v4810, 0.18741608
      %v4812 = vmul.f32 %v4803, %v4811
      %v4813 = vadd.f32 %v4812, 1.1283791
      %v4814 = vmul.f32 %v4302, %v4813
      %v4815 = vmul.f32 %v4803, 3.8918573e-05
      %v4816 = vadd.f32 %v4815, 0.001143296
      %v4817 = vmul.f32 %v4803, %v4816
      %v4818 = vadd.f32 %v4817, 0.014752088
      %v4819 = vmul.f32 %v4803, %v4818
      %v4820 = vadd.f32 %v4819, 0.112945676
      %v4821 = vmul.f32 %v4803, %v4820
      %v4822 = vadd.f32 %v4821, 0.4994258
      %v4823 = vmul.f32 %v4803, %v4822
      %v4824 = vadd.f32 %v4823, 1.0
      %v4825 = vrcp.pop %v4824
      %v4826 = vmul.f32 %v4824, %v4825
      %v4827 = vsub.f32 1.0, %v4826
      %v4828 = vmul.f32 %v4825, %v4827
      %v4829 = vadd.f32 %v4825, %v4828
      %vm4830 = vweird.f32 %v4824
      %vm4831 = vweird.f32 %v4825
      %vm4832 = vmor %vm4830, %vm4831
      %v4833 = vsel %vm4832, %v4825, %v4829
      %v4834 = vand.u32 2147483647, %v4824
      %vm4835 = vcmp.eq.f32.partialorder %v4834, 8.507059e+37
      %v4836 = vand.u32 %v4824, 2147483648
      %v4837 = vor.u32 1.1754944e-38, %v4836
      %v4838 = vsel %vm4835, %v4837, %v4833
      %v4839 = vmul.f32 %v4814, %v4838
      %v4840 = vmin.f32 %v4839, 1.0
      %v4841 = vmax.f32 %v4840, -1.0
      %v4842 = vmul.f32 %v4303, %v4303
      %v4843 = vmin.f32 16.0, %v4842
      %v4844 = vmul.f32 %v4843, 2.1237322e-06
      %v4845 = vadd.f32 %v4844, 0.00028619796
      %v4846 = vmul.f32 %v4843, %v4845
      %v4847 = vadd.f32 %v4846, 0.0036580483
      %v4848 = vmul.f32 %v4843, %v4847
      %v4849 = vadd.f32 %v4848, 0.05243302
      %v4850 = vmul.f32 %v4843, %v4849
      %v4851 = vadd.f32 %v4850, 0.18741608
      %v4852 = vmul.f32 %v4843, %v4851
      %v4853 = vadd.f32 %v4852, 1.1283791
      %v4854 = vmul.f32 %v4303, %v4853
      %v4855 = vmul.f32 %v4843, 3.8918573e-05
      %v4856 = vadd.f32 %v4855, 0.001143296
      %v4857 = vmul.f32 %v4843, %v4856
      %v4858 = vadd.f32 %v4857, 0.014752088
      %v4859 = vmul.f32 %v4843, %v4858
      %v4860 = vadd.f32 %v4859, 0.112945676
      %v4861 = vmul.f32 %v4843, %v4860
      %v4862 = vadd.f32 %v4861, 0.4994258
      %v4863 = vmul.f32 %v4843, %v4862
      %v4864 = vadd.f32 %v4863, 1.0
      %v4865 = vrcp.pop %v4864
      %v4866 = vmul.f32 %v4864, %v4865
      %v4867 = vsub.f32 1.0, %v4866
      %v4868 = vmul.f32 %v4865, %v4867
      %v4869 = vadd.f32 %v4865, %v4868
      %vm4870 = vweird.f32 %v4864
      %vm4871 = vweird.f32 %v4865
      %vm4872 = vmor %vm4870, %vm4871
      %v4873 = vsel %vm4872, %v4865, %v4869
      %v4874 = vand.u32 2147483647, %v4864
      %vm4875 = vcmp.eq.f32.partialorder %v4874, 8.507059e+37
      %v4876 = vand.u32 %v4864, 2147483648
      %v4877 = vor.u32 1.1754944e-38, %v4876
      %v4878 = vsel %vm4875, %v4877, %v4873
      %v4879 = vmul.f32 %v4854, %v4878
      %v4880 = vmin.f32 %v4879, 1.0
      %v4881 = vmax.f32 %v4880, -1.0
      %v4882 = vmul.f32 %v4304, %v4304
      %v4883 = vmin.f32 16.0, %v4882
      %v4884 = vmul.f32 %v4883, 2.1237322e-06
      %v4885 = vadd.f32 %v4884, 0.00028619796
      %v4886 = vmul.f32 %v4883, %v4885
      %v4887 = vadd.f32 %v4886, 0.0036580483
      %v4888 = vmul.f32 %v4883, %v4887
      %v4889 = vadd.f32 %v4888, 0.05243302
      %v4890 = vmul.f32 %v4883, %v4889
      %v4891 = vadd.f32 %v4890, 0.18741608
      %v4892 = vmul.f32 %v4883, %v4891
      %v4893 = vadd.f32 %v4892, 1.1283791
      %v4894 = vmul.f32 %v4304, %v4893
      %v4895 = vmul.f32 %v4883, 3.8918573e-05
      %v4896 = vadd.f32 %v4895, 0.001143296
      %v4897 = vmul.f32 %v4883, %v4896
      %v4898 = vadd.f32 %v4897, 0.014752088
      %v4899 = vmul.f32 %v4883, %v4898
      %v4900 = vadd.f32 %v4899, 0.112945676
      %v4901 = vmul.f32 %v4883, %v4900
      %v4902 = vadd.f32 %v4901, 0.4994258
      %v4903 = vmul.f32 %v4883, %v4902
      %v4904 = vadd.f32 %v4903, 1.0
      %v4905 = vrcp.pop %v4904
      %v4906 = vmul.f32 %v4904, %v4905
      %v4907 = vsub.f32 1.0, %v4906
      %v4908 = vmul.f32 %v4905, %v4907
      %v4909 = vadd.f32 %v4905, %v4908
      %vm4910 = vweird.f32 %v4904
      %vm4911 = vweird.f32 %v4905
      %vm4912 = vmor %vm4910, %vm4911
      %v4913 = vsel %vm4912, %v4905, %v4909
      %v4914 = vand.u32 2147483647, %v4904
      %vm4915 = vcmp.eq.f32.partialorder %v4914, 8.507059e+37
      %v4916 = vand.u32 %v4904, 2147483648
      %v4917 = vor.u32 1.1754944e-38, %v4916
      %v4918 = vsel %vm4915, %v4917, %v4913
      %v4919 = vmul.f32 %v4894, %v4918
      %v4920 = vmin.f32 %v4919, 1.0
      %v4921 = vmax.f32 %v4920, -1.0
      %v4922 = vmul.f32 %v4305, %v4305
      %v4923 = vmin.f32 16.0, %v4922
      %v4924 = vmul.f32 %v4923, 2.1237322e-06
      %v4925 = vadd.f32 %v4924, 0.00028619796
      %v4926 = vmul.f32 %v4923, %v4925
      %v4927 = vadd.f32 %v4926, 0.0036580483
      %v4928 = vmul.f32 %v4923, %v4927
      %v4929 = vadd.f32 %v4928, 0.05243302
      %v4930 = vmul.f32 %v4923, %v4929
      %v4931 = vadd.f32 %v4930, 0.18741608
      %v4932 = vmul.f32 %v4923, %v4931
      %v4933 = vadd.f32 %v4932, 1.1283791
      %v4934 = vmul.f32 %v4305, %v4933
      %v4935 = vmul.f32 %v4923, 3.8918573e-05
      %v4936 = vadd.f32 %v4935, 0.001143296
      %v4937 = vmul.f32 %v4923, %v4936
      %v4938 = vadd.f32 %v4937, 0.014752088
      %v4939 = vmul.f32 %v4923, %v4938
      %v4940 = vadd.f32 %v4939, 0.112945676
      %v4941 = vmul.f32 %v4923, %v4940
      %v4942 = vadd.f32 %v4941, 0.4994258
      %v4943 = vmul.f32 %v4923, %v4942
      %v4944 = vadd.f32 %v4943, 1.0
      %v4945 = vrcp.pop %v4944
      %v4946 = vmul.f32 %v4944, %v4945
      %v4947 = vsub.f32 1.0, %v4946
      %v4948 = vmul.f32 %v4945, %v4947
      %v4949 = vadd.f32 %v4945, %v4948
      %vm4950 = vweird.f32 %v4944
      %vm4951 = vweird.f32 %v4945
      %vm4952 = vmor %vm4950, %vm4951
      %v4953 = vsel %vm4952, %v4945, %v4949
      %v4954 = vand.u32 2147483647, %v4944
      %vm4955 = vcmp.eq.f32.partialorder %v4954, 8.507059e+37
      %v4956 = vand.u32 %v4944, 2147483648
      %v4957 = vor.u32 1.1754944e-38, %v4956
      %v4958 = vsel %vm4955, %v4957, %v4953
      %v4959 = vmul.f32 %v4934, %v4958
      %v4960 = vmin.f32 %v4959, 1.0
      %v4961 = vmax.f32 %v4960, -1.0
      %v4962 = vmul.f32 %v4306, %v4306
      %v4963 = vmin.f32 16.0, %v4962
      %v4964 = vmul.f32 %v4963, 2.1237322e-06
      %v4965 = vadd.f32 %v4964, 0.00028619796
      %v4966 = vmul.f32 %v4963, %v4965
      %v4967 = vadd.f32 %v4966, 0.0036580483
      %v4968 = vmul.f32 %v4963, %v4967
      %v4969 = vadd.f32 %v4968, 0.05243302
      %v4970 = vmul.f32 %v4963, %v4969
      %v4971 = vadd.f32 %v4970, 0.18741608
      %v4972 = vmul.f32 %v4963, %v4971
      %v4973 = vadd.f32 %v4972, 1.1283791
      %v4974 = vmul.f32 %v4306, %v4973
      %v4975 = vmul.f32 %v4963, 3.8918573e-05
      %v4976 = vadd.f32 %v4975, 0.001143296
      %v4977 = vmul.f32 %v4963, %v4976
      %v4978 = vadd.f32 %v4977, 0.014752088
      %v4979 = vmul.f32 %v4963, %v4978
      %v4980 = vadd.f32 %v4979, 0.112945676
      %v4981 = vmul.f32 %v4963, %v4980
      %v4982 = vadd.f32 %v4981, 0.4994258
      %v4983 = vmul.f32 %v4963, %v4982
      %v4984 = vadd.f32 %v4983, 1.0
      %v4985 = vrcp.pop %v4984
      %v4986 = vmul.f32 %v4984, %v4985
      %v4987 = vsub.f32 1.0, %v4986
      %v4988 = vmul.f32 %v4985, %v4987
      %v4989 = vadd.f32 %v4985, %v4988
      %vm4990 = vweird.f32 %v4984
      %vm4991 = vweird.f32 %v4985
      %vm4992 = vmor %vm4990, %vm4991
      %v4993 = vsel %vm4992, %v4985, %v4989
      %v4994 = vand.u32 2147483647, %v4984
      %vm4995 = vcmp.eq.f32.partialorder %v4994, 8.507059e+37
      %v4996 = vand.u32 %v4984, 2147483648
      %v4997 = vor.u32 1.1754944e-38, %v4996
      %v4998 = vsel %vm4995, %v4997, %v4993
      %v4999 = vmul.f32 %v4974, %v4998
      %v5000 = vmin.f32 %v4999, 1.0
      %v5001 = vmax.f32 %v5000, -1.0
      %v5002 = vmul.f32 %v4307, %v4307
      %v5003 = vmin.f32 16.0, %v5002
      %v5004 = vmul.f32 %v5003, 2.1237322e-06
      %v5005 = vadd.f32 %v5004, 0.00028619796
      %v5006 = vmul.f32 %v5003, %v5005
      %v5007 = vadd.f32 %v5006, 0.0036580483
      %v5008 = vmul.f32 %v5003, %v5007
      %v5009 = vadd.f32 %v5008, 0.05243302
      %v5010 = vmul.f32 %v5003, %v5009
      %v5011 = vadd.f32 %v5010, 0.18741608
      %v5012 = vmul.f32 %v5003, %v5011
      %v5013 = vadd.f32 %v5012, 1.1283791
      %v5014 = vmul.f32 %v4307, %v5013
      %v5015 = vmul.f32 %v5003, 3.8918573e-05
      %v5016 = vadd.f32 %v5015, 0.001143296
      %v5017 = vmul.f32 %v5003, %v5016
      %v5018 = vadd.f32 %v5017, 0.014752088
      %v5019 = vmul.f32 %v5003, %v5018
      %v5020 = vadd.f32 %v5019, 0.112945676
      %v5021 = vmul.f32 %v5003, %v5020
      %v5022 = vadd.f32 %v5021, 0.4994258
      %v5023 = vmul.f32 %v5003, %v5022
      %v5024 = vadd.f32 %v5023, 1.0
      %v5025 = vrcp.pop %v5024
      %v5026 = vmul.f32 %v5024, %v5025
      %v5027 = vsub.f32 1.0, %v5026
      %v5028 = vmul.f32 %v5025, %v5027
      %v5029 = vadd.f32 %v5025, %v5028
      %vm5030 = vweird.f32 %v5024
      %vm5031 = vweird.f32 %v5025
      %vm5032 = vmor %vm5030, %vm5031
      %v5033 = vsel %vm5032, %v5025, %v5029
      %v5034 = vand.u32 2147483647, %v5024
      %vm5035 = vcmp.eq.f32.partialorder %v5034, 8.507059e+37
      %v5036 = vand.u32 %v5024, 2147483648
      %v5037 = vor.u32 1.1754944e-38, %v5036
      %v5038 = vsel %vm5035, %v5037, %v5033
      %v5039 = vmul.f32 %v5014, %v5038
      %v5040 = vmin.f32 %v5039, 1.0
      %v5041 = vmax.f32 %v5040, -1.0
      %v5042 = vmul.f32 %v4308, %v4308
      %v5043 = vmin.f32 16.0, %v5042
      %v5044 = vmul.f32 %v5043, 2.1237322e-06
      %v5045 = vadd.f32 %v5044, 0.00028619796
      %v5046 = vmul.f32 %v5043, %v5045
      %v5047 = vadd.f32 %v5046, 0.0036580483
      %v5048 = vmul.f32 %v5043, %v5047
      %v5049 = vadd.f32 %v5048, 0.05243302
      %v5050 = vmul.f32 %v5043, %v5049
      %v5051 = vadd.f32 %v5050, 0.18741608
      %v5052 = vmul.f32 %v5043, %v5051
      %v5053 = vadd.f32 %v5052, 1.1283791
      %v5054 = vmul.f32 %v4308, %v5053
      %v5055 = vmul.f32 %v5043, 3.8918573e-05
      %v5056 = vadd.f32 %v5055, 0.001143296
      %v5057 = vmul.f32 %v5043, %v5056
      %v5058 = vadd.f32 %v5057, 0.014752088
      %v5059 = vmul.f32 %v5043, %v5058
      %v5060 = vadd.f32 %v5059, 0.112945676
      %v5061 = vmul.f32 %v5043, %v5060
      %v5062 = vadd.f32 %v5061, 0.4994258
      %v5063 = vmul.f32 %v5043, %v5062
      %v5064 = vadd.f32 %v5063, 1.0
      %v5065 = vrcp.pop %v5064
      %v5066 = vmul.f32 %v5064, %v5065
      %v5067 = vsub.f32 1.0, %v5066
      %v5068 = vmul.f32 %v5065, %v5067
      %v5069 = vadd.f32 %v5065, %v5068
      %vm5070 = vweird.f32 %v5064
      %vm5071 = vweird.f32 %v5065
      %vm5072 = vmor %vm5070, %vm5071
      %v5073 = vsel %vm5072, %v5065, %v5069
      %v5074 = vand.u32 2147483647, %v5064
      %vm5075 = vcmp.eq.f32.partialorder %v5074, 8.507059e+37
      %v5076 = vand.u32 %v5064, 2147483648
      %v5077 = vor.u32 1.1754944e-38, %v5076
      %v5078 = vsel %vm5075, %v5077, %v5073
      %v5079 = vmul.f32 %v5054, %v5078
      %v5080 = vmin.f32 %v5079, 1.0
      %v5081 = vmax.f32 %v5080, -1.0
      %v5082 = vmul.f32 %v4309, %v4309
      %v5083 = vmin.f32 16.0, %v5082
      %v5084 = vmul.f32 %v5083, 2.1237322e-06
      %v5085 = vadd.f32 %v5084, 0.00028619796
      %v5086 = vmul.f32 %v5083, %v5085
      %v5087 = vadd.f32 %v5086, 0.0036580483
      %v5088 = vmul.f32 %v5083, %v5087
      %v5089 = vadd.f32 %v5088, 0.05243302
      %v5090 = vmul.f32 %v5083, %v5089
      %v5091 = vadd.f32 %v5090, 0.18741608
      %v5092 = vmul.f32 %v5083, %v5091
      %v5093 = vadd.f32 %v5092, 1.1283791
      %v5094 = vmul.f32 %v4309, %v5093
      %v5095 = vmul.f32 %v5083, 3.8918573e-05
      %v5096 = vadd.f32 %v5095, 0.001143296
      %v5097 = vmul.f32 %v5083, %v5096
      %v5098 = vadd.f32 %v5097, 0.014752088
      %v5099 = vmul.f32 %v5083, %v5098
      %v5100 = vadd.f32 %v5099, 0.112945676
      %v5101 = vmul.f32 %v5083, %v5100
      %v5102 = vadd.f32 %v5101, 0.4994258
      %v5103 = vmul.f32 %v5083, %v5102
      %v5104 = vadd.f32 %v5103, 1.0
      %v5105 = vrcp.pop %v5104
      %v5106 = vmul.f32 %v5104, %v5105
      %v5107 = vsub.f32 1.0, %v5106
      %v5108 = vmul.f32 %v5105, %v5107
      %v5109 = vadd.f32 %v5105, %v5108
      %vm5110 = vweird.f32 %v5104
      %vm5111 = vweird.f32 %v5105
      %vm5112 = vmor %vm5110, %vm5111
      %v5113 = vsel %vm5112, %v5105, %v5109
      %v5114 = vand.u32 2147483647, %v5104
      %vm5115 = vcmp.eq.f32.partialorder %v5114, 8.507059e+37
      %v5116 = vand.u32 %v5104, 2147483648
      %v5117 = vor.u32 1.1754944e-38, %v5116
      %v5118 = vsel %vm5115, %v5117, %v5113
      %v5119 = vmul.f32 %v5094, %v5118
      %v5120 = vmin.f32 %v5119, 1.0
      %v5121 = vmax.f32 %v5120, -1.0
      %v5122 = vmul.f32 %v4310, %v4310
      %v5123 = vmin.f32 16.0, %v5122
      %v5124 = vmul.f32 %v5123, 2.1237322e-06
      %v5125 = vadd.f32 %v5124, 0.00028619796
      %v5126 = vmul.f32 %v5123, %v5125
      %v5127 = vadd.f32 %v5126, 0.0036580483
      %v5128 = vmul.f32 %v5123, %v5127
      %v5129 = vadd.f32 %v5128, 0.05243302
      %v5130 = vmul.f32 %v5123, %v5129
      %v5131 = vadd.f32 %v5130, 0.18741608
      %v5132 = vmul.f32 %v5123, %v5131
      %v5133 = vadd.f32 %v5132, 1.1283791
      %v5134 = vmul.f32 %v4310, %v5133
      %v5135 = vmul.f32 %v5123, 3.8918573e-05
      %v5136 = vadd.f32 %v5135, 0.001143296
      %v5137 = vmul.f32 %v5123, %v5136
      %v5138 = vadd.f32 %v5137, 0.014752088
      %v5139 = vmul.f32 %v5123, %v5138
      %v5140 = vadd.f32 %v5139, 0.112945676
      %v5141 = vmul.f32 %v5123, %v5140
      %v5142 = vadd.f32 %v5141, 0.4994258
      %v5143 = vmul.f32 %v5123, %v5142
      %v5144 = vadd.f32 %v5143, 1.0
      %v5145 = vrcp.pop %v5144
      %v5146 = vmul.f32 %v5144, %v5145
      %v5147 = vsub.f32 1.0, %v5146
      %v5148 = vmul.f32 %v5145, %v5147
      %v5149 = vadd.f32 %v5145, %v5148
      %vm5150 = vweird.f32 %v5144
      %vm5151 = vweird.f32 %v5145
      %vm5152 = vmor %vm5150, %vm5151
      %v5153 = vsel %vm5152, %v5145, %v5149
      %v5154 = vand.u32 2147483647, %v5144
      %vm5155 = vcmp.eq.f32.partialorder %v5154, 8.507059e+37
      %v5156 = vand.u32 %v5144, 2147483648
      %v5157 = vor.u32 1.1754944e-38, %v5156
      %v5158 = vsel %vm5155, %v5157, %v5153
      %v5159 = vmul.f32 %v5134, %v5158
      %v5160 = vmin.f32 %v5159, 1.0
      %v5161 = vmax.f32 %v5160, -1.0
      %v5162 = vmul.f32 %v4311, %v4311
      %v5163 = vmin.f32 16.0, %v5162
      %v5164 = vmul.f32 %v5163, 2.1237322e-06
      %v5165 = vadd.f32 %v5164, 0.00028619796
      %v5166 = vmul.f32 %v5163, %v5165
      %v5167 = vadd.f32 %v5166, 0.0036580483
      %v5168 = vmul.f32 %v5163, %v5167
      %v5169 = vadd.f32 %v5168, 0.05243302
      %v5170 = vmul.f32 %v5163, %v5169
      %v5171 = vadd.f32 %v5170, 0.18741608
      %v5172 = vmul.f32 %v5163, %v5171
      %v5173 = vadd.f32 %v5172, 1.1283791
      %v5174 = vmul.f32 %v4311, %v5173
      %v5175 = vmul.f32 %v5163, 3.8918573e-05
      %v5176 = vadd.f32 %v5175, 0.001143296
      %v5177 = vmul.f32 %v5163, %v5176
      %v5178 = vadd.f32 %v5177, 0.014752088
      %v5179 = vmul.f32 %v5163, %v5178
      %v5180 = vadd.f32 %v5179, 0.112945676
      %v5181 = vmul.f32 %v5163, %v5180
      %v5182 = vadd.f32 %v5181, 0.4994258
      %v5183 = vmul.f32 %v5163, %v5182
      %v5184 = vadd.f32 %v5183, 1.0
      %v5185 = vrcp.pop %v5184
      %v5186 = vmul.f32 %v5184, %v5185
      %v5187 = vsub.f32 1.0, %v5186
      %v5188 = vmul.f32 %v5185, %v5187
      %v5189 = vadd.f32 %v5185, %v5188
      %vm5190 = vweird.f32 %v5184
      %vm5191 = vweird.f32 %v5185
      %vm5192 = vmor %vm5190, %vm5191
      %v5193 = vsel %vm5192, %v5185, %v5189
      %v5194 = vand.u32 2147483647, %v5184
      %vm5195 = vcmp.eq.f32.partialorder %v5194, 8.507059e+37
      %v5196 = vand.u32 %v5184, 2147483648
      %v5197 = vor.u32 1.1754944e-38, %v5196
      %v5198 = vsel %vm5195, %v5197, %v5193
      %v5199 = vmul.f32 %v5174, %v5198
      %v5200 = vmin.f32 %v5199, 1.0
      %v5201 = vmax.f32 %v5200, -1.0
      %v5202 = vmul.f32 %v4312, %v4312
      %v5203 = vmin.f32 16.0, %v5202
      %v5204 = vmul.f32 %v5203, 2.1237322e-06
      %v5205 = vadd.f32 %v5204, 0.00028619796
      %v5206 = vmul.f32 %v5203, %v5205
      %v5207 = vadd.f32 %v5206, 0.0036580483
      %v5208 = vmul.f32 %v5203, %v5207
      %v5209 = vadd.f32 %v5208, 0.05243302
      %v5210 = vmul.f32 %v5203, %v5209
      %v5211 = vadd.f32 %v5210, 0.18741608
      %v5212 = vmul.f32 %v5203, %v5211
      %v5213 = vadd.f32 %v5212, 1.1283791
      %v5214 = vmul.f32 %v4312, %v5213
      %v5215 = vmul.f32 %v5203, 3.8918573e-05
      %v5216 = vadd.f32 %v5215, 0.001143296
      %v5217 = vmul.f32 %v5203, %v5216
      %v5218 = vadd.f32 %v5217, 0.014752088
      %v5219 = vmul.f32 %v5203, %v5218
      %v5220 = vadd.f32 %v5219, 0.112945676
      %v5221 = vmul.f32 %v5203, %v5220
      %v5222 = vadd.f32 %v5221, 0.4994258
      %v5223 = vmul.f32 %v5203, %v5222
      %v5224 = vadd.f32 %v5223, 1.0
      %v5225 = vrcp.pop %v5224
      %v5226 = vmul.f32 %v5224, %v5225
      %v5227 = vsub.f32 1.0, %v5226
      %v5228 = vmul.f32 %v5225, %v5227
      %v5229 = vadd.f32 %v5225, %v5228
      %vm5230 = vweird.f32 %v5224
      %vm5231 = vweird.f32 %v5225
      %vm5232 = vmor %vm5230, %vm5231
      %v5233 = vsel %vm5232, %v5225, %v5229
      %v5234 = vand.u32 2147483647, %v5224
      %vm5235 = vcmp.eq.f32.partialorder %v5234, 8.507059e+37
      %v5236 = vand.u32 %v5224, 2147483648
      %v5237 = vor.u32 1.1754944e-38, %v5236
      %v5238 = vsel %vm5235, %v5237, %v5233
      %v5239 = vmul.f32 %v5214, %v5238
      %v5240 = vmin.f32 %v5239, 1.0
      %v5241 = vmax.f32 %v5240, -1.0
      %v5242 = vmul.f32 %v4313, %v4313
      %v5243 = vmin.f32 16.0, %v5242
      %v5244 = vmul.f32 %v5243, 2.1237322e-06
      %v5245 = vadd.f32 %v5244, 0.00028619796
      %v5246 = vmul.f32 %v5243, %v5245
      %v5247 = vadd.f32 %v5246, 0.0036580483
      %v5248 = vmul.f32 %v5243, %v5247
      %v5249 = vadd.f32 %v5248, 0.05243302
      %v5250 = vmul.f32 %v5243, %v5249
      %v5251 = vadd.f32 %v5250, 0.18741608
      %v5252 = vmul.f32 %v5243, %v5251
      %v5253 = vadd.f32 %v5252, 1.1283791
      %v5254 = vmul.f32 %v4313, %v5253
      %v5255 = vmul.f32 %v5243, 3.8918573e-05
      %v5256 = vadd.f32 %v5255, 0.001143296
      %v5257 = vmul.f32 %v5243, %v5256
      %v5258 = vadd.f32 %v5257, 0.014752088
      %v5259 = vmul.f32 %v5243, %v5258
      %v5260 = vadd.f32 %v5259, 0.112945676
      %v5261 = vmul.f32 %v5243, %v5260
      %v5262 = vadd.f32 %v5261, 0.4994258
      %v5263 = vmul.f32 %v5243, %v5262
      %v5264 = vadd.f32 %v5263, 1.0
      %v5265 = vrcp.pop %v5264
      %v5266 = vmul.f32 %v5264, %v5265
      %v5267 = vsub.f32 1.0, %v5266
      %v5268 = vmul.f32 %v5265, %v5267
      %v5269 = vadd.f32 %v5265, %v5268
      %vm5270 = vweird.f32 %v5264
      %vm5271 = vweird.f32 %v5265
      %vm5272 = vmor %vm5270, %vm5271
      %v5273 = vsel %vm5272, %v5265, %v5269
      %v5274 = vand.u32 2147483647, %v5264
      %vm5275 = vcmp.eq.f32.partialorder %v5274, 8.507059e+37
      %v5276 = vand.u32 %v5264, 2147483648
      %v5277 = vor.u32 1.1754944e-38, %v5276
      %v5278 = vsel %vm5275, %v5277, %v5273
      %v5279 = vmul.f32 %v5254, %v5278
      %v5280 = vmin.f32 %v5279, 1.0
      %v5281 = vmax.f32 %v5280, -1.0
      %v5282 = vmul.f32 %v4314, %v4314
      %v5283 = vmin.f32 16.0, %v5282
      %v5284 = vmul.f32 %v5283, 2.1237322e-06
      %v5285 = vadd.f32 %v5284, 0.00028619796
      %v5286 = vmul.f32 %v5283, %v5285
      %v5287 = vadd.f32 %v5286, 0.0036580483
      %v5288 = vmul.f32 %v5283, %v5287
      %v5289 = vadd.f32 %v5288, 0.05243302
      %v5290 = vmul.f32 %v5283, %v5289
      %v5291 = vadd.f32 %v5290, 0.18741608
      %v5292 = vmul.f32 %v5283, %v5291
      %v5293 = vadd.f32 %v5292, 1.1283791
      %v5294 = vmul.f32 %v4314, %v5293
      %v5295 = vmul.f32 %v5283, 3.8918573e-05
      %v5296 = vadd.f32 %v5295, 0.001143296
      %v5297 = vmul.f32 %v5283, %v5296
      %v5298 = vadd.f32 %v5297, 0.014752088
      %v5299 = vmul.f32 %v5283, %v5298
      %v5300 = vadd.f32 %v5299, 0.112945676
      %v5301 = vmul.f32 %v5283, %v5300
      %v5302 = vadd.f32 %v5301, 0.4994258
      %v5303 = vmul.f32 %v5283, %v5302
      %v5304 = vadd.f32 %v5303, 1.0
      %v5305 = vrcp.pop %v5304
      %v5306 = vmul.f32 %v5304, %v5305
      %v5307 = vsub.f32 1.0, %v5306
      %v5308 = vmul.f32 %v5305, %v5307
      %v5309 = vadd.f32 %v5305, %v5308
      %vm5310 = vweird.f32 %v5304
      %vm5311 = vweird.f32 %v5305
      %vm5312 = vmor %vm5310, %vm5311
      %v5313 = vsel %vm5312, %v5305, %v5309
      %v5314 = vand.u32 2147483647, %v5304
      %vm5315 = vcmp.eq.f32.partialorder %v5314, 8.507059e+37
      %v5316 = vand.u32 %v5304, 2147483648
      %v5317 = vor.u32 1.1754944e-38, %v5316
      %v5318 = vsel %vm5315, %v5317, %v5313
      %v5319 = vmul.f32 %v5294, %v5318
      %v5320 = vmin.f32 %v5319, 1.0
      %v5321 = vmax.f32 %v5320, -1.0
      %v5322 = vmul.f32 %v4315, %v4315
      %v5323 = vmin.f32 16.0, %v5322
      %v5324 = vmul.f32 %v5323, 2.1237322e-06
      %v5325 = vadd.f32 %v5324, 0.00028619796
      %v5326 = vmul.f32 %v5323, %v5325
      %v5327 = vadd.f32 %v5326, 0.0036580483
      %v5328 = vmul.f32 %v5323, %v5327
      %v5329 = vadd.f32 %v5328, 0.05243302
      %v5330 = vmul.f32 %v5323, %v5329
      %v5331 = vadd.f32 %v5330, 0.18741608
      %v5332 = vmul.f32 %v5323, %v5331
      %v5333 = vadd.f32 %v5332, 1.1283791
      %v5334 = vmul.f32 %v4315, %v5333
      %v5335 = vmul.f32 %v5323, 3.8918573e-05
      %v5336 = vadd.f32 %v5335, 0.001143296
      %v5337 = vmul.f32 %v5323, %v5336
      %v5338 = vadd.f32 %v5337, 0.014752088
      %v5339 = vmul.f32 %v5323, %v5338
      %v5340 = vadd.f32 %v5339, 0.112945676
      %v5341 = vmul.f32 %v5323, %v5340
      %v5342 = vadd.f32 %v5341, 0.4994258
      %v5343 = vmul.f32 %v5323, %v5342
      %v5344 = vadd.f32 %v5343, 1.0
      %v5345 = vrcp.pop %v5344
      %v5346 = vmul.f32 %v5344, %v5345
      %v5347 = vsub.f32 1.0, %v5346
      %v5348 = vmul.f32 %v5345, %v5347
      %v5349 = vadd.f32 %v5345, %v5348
      %vm5350 = vweird.f32 %v5344
      %vm5351 = vweird.f32 %v5345
      %vm5352 = vmor %vm5350, %vm5351
      %v5353 = vsel %vm5352, %v5345, %v5349
      %v5354 = vand.u32 2147483647, %v5344
      %vm5355 = vcmp.eq.f32.partialorder %v5354, 8.507059e+37
      %v5356 = vand.u32 %v5344, 2147483648
      %v5357 = vor.u32 1.1754944e-38, %v5356
      %v5358 = vsel %vm5355, %v5357, %v5353
      %v5359 = vmul.f32 %v5334, %v5358
      %v5360 = vmin.f32 %v5359, 1.0
      %v5361 = vmax.f32 %v5360, -1.0
      %v5362 = vmul.f32 %v4316, %v4316
      %v5363 = vmin.f32 16.0, %v5362
      %v5364 = vmul.f32 %v5363, 2.1237322e-06
      %v5365 = vadd.f32 %v5364, 0.00028619796
      %v5366 = vmul.f32 %v5363, %v5365
      %v5367 = vadd.f32 %v5366, 0.0036580483
      %v5368 = vmul.f32 %v5363, %v5367
      %v5369 = vadd.f32 %v5368, 0.05243302
      %v5370 = vmul.f32 %v5363, %v5369
      %v5371 = vadd.f32 %v5370, 0.18741608
      %v5372 = vmul.f32 %v5363, %v5371
      %v5373 = vadd.f32 %v5372, 1.1283791
      %v5374 = vmul.f32 %v4316, %v5373
      %v5375 = vmul.f32 %v5363, 3.8918573e-05
      %v5376 = vadd.f32 %v5375, 0.001143296
      %v5377 = vmul.f32 %v5363, %v5376
      %v5378 = vadd.f32 %v5377, 0.014752088
      %v5379 = vmul.f32 %v5363, %v5378
      %v5380 = vadd.f32 %v5379, 0.112945676
      %v5381 = vmul.f32 %v5363, %v5380
      %v5382 = vadd.f32 %v5381, 0.4994258
      %v5383 = vmul.f32 %v5363, %v5382
      %v5384 = vadd.f32 %v5383, 1.0
      %v5385 = vrcp.pop %v5384
      %v5386 = vmul.f32 %v5384, %v5385
      %v5387 = vsub.f32 1.0, %v5386
      %v5388 = vmul.f32 %v5385, %v5387
      %v5389 = vadd.f32 %v5385, %v5388
      %vm5390 = vweird.f32 %v5384
      %vm5391 = vweird.f32 %v5385
      %vm5392 = vmor %vm5390, %vm5391
      %v5393 = vsel %vm5392, %v5385, %v5389
      %v5394 = vand.u32 2147483647, %v5384
      %vm5395 = vcmp.eq.f32.partialorder %v5394, 8.507059e+37
      %v5396 = vand.u32 %v5384, 2147483648
      %v5397 = vor.u32 1.1754944e-38, %v5396
      %v5398 = vsel %vm5395, %v5397, %v5393
      %v5399 = vmul.f32 %v5374, %v5398
      %v5400 = vmin.f32 %v5399, 1.0
      %v5401 = vmax.f32 %v5400, -1.0
      %v5402 = vmul.f32 %v4317, %v4317
      %v5403 = vmin.f32 16.0, %v5402
      %v5404 = vmul.f32 %v5403, 2.1237322e-06
      %v5405 = vadd.f32 %v5404, 0.00028619796
      %v5406 = vmul.f32 %v5403, %v5405
      %v5407 = vadd.f32 %v5406, 0.0036580483
      %v5408 = vmul.f32 %v5403, %v5407
      %v5409 = vadd.f32 %v5408, 0.05243302
      %v5410 = vmul.f32 %v5403, %v5409
      %v5411 = vadd.f32 %v5410, 0.18741608
      %v5412 = vmul.f32 %v5403, %v5411
      %v5413 = vadd.f32 %v5412, 1.1283791
      %v5414 = vmul.f32 %v4317, %v5413
      %v5415 = vmul.f32 %v5403, 3.8918573e-05
      %v5416 = vadd.f32 %v5415, 0.001143296
      %v5417 = vmul.f32 %v5403, %v5416
      %v5418 = vadd.f32 %v5417, 0.014752088
      %v5419 = vmul.f32 %v5403, %v5418
      %v5420 = vadd.f32 %v5419, 0.112945676
      %v5421 = vmul.f32 %v5403, %v5420
      %v5422 = vadd.f32 %v5421, 0.4994258
      %v5423 = vmul.f32 %v5403, %v5422
      %v5424 = vadd.f32 %v5423, 1.0
      %v5425 = vrcp.pop %v5424
      %v5426 = vmul.f32 %v5424, %v5425
      %v5427 = vsub.f32 1.0, %v5426
      %v5428 = vmul.f32 %v5425, %v5427
      %v5429 = vadd.f32 %v5425, %v5428
      %vm5430 = vweird.f32 %v5424
      %vm5431 = vweird.f32 %v5425
      %vm5432 = vmor %vm5430, %vm5431
      %v5433 = vsel %vm5432, %v5425, %v5429
      %v5434 = vand.u32 2147483647, %v5424
      %vm5435 = vcmp.eq.f32.partialorder %v5434, 8.507059e+37
      %v5436 = vand.u32 %v5424, 2147483648
      %v5437 = vor.u32 1.1754944e-38, %v5436
      %v5438 = vsel %vm5435, %v5437, %v5433
      %v5439 = vmul.f32 %v5414, %v5438
      %v5440 = vmin.f32 %v5439, 1.0
      %v5441 = vmax.f32 %v5440, -1.0
      %v5442 = vmul.f32 %v4318, %v4318
      %v5443 = vmin.f32 16.0, %v5442
      %v5444 = vmul.f32 %v5443, 2.1237322e-06
      %v5445 = vadd.f32 %v5444, 0.00028619796
      %v5446 = vmul.f32 %v5443, %v5445
      %v5447 = vadd.f32 %v5446, 0.0036580483
      %v5448 = vmul.f32 %v5443, %v5447
      %v5449 = vadd.f32 %v5448, 0.05243302
      %v5450 = vmul.f32 %v5443, %v5449
      %v5451 = vadd.f32 %v5450, 0.18741608
      %v5452 = vmul.f32 %v5443, %v5451
      %v5453 = vadd.f32 %v5452, 1.1283791
      %v5454 = vmul.f32 %v4318, %v5453
      %v5455 = vmul.f32 %v5443, 3.8918573e-05
      %v5456 = vadd.f32 %v5455, 0.001143296
      %v5457 = vmul.f32 %v5443, %v5456
      %v5458 = vadd.f32 %v5457, 0.014752088
      %v5459 = vmul.f32 %v5443, %v5458
      %v5460 = vadd.f32 %v5459, 0.112945676
      %v5461 = vmul.f32 %v5443, %v5460
      %v5462 = vadd.f32 %v5461, 0.4994258
      %v5463 = vmul.f32 %v5443, %v5462
      %v5464 = vadd.f32 %v5463, 1.0
      %v5465 = vrcp.pop %v5464
      %v5466 = vmul.f32 %v5464, %v5465
      %v5467 = vsub.f32 1.0, %v5466
      %v5468 = vmul.f32 %v5465, %v5467
      %v5469 = vadd.f32 %v5465, %v5468
      %vm5470 = vweird.f32 %v5464
      %vm5471 = vweird.f32 %v5465
      %vm5472 = vmor %vm5470, %vm5471
      %v5473 = vsel %vm5472, %v5465, %v5469
      %v5474 = vand.u32 2147483647, %v5464
      %vm5475 = vcmp.eq.f32.partialorder %v5474, 8.507059e+37
      %v5476 = vand.u32 %v5464, 2147483648
      %v5477 = vor.u32 1.1754944e-38, %v5476
      %v5478 = vsel %vm5475, %v5477, %v5473
      %v5479 = vmul.f32 %v5454, %v5478
      %v5480 = vmin.f32 %v5479, 1.0
      %v5481 = vmax.f32 %v5480, -1.0
      %v5482 = vmul.f32 %v4319, %v4319
      %v5483 = vmin.f32 16.0, %v5482
      %v5484 = vmul.f32 %v5483, 2.1237322e-06
      %v5485 = vadd.f32 %v5484, 0.00028619796
      %v5486 = vmul.f32 %v5483, %v5485
      %v5487 = vadd.f32 %v5486, 0.0036580483
      %v5488 = vmul.f32 %v5483, %v5487
      %v5489 = vadd.f32 %v5488, 0.05243302
      %v5490 = vmul.f32 %v5483, %v5489
      %v5491 = vadd.f32 %v5490, 0.18741608
      %v5492 = vmul.f32 %v5483, %v5491
      %v5493 = vadd.f32 %v5492, 1.1283791
      %v5494 = vmul.f32 %v4319, %v5493
      %v5495 = vmul.f32 %v5483, 3.8918573e-05
      %v5496 = vadd.f32 %v5495, 0.001143296
      %v5497 = vmul.f32 %v5483, %v5496
      %v5498 = vadd.f32 %v5497, 0.014752088
      %v5499 = vmul.f32 %v5483, %v5498
      %v5500 = vadd.f32 %v5499, 0.112945676
      %v5501 = vmul.f32 %v5483, %v5500
      %v5502 = vadd.f32 %v5501, 0.4994258
      %v5503 = vmul.f32 %v5483, %v5502
      %v5504 = vadd.f32 %v5503, 1.0
      %v5505 = vrcp.pop %v5504
      %v5506 = vmul.f32 %v5504, %v5505
      %v5507 = vsub.f32 1.0, %v5506
      %v5508 = vmul.f32 %v5505, %v5507
      %v5509 = vadd.f32 %v5505, %v5508
      %vm5510 = vweird.f32 %v5504
      %vm5511 = vweird.f32 %v5505
      %vm5512 = vmor %vm5510, %vm5511
      %v5513 = vsel %vm5512, %v5505, %v5509
      %v5514 = vand.u32 2147483647, %v5504
      %vm5515 = vcmp.eq.f32.partialorder %v5514, 8.507059e+37
      %v5516 = vand.u32 %v5504, 2147483648
      %v5517 = vor.u32 1.1754944e-38, %v5516
      %v5518 = vsel %vm5515, %v5517, %v5513
      %v5519 = vmul.f32 %v5494, %v5518
      %v5520 = vmin.f32 %v5519, 1.0
      %v5521 = vmax.f32 %v5520, -1.0
      %v5522 = vmul.f32 %v4320, %v4320
      %v5523 = vmin.f32 16.0, %v5522
      %v5524 = vmul.f32 %v5523, 2.1237322e-06
      %v5525 = vadd.f32 %v5524, 0.00028619796
      %v5526 = vmul.f32 %v5523, %v5525
      %v5527 = vadd.f32 %v5526, 0.0036580483
      %v5528 = vmul.f32 %v5523, %v5527
      %v5529 = vadd.f32 %v5528, 0.05243302
      %v5530 = vmul.f32 %v5523, %v5529
      %v5531 = vadd.f32 %v5530, 0.18741608
      %v5532 = vmul.f32 %v5523, %v5531
      %v5533 = vadd.f32 %v5532, 1.1283791
      %v5534 = vmul.f32 %v4320, %v5533
      %v5535 = vmul.f32 %v5523, 3.8918573e-05
      %v5536 = vadd.f32 %v5535, 0.001143296
      %v5537 = vmul.f32 %v5523, %v5536
      %v5538 = vadd.f32 %v5537, 0.014752088
      %v5539 = vmul.f32 %v5523, %v5538
      %v5540 = vadd.f32 %v5539, 0.112945676
      %v5541 = vmul.f32 %v5523, %v5540
      %v5542 = vadd.f32 %v5541, 0.4994258
      %v5543 = vmul.f32 %v5523, %v5542
      %v5544 = vadd.f32 %v5543, 1.0
      %v5545 = vrcp.pop %v5544
      %v5546 = vmul.f32 %v5544, %v5545
      %v5547 = vsub.f32 1.0, %v5546
      %v5548 = vmul.f32 %v5545, %v5547
      %v5549 = vadd.f32 %v5545, %v5548
      %vm5550 = vweird.f32 %v5544
      %vm5551 = vweird.f32 %v5545
      %vm5552 = vmor %vm5550, %vm5551
      %v5553 = vsel %vm5552, %v5545, %v5549
      %v5554 = vand.u32 2147483647, %v5544
      %vm5555 = vcmp.eq.f32.partialorder %v5554, 8.507059e+37
      %v5556 = vand.u32 %v5544, 2147483648
      %v5557 = vor.u32 1.1754944e-38, %v5556
      %v5558 = vsel %vm5555, %v5557, %v5553
      %v5559 = vmul.f32 %v5534, %v5558
      %v5560 = vmin.f32 %v5559, 1.0
      %v5561 = vmax.f32 %v5560, -1.0
      %v5562 = vmul.f32 %v4321, %v4321
      %v5563 = vmin.f32 16.0, %v5562
      %v5564 = vmul.f32 %v5563, 2.1237322e-06
      %v5565 = vadd.f32 %v5564, 0.00028619796
      %v5566 = vmul.f32 %v5563, %v5565
      %v5567 = vadd.f32 %v5566, 0.0036580483
      %v5568 = vmul.f32 %v5563, %v5567
      %v5569 = vadd.f32 %v5568, 0.05243302
      %v5570 = vmul.f32 %v5563, %v5569
      %v5571 = vadd.f32 %v5570, 0.18741608
      %v5572 = vmul.f32 %v5563, %v5571
      %v5573 = vadd.f32 %v5572, 1.1283791
      %v5574 = vmul.f32 %v4321, %v5573
      %v5575 = vmul.f32 %v5563, 3.8918573e-05
      %v5576 = vadd.f32 %v5575, 0.001143296
      %v5577 = vmul.f32 %v5563, %v5576
      %v5578 = vadd.f32 %v5577, 0.014752088
      %v5579 = vmul.f32 %v5563, %v5578
      %v5580 = vadd.f32 %v5579, 0.112945676
      %v5581 = vmul.f32 %v5563, %v5580
      %v5582 = vadd.f32 %v5581, 0.4994258
      %v5583 = vmul.f32 %v5563, %v5582
      %v5584 = vadd.f32 %v5583, 1.0
      %v5585 = vrcp.pop %v5584
      %v5586 = vmul.f32 %v5584, %v5585
      %v5587 = vsub.f32 1.0, %v5586
      %v5588 = vmul.f32 %v5585, %v5587
      %v5589 = vadd.f32 %v5585, %v5588
      %vm5590 = vweird.f32 %v5584
      %vm5591 = vweird.f32 %v5585
      %vm5592 = vmor %vm5590, %vm5591
      %v5593 = vsel %vm5592, %v5585, %v5589
      %v5594 = vand.u32 2147483647, %v5584
      %vm5595 = vcmp.eq.f32.partialorder %v5594, 8.507059e+37
      %v5596 = vand.u32 %v5584, 2147483648
      %v5597 = vor.u32 1.1754944e-38, %v5596
      %v5598 = vsel %vm5595, %v5597, %v5593
      %v5599 = vmul.f32 %v5574, %v5598
      %v5600 = vmin.f32 %v5599, 1.0
      %v5601 = vmax.f32 %v5600, -1.0
      %v5602 = vadd.f32 %v4361, 1.0
      %v5603 = vadd.f32 %v4401, 1.0
      %v5604 = vadd.f32 %v4441, 1.0
      %v5605 = vadd.f32 %v4481, 1.0
      %v5606 = vadd.f32 %v4521, 1.0
      %v5607 = vadd.f32 %v4561, 1.0
      %v5608 = vadd.f32 %v4601, 1.0
      %v5609 = vadd.f32 %v4641, 1.0
      %v5610 = vadd.f32 %v4681, 1.0
      %v5611 = vadd.f32 %v4721, 1.0
      %v5612 = vadd.f32 %v4761, 1.0
      %v5613 = vadd.f32 %v4801, 1.0
      %v5614 = vadd.f32 %v4841, 1.0
      %v5615 = vadd.f32 %v4881, 1.0
      %v5616 = vadd.f32 %v4921, 1.0
      %v5617 = vadd.f32 %v4961, 1.0
      %v5618 = vadd.f32 %v5001, 1.0
      %v5619 = vadd.f32 %v5041, 1.0
      %v5620 = vadd.f32 %v5081, 1.0
      %v5621 = vadd.f32 %v5121, 1.0
      %v5622 = vadd.f32 %v5161, 1.0
      %v5623 = vadd.f32 %v5201, 1.0
      %v5624 = vadd.f32 %v5241, 1.0
      %v5625 = vadd.f32 %v5281, 1.0
      %v5626 = vadd.f32 %v5321, 1.0
      %v5627 = vadd.f32 %v5361, 1.0
      %v5628 = vadd.f32 %v5401, 1.0
      %v5629 = vadd.f32 %v5441, 1.0
      %v5630 = vadd.f32 %v5481, 1.0
      %v5631 = vadd.f32 %v5521, 1.0
      %v5632 = vadd.f32 %v5561, 1.0
      %v5633 = vadd.f32 %v5601, 1.0
      %v5634 = vmul.f32 %v4258, %v5602
      %v5635 = vmul.f32 %v4259, %v5603
      %v5636 = vmul.f32 %v4260, %v5604
      %v5637 = vmul.f32 %v4261, %v5605
      %v5638 = vmul.f32 %v4262, %v5606
      %v5639 = vmul.f32 %v4263, %v5607
      %v5640 = vmul.f32 %v4264, %v5608
      %v5641 = vmul.f32 %v4265, %v5609
      %v5642 = vmul.f32 %v4266, %v5610
      %v5643 = vmul.f32 %v4267, %v5611
      %v5644 = vmul.f32 %v4268, %v5612
      %v5645 = vmul.f32 %v4269, %v5613
      %v5646 = vmul.f32 %v4270, %v5614
      %v5647 = vmul.f32 %v4271, %v5615
      %v5648 = vmul.f32 %v4272, %v5616
      %v5649 = vmul.f32 %v4273, %v5617
      %v5650 = vmul.f32 %v4274, %v5618
      %v5651 = vmul.f32 %v4275, %v5619
      %v5652 = vmul.f32 %v4276, %v5620
      %v5653 = vmul.f32 %v4277, %v5621
      %v5654 = vmul.f32 %v4278, %v5622
      %v5655 = vmul.f32 %v4279, %v5623
      %v5656 = vmul.f32 %v4280, %v5624
      %v5657 = vmul.f32 %v4281, %v5625
      %v5658 = vmul.f32 %v4282, %v5626
      %v5659 = vmul.f32 %v4283, %v5627
      %v5660 = vmul.f32 %v4284, %v5628
      %v5661 = vmul.f32 %v4285, %v5629
      %v5662 = vmul.f32 %v4286, %v5630
      %v5663 = vmul.f32 %v4287, %v5631
      %v5664 = vmul.f32 %v4288, %v5632
      %v5665 = vmul.f32 %v4289, %v5633
      %v5666 = vpack.c.bf16 %v5635, %v5634
      %v5667 = vpack.c.bf16 %v5637, %v5636
      %v5668 = vpack.c.bf16 %v5639, %v5638
      %v5669 = vpack.c.bf16 %v5641, %v5640
      %v5670 = vpack.c.bf16 %v5643, %v5642
      %v5671 = vpack.c.bf16 %v5645, %v5644
      %v5672 = vpack.c.bf16 %v5647, %v5646
      %v5673 = vpack.c.bf16 %v5649, %v5648
      %v5674 = vpack.c.bf16 %v5651, %v5650
      %v5675 = vpack.c.bf16 %v5653, %v5652
      %v5676 = vpack.c.bf16 %v5655, %v5654
      %v5677 = vpack.c.bf16 %v5657, %v5656
      %v5678 = vpack.c.bf16 %v5659, %v5658
      %v5679 = vpack.c.bf16 %v5661, %v5660
      %v5680 = vpack.c.bf16 %v5663, %v5662
      %v5681 = vpack.c.bf16 %v5665, %v5664
      %v5682 = vld [vmem:[%s5] sm:$0xf]
      %v5683 = vld [vmem:[%s5 + $0x4] sm:$0xf]
      %v5684 = vld [vmem:[%s5 + $0x8] sm:$0xf]
      %v5685 = vld [vmem:[%s5 + $0xc] sm:$0xf]
      %v5686 = vld [vmem:[%s5 + $0x10] sm:$0xf]
      %v5687 = vld [vmem:[%s5 + $0x14] sm:$0xf]
      %v5688 = vld [vmem:[%s5 + $0x18] sm:$0xf]
      %v5689 = vld [vmem:[%s5 + $0x1c] sm:$0xf]
      %v5690 = vld [vmem:[%s5 + $0x20] sm:$0xf]
      %v5691 = vld [vmem:[%s5 + $0x24] sm:$0xf]
      %v5692 = vld [vmem:[%s5 + $0x28] sm:$0xf]
      %v5693 = vld [vmem:[%s5 + $0x2c] sm:$0xf]
      %v5694 = vld [vmem:[%s5 + $0x30] sm:$0xf]
      %v5695 = vld [vmem:[%s5 + $0x34] sm:$0xf]
      %v5696 = vld [vmem:[%s5 + $0x38] sm:$0xf]
      %v5697 = vld [vmem:[%s5 + $0x3c] sm:$0xf]
      %v5714 = vunpack.c.l.b16 %v5682
      %v5715 = vunpack.c.l.b16 %v5683
      %v5716 = vunpack.c.l.b16 %v5684
      %v5717 = vunpack.c.l.b16 %v5685
      %v5718 = vunpack.c.l.b16 %v5686
      %v5719 = vunpack.c.l.b16 %v5687
      %v5720 = vunpack.c.l.b16 %v5688
      %v5721 = vunpack.c.l.b16 %v5689
      %v5722 = vunpack.c.l.b16 %v5690
      %v5723 = vunpack.c.l.b16 %v5691
      %v5724 = vunpack.c.l.b16 %v5692
      %v5725 = vunpack.c.l.b16 %v5693
      %v5726 = vunpack.c.l.b16 %v5694
      %v5727 = vunpack.c.l.b16 %v5695
      %v5728 = vunpack.c.l.b16 %v5696
      %v5729 = vunpack.c.l.b16 %v5697
      %v5730 = vpack.c.b16 %v5715, %v5714
      %v5731 = vpack.c.b16 %v5717, %v5716
      %v5732 = vpack.c.b16 %v5719, %v5718
      %v5733 = vpack.c.b16 %v5721, %v5720
      %v5734 = vpack.c.b16 %v5723, %v5722
      %v5735 = vpack.c.b16 %v5725, %v5724
      %v5736 = vpack.c.b16 %v5727, %v5726
      %v5737 = vpack.c.b16 %v5729, %v5728
      %5746 = vmatpush.bf16.msra.mxu0 %v5737
      %5747 = vmatpush.bf16.msra.mxu0 %v5736
      %5748 = vmatpush.bf16.msra.mxu0 %v5735
      %5749 = vmatpush.bf16.msra.mxu0 %v5734
      %5750 = vmatpush.bf16.msra.mxu0 %v5733
      %5751 = vmatpush.bf16.msra.mxu0 %v5732
      %5752 = vmatpush.bf16.msra.mxu0 %v5731
      %5753 = vmatpush.bf16.msra.mxu0 %v5730
      %5754 = vmatmul.bf16.gmra.mxu0 %v5666
      %v5755 = vpop.f32.mrf.mxu0
      %v5756 = vadd.f32 0.0, %v5755
      %v5757 = vpop.f32.mrf.mxu0
      %v5758 = vadd.f32 0.0, %v5757
      %5759 = vmatmul.bf16.gmra.mxu0 %v5667
      %v5760 = vpop.f32.mrf.mxu0
      %v5761 = vadd.f32 0.0, %v5760
      %v5762 = vpop.f32.mrf.mxu0
      %v5763 = vadd.f32 0.0, %v5762
      %5764 = vmatmul.bf16.gmra.mxu0 %v5668
      %v5765 = vpop.f32.mrf.mxu0
      %v5766 = vadd.f32 0.0, %v5765
      %v5767 = vpop.f32.mrf.mxu0
      %v5768 = vadd.f32 0.0, %v5767
      %5769 = vmatmul.bf16.gmra.mxu0 %v5669
      %v5770 = vpop.f32.mrf.mxu0
      %v5771 = vadd.f32 0.0, %v5770
      %v5772 = vpop.f32.mrf.mxu0
      %v5773 = vadd.f32 0.0, %v5772
      %5774 = vmatmul.bf16.gmra.mxu0 %v5670
      %v5775 = vpop.f32.mrf.mxu0
      %v5776 = vadd.f32 0.0, %v5775
      %v5777 = vpop.f32.mrf.mxu0
      %v5778 = vadd.f32 0.0, %v5777
      %5779 = vmatmul.bf16.gmra.mxu0 %v5671
      %v5780 = vpop.f32.mrf.mxu0
      %v5781 = vadd.f32 0.0, %v5780
      %v5782 = vpop.f32.mrf.mxu0
      %v5783 = vadd.f32 0.0, %v5782
      %5784 = vmatmul.bf16.gmra.mxu0 %v5672
      %v5785 = vpop.f32.mrf.mxu0
      %v5786 = vadd.f32 0.0, %v5785
      %v5787 = vpop.f32.mrf.mxu0
      %v5788 = vadd.f32 0.0, %v5787
      %5789 = vmatmul.bf16.gmra.mxu0 %v5673
      %v5790 = vpop.f32.mrf.mxu0
      %v5791 = vadd.f32 0.0, %v5790
      %v5792 = vpop.f32.mrf.mxu0
      %v5793 = vadd.f32 0.0, %v5792
      %5794 = vmatmul.bf16.gmra.mxu0 %v5674
      %v5795 = vpop.f32.mrf.mxu0
      %v5796 = vadd.f32 0.0, %v5795
      %v5797 = vpop.f32.mrf.mxu0
      %v5798 = vadd.f32 0.0, %v5797
      %5799 = vmatmul.bf16.gmra.mxu0 %v5675
      %v5800 = vpop.f32.mrf.mxu0
      %v5801 = vadd.f32 0.0, %v5800
      %v5802 = vpop.f32.mrf.mxu0
      %v5803 = vadd.f32 0.0, %v5802
      %5804 = vmatmul.bf16.gmra.mxu0 %v5676
      %v5805 = vpop.f32.mrf.mxu0
      %v5806 = vadd.f32 0.0, %v5805
      %v5807 = vpop.f32.mrf.mxu0
      %v5808 = vadd.f32 0.0, %v5807
      %5809 = vmatmul.bf16.gmra.mxu0 %v5677
      %v5810 = vpop.f32.mrf.mxu0
      %v5811 = vadd.f32 0.0, %v5810
      %v5812 = vpop.f32.mrf.mxu0
      %v5813 = vadd.f32 0.0, %v5812
      %5814 = vmatmul.bf16.gmra.mxu0 %v5678
      %v5815 = vpop.f32.mrf.mxu0
      %v5816 = vadd.f32 0.0, %v5815
      %v5817 = vpop.f32.mrf.mxu0
      %v5818 = vadd.f32 0.0, %v5817
      %5819 = vmatmul.bf16.gmra.mxu0 %v5679
      %v5820 = vpop.f32.mrf.mxu0
      %v5821 = vadd.f32 0.0, %v5820
      %v5822 = vpop.f32.mrf.mxu0
      %v5823 = vadd.f32 0.0, %v5822
      %5824 = vmatmul.bf16.gmra.mxu0 %v5680
      %v5825 = vpop.f32.mrf.mxu0
      %v5826 = vadd.f32 0.0, %v5825
      %v5827 = vpop.f32.mrf.mxu0
      %v5828 = vadd.f32 0.0, %v5827
      %5829 = vmatmul.bf16.gmra.mxu0 %v5681
      %v5830 = vpop.f32.mrf.mxu0
      %v5831 = vadd.f32 0.0, %v5830
      %v5832 = vpop.f32.mrf.mxu0
      %v5833 = vadd.f32 0.0, %v5832
      %5834 = vdwg.mxu0
      %v5835 = vadd.f32 %v5756, %v252
      %v5836 = vadd.f32 %v5758, %v253
      %v5837 = vadd.f32 %v5761, %v254
      %v5838 = vadd.f32 %v5763, %v255
      %v5839 = vadd.f32 %v5766, %v256
      %v5840 = vadd.f32 %v5768, %v257
      %v5841 = vadd.f32 %v5771, %v258
      %v5842 = vadd.f32 %v5773, %v259
      %v5843 = vadd.f32 %v5776, %v260
      %v5844 = vadd.f32 %v5778, %v261
      %v5845 = vadd.f32 %v5781, %v262
      %v5846 = vadd.f32 %v5783, %v263
      %v5847 = vadd.f32 %v5786, %v264
      %v5848 = vadd.f32 %v5788, %v265
      %v5849 = vadd.f32 %v5791, %v266
      %v5850 = vadd.f32 %v5793, %v267
      %v5851 = vadd.f32 %v5796, %v268
      %v5852 = vadd.f32 %v5798, %v269
      %v5853 = vadd.f32 %v5801, %v270
      %v5854 = vadd.f32 %v5803, %v271
      %v5855 = vadd.f32 %v5806, %v272
      %v5856 = vadd.f32 %v5808, %v273
      %v5857 = vadd.f32 %v5811, %v274
      %v5858 = vadd.f32 %v5813, %v275
      %v5859 = vadd.f32 %v5816, %v276
      %v5860 = vadd.f32 %v5818, %v277
      %v5861 = vadd.f32 %v5821, %v278
      %v5862 = vadd.f32 %v5823, %v279
      %v5863 = vadd.f32 %v5826, %v280
      %v5864 = vadd.f32 %v5828, %v281
      %v5865 = vadd.f32 %v5831, %v282
      %v5866 = vadd.f32 %v5833, %v283
      %5867 = vst [vmem:[%s251] sm:$0xff] %v5835
      %5868 = vst [vmem:[%s251 + $0x8] sm:$0xff] %v5836
      %5869 = vst [vmem:[%s251 + $0x10] sm:$0xff] %v5837
      %5870 = vst [vmem:[%s251 + $0x18] sm:$0xff] %v5838
      %5871 = vst [vmem:[%s251 + $0x20] sm:$0xff] %v5839
      %5872 = vst [vmem:[%s251 + $0x28] sm:$0xff] %v5840
      %5873 = vst [vmem:[%s251 + $0x30] sm:$0xff] %v5841
      %5874 = vst [vmem:[%s251 + $0x38] sm:$0xff] %v5842
      %5875 = vst [vmem:[%s251 + $0x40] sm:$0xff] %v5843
      %5876 = vst [vmem:[%s251 + $0x48] sm:$0xff] %v5844
      %5877 = vst [vmem:[%s251 + $0x50] sm:$0xff] %v5845
      %5878 = vst [vmem:[%s251 + $0x58] sm:$0xff] %v5846
      %5879 = vst [vmem:[%s251 + $0x60] sm:$0xff] %v5847
      %5880 = vst [vmem:[%s251 + $0x68] sm:$0xff] %v5848
      %5881 = vst [vmem:[%s251 + $0x70] sm:$0xff] %v5849
      %5882 = vst [vmem:[%s251 + $0x78] sm:$0xff] %v5850
      %5883 = vst [vmem:[%s251 + $0x80] sm:$0xff] %v5851
      %5884 = vst [vmem:[%s251 + $0x88] sm:$0xff] %v5852
      %5885 = vst [vmem:[%s251 + $0x90] sm:$0xff] %v5853
      %5886 = vst [vmem:[%s251 + $0x98] sm:$0xff] %v5854
      %5887 = vst [vmem:[%s251 + $0xa0] sm:$0xff] %v5855
      %5888 = vst [vmem:[%s251 + $0xa8] sm:$0xff] %v5856
      %5889 = vst [vmem:[%s251 + $0xb0] sm:$0xff] %v5857
      %5890 = vst [vmem:[%s251 + $0xb8] sm:$0xff] %v5858
      %5891 = vst [vmem:[%s251 + $0xc0] sm:$0xff] %v5859
      %5892 = vst [vmem:[%s251 + $0xc8] sm:$0xff] %v5860
      %5893 = vst [vmem:[%s251 + $0xd0] sm:$0xff] %v5861
      %5894 = vst [vmem:[%s251 + $0xd8] sm:$0xff] %v5862
      %5895 = vst [vmem:[%s251 + $0xe0] sm:$0xff] %v5863
      %5896 = vst [vmem:[%s251 + $0xe8] sm:$0xff] %v5864
      %5897 = vst [vmem:[%s251 + $0xf0] sm:$0xff] %v5865
      %5898 = vst [vmem:[%s251 + $0xf8] sm:$0xff] %v5866
      %p5899 = scmp.lt.s32.totalorder %s17, 1
      %s5900 = scalar_select %p5899, %s17, 1
      %s5901 = smul.addr %s5900, 32
      %s5902 = smul.addr %s5901, 8
      %s5903 = scalar_lea.vmem %s6, %s5902
      // Predicated region
      $region45: #{convnext_block_gamma.1} parent=43 // pred_check
        %p5904 = pneg %p166
      $region46: #{convnext_block_gamma.1} parent=43 // pred_check_branch
        %5906 = sbr.rel (%p5904) target = $region48
      $region47: #{convnext_block_gamma.1} parent=43 // pred_region
        _
      $region48: #{convnext_block_gamma.1} parent=43 // pred_fallthru
        _
    $region44: #{convnext_block_gamma.1} parent=5 // pred_fallthru
      _
    %p5907 = scmp.le.s32.totalorder 2, %s12
    // Predicated region
    $region49: #{convnext_block_gamma.1} parent=5 // pred_check
      %p5908 = pneg %p5907
    $region50: #{convnext_block_gamma.1} parent=5 // pred_check_branch
      %5910 = sbr.rel (%p5908) target = $region52
    $region51: #{convnext_block_gamma.1} parent=5 // pred_region
      %s5911 = ssub.s32 %s12, 2
      // Predicated region
      $region53: #{convnext_block_gamma.1} parent=51 // pred_check
        %p5912 = pneg %p172
      $region54: #{convnext_block_gamma.1} parent=51 // pred_check_branch
        %5914 = sbr.rel (%p5912) target = $region56
      $region55: #{convnext_block_gamma.1} parent=51 // pred_region
        %p5915 = scmp.lt.s32.totalorder %s18, 1
        %s5916 = scalar_select %p5915, %s18, 1
        %s5917 = smul.addr %s5916, 32
        %s5918 = smul.addr %s5917, 8
        %s5919 = scalar_lea.vmem %s6, %s5918
      $region56: #{convnext_block_gamma.1} parent=51 // pred_fallthru
        _
    $region52: #{convnext_block_gamma.1} parent=5 // pred_fallthru
      _
  $region6: #{convnext_block_gamma.1} parent=0 // loop_footer
    %s16 = sadd.s32 1, %s12
  $region7: #{convnext_block_gamma.1} parent=0 // loop_footer_branch
    %11 = sbr.rel target = $region3
  $region8: #{convnext_block_gamma.1} parent=0 // loop_exit
    _

</llo_original>
